<compile_context>
chip_gen: v5e
topology: v5e:2x2
jax: 0.10.0
libtpu: 0.0.40
codegen_flags: <defaults>
</compile_context>

<pallas_src>
import math

import jax
import jax.numpy as jnp
from jax.experimental import pallas as pl
from jax.experimental.pallas import tpu as pltpu

# ------------------------- model hyper-parameters ---------------------------
B = 2          # batch
S = 8          # base-model sequence length (layer_0 sees S+1)
H = 32         # hidden size
NH = 4         # attention heads
DH = H // NH   # head dim
INTER = 64     # intermediate (FFN) size
VOCAB = 96     # vocab size
LN_EPS = 1e-12 # RobertaConfig.layer_norm_eps default
DTYPE = jnp.float32

_INV_SQRT2 = 1.0 / math.sqrt(2.0)
_ATTN_SCALE = 1.0 / math.sqrt(DH)

N_LAYER_PARAMS = 12   # wqkv, bqkv, wo, bo, ln1g, ln1b, wi, bi, wf, bf, ln2g, ln2b
N_HEAD_PARAMS = 6     # dense_w, dense_b, ln_g, ln_b, dec_w, dec_b
N_PARAMS = 2 * N_LAYER_PARAMS + N_HEAD_PARAMS


# --------------------------- in-kernel math helpers --------------------------
def _gelu(x):
    # exact (erf) GELU, matching HF "gelu"
    return 0.5 * x * (1.0 + jax.lax.erf(x * _INV_SQRT2))


def _layernorm(x, g, b):
    mu = jnp.mean(x, axis=-1, keepdims=True)
    var = jnp.mean(jnp.square(x - mu), axis=-1, keepdims=True)
    return (x - mu) * jax.lax.rsqrt(var + LN_EPS) * g + b


def _roberta_layer(x, prm):
    """One RobertaLayer on a 2-D (rows, H) tile; no mask, eval mode."""
    (wqkv, bqkv, wo, bo, ln1g, ln1b, wi, bi, wf, bf, ln2g, ln2b) = prm

    # Multi-head self-attention; heads kept as separate 2-D tiles (static
    # unroll, NH=4).  concat_h(ctx_h) @ Wo == sum_h ctx_h @ Wo[h].
    attn = bo[...]
    for h in range(NH):
        q = jnp.dot(x, wqkv[h], preferred_element_type=jnp.float32) + bqkv[h]
        k = (jnp.dot(x, wqkv[NH + h], preferred_element_type=jnp.float32)
             + bqkv[NH + h])
        v = (jnp.dot(x, wqkv[2 * NH + h], preferred_element_type=jnp.float32)
             + bqkv[2 * NH + h])
        # scores: contract head dims -> (R, R), no explicit transpose
        s = jax.lax.dot_general(q, k, (((1,), (1,)), ((), ())),
                                preferred_element_type=jnp.float32) * _ATTN_SCALE
        m = jnp.max(s, axis=-1, keepdims=True)
        e = jnp.exp(s - m)
        w = e * pl.reciprocal(jnp.sum(e, axis=-1, keepdims=True), approx=True)
        ctx = jnp.dot(w, v, preferred_element_type=jnp.float32)
        attn = attn + jnp.dot(ctx, wo[h], preferred_element_type=jnp.float32)

    attn = _layernorm(attn + x, ln1g[...], ln1b[...])                     # SelfOutput
    inter = _gelu(jnp.dot(attn, wi[...],
                          preferred_element_type=jnp.float32) + bi[...])  # Intermediate
    ffn = jnp.dot(inter, wf[...], preferred_element_type=jnp.float32) + bf[...]
    return _layernorm(ffn + attn, ln2g[...], ln2b[...])                   # Output LN


def _lm_head(x, prm):
    """RobertaLMHead: dense -> gelu -> LayerNorm (no residual) -> decoder."""
    (dw, db, lg, lb, decw, decb) = prm
    t = _gelu(jnp.dot(x, dw[...], preferred_element_type=jnp.float32) + db[...])
    t = _layernorm(t, lg[...], lb[...])
    return jnp.dot(t, decw[...], preferred_element_type=jnp.float32) + decb[...]


# ------------------------------ fused Pallas kernel --------------------------
def _decoder_head_kernel(x_ref, *rest):
    """Whole QaracDecoderHead forward for all batches in one kernel call.

    x_ref : (B, S+1, H)   concatenated [vector, hidden_states]
    rest  : 30 parameter refs, out_ref (B, S, VOCAB), l0 scratch (S+1, H).
    """
    param_refs = rest[:N_PARAMS]
    out_ref = rest[N_PARAMS]
    l0_buf = rest[N_PARAMS + 1]

    l0p = param_refs[0:N_LAYER_PARAMS]
    l1p = param_refs[N_LAYER_PARAMS:2 * N_LAYER_PARAMS]
    hdp = param_refs[2 * N_LAYER_PARAMS:]

    # TODO(synk): attention_mask branch of the original module is not
    # reproduced (the PyTorch source is only executable with attention_mask=None).
    for b in range(B):                              # static unroll, B=2
        x_b = x_ref[b]                              # (S+1, H)
        l0_buf[...] = _roberta_layer(x_b, l0p)      # layer_0 on (S+1) rows
        l1_in = l0_buf[pl.ds(1, S), :]              # drop the vector slot
        l1 = _roberta_layer(l1_in, l1p)             # layer_1 on S rows
        out_ref[b] = _lm_head(l1, hdp).astype(out_ref.dtype)


# ------------------------------- host wrapper --------------------------------
def qarac_decoder_head(vector, hidden_states, packed_params):
    """vector: (B, 1, H), hidden_states: (B, S, H) -> logits (B, S, VOCAB)."""
    vectors = jnp.concatenate([vector, hidden_states], axis=1)   # (B, S+1, H)
    bsz, s1, h = vectors.shape
    return pl.pallas_call(
        _decoder_head_kernel,
        out_shape=jax.ShapeDtypeStruct((bsz, s1 - 1, VOCAB), vectors.dtype),
        scratch_shapes=[pltpu.VMEM((s1, h), jnp.float32)],
    )(vectors, *packed_params)


# ---------------------------- parameter packing -------------------------------
def _per_head_in(w):
    """(H, H) projection -> per-head slabs (NH, H, DH): w[:, h*DH:(h+1)*DH]."""
    return w.reshape(H, NH, DH).transpose(1, 0, 2)


def pack_layer_params(p):
    wqkv = jnp.concatenate([_per_head_in(p["wq"]),
                            _per_head_in(p["wk"]),
                            _per_head_in(p["wv"])], axis=0)          # (3*NH, H, DH)
    bqkv = jnp.concatenate([p["bq"].reshape(NH, 1, DH),
                            p["bk"].reshape(NH, 1, DH),
                            p["bv"].reshape(NH, 1, DH)], axis=0)     # (3*NH, 1, DH)
    wo_h = p["wo"].reshape(NH, DH, H)                                # rows grouped by head
    return (
        wqkv, bqkv, wo_h, p["bo"].reshape(1, H),
        p["ln1_g"].reshape(1, H), p["ln1_b"].reshape(1, H),
        p["wi"], p["bi"].reshape(1, INTER),
        p["wf"], p["bf"].reshape(1, H),
        p["ln2_g"].reshape(1, H), p["ln2_b"].reshape(1, H),
    )


def pack_head_params(p):
    return (
        p["dense_w"], p["dense_b"].reshape(1, H),
        p["ln_g"].reshape(1, H), p["ln_b"].reshape(1, H),
        p["dec_w"], p["dec_b"].reshape(1, VOCAB),
    )


def pack_params(params):
    return (pack_layer_params(params["layer_0"])
            + pack_layer_params(params["layer_1"])
            + pack_head_params(params["head"]))


# ----------------------------- parameter creation ----------------------------
def _linear(key, fan_in, fan_out):
    w = jax.random.normal(key, (fan_in, fan_out), DTYPE) * 0.02
    b = jnp.zeros((fan_out,), DTYPE)
    return w, b


def init_roberta_layer(key):
    ks = jax.random.split(key, 6)
    wq, bq = _linear(ks[0], H, H)
    wk, bk = _linear(ks[1], H, H)
    wv, bv = _linear(ks[2], H, H)
    wo, bo = _linear(ks[3], H, H)
    wi, bi = _linear(ks[4], H, INTER)
    wf, bf = _linear(ks[5], INTER, H)
    return dict(
        wq=wq, bq=bq, wk=wk, bk=bk, wv=wv, bv=bv, wo=wo, bo=bo,
        ln1_g=jnp.ones((H,), DTYPE), ln1_b=jnp.zeros((H,), DTYPE),
        wi=wi, bi=bi, wf=wf, bf=bf,
        ln2_g=jnp.ones((H,), DTYPE), ln2_b=jnp.zeros((H,), DTYPE),
    )


def init_lm_head(key):
    k0, k1 = jax.random.split(key, 2)
    dense_w, dense_b = _linear(k0, H, H)
    dec_w, dec_b = _linear(k1, H, VOCAB)
    return dict(
        dense_w=dense_w, dense_b=dense_b,
        ln_g=jnp.ones((H,), DTYPE), ln_b=jnp.zeros((H,), DTYPE),
        dec_w=dec_w, dec_b=dec_b,
    )


def init_params(key):
    k0, k1, k2 = jax.random.split(key, 3)
    return dict(layer_0=init_roberta_layer(k0),
                layer_1=init_roberta_layer(k1),
                head=init_lm_head(k2))


# ---------------------------------- main -------------------------------------
if __name__ == "__main__":
    root = jax.random.PRNGKey(0)
    k_params, k_vec, k_hid = jax.random.split(root, 3)

    params = init_params(k_params)
    packed = pack_params(params)                                  # one-time host prep
    vector = jax.random.normal(k_vec, (B, 1, H), DTYPE)           # decoded vector
    hidden_states = jax.random.normal(k_hid, (B, S, H), DTYPE)    # base-model states

    fwd = jax.jit(qarac_decoder_head)
    logits = fwd(vector, hidden_states, packed)
    jax.block_until_ready(logits)

    assert logits.shape == (B, S, VOCAB), logits.shape
    assert logits.dtype == DTYPE
    assert bool(jnp.all(jnp.isfinite(logits)))
    print("KERNEL_OK")
</pallas_src>

<mosaic_0001>
module attributes {stable_mosaic.version = 11 : i64} {
  func.func @_decoder_head_kernel(%arg0: memref<2x9x32xf32, #tpu.memory_space<vmem>>, %arg1: memref<12x32x8xf32, #tpu.memory_space<vmem>>, %arg2: memref<12x1x8xf32, #tpu.memory_space<vmem>>, %arg3: memref<4x8x32xf32, #tpu.memory_space<vmem>>, %arg4: memref<1x32xf32, #tpu.memory_space<vmem>>, %arg5: memref<1x32xf32, #tpu.memory_space<vmem>>, %arg6: memref<1x32xf32, #tpu.memory_space<vmem>>, %arg7: memref<32x64xf32, #tpu.memory_space<vmem>>, %arg8: memref<1x64xf32, #tpu.memory_space<vmem>>, %arg9: memref<64x32xf32, #tpu.memory_space<vmem>>, %arg10: memref<1x32xf32, #tpu.memory_space<vmem>>, %arg11: memref<1x32xf32, #tpu.memory_space<vmem>>, %arg12: memref<1x32xf32, #tpu.memory_space<vmem>>, %arg13: memref<12x32x8xf32, #tpu.memory_space<vmem>>, %arg14: memref<12x1x8xf32, #tpu.memory_space<vmem>>, %arg15: memref<4x8x32xf32, #tpu.memory_space<vmem>>, %arg16: memref<1x32xf32, #tpu.memory_space<vmem>>, %arg17: memref<1x32xf32, #tpu.memory_space<vmem>>, %arg18: memref<1x32xf32, #tpu.memory_space<vmem>>, %arg19: memref<32x64xf32, #tpu.memory_space<vmem>>, %arg20: memref<1x64xf32, #tpu.memory_space<vmem>>, %arg21: memref<64x32xf32, #tpu.memory_space<vmem>>, %arg22: memref<1x32xf32, #tpu.memory_space<vmem>>, %arg23: memref<1x32xf32, #tpu.memory_space<vmem>>, %arg24: memref<1x32xf32, #tpu.memory_space<vmem>>, %arg25: memref<32x32xf32, #tpu.memory_space<vmem>>, %arg26: memref<1x32xf32, #tpu.memory_space<vmem>>, %arg27: memref<1x32xf32, #tpu.memory_space<vmem>>, %arg28: memref<1x32xf32, #tpu.memory_space<vmem>>, %arg29: memref<32x96xf32, #tpu.memory_space<vmem>>, %arg30: memref<1x96xf32, #tpu.memory_space<vmem>>, %arg31: memref<2x8x96xf32, #tpu.memory_space<vmem>>, %arg32: memref<9x32xf32, #tpu.memory_space<vmem>>) attributes {dimension_semantics = [], scalar_prefetch = 0 : i64, scratch_operands = 1 : i64, tpu.core_type = #tpu.core_type<tc>} {
    %c0 = arith.constant 0 : index
    %c0_0 = arith.constant 0 : index
    %c0_1 = arith.constant 0 : index
    %0 = vector.load %arg0[%c0, %c0_0, %c0_1] : memref<2x9x32xf32, #tpu.memory_space<vmem>>, vector<1x9x32xf32>
    %1 = vector.shape_cast %0 : vector<1x9x32xf32> to vector<9x32xf32>
    %c0_2 = arith.constant 0 : index
    %c0_3 = arith.constant 0 : index
    %2 = vector.load %arg4[%c0_2, %c0_3] : memref<1x32xf32, #tpu.memory_space<vmem>>, vector<1x32xf32>
    %c0_4 = arith.constant 0 : index
    %c0_5 = arith.constant 0 : index
    %c0_6 = arith.constant 0 : index
    %3 = vector.load %arg1[%c0_4, %c0_5, %c0_6] : memref<12x32x8xf32, #tpu.memory_space<vmem>>, vector<1x32x8xf32>
    %4 = vector.shape_cast %3 : vector<1x32x8xf32> to vector<32x8xf32>
    %cst = arith.constant dense<0.000000e+00> : vector<9x8xf32>
    %5 = tpu.matmul %1, %4, %cst {dimension_numbers = #tpu.dot_dimension_numbers<[1], [0], [0], [1], [0, 0, 1, 1], [], []>} : vector<9x32xf32>, vector<32x8xf32>, vector<9x8xf32> -> vector<9x8xf32>
    %c0_7 = arith.constant 0 : index
    %c0_8 = arith.constant 0 : index
    %c0_9 = arith.constant 0 : index
    %6 = vector.load %arg2[%c0_7, %c0_8, %c0_9] : memref<12x1x8xf32, #tpu.memory_space<vmem>>, vector<1x1x8xf32>
    %7 = vector.shape_cast %6 : vector<1x1x8xf32> to vector<1x8xf32>
    %8 = vector.broadcast %7 : vector<1x8xf32> to vector<9x8xf32>
    %9 = arith.addf %5, %8 : vector<9x8xf32>
    %c4 = arith.constant 4 : index
    %c0_10 = arith.constant 0 : index
    %c0_11 = arith.constant 0 : index
    %10 = vector.load %arg1[%c4, %c0_10, %c0_11] : memref<12x32x8xf32, #tpu.memory_space<vmem>>, vector<1x32x8xf32>
    %11 = vector.shape_cast %10 : vector<1x32x8xf32> to vector<32x8xf32>
    %cst_12 = arith.constant dense<0.000000e+00> : vector<9x8xf32>
    %12 = tpu.matmul %1, %11, %cst_12 {dimension_numbers = #tpu.dot_dimension_numbers<[1], [0], [0], [1], [0, 0, 1, 1], [], []>} : vector<9x32xf32>, vector<32x8xf32>, vector<9x8xf32> -> vector<9x8xf32>
    %c4_13 = arith.constant 4 : index
    %c0_14 = arith.constant 0 : index
    %c0_15 = arith.constant 0 : index
    %13 = vector.load %arg2[%c4_13, %c0_14, %c0_15] : memref<12x1x8xf32, #tpu.memory_space<vmem>>, vector<1x1x8xf32>
    %14 = vector.shape_cast %13 : vector<1x1x8xf32> to vector<1x8xf32>
    %15 = vector.broadcast %14 : vector<1x8xf32> to vector<9x8xf32>
    %16 = arith.addf %12, %15 : vector<9x8xf32>
    %c8 = arith.constant 8 : index
    %c0_16 = arith.constant 0 : index
    %c0_17 = arith.constant 0 : index
    %17 = vector.load %arg1[%c8, %c0_16, %c0_17] : memref<12x32x8xf32, #tpu.memory_space<vmem>>, vector<1x32x8xf32>
    %18 = vector.shape_cast %17 : vector<1x32x8xf32> to vector<32x8xf32>
    %cst_18 = arith.constant dense<0.000000e+00> : vector<9x8xf32>
    %19 = tpu.matmul %1, %18, %cst_18 {dimension_numbers = #tpu.dot_dimension_numbers<[1], [0], [0], [1], [0, 0, 1, 1], [], []>} : vector<9x32xf32>, vector<32x8xf32>, vector<9x8xf32> -> vector<9x8xf32>
    %c8_19 = arith.constant 8 : index
    %c0_20 = arith.constant 0 : index
    %c0_21 = arith.constant 0 : index
    %20 = vector.load %arg2[%c8_19, %c0_20, %c0_21] : memref<12x1x8xf32, #tpu.memory_space<vmem>>, vector<1x1x8xf32>
    %21 = vector.shape_cast %20 : vector<1x1x8xf32> to vector<1x8xf32>
    %22 = vector.broadcast %21 : vector<1x8xf32> to vector<9x8xf32>
    %23 = arith.addf %19, %22 : vector<9x8xf32>
    %cst_22 = arith.constant dense<0.000000e+00> : vector<9x9xf32>
    %24 = tpu.matmul %9, %16, %cst_22 {dimension_numbers = #tpu.dot_dimension_numbers<[1], [1], [0], [0], [0, 0, 1, 0], [], []>} : vector<9x8xf32>, vector<9x8xf32>, vector<9x9xf32> -> vector<9x9xf32>
    %cst_23 = arith.constant 0.353553385 : f32
    %25 = vector.broadcast %cst_23 : f32 to vector<9x9xf32>
    %26 = arith.mulf %24, %25 : vector<9x9xf32>
    %cst_24 = arith.constant dense<0xFF800000> : vector<9xf32>
    %27 = vector.multi_reduction <maximumf>, %26, %cst_24 [1] : vector<9x9xf32> to vector<9xf32>
    %28 = vector.shape_cast %27 : vector<9xf32> to vector<9x1xf32>
    %29 = vector.broadcast %28 : vector<9x1xf32> to vector<9x9xf32>
    %30 = arith.subf %26, %29 : vector<9x9xf32>
    %31 = math.exp %30 : vector<9x9xf32>
    %cst_25 = arith.constant dense<0.000000e+00> : vector<9xf32>
    %32 = vector.multi_reduction <add>, %31, %cst_25 [1] : vector<9x9xf32> to vector<9xf32>
    %33 = vector.shape_cast %32 : vector<9xf32> to vector<9x1xf32>
    %34 = tpu.reciprocal %33 {approx = true} : vector<9x1xf32> -> vector<9x1xf32>
    %35 = vector.broadcast %34 : vector<9x1xf32> to vector<9x9xf32>
    %36 = arith.mulf %31, %35 : vector<9x9xf32>
    %cst_26 = arith.constant dense<0.000000e+00> : vector<9x8xf32>
    %37 = tpu.matmul %36, %23, %cst_26 {dimension_numbers = #tpu.dot_dimension_numbers<[1], [0], [0], [1], [0, 0, 1, 1], [], []>} : vector<9x9xf32>, vector<9x8xf32>, vector<9x8xf32> -> vector<9x8xf32>
    %c0_27 = arith.constant 0 : index
    %c0_28 = arith.constant 0 : index
    %c0_29 = arith.constant 0 : index
    %38 = vector.load %arg3[%c0_27, %c0_28, %c0_29] : memref<4x8x32xf32, #tpu.memory_space<vmem>>, vector<1x8x32xf32>
    %39 = vector.shape_cast %38 : vector<1x8x32xf32> to vector<8x32xf32>
    %cst_30 = arith.constant dense<0.000000e+00> : vector<9x32xf32>
    %40 = tpu.matmul %37, %39, %cst_30 {dimension_numbers = #tpu.dot_dimension_numbers<[1], [0], [0], [1], [0, 0, 1, 1], [], []>} : vector<9x8xf32>, vector<8x32xf32>, vector<9x32xf32> -> vector<9x32xf32>
    %41 = vector.broadcast %2 : vector<1x32xf32> to vector<9x32xf32>
    %42 = arith.addf %41, %40 : vector<9x32xf32>
    %c1 = arith.constant 1 : index
    %c0_31 = arith.constant 0 : index
    %c0_32 = arith.constant 0 : index
    %43 = vector.load %arg1[%c1, %c0_31, %c0_32] : memref<12x32x8xf32, #tpu.memory_space<vmem>>, vector<1x32x8xf32>
    %44 = vector.shape_cast %43 : vector<1x32x8xf32> to vector<32x8xf32>
    %cst_33 = arith.constant dense<0.000000e+00> : vector<9x8xf32>
    %45 = tpu.matmul %1, %44, %cst_33 {dimension_numbers = #tpu.dot_dimension_numbers<[1], [0], [0], [1], [0, 0, 1, 1], [], []>} : vector<9x32xf32>, vector<32x8xf32>, vector<9x8xf32> -> vector<9x8xf32>
    %c1_34 = arith.constant 1 : index
    %c0_35 = arith.constant 0 : index
    %c0_36 = arith.constant 0 : index
    %46 = vector.load %arg2[%c1_34, %c0_35, %c0_36] : memref<12x1x8xf32, #tpu.memory_space<vmem>>, vector<1x1x8xf32>
    %47 = vector.shape_cast %46 : vector<1x1x8xf32> to vector<1x8xf32>
    %48 = vector.broadcast %47 : vector<1x8xf32> to vector<9x8xf32>
    %49 = arith.addf %45, %48 : vector<9x8xf32>
    %c5 = arith.constant 5 : index
    %c0_37 = arith.constant 0 : index
    %c0_38 = arith.constant 0 : index
    %50 = vector.load %arg1[%c5, %c0_37, %c0_38] : memref<12x32x8xf32, #tpu.memory_space<vmem>>, vector<1x32x8xf32>
    %51 = vector.shape_cast %50 : vector<1x32x8xf32> to vector<32x8xf32>
    %cst_39 = arith.constant dense<0.000000e+00> : vector<9x8xf32>
    %52 = tpu.matmul %1, %51, %cst_39 {dimension_numbers = #tpu.dot_dimension_numbers<[1], [0], [0], [1], [0, 0, 1, 1], [], []>} : vector<9x32xf32>, vector<32x8xf32>, vector<9x8xf32> -> vector<9x8xf32>
    %c5_40 = arith.constant 5 : index
    %c0_41 = arith.constant 0 : index
    %c0_42 = arith.constant 0 : index
    %53 = vector.load %arg2[%c5_40, %c0_41, %c0_42] : memref<12x1x8xf32, #tpu.memory_space<vmem>>, vector<1x1x8xf32>
    %54 = vector.shape_cast %53 : vector<1x1x8xf32> to vector<1x8xf32>
    %55 = vector.broadcast %54 : vector<1x8xf32> to vector<9x8xf32>
    %56 = arith.addf %52, %55 : vector<9x8xf32>
    %c9 = arith.constant 9 : index
    %c0_43 = arith.constant 0 : index
    %c0_44 = arith.constant 0 : index
    %57 = vector.load %arg1[%c9, %c0_43, %c0_44] : memref<12x32x8xf32, #tpu.memory_space<vmem>>, vector<1x32x8xf32>
    %58 = vector.shape_cast %57 : vector<1x32x8xf32> to vector<32x8xf32>
    %cst_45 = arith.constant dense<0.000000e+00> : vector<9x8xf32>
    %59 = tpu.matmul %1, %58, %cst_45 {dimension_numbers = #tpu.dot_dimension_numbers<[1], [0], [0], [1], [0, 0, 1, 1], [], []>} : vector<9x32xf32>, vector<32x8xf32>, vector<9x8xf32> -> vector<9x8xf32>
    %c9_46 = arith.constant 9 : index
    %c0_47 = arith.constant 0 : index
    %c0_48 = arith.constant 0 : index
    %60 = vector.load %arg2[%c9_46, %c0_47, %c0_48] : memref<12x1x8xf32, #tpu.memory_space<vmem>>, vector<1x1x8xf32>
    %61 = vector.shape_cast %60 : vector<1x1x8xf32> to vector<1x8xf32>
    %62 = vector.broadcast %61 : vector<1x8xf32> to vector<9x8xf32>
    %63 = arith.addf %59, %62 : vector<9x8xf32>
    %cst_49 = arith.constant dense<0.000000e+00> : vector<9x9xf32>
    %64 = tpu.matmul %49, %56, %cst_49 {dimension_numbers = #tpu.dot_dimension_numbers<[1], [1], [0], [0], [0, 0, 1, 0], [], []>} : vector<9x8xf32>, vector<9x8xf32>, vector<9x9xf32> -> vector<9x9xf32>
    %cst_50 = arith.constant 0.353553385 : f32
    %65 = vector.broadcast %cst_50 : f32 to vector<9x9xf32>
    %66 = arith.mulf %64, %65 : vector<9x9xf32>
    %cst_51 = arith.constant dense<0xFF800000> : vector<9xf32>
    %67 = vector.multi_reduction <maximumf>, %66, %cst_51 [1] : vector<9x9xf32> to vector<9xf32>
    %68 = vector.shape_cast %67 : vector<9xf32> to vector<9x1xf32>
    %69 = vector.broadcast %68 : vector<9x1xf32> to vector<9x9xf32>
    %70 = arith.subf %66, %69 : vector<9x9xf32>
    %71 = math.exp %70 : vector<9x9xf32>
    %cst_52 = arith.constant dense<0.000000e+00> : vector<9xf32>
    %72 = vector.multi_reduction <add>, %71, %cst_52 [1] : vector<9x9xf32> to vector<9xf32>
    %73 = vector.shape_cast %72 : vector<9xf32> to vector<9x1xf32>
    %74 = tpu.reciprocal %73 {approx = true} : vector<9x1xf32> -> vector<9x1xf32>
    %75 = vector.broadcast %74 : vector<9x1xf32> to vector<9x9xf32>
    %76 = arith.mulf %71, %75 : vector<9x9xf32>
    %cst_53 = arith.constant dense<0.000000e+00> : vector<9x8xf32>
    %77 = tpu.matmul %76, %63, %cst_53 {dimension_numbers = #tpu.dot_dimension_numbers<[1], [0], [0], [1], [0, 0, 1, 1], [], []>} : vector<9x9xf32>, vector<9x8xf32>, vector<9x8xf32> -> vector<9x8xf32>
    %c1_54 = arith.constant 1 : index
    %c0_55 = arith.constant 0 : index
    %c0_56 = arith.constant 0 : index
    %78 = vector.load %arg3[%c1_54, %c0_55, %c0_56] : memref<4x8x32xf32, #tpu.memory_space<vmem>>, vector<1x8x32xf32>
    %79 = vector.shape_cast %78 : vector<1x8x32xf32> to vector<8x32xf32>
    %cst_57 = arith.constant dense<0.000000e+00> : vector<9x32xf32>
    %80 = tpu.matmul %77, %79, %cst_57 {dimension_numbers = #tpu.dot_dimension_numbers<[1], [0], [0], [1], [0, 0, 1, 1], [], []>} : vector<9x8xf32>, vector<8x32xf32>, vector<9x32xf32> -> vector<9x32xf32>
    %81 = arith.addf %42, %80 : vector<9x32xf32>
    %c2 = arith.constant 2 : index
    %c0_58 = arith.constant 0 : index
    %c0_59 = arith.constant 0 : index
    %82 = vector.load %arg1[%c2, %c0_58, %c0_59] : memref<12x32x8xf32, #tpu.memory_space<vmem>>, vector<1x32x8xf32>
    %83 = vector.shape_cast %82 : vector<1x32x8xf32> to vector<32x8xf32>
    %cst_60 = arith.constant dense<0.000000e+00> : vector<9x8xf32>
    %84 = tpu.matmul %1, %83, %cst_60 {dimension_numbers = #tpu.dot_dimension_numbers<[1], [0], [0], [1], [0, 0, 1, 1], [], []>} : vector<9x32xf32>, vector<32x8xf32>, vector<9x8xf32> -> vector<9x8xf32>
    %c2_61 = arith.constant 2 : index
    %c0_62 = arith.constant 0 : index
    %c0_63 = arith.constant 0 : index
    %85 = vector.load %arg2[%c2_61, %c0_62, %c0_63] : memref<12x1x8xf32, #tpu.memory_space<vmem>>, vector<1x1x8xf32>
    %86 = vector.shape_cast %85 : vector<1x1x8xf32> to vector<1x8xf32>
    %87 = vector.broadcast %86 : vector<1x8xf32> to vector<9x8xf32>
    %88 = arith.addf %84, %87 : vector<9x8xf32>
    %c6 = arith.constant 6 : index
    %c0_64 = arith.constant 0 : index
    %c0_65 = arith.constant 0 : index
    %89 = vector.load %arg1[%c6, %c0_64, %c0_65] : memref<12x32x8xf32, #tpu.memory_space<vmem>>, vector<1x32x8xf32>
    %90 = vector.shape_cast %89 : vector<1x32x8xf32> to vector<32x8xf32>
    %cst_66 = arith.constant dense<0.000000e+00> : vector<9x8xf32>
    %91 = tpu.matmul %1, %90, %cst_66 {dimension_numbers = #tpu.dot_dimension_numbers<[1], [0], [0], [1], [0, 0, 1, 1], [], []>} : vector<9x32xf32>, vector<32x8xf32>, vector<9x8xf32> -> vector<9x8xf32>
    %c6_67 = arith.constant 6 : index
    %c0_68 = arith.constant 0 : index
    %c0_69 = arith.constant 0 : index
    %92 = vector.load %arg2[%c6_67, %c0_68, %c0_69] : memref<12x1x8xf32, #tpu.memory_space<vmem>>, vector<1x1x8xf32>
    %93 = vector.shape_cast %92 : vector<1x1x8xf32> to vector<1x8xf32>
    %94 = vector.broadcast %93 : vector<1x8xf32> to vector<9x8xf32>
    %95 = arith.addf %91, %94 : vector<9x8xf32>
    %c10 = arith.constant 10 : index
    %c0_70 = arith.constant 0 : index
    %c0_71 = arith.constant 0 : index
    %96 = vector.load %arg1[%c10, %c0_70, %c0_71] : memref<12x32x8xf32, #tpu.memory_space<vmem>>, vector<1x32x8xf32>
    %97 = vector.shape_cast %96 : vector<1x32x8xf32> to vector<32x8xf32>
    %cst_72 = arith.constant dense<0.000000e+00> : vector<9x8xf32>
    %98 = tpu.matmul %1, %97, %cst_72 {dimension_numbers = #tpu.dot_dimension_numbers<[1], [0], [0], [1], [0, 0, 1, 1], [], []>} : vector<9x32xf32>, vector<32x8xf32>, vector<9x8xf32> -> vector<9x8xf32>
    %c10_73 = arith.constant 10 : index
    %c0_74 = arith.constant 0 : index
    %c0_75 = arith.constant 0 : index
    %99 = vector.load %arg2[%c10_73, %c0_74, %c0_75] : memref<12x1x8xf32, #tpu.memory_space<vmem>>, vector<1x1x8xf32>
    %100 = vector.shape_cast %99 : vector<1x1x8xf32> to vector<1x8xf32>
    %101 = vector.broadcast %100 : vector<1x8xf32> to vector<9x8xf32>
    %102 = arith.addf %98, %101 : vector<9x8xf32>
    %cst_76 = arith.constant dense<0.000000e+00> : vector<9x9xf32>
    %103 = tpu.matmul %88, %95, %cst_76 {dimension_numbers = #tpu.dot_dimension_numbers<[1], [1], [0], [0], [0, 0, 1, 0], [], []>} : vector<9x8xf32>, vector<9x8xf32>, vector<9x9xf32> -> vector<9x9xf32>
    %cst_77 = arith.constant 0.353553385 : f32
    %104 = vector.broadcast %cst_77 : f32 to vector<9x9xf32>
    %105 = arith.mulf %103, %104 : vector<9x9xf32>
    %cst_78 = arith.constant dense<0xFF800000> : vector<9xf32>
    %106 = vector.multi_reduction <maximumf>, %105, %cst_78 [1] : vector<9x9xf32> to vector<9xf32>
    %107 = vector.shape_cast %106 : vector<9xf32> to vector<9x1xf32>
    %108 = vector.broadcast %107 : vector<9x1xf32> to vector<9x9xf32>
    %109 = arith.subf %105, %108 : vector<9x9xf32>
    %110 = math.exp %109 : vector<9x9xf32>
    %cst_79 = arith.constant dense<0.000000e+00> : vector<9xf32>
    %111 = vector.multi_reduction <add>, %110, %cst_79 [1] : vector<9x9xf32> to vector<9xf32>
    %112 = vector.shape_cast %111 : vector<9xf32> to vector<9x1xf32>
    %113 = tpu.reciprocal %112 {approx = true} : vector<9x1xf32> -> vector<9x1xf32>
    %114 = vector.broadcast %113 : vector<9x1xf32> to vector<9x9xf32>
    %115 = arith.mulf %110, %114 : vector<9x9xf32>
    %cst_80 = arith.constant dense<0.000000e+00> : vector<9x8xf32>
    %116 = tpu.matmul %115, %102, %cst_80 {dimension_numbers = #tpu.dot_dimension_numbers<[1], [0], [0], [1], [0, 0, 1, 1], [], []>} : vector<9x9xf32>, vector<9x8xf32>, vector<9x8xf32> -> vector<9x8xf32>
    %c2_81 = arith.constant 2 : index
    %c0_82 = arith.constant 0 : index
    %c0_83 = arith.constant 0 : index
    %117 = vector.load %arg3[%c2_81, %c0_82, %c0_83] : memref<4x8x32xf32, #tpu.memory_space<vmem>>, vector<1x8x32xf32>
    %118 = vector.shape_cast %117 : vector<1x8x32xf32> to vector<8x32xf32>
    %cst_84 = arith.constant dense<0.000000e+00> : vector<9x32xf32>
    %119 = tpu.matmul %116, %118, %cst_84 {dimension_numbers = #tpu.dot_dimension_numbers<[1], [0], [0], [1], [0, 0, 1, 1], [], []>} : vector<9x8xf32>, vector<8x32xf32>, vector<9x32xf32> -> vector<9x32xf32>
    %120 = arith.addf %81, %119 : vector<9x32xf32>
    %c3 = arith.constant 3 : index
    %c0_85 = arith.constant 0 : index
    %c0_86 = arith.constant 0 : index
    %121 = vector.load %arg1[%c3, %c0_85, %c0_86] : memref<12x32x8xf32, #tpu.memory_space<vmem>>, vector<1x32x8xf32>
    %122 = vector.shape_cast %121 : vector<1x32x8xf32> to vector<32x8xf32>
    %cst_87 = arith.constant dense<0.000000e+00> : vector<9x8xf32>
    %123 = tpu.matmul %1, %122, %cst_87 {dimension_numbers = #tpu.dot_dimension_numbers<[1], [0], [0], [1], [0, 0, 1, 1], [], []>} : vector<9x32xf32>, vector<32x8xf32>, vector<9x8xf32> -> vector<9x8xf32>
    %c3_88 = arith.constant 3 : index
    %c0_89 = arith.constant 0 : index
    %c0_90 = arith.constant 0 : index
    %124 = vector.load %arg2[%c3_88, %c0_89, %c0_90] : memref<12x1x8xf32, #tpu.memory_space<vmem>>, vector<1x1x8xf32>
    %125 = vector.shape_cast %124 : vector<1x1x8xf32> to vector<1x8xf32>
    %126 = vector.broadcast %125 : vector<1x8xf32> to vector<9x8xf32>
    %127 = arith.addf %123, %126 : vector<9x8xf32>
    %c7 = arith.constant 7 : index
    %c0_91 = arith.constant 0 : index
    %c0_92 = arith.constant 0 : index
    %128 = vector.load %arg1[%c7, %c0_91, %c0_92] : memref<12x32x8xf32, #tpu.memory_space<vmem>>, vector<1x32x8xf32>
    %129 = vector.shape_cast %128 : vector<1x32x8xf32> to vector<32x8xf32>
    %cst_93 = arith.constant dense<0.000000e+00> : vector<9x8xf32>
    %130 = tpu.matmul %1, %129, %cst_93 {dimension_numbers = #tpu.dot_dimension_numbers<[1], [0], [0], [1], [0, 0, 1, 1], [], []>} : vector<9x32xf32>, vector<32x8xf32>, vector<9x8xf32> -> vector<9x8xf32>
    %c7_94 = arith.constant 7 : index
    %c0_95 = arith.constant 0 : index
    %c0_96 = arith.constant 0 : index
    %131 = vector.load %arg2[%c7_94, %c0_95, %c0_96] : memref<12x1x8xf32, #tpu.memory_space<vmem>>, vector<1x1x8xf32>
    %132 = vector.shape_cast %131 : vector<1x1x8xf32> to vector<1x8xf32>
    %133 = vector.broadcast %132 : vector<1x8xf32> to vector<9x8xf32>
    %134 = arith.addf %130, %133 : vector<9x8xf32>
    %c11 = arith.constant 11 : index
    %c0_97 = arith.constant 0 : index
    %c0_98 = arith.constant 0 : index
    %135 = vector.load %arg1[%c11, %c0_97, %c0_98] : memref<12x32x8xf32, #tpu.memory_space<vmem>>, vector<1x32x8xf32>
    %136 = vector.shape_cast %135 : vector<1x32x8xf32> to vector<32x8xf32>
    %cst_99 = arith.constant dense<0.000000e+00> : vector<9x8xf32>
    %137 = tpu.matmul %1, %136, %cst_99 {dimension_numbers = #tpu.dot_dimension_numbers<[1], [0], [0], [1], [0, 0, 1, 1], [], []>} : vector<9x32xf32>, vector<32x8xf32>, vector<9x8xf32> -> vector<9x8xf32>
    %c11_100 = arith.constant 11 : index
    %c0_101 = arith.constant 0 : index
    %c0_102 = arith.constant 0 : index
    %138 = vector.load %arg2[%c11_100, %c0_101, %c0_102] : memref<12x1x8xf32, #tpu.memory_space<vmem>>, vector<1x1x8xf32>
    %139 = vector.shape_cast %138 : vector<1x1x8xf32> to vector<1x8xf32>
    %140 = vector.broadcast %139 : vector<1x8xf32> to vector<9x8xf32>
    %141 = arith.addf %137, %140 : vector<9x8xf32>
    %cst_103 = arith.constant dense<0.000000e+00> : vector<9x9xf32>
    %142 = tpu.matmul %127, %134, %cst_103 {dimension_numbers = #tpu.dot_dimension_numbers<[1], [1], [0], [0], [0, 0, 1, 0], [], []>} : vector<9x8xf32>, vector<9x8xf32>, vector<9x9xf32> -> vector<9x9xf32>
    %cst_104 = arith.constant 0.353553385 : f32
    %143 = vector.broadcast %cst_104 : f32 to vector<9x9xf32>
    %144 = arith.mulf %142, %143 : vector<9x9xf32>
    %cst_105 = arith.constant dense<0xFF800000> : vector<9xf32>
    %145 = vector.multi_reduction <maximumf>, %144, %cst_105 [1] : vector<9x9xf32> to vector<9xf32>
    %146 = vector.shape_cast %145 : vector<9xf32> to vector<9x1xf32>
    %147 = vector.broadcast %146 : vector<9x1xf32> to vector<9x9xf32>
    %148 = arith.subf %144, %147 : vector<9x9xf32>
    %149 = math.exp %148 : vector<9x9xf32>
    %cst_106 = arith.constant dense<0.000000e+00> : vector<9xf32>
    %150 = vector.multi_reduction <add>, %149, %cst_106 [1] : vector<9x9xf32> to vector<9xf32>
    %151 = vector.shape_cast %150 : vector<9xf32> to vector<9x1xf32>
    %152 = tpu.reciprocal %151 {approx = true} : vector<9x1xf32> -> vector<9x1xf32>
    %153 = vector.broadcast %152 : vector<9x1xf32> to vector<9x9xf32>
    %154 = arith.mulf %149, %153 : vector<9x9xf32>
    %cst_107 = arith.constant dense<0.000000e+00> : vector<9x8xf32>
    %155 = tpu.matmul %154, %141, %cst_107 {dimension_numbers = #tpu.dot_dimension_numbers<[1], [0], [0], [1], [0, 0, 1, 1], [], []>} : vector<9x9xf32>, vector<9x8xf32>, vector<9x8xf32> -> vector<9x8xf32>
    %c3_108 = arith.constant 3 : index
    %c0_109 = arith.constant 0 : index
    %c0_110 = arith.constant 0 : index
    %156 = vector.load %arg3[%c3_108, %c0_109, %c0_110] : memref<4x8x32xf32, #tpu.memory_space<vmem>>, vector<1x8x32xf32>
    %157 = vector.shape_cast %156 : vector<1x8x32xf32> to vector<8x32xf32>
    %cst_111 = arith.constant dense<0.000000e+00> : vector<9x32xf32>
    %158 = tpu.matmul %155, %157, %cst_111 {dimension_numbers = #tpu.dot_dimension_numbers<[1], [0], [0], [1], [0, 0, 1, 1], [], []>} : vector<9x8xf32>, vector<8x32xf32>, vector<9x32xf32> -> vector<9x32xf32>
    %159 = arith.addf %120, %158 : vector<9x32xf32>
    %160 = arith.addf %159, %1 : vector<9x32xf32>
    %c0_112 = arith.constant 0 : index
    %c0_113 = arith.constant 0 : index
    %161 = vector.load %arg5[%c0_112, %c0_113] : memref<1x32xf32, #tpu.memory_space<vmem>>, vector<1x32xf32>
    %c0_114 = arith.constant 0 : index
    %c0_115 = arith.constant 0 : index
    %162 = vector.load %arg6[%c0_114, %c0_115] : memref<1x32xf32, #tpu.memory_space<vmem>>, vector<1x32xf32>
    %cst_116 = arith.constant dense<0.000000e+00> : vector<9xf32>
    %163 = vector.multi_reduction <add>, %160, %cst_116 [1] : vector<9x32xf32> to vector<9xf32>
    %164 = vector.shape_cast %163 : vector<9xf32> to vector<9x1xf32>
    %cst_117 = arith.constant 3.200000e+01 : f32
    %165 = vector.broadcast %cst_117 : f32 to vector<9x1xf32>
    %166 = arith.divf %164, %165 : vector<9x1xf32>
    %167 = vector.broadcast %166 : vector<9x1xf32> to vector<9x32xf32>
    %168 = arith.subf %160, %167 : vector<9x32xf32>
    %169 = arith.mulf %168, %168 : vector<9x32xf32>
    %cst_118 = arith.constant dense<0.000000e+00> : vector<9xf32>
    %170 = vector.multi_reduction <add>, %169, %cst_118 [1] : vector<9x32xf32> to vector<9xf32>
    %171 = vector.shape_cast %170 : vector<9xf32> to vector<9x1xf32>
    %cst_119 = arith.constant 3.200000e+01 : f32
    %172 = vector.broadcast %cst_119 : f32 to vector<9x1xf32>
    %173 = arith.divf %171, %172 : vector<9x1xf32>
    %174 = vector.broadcast %166 : vector<9x1xf32> to vector<9x32xf32>
    %175 = arith.subf %160, %174 : vector<9x32xf32>
    %cst_120 = arith.constant 9.99999996E-13 : f32
    %176 = vector.broadcast %cst_120 : f32 to vector<9x1xf32>
    %177 = arith.addf %173, %176 : vector<9x1xf32>
    %178 = math.rsqrt %177 : vector<9x1xf32>
    %179 = vector.broadcast %178 : vector<9x1xf32> to vector<9x32xf32>
    %180 = arith.mulf %175, %179 : vector<9x32xf32>
    %181 = vector.broadcast %161 : vector<1x32xf32> to vector<9x32xf32>
    %182 = arith.mulf %180, %181 : vector<9x32xf32>
    %183 = vector.broadcast %162 : vector<1x32xf32> to vector<9x32xf32>
    %184 = arith.addf %182, %183 : vector<9x32xf32>
    %c0_121 = arith.constant 0 : index
    %c0_122 = arith.constant 0 : index
    %185 = vector.load %arg7[%c0_121, %c0_122] : memref<32x64xf32, #tpu.memory_space<vmem>>, vector<32x64xf32>
    %cst_123 = arith.constant dense<0.000000e+00> : vector<9x64xf32>
    %186 = tpu.matmul %184, %185, %cst_123 {dimension_numbers = #tpu.dot_dimension_numbers<[1], [0], [0], [1], [0, 0, 1, 1], [], []>} : vector<9x32xf32>, vector<32x64xf32>, vector<9x64xf32> -> vector<9x64xf32>
    %c0_124 = arith.constant 0 : index
    %c0_125 = arith.constant 0 : index
    %187 = vector.load %arg8[%c0_124, %c0_125] : memref<1x64xf32, #tpu.memory_space<vmem>>, vector<1x64xf32>
    %188 = vector.broadcast %187 : vector<1x64xf32> to vector<9x64xf32>
    %189 = arith.addf %186, %188 : vector<9x64xf32>
    %cst_126 = arith.constant 5.000000e-01 : f32
    %190 = vector.broadcast %cst_126 : f32 to vector<9x64xf32>
    %191 = arith.mulf %190, %189 : vector<9x64xf32>
    %cst_127 = arith.constant 0.707106769 : f32
    %192 = vector.broadcast %cst_127 : f32 to vector<9x64xf32>
    %193 = arith.mulf %189, %192 : vector<9x64xf32>
    %194 = math.erf %193 : vector<9x64xf32>
    %cst_128 = arith.constant 1.000000e+00 : f32
    %195 = vector.broadcast %cst_128 : f32 to vector<9x64xf32>
    %196 = arith.addf %195, %194 : vector<9x64xf32>
    %197 = arith.mulf %191, %196 : vector<9x64xf32>
    %c0_129 = arith.constant 0 : index
    %c0_130 = arith.constant 0 : index
    %198 = vector.load %arg9[%c0_129, %c0_130] : memref<64x32xf32, #tpu.memory_space<vmem>>, vector<64x32xf32>
    %cst_131 = arith.constant dense<0.000000e+00> : vector<9x32xf32>
    %199 = tpu.matmul %197, %198, %cst_131 {dimension_numbers = #tpu.dot_dimension_numbers<[1], [0], [0], [1], [0, 0, 1, 1], [], []>} : vector<9x64xf32>, vector<64x32xf32>, vector<9x32xf32> -> vector<9x32xf32>
    %c0_132 = arith.constant 0 : index
    %c0_133 = arith.constant 0 : index
    %200 = vector.load %arg10[%c0_132, %c0_133] : memref<1x32xf32, #tpu.memory_space<vmem>>, vector<1x32xf32>
    %201 = vector.broadcast %200 : vector<1x32xf32> to vector<9x32xf32>
    %202 = arith.addf %199, %201 : vector<9x32xf32>
    %203 = arith.addf %202, %184 : vector<9x32xf32>
    %c0_134 = arith.constant 0 : index
    %c0_135 = arith.constant 0 : index
    %204 = vector.load %arg11[%c0_134, %c0_135] : memref<1x32xf32, #tpu.memory_space<vmem>>, vector<1x32xf32>
    %c0_136 = arith.constant 0 : index
    %c0_137 = arith.constant 0 : index
    %205 = vector.load %arg12[%c0_136, %c0_137] : memref<1x32xf32, #tpu.memory_space<vmem>>, vector<1x32xf32>
    %cst_138 = arith.constant dense<0.000000e+00> : vector<9xf32>
    %206 = vector.multi_reduction <add>, %203, %cst_138 [1] : vector<9x32xf32> to vector<9xf32>
    %207 = vector.shape_cast %206 : vector<9xf32> to vector<9x1xf32>
    %cst_139 = arith.constant 3.200000e+01 : f32
    %208 = vector.broadcast %cst_139 : f32 to vector<9x1xf32>
    %209 = arith.divf %207, %208 : vector<9x1xf32>
    %210 = vector.broadcast %209 : vector<9x1xf32> to vector<9x32xf32>
    %211 = arith.subf %203, %210 : vector<9x32xf32>
    %212 = arith.mulf %211, %211 : vector<9x32xf32>
    %cst_140 = arith.constant dense<0.000000e+00> : vector<9xf32>
    %213 = vector.multi_reduction <add>, %212, %cst_140 [1] : vector<9x32xf32> to vector<9xf32>
    %214 = vector.shape_cast %213 : vector<9xf32> to vector<9x1xf32>
    %cst_141 = arith.constant 3.200000e+01 : f32
    %215 = vector.broadcast %cst_141 : f32 to vector<9x1xf32>
    %216 = arith.divf %214, %215 : vector<9x1xf32>
    %217 = vector.broadcast %209 : vector<9x1xf32> to vector<9x32xf32>
    %218 = arith.subf %203, %217 : vector<9x32xf32>
    %cst_142 = arith.constant 9.99999996E-13 : f32
    %219 = vector.broadcast %cst_142 : f32 to vector<9x1xf32>
    %220 = arith.addf %216, %219 : vector<9x1xf32>
    %221 = math.rsqrt %220 : vector<9x1xf32>
    %222 = vector.broadcast %221 : vector<9x1xf32> to vector<9x32xf32>
    %223 = arith.mulf %218, %222 : vector<9x32xf32>
    %224 = vector.broadcast %204 : vector<1x32xf32> to vector<9x32xf32>
    %225 = arith.mulf %223, %224 : vector<9x32xf32>
    %226 = vector.broadcast %205 : vector<1x32xf32> to vector<9x32xf32>
    %227 = arith.addf %225, %226 : vector<9x32xf32>
    %c0_143 = arith.constant 0 : index
    %c0_144 = arith.constant 0 : index
    %228 = vector.load %arg32[%c0_143, %c0_144] : memref<9x32xf32, #tpu.memory_space<vmem>>, vector<9x32xf32>
    tpu.vector_store %arg32[%c0_143, %c0_144], %227 {strides = array<i32>} : memref<9x32xf32, #tpu.memory_space<vmem>>, vector<9x32xf32>,
    %c1_145 = arith.constant 1 : index
    %c0_146 = arith.constant 0 : index
    %229 = vector.load %arg32[%c1_145, %c0_146] : memref<9x32xf32, #tpu.memory_space<vmem>>, vector<8x32xf32>
    %c0_147 = arith.constant 0 : index
    %c0_148 = arith.constant 0 : index
    %230 = vector.load %arg16[%c0_147, %c0_148] : memref<1x32xf32, #tpu.memory_space<vmem>>, vector<1x32xf32>
    %c0_149 = arith.constant 0 : index
    %c0_150 = arith.constant 0 : index
    %c0_151 = arith.constant 0 : index
    %231 = vector.load %arg13[%c0_149, %c0_150, %c0_151] : memref<12x32x8xf32, #tpu.memory_space<vmem>>, vector<1x32x8xf32>
    %232 = vector.shape_cast %231 : vector<1x32x8xf32> to vector<32x8xf32>
    %cst_152 = arith.constant dense<0.000000e+00> : vector<8x8xf32>
    %233 = tpu.matmul %229, %232, %cst_152 {dimension_numbers = #tpu.dot_dimension_numbers<[1], [0], [0], [1], [0, 0, 1, 1], [], []>} : vector<8x32xf32>, vector<32x8xf32>, vector<8x8xf32> -> vector<8x8xf32>
    %c0_153 = arith.constant 0 : index
    %c0_154 = arith.constant 0 : index
    %c0_155 = arith.constant 0 : index
    %234 = vector.load %arg14[%c0_153, %c0_154, %c0_155] : memref<12x1x8xf32, #tpu.memory_space<vmem>>, vector<1x1x8xf32>
    %235 = vector.shape_cast %234 : vector<1x1x8xf32> to vector<1x8xf32>
    %236 = vector.broadcast %235 : vector<1x8xf32> to vector<8x8xf32>
    %237 = arith.addf %233, %236 : vector<8x8xf32>
    %c4_156 = arith.constant 4 : index
    %c0_157 = arith.constant 0 : index
    %c0_158 = arith.constant 0 : index
    %238 = vector.load %arg13[%c4_156, %c0_157, %c0_158] : memref<12x32x8xf32, #tpu.memory_space<vmem>>, vector<1x32x8xf32>
    %239 = vector.shape_cast %238 : vector<1x32x8xf32> to vector<32x8xf32>
    %cst_159 = arith.constant dense<0.000000e+00> : vector<8x8xf32>
    %240 = tpu.matmul %229, %239, %cst_159 {dimension_numbers = #tpu.dot_dimension_numbers<[1], [0], [0], [1], [0, 0, 1, 1], [], []>} : vector<8x32xf32>, vector<32x8xf32>, vector<8x8xf32> -> vector<8x8xf32>
    %c4_160 = arith.constant 4 : index
    %c0_161 = arith.constant 0 : index
    %c0_162 = arith.constant 0 : index
    %241 = vector.load %arg14[%c4_160, %c0_161, %c0_162] : memref<12x1x8xf32, #tpu.memory_space<vmem>>, vector<1x1x8xf32>
    %242 = vector.shape_cast %241 : vector<1x1x8xf32> to vector<1x8xf32>
    %243 = vector.broadcast %242 : vector<1x8xf32> to vector<8x8xf32>
    %244 = arith.addf %240, %243 : vector<8x8xf32>
    %c8_163 = arith.constant 8 : index
    %c0_164 = arith.constant 0 : index
    %c0_165 = arith.constant 0 : index
    %245 = vector.load %arg13[%c8_163, %c0_164, %c0_165] : memref<12x32x8xf32, #tpu.memory_space<vmem>>, vector<1x32x8xf32>
    %246 = vector.shape_cast %245 : vector<1x32x8xf32> to vector<32x8xf32>
    %cst_166 = arith.constant dense<0.000000e+00> : vector<8x8xf32>
    %247 = tpu.matmul %229, %246, %cst_166 {dimension_numbers = #tpu.dot_dimension_numbers<[1], [0], [0], [1], [0, 0, 1, 1], [], []>} : vector<8x32xf32>, vector<32x8xf32>, vector<8x8xf32> -> vector<8x8xf32>
    %c8_167 = arith.constant 8 : index
    %c0_168 = arith.constant 0 : index
    %c0_169 = arith.constant 0 : index
    %248 = vector.load %arg14[%c8_167, %c0_168, %c0_169] : memref<12x1x8xf32, #tpu.memory_space<vmem>>, vector<1x1x8xf32>
    %249 = vector.shape_cast %248 : vector<1x1x8xf32> to vector<1x8xf32>
    %250 = vector.broadcast %249 : vector<1x8xf32> to vector<8x8xf32>
    %251 = arith.addf %247, %250 : vector<8x8xf32>
    %cst_170 = arith.constant dense<0.000000e+00> : vector<8x8xf32>
    %252 = tpu.matmul %237, %244, %cst_170 {dimension_numbers = #tpu.dot_dimension_numbers<[1], [1], [0], [0], [0, 0, 1, 0], [], []>} : vector<8x8xf32>, vector<8x8xf32>, vector<8x8xf32> -> vector<8x8xf32>
    %cst_171 = arith.constant 0.353553385 : f32
    %253 = vector.broadcast %cst_171 : f32 to vector<8x8xf32>
    %254 = arith.mulf %252, %253 : vector<8x8xf32>
    %cst_172 = arith.constant dense<0xFF800000> : vector<8xf32>
    %255 = vector.multi_reduction <maximumf>, %254, %cst_172 [1] : vector<8x8xf32> to vector<8xf32>
    %256 = vector.shape_cast %255 : vector<8xf32> to vector<8x1xf32>
    %257 = vector.broadcast %256 : vector<8x1xf32> to vector<8x8xf32>
    %258 = arith.subf %254, %257 : vector<8x8xf32>
    %259 = math.exp %258 : vector<8x8xf32>
    %cst_173 = arith.constant dense<0.000000e+00> : vector<8xf32>
    %260 = vector.multi_reduction <add>, %259, %cst_173 [1] : vector<8x8xf32> to vector<8xf32>
    %261 = vector.shape_cast %260 : vector<8xf32> to vector<8x1xf32>
    %262 = tpu.reciprocal %261 {approx = true} : vector<8x1xf32> -> vector<8x1xf32>
    %263 = vector.broadcast %262 : vector<8x1xf32> to vector<8x8xf32>
    %264 = arith.mulf %259, %263 : vector<8x8xf32>
    %cst_174 = arith.constant dense<0.000000e+00> : vector<8x8xf32>
    %265 = tpu.matmul %264, %251, %cst_174 {dimension_numbers = #tpu.dot_dimension_numbers<[1], [0], [0], [1], [0, 0, 1, 1], [], []>} : vector<8x8xf32>, vector<8x8xf32>, vector<8x8xf32> -> vector<8x8xf32>
    %c0_175 = arith.constant 0 : index
    %c0_176 = arith.constant 0 : index
    %c0_177 = arith.constant 0 : index
    %266 = vector.load %arg15[%c0_175, %c0_176, %c0_177] : memref<4x8x32xf32, #tpu.memory_space<vmem>>, vector<1x8x32xf32>
    %267 = vector.shape_cast %266 : vector<1x8x32xf32> to vector<8x32xf32>
    %cst_178 = arith.constant dense<0.000000e+00> : vector<8x32xf32>
    %268 = tpu.matmul %265, %267, %cst_178 {dimension_numbers = #tpu.dot_dimension_numbers<[1], [0], [0], [1], [0, 0, 1, 1], [], []>} : vector<8x8xf32>, vector<8x32xf32>, vector<8x32xf32> -> vector<8x32xf32>
    %269 = vector.broadcast %230 : vector<1x32xf32> to vector<8x32xf32>
    %270 = arith.addf %269, %268 : vector<8x32xf32>
    %c1_179 = arith.constant 1 : index
    %c0_180 = arith.constant 0 : index
    %c0_181 = arith.constant 0 : index
    %271 = vector.load %arg13[%c1_179, %c0_180, %c0_181] : memref<12x32x8xf32, #tpu.memory_space<vmem>>, vector<1x32x8xf32>
    %272 = vector.shape_cast %271 : vector<1x32x8xf32> to vector<32x8xf32>
    %cst_182 = arith.constant dense<0.000000e+00> : vector<8x8xf32>
    %273 = tpu.matmul %229, %272, %cst_182 {dimension_numbers = #tpu.dot_dimension_numbers<[1], [0], [0], [1], [0, 0, 1, 1], [], []>} : vector<8x32xf32>, vector<32x8xf32>, vector<8x8xf32> -> vector<8x8xf32>
    %c1_183 = arith.constant 1 : index
    %c0_184 = arith.constant 0 : index
    %c0_185 = arith.constant 0 : index
    %274 = vector.load %arg14[%c1_183, %c0_184, %c0_185] : memref<12x1x8xf32, #tpu.memory_space<vmem>>, vector<1x1x8xf32>
    %275 = vector.shape_cast %274 : vector<1x1x8xf32> to vector<1x8xf32>
    %276 = vector.broadcast %275 : vector<1x8xf32> to vector<8x8xf32>
    %277 = arith.addf %273, %276 : vector<8x8xf32>
    %c5_186 = arith.constant 5 : index
    %c0_187 = arith.constant 0 : index
    %c0_188 = arith.constant 0 : index
    %278 = vector.load %arg13[%c5_186, %c0_187, %c0_188] : memref<12x32x8xf32, #tpu.memory_space<vmem>>, vector<1x32x8xf32>
    %279 = vector.shape_cast %278 : vector<1x32x8xf32> to vector<32x8xf32>
    %cst_189 = arith.constant dense<0.000000e+00> : vector<8x8xf32>
    %280 = tpu.matmul %229, %279, %cst_189 {dimension_numbers = #tpu.dot_dimension_numbers<[1], [0], [0], [1], [0, 0, 1, 1], [], []>} : vector<8x32xf32>, vector<32x8xf32>, vector<8x8xf32> -> vector<8x8xf32>
    %c5_190 = arith.constant 5 : index
    %c0_191 = arith.constant 0 : index
    %c0_192 = arith.constant 0 : index
    %281 = vector.load %arg14[%c5_190, %c0_191, %c0_192] : memref<12x1x8xf32, #tpu.memory_space<vmem>>, vector<1x1x8xf32>
    %282 = vector.shape_cast %281 : vector<1x1x8xf32> to vector<1x8xf32>
    %283 = vector.broadcast %282 : vector<1x8xf32> to vector<8x8xf32>
    %284 = arith.addf %280, %283 : vector<8x8xf32>
    %c9_193 = arith.constant 9 : index
    %c0_194 = arith.constant 0 : index
    %c0_195 = arith.constant 0 : index
    %285 = vector.load %arg13[%c9_193, %c0_194, %c0_195] : memref<12x32x8xf32, #tpu.memory_space<vmem>>, vector<1x32x8xf32>
    %286 = vector.shape_cast %285 : vector<1x32x8xf32> to vector<32x8xf32>
    %cst_196 = arith.constant dense<0.000000e+00> : vector<8x8xf32>
    %287 = tpu.matmul %229, %286, %cst_196 {dimension_numbers = #tpu.dot_dimension_numbers<[1], [0], [0], [1], [0, 0, 1, 1], [], []>} : vector<8x32xf32>, vector<32x8xf32>, vector<8x8xf32> -> vector<8x8xf32>
    %c9_197 = arith.constant 9 : index
    %c0_198 = arith.constant 0 : index
    %c0_199 = arith.constant 0 : index
    %288 = vector.load %arg14[%c9_197, %c0_198, %c0_199] : memref<12x1x8xf32, #tpu.memory_space<vmem>>, vector<1x1x8xf32>
    %289 = vector.shape_cast %288 : vector<1x1x8xf32> to vector<1x8xf32>
    %290 = vector.broadcast %289 : vector<1x8xf32> to vector<8x8xf32>
    %291 = arith.addf %287, %290 : vector<8x8xf32>
    %cst_200 = arith.constant dense<0.000000e+00> : vector<8x8xf32>
    %292 = tpu.matmul %277, %284, %cst_200 {dimension_numbers = #tpu.dot_dimension_numbers<[1], [1], [0], [0], [0, 0, 1, 0], [], []>} : vector<8x8xf32>, vector<8x8xf32>, vector<8x8xf32> -> vector<8x8xf32>
    %cst_201 = arith.constant 0.353553385 : f32
    %293 = vector.broadcast %cst_201 : f32 to vector<8x8xf32>
    %294 = arith.mulf %292, %293 : vector<8x8xf32>
    %cst_202 = arith.constant dense<0xFF800000> : vector<8xf32>
    %295 = vector.multi_reduction <maximumf>, %294, %cst_202 [1] : vector<8x8xf32> to vector<8xf32>
    %296 = vector.shape_cast %295 : vector<8xf32> to vector<8x1xf32>
    %297 = vector.broadcast %296 : vector<8x1xf32> to vector<8x8xf32>
    %298 = arith.subf %294, %297 : vector<8x8xf32>
    %299 = math.exp %298 : vector<8x8xf32>
    %cst_203 = arith.constant dense<0.000000e+00> : vector<8xf32>
    %300 = vector.multi_reduction <add>, %299, %cst_203 [1] : vector<8x8xf32> to vector<8xf32>
    %301 = vector.shape_cast %300 : vector<8xf32> to vector<8x1xf32>
    %302 = tpu.reciprocal %301 {approx = true} : vector<8x1xf32> -> vector<8x1xf32>
    %303 = vector.broadcast %302 : vector<8x1xf32> to vector<8x8xf32>
    %304 = arith.mulf %299, %303 : vector<8x8xf32>
    %cst_204 = arith.constant dense<0.000000e+00> : vector<8x8xf32>
    %305 = tpu.matmul %304, %291, %cst_204 {dimension_numbers = #tpu.dot_dimension_numbers<[1], [0], [0], [1], [0, 0, 1, 1], [], []>} : vector<8x8xf32>, vector<8x8xf32>, vector<8x8xf32> -> vector<8x8xf32>
    %c1_205 = arith.constant 1 : index
    %c0_206 = arith.constant 0 : index
    %c0_207 = arith.constant 0 : index
    %306 = vector.load %arg15[%c1_205, %c0_206, %c0_207] : memref<4x8x32xf32, #tpu.memory_space<vmem>>, vector<1x8x32xf32>
    %307 = vector.shape_cast %306 : vector<1x8x32xf32> to vector<8x32xf32>
    %cst_208 = arith.constant dense<0.000000e+00> : vector<8x32xf32>
    %308 = tpu.matmul %305, %307, %cst_208 {dimension_numbers = #tpu.dot_dimension_numbers<[1], [0], [0], [1], [0, 0, 1, 1], [], []>} : vector<8x8xf32>, vector<8x32xf32>, vector<8x32xf32> -> vector<8x32xf32>
    %309 = arith.addf %270, %308 : vector<8x32xf32>
    %c2_209 = arith.constant 2 : index
    %c0_210 = arith.constant 0 : index
    %c0_211 = arith.constant 0 : index
    %310 = vector.load %arg13[%c2_209, %c0_210, %c0_211] : memref<12x32x8xf32, #tpu.memory_space<vmem>>, vector<1x32x8xf32>
    %311 = vector.shape_cast %310 : vector<1x32x8xf32> to vector<32x8xf32>
    %cst_212 = arith.constant dense<0.000000e+00> : vector<8x8xf32>
    %312 = tpu.matmul %229, %311, %cst_212 {dimension_numbers = #tpu.dot_dimension_numbers<[1], [0], [0], [1], [0, 0, 1, 1], [], []>} : vector<8x32xf32>, vector<32x8xf32>, vector<8x8xf32> -> vector<8x8xf32>
    %c2_213 = arith.constant 2 : index
    %c0_214 = arith.constant 0 : index
    %c0_215 = arith.constant 0 : index
    %313 = vector.load %arg14[%c2_213, %c0_214, %c0_215] : memref<12x1x8xf32, #tpu.memory_space<vmem>>, vector<1x1x8xf32>
    %314 = vector.shape_cast %313 : vector<1x1x8xf32> to vector<1x8xf32>
    %315 = vector.broadcast %314 : vector<1x8xf32> to vector<8x8xf32>
    %316 = arith.addf %312, %315 : vector<8x8xf32>
    %c6_216 = arith.constant 6 : index
    %c0_217 = arith.constant 0 : index
    %c0_218 = arith.constant 0 : index
    %317 = vector.load %arg13[%c6_216, %c0_217, %c0_218] : memref<12x32x8xf32, #tpu.memory_space<vmem>>, vector<1x32x8xf32>
    %318 = vector.shape_cast %317 : vector<1x32x8xf32> to vector<32x8xf32>
    %cst_219 = arith.constant dense<0.000000e+00> : vector<8x8xf32>
    %319 = tpu.matmul %229, %318, %cst_219 {dimension_numbers = #tpu.dot_dimension_numbers<[1], [0], [0], [1], [0, 0, 1, 1], [], []>} : vector<8x32xf32>, vector<32x8xf32>, vector<8x8xf32> -> vector<8x8xf32>
    %c6_220 = arith.constant 6 : index
    %c0_221 = arith.constant 0 : index
    %c0_222 = arith.constant 0 : index
    %320 = vector.load %arg14[%c6_220, %c0_221, %c0_222] : memref<12x1x8xf32, #tpu.memory_space<vmem>>, vector<1x1x8xf32>
    %321 = vector.shape_cast %320 : vector<1x1x8xf32> to vector<1x8xf32>
    %322 = vector.broadcast %321 : vector<1x8xf32> to vector<8x8xf32>
    %323 = arith.addf %319, %322 : vector<8x8xf32>
    %c10_223 = arith.constant 10 : index
    %c0_224 = arith.constant 0 : index
    %c0_225 = arith.constant 0 : index
    %324 = vector.load %arg13[%c10_223, %c0_224, %c0_225] : memref<12x32x8xf32, #tpu.memory_space<vmem>>, vector<1x32x8xf32>
    %325 = vector.shape_cast %324 : vector<1x32x8xf32> to vector<32x8xf32>
    %cst_226 = arith.constant dense<0.000000e+00> : vector<8x8xf32>
    %326 = tpu.matmul %229, %325, %cst_226 {dimension_numbers = #tpu.dot_dimension_numbers<[1], [0], [0], [1], [0, 0, 1, 1], [], []>} : vector<8x32xf32>, vector<32x8xf32>, vector<8x8xf32> -> vector<8x8xf32>
    %c10_227 = arith.constant 10 : index
    %c0_228 = arith.constant 0 : index
    %c0_229 = arith.constant 0 : index
    %327 = vector.load %arg14[%c10_227, %c0_228, %c0_229] : memref<12x1x8xf32, #tpu.memory_space<vmem>>, vector<1x1x8xf32>
    %328 = vector.shape_cast %327 : vector<1x1x8xf32> to vector<1x8xf32>
    %329 = vector.broadcast %328 : vector<1x8xf32> to vector<8x8xf32>
    %330 = arith.addf %326, %329 : vector<8x8xf32>
    %cst_230 = arith.constant dense<0.000000e+00> : vector<8x8xf32>
    %331 = tpu.matmul %316, %323, %cst_230 {dimension_numbers = #tpu.dot_dimension_numbers<[1], [1], [0], [0], [0, 0, 1, 0], [], []>} : vector<8x8xf32>, vector<8x8xf32>, vector<8x8xf32> -> vector<8x8xf32>
    %cst_231 = arith.constant 0.353553385 : f32
    %332 = vector.broadcast %cst_231 : f32 to vector<8x8xf32>
    %333 = arith.mulf %331, %332 : vector<8x8xf32>
    %cst_232 = arith.constant dense<0xFF800000> : vector<8xf32>
    %334 = vector.multi_reduction <maximumf>, %333, %cst_232 [1] : vector<8x8xf32> to vector<8xf32>
    %335 = vector.shape_cast %334 : vector<8xf32> to vector<8x1xf32>
    %336 = vector.broadcast %335 : vector<8x1xf32> to vector<8x8xf32>
    %337 = arith.subf %333, %336 : vector<8x8xf32>
    %338 = math.exp %337 : vector<8x8xf32>
    %cst_233 = arith.constant dense<0.000000e+00> : vector<8xf32>
    %339 = vector.multi_reduction <add>, %338, %cst_233 [1] : vector<8x8xf32> to vector<8xf32>
    %340 = vector.shape_cast %339 : vector<8xf32> to vector<8x1xf32>
    %341 = tpu.reciprocal %340 {approx = true} : vector<8x1xf32> -> vector<8x1xf32>
    %342 = vector.broadcast %341 : vector<8x1xf32> to vector<8x8xf32>
    %343 = arith.mulf %338, %342 : vector<8x8xf32>
    %cst_234 = arith.constant dense<0.000000e+00> : vector<8x8xf32>
    %344 = tpu.matmul %343, %330, %cst_234 {dimension_numbers = #tpu.dot_dimension_numbers<[1], [0], [0], [1], [0, 0, 1, 1], [], []>} : vector<8x8xf32>, vector<8x8xf32>, vector<8x8xf32> -> vector<8x8xf32>
    %c2_235 = arith.constant 2 : index
    %c0_236 = arith.constant 0 : index
    %c0_237 = arith.constant 0 : index
    %345 = vector.load %arg15[%c2_235, %c0_236, %c0_237] : memref<4x8x32xf32, #tpu.memory_space<vmem>>, vector<1x8x32xf32>
    %346 = vector.shape_cast %345 : vector<1x8x32xf32> to vector<8x32xf32>
    %cst_238 = arith.constant dense<0.000000e+00> : vector<8x32xf32>
    %347 = tpu.matmul %344, %346, %cst_238 {dimension_numbers = #tpu.dot_dimension_numbers<[1], [0], [0], [1], [0, 0, 1, 1], [], []>} : vector<8x8xf32>, vector<8x32xf32>, vector<8x32xf32> -> vector<8x32xf32>
    %348 = arith.addf %309, %347 : vector<8x32xf32>
    %c3_239 = arith.constant 3 : index
    %c0_240 = arith.constant 0 : index
    %c0_241 = arith.constant 0 : index
    %349 = vector.load %arg13[%c3_239, %c0_240, %c0_241] : memref<12x32x8xf32, #tpu.memory_space<vmem>>, vector<1x32x8xf32>
    %350 = vector.shape_cast %349 : vector<1x32x8xf32> to vector<32x8xf32>
    %cst_242 = arith.constant dense<0.000000e+00> : vector<8x8xf32>
    %351 = tpu.matmul %229, %350, %cst_242 {dimension_numbers = #tpu.dot_dimension_numbers<[1], [0], [0], [1], [0, 0, 1, 1], [], []>} : vector<8x32xf32>, vector<32x8xf32>, vector<8x8xf32> -> vector<8x8xf32>
    %c3_243 = arith.constant 3 : index
    %c0_244 = arith.constant 0 : index
    %c0_245 = arith.constant 0 : index
    %352 = vector.load %arg14[%c3_243, %c0_244, %c0_245] : memref<12x1x8xf32, #tpu.memory_space<vmem>>, vector<1x1x8xf32>
    %353 = vector.shape_cast %352 : vector<1x1x8xf32> to vector<1x8xf32>
    %354 = vector.broadcast %353 : vector<1x8xf32> to vector<8x8xf32>
    %355 = arith.addf %351, %354 : vector<8x8xf32>
    %c7_246 = arith.constant 7 : index
    %c0_247 = arith.constant 0 : index
    %c0_248 = arith.constant 0 : index
    %356 = vector.load %arg13[%c7_246, %c0_247, %c0_248] : memref<12x32x8xf32, #tpu.memory_space<vmem>>, vector<1x32x8xf32>
    %357 = vector.shape_cast %356 : vector<1x32x8xf32> to vector<32x8xf32>
    %cst_249 = arith.constant dense<0.000000e+00> : vector<8x8xf32>
    %358 = tpu.matmul %229, %357, %cst_249 {dimension_numbers = #tpu.dot_dimension_numbers<[1], [0], [0], [1], [0, 0, 1, 1], [], []>} : vector<8x32xf32>, vector<32x8xf32>, vector<8x8xf32> -> vector<8x8xf32>
    %c7_250 = arith.constant 7 : index
    %c0_251 = arith.constant 0 : index
    %c0_252 = arith.constant 0 : index
    %359 = vector.load %arg14[%c7_250, %c0_251, %c0_252] : memref<12x1x8xf32, #tpu.memory_space<vmem>>, vector<1x1x8xf32>
    %360 = vector.shape_cast %359 : vector<1x1x8xf32> to vector<1x8xf32>
    %361 = vector.broadcast %360 : vector<1x8xf32> to vector<8x8xf32>
    %362 = arith.addf %358, %361 : vector<8x8xf32>
    %c11_253 = arith.constant 11 : index
    %c0_254 = arith.constant 0 : index
    %c0_255 = arith.constant 0 : index
    %363 = vector.load %arg13[%c11_253, %c0_254, %c0_255] : memref<12x32x8xf32, #tpu.memory_space<vmem>>, vector<1x32x8xf32>
    %364 = vector.shape_cast %363 : vector<1x32x8xf32> to vector<32x8xf32>
    %cst_256 = arith.constant dense<0.000000e+00> : vector<8x8xf32>
    %365 = tpu.matmul %229, %364, %cst_256 {dimension_numbers = #tpu.dot_dimension_numbers<[1], [0], [0], [1], [0, 0, 1, 1], [], []>} : vector<8x32xf32>, vector<32x8xf32>, vector<8x8xf32> -> vector<8x8xf32>
    %c11_257 = arith.constant 11 : index
    %c0_258 = arith.constant 0 : index
    %c0_259 = arith.constant 0 : index
    %366 = vector.load %arg14[%c11_257, %c0_258, %c0_259] : memref<12x1x8xf32, #tpu.memory_space<vmem>>, vector<1x1x8xf32>
    %367 = vector.shape_cast %366 : vector<1x1x8xf32> to vector<1x8xf32>
    %368 = vector.broadcast %367 : vector<1x8xf32> to vector<8x8xf32>
    %369 = arith.addf %365, %368 : vector<8x8xf32>
    %cst_260 = arith.constant dense<0.000000e+00> : vector<8x8xf32>
    %370 = tpu.matmul %355, %362, %cst_260 {dimension_numbers = #tpu.dot_dimension_numbers<[1], [1], [0], [0], [0, 0, 1, 0], [], []>} : vector<8x8xf32>, vector<8x8xf32>, vector<8x8xf32> -> vector<8x8xf32>
    %cst_261 = arith.constant 0.353553385 : f32
    %371 = vector.broadcast %cst_261 : f32 to vector<8x8xf32>
    %372 = arith.mulf %370, %371 : vector<8x8xf32>
    %cst_262 = arith.constant dense<0xFF800000> : vector<8xf32>
    %373 = vector.multi_reduction <maximumf>, %372, %cst_262 [1] : vector<8x8xf32> to vector<8xf32>
    %374 = vector.shape_cast %373 : vector<8xf32> to vector<8x1xf32>
    %375 = vector.broadcast %374 : vector<8x1xf32> to vector<8x8xf32>
    %376 = arith.subf %372, %375 : vector<8x8xf32>
    %377 = math.exp %376 : vector<8x8xf32>
    %cst_263 = arith.constant dense<0.000000e+00> : vector<8xf32>
    %378 = vector.multi_reduction <add>, %377, %cst_263 [1] : vector<8x8xf32> to vector<8xf32>
    %379 = vector.shape_cast %378 : vector<8xf32> to vector<8x1xf32>
    %380 = tpu.reciprocal %379 {approx = true} : vector<8x1xf32> -> vector<8x1xf32>
    %381 = vector.broadcast %380 : vector<8x1xf32> to vector<8x8xf32>
    %382 = arith.mulf %377, %381 : vector<8x8xf32>
    %cst_264 = arith.constant dense<0.000000e+00> : vector<8x8xf32>
    %383 = tpu.matmul %382, %369, %cst_264 {dimension_numbers = #tpu.dot_dimension_numbers<[1], [0], [0], [1], [0, 0, 1, 1], [], []>} : vector<8x8xf32>, vector<8x8xf32>, vector<8x8xf32> -> vector<8x8xf32>
    %c3_265 = arith.constant 3 : index
    %c0_266 = arith.constant 0 : index
    %c0_267 = arith.constant 0 : index
    %384 = vector.load %arg15[%c3_265, %c0_266, %c0_267] : memref<4x8x32xf32, #tpu.memory_space<vmem>>, vector<1x8x32xf32>
    %385 = vector.shape_cast %384 : vector<1x8x32xf32> to vector<8x32xf32>
    %cst_268 = arith.constant dense<0.000000e+00> : vector<8x32xf32>
    %386 = tpu.matmul %383, %385, %cst_268 {dimension_numbers = #tpu.dot_dimension_numbers<[1], [0], [0], [1], [0, 0, 1, 1], [], []>} : vector<8x8xf32>, vector<8x32xf32>, vector<8x32xf32> -> vector<8x32xf32>
    %387 = arith.addf %348, %386 : vector<8x32xf32>
    %388 = arith.addf %387, %229 : vector<8x32xf32>
    %c0_269 = arith.constant 0 : index
    %c0_270 = arith.constant 0 : index
    %389 = vector.load %arg17[%c0_269, %c0_270] : memref<1x32xf32, #tpu.memory_space<vmem>>, vector<1x32xf32>
    %c0_271 = arith.constant 0 : index
    %c0_272 = arith.constant 0 : index
    %390 = vector.load %arg18[%c0_271, %c0_272] : memref<1x32xf32, #tpu.memory_space<vmem>>, vector<1x32xf32>
    %cst_273 = arith.constant dense<0.000000e+00> : vector<8xf32>
    %391 = vector.multi_reduction <add>, %388, %cst_273 [1] : vector<8x32xf32> to vector<8xf32>
    %392 = vector.shape_cast %391 : vector<8xf32> to vector<8x1xf32>
    %cst_274 = arith.constant 3.200000e+01 : f32
    %393 = vector.broadcast %cst_274 : f32 to vector<8x1xf32>
    %394 = arith.divf %392, %393 : vector<8x1xf32>
    %395 = vector.broadcast %394 : vector<8x1xf32> to vector<8x32xf32>
    %396 = arith.subf %388, %395 : vector<8x32xf32>
    %397 = arith.mulf %396, %396 : vector<8x32xf32>
    %cst_275 = arith.constant dense<0.000000e+00> : vector<8xf32>
    %398 = vector.multi_reduction <add>, %397, %cst_275 [1] : vector<8x32xf32> to vector<8xf32>
    %399 = vector.shape_cast %398 : vector<8xf32> to vector<8x1xf32>
    %cst_276 = arith.constant 3.200000e+01 : f32
    %400 = vector.broadcast %cst_276 : f32 to vector<8x1xf32>
    %401 = arith.divf %399, %400 : vector<8x1xf32>
    %402 = vector.broadcast %394 : vector<8x1xf32> to vector<8x32xf32>
    %403 = arith.subf %388, %402 : vector<8x32xf32>
    %cst_277 = arith.constant 9.99999996E-13 : f32
    %404 = vector.broadcast %cst_277 : f32 to vector<8x1xf32>
    %405 = arith.addf %401, %404 : vector<8x1xf32>
    %406 = math.rsqrt %405 : vector<8x1xf32>
    %407 = vector.broadcast %406 : vector<8x1xf32> to vector<8x32xf32>
    %408 = arith.mulf %403, %407 : vector<8x32xf32>
    %409 = vector.broadcast %389 : vector<1x32xf32> to vector<8x32xf32>
    %410 = arith.mulf %408, %409 : vector<8x32xf32>
    %411 = vector.broadcast %390 : vector<1x32xf32> to vector<8x32xf32>
    %412 = arith.addf %410, %411 : vector<8x32xf32>
    %c0_278 = arith.constant 0 : index
    %c0_279 = arith.constant 0 : index
    %413 = vector.load %arg19[%c0_278, %c0_279] : memref<32x64xf32, #tpu.memory_space<vmem>>, vector<32x64xf32>
    %cst_280 = arith.constant dense<0.000000e+00> : vector<8x64xf32>
    %414 = tpu.matmul %412, %413, %cst_280 {dimension_numbers = #tpu.dot_dimension_numbers<[1], [0], [0], [1], [0, 0, 1, 1], [], []>} : vector<8x32xf32>, vector<32x64xf32>, vector<8x64xf32> -> vector<8x64xf32>
    %c0_281 = arith.constant 0 : index
    %c0_282 = arith.constant 0 : index
    %415 = vector.load %arg20[%c0_281, %c0_282] : memref<1x64xf32, #tpu.memory_space<vmem>>, vector<1x64xf32>
    %416 = vector.broadcast %415 : vector<1x64xf32> to vector<8x64xf32>
    %417 = arith.addf %414, %416 : vector<8x64xf32>
    %cst_283 = arith.constant 5.000000e-01 : f32
    %418 = vector.broadcast %cst_283 : f32 to vector<8x64xf32>
    %419 = arith.mulf %418, %417 : vector<8x64xf32>
    %cst_284 = arith.constant 0.707106769 : f32
    %420 = vector.broadcast %cst_284 : f32 to vector<8x64xf32>
    %421 = arith.mulf %417, %420 : vector<8x64xf32>
    %422 = math.erf %421 : vector<8x64xf32>
    %cst_285 = arith.constant 1.000000e+00 : f32
    %423 = vector.broadcast %cst_285 : f32 to vector<8x64xf32>
    %424 = arith.addf %423, %422 : vector<8x64xf32>
    %425 = arith.mulf %419, %424 : vector<8x64xf32>
    %c0_286 = arith.constant 0 : index
    %c0_287 = arith.constant 0 : index
    %426 = vector.load %arg21[%c0_286, %c0_287] : memref<64x32xf32, #tpu.memory_space<vmem>>, vector<64x32xf32>
    %cst_288 = arith.constant dense<0.000000e+00> : vector<8x32xf32>
    %427 = tpu.matmul %425, %426, %cst_288 {dimension_numbers = #tpu.dot_dimension_numbers<[1], [0], [0], [1], [0, 0, 1, 1], [], []>} : vector<8x64xf32>, vector<64x32xf32>, vector<8x32xf32> -> vector<8x32xf32>
    %c0_289 = arith.constant 0 : index
    %c0_290 = arith.constant 0 : index
    %428 = vector.load %arg22[%c0_289, %c0_290] : memref<1x32xf32, #tpu.memory_space<vmem>>, vector<1x32xf32>
    %429 = vector.broadcast %428 : vector<1x32xf32> to vector<8x32xf32>
    %430 = arith.addf %427, %429 : vector<8x32xf32>
    %431 = arith.addf %430, %412 : vector<8x32xf32>
    %c0_291 = arith.constant 0 : index
    %c0_292 = arith.constant 0 : index
    %432 = vector.load %arg23[%c0_291, %c0_292] : memref<1x32xf32, #tpu.memory_space<vmem>>, vector<1x32xf32>
    %c0_293 = arith.constant 0 : index
    %c0_294 = arith.constant 0 : index
    %433 = vector.load %arg24[%c0_293, %c0_294] : memref<1x32xf32, #tpu.memory_space<vmem>>, vector<1x32xf32>
    %cst_295 = arith.constant dense<0.000000e+00> : vector<8xf32>
    %434 = vector.multi_reduction <add>, %431, %cst_295 [1] : vector<8x32xf32> to vector<8xf32>
    %435 = vector.shape_cast %434 : vector<8xf32> to vector<8x1xf32>
    %cst_296 = arith.constant 3.200000e+01 : f32
    %436 = vector.broadcast %cst_296 : f32 to vector<8x1xf32>
    %437 = arith.divf %435, %436 : vector<8x1xf32>
    %438 = vector.broadcast %437 : vector<8x1xf32> to vector<8x32xf32>
    %439 = arith.subf %431, %438 : vector<8x32xf32>
    %440 = arith.mulf %439, %439 : vector<8x32xf32>
    %cst_297 = arith.constant dense<0.000000e+00> : vector<8xf32>
    %441 = vector.multi_reduction <add>, %440, %cst_297 [1] : vector<8x32xf32> to vector<8xf32>
    %442 = vector.shape_cast %441 : vector<8xf32> to vector<8x1xf32>
    %cst_298 = arith.constant 3.200000e+01 : f32
    %443 = vector.broadcast %cst_298 : f32 to vector<8x1xf32>
    %444 = arith.divf %442, %443 : vector<8x1xf32>
    %445 = vector.broadcast %437 : vector<8x1xf32> to vector<8x32xf32>
    %446 = arith.subf %431, %445 : vector<8x32xf32>
    %cst_299 = arith.constant 9.99999996E-13 : f32
    %447 = vector.broadcast %cst_299 : f32 to vector<8x1xf32>
    %448 = arith.addf %444, %447 : vector<8x1xf32>
    %449 = math.rsqrt %448 : vector<8x1xf32>
    %450 = vector.broadcast %449 : vector<8x1xf32> to vector<8x32xf32>
    %451 = arith.mulf %446, %450 : vector<8x32xf32>
    %452 = vector.broadcast %432 : vector<1x32xf32> to vector<8x32xf32>
    %453 = arith.mulf %451, %452 : vector<8x32xf32>
    %454 = vector.broadcast %433 : vector<1x32xf32> to vector<8x32xf32>
    %455 = arith.addf %453, %454 : vector<8x32xf32>
    %c0_300 = arith.constant 0 : index
    %c0_301 = arith.constant 0 : index
    %456 = vector.load %arg25[%c0_300, %c0_301] : memref<32x32xf32, #tpu.memory_space<vmem>>, vector<32x32xf32>
    %cst_302 = arith.constant dense<0.000000e+00> : vector<8x32xf32>
    %457 = tpu.matmul %455, %456, %cst_302 {dimension_numbers = #tpu.dot_dimension_numbers<[1], [0], [0], [1], [0, 0, 1, 1], [], []>} : vector<8x32xf32>, vector<32x32xf32>, vector<8x32xf32> -> vector<8x32xf32>
    %c0_303 = arith.constant 0 : index
    %c0_304 = arith.constant 0 : index
    %458 = vector.load %arg26[%c0_303, %c0_304] : memref<1x32xf32, #tpu.memory_space<vmem>>, vector<1x32xf32>
    %459 = vector.broadcast %458 : vector<1x32xf32> to vector<8x32xf32>
    %460 = arith.addf %457, %459 : vector<8x32xf32>
    %cst_305 = arith.constant 5.000000e-01 : f32
    %461 = vector.broadcast %cst_305 : f32 to vector<8x32xf32>
    %462 = arith.mulf %461, %460 : vector<8x32xf32>
    %cst_306 = arith.constant 0.707106769 : f32
    %463 = vector.broadcast %cst_306 : f32 to vector<8x32xf32>
    %464 = arith.mulf %460, %463 : vector<8x32xf32>
    %465 = math.erf %464 : vector<8x32xf32>
    %cst_307 = arith.constant 1.000000e+00 : f32
    %466 = vector.broadcast %cst_307 : f32 to vector<8x32xf32>
    %467 = arith.addf %466, %465 : vector<8x32xf32>
    %468 = arith.mulf %462, %467 : vector<8x32xf32>
    %c0_308 = arith.constant 0 : index
    %c0_309 = arith.constant 0 : index
    %469 = vector.load %arg27[%c0_308, %c0_309] : memref<1x32xf32, #tpu.memory_space<vmem>>, vector<1x32xf32>
    %c0_310 = arith.constant 0 : index
    %c0_311 = arith.constant 0 : index
    %470 = vector.load %arg28[%c0_310, %c0_311] : memref<1x32xf32, #tpu.memory_space<vmem>>, vector<1x32xf32>
    %cst_312 = arith.constant dense<0.000000e+00> : vector<8xf32>
    %471 = vector.multi_reduction <add>, %468, %cst_312 [1] : vector<8x32xf32> to vector<8xf32>
    %472 = vector.shape_cast %471 : vector<8xf32> to vector<8x1xf32>
    %cst_313 = arith.constant 3.200000e+01 : f32
    %473 = vector.broadcast %cst_313 : f32 to vector<8x1xf32>
    %474 = arith.divf %472, %473 : vector<8x1xf32>
    %475 = vector.broadcast %474 : vector<8x1xf32> to vector<8x32xf32>
    %476 = arith.subf %468, %475 : vector<8x32xf32>
    %477 = arith.mulf %476, %476 : vector<8x32xf32>
    %cst_314 = arith.constant dense<0.000000e+00> : vector<8xf32>
    %478 = vector.multi_reduction <add>, %477, %cst_314 [1] : vector<8x32xf32> to vector<8xf32>
    %479 = vector.shape_cast %478 : vector<8xf32> to vector<8x1xf32>
    %cst_315 = arith.constant 3.200000e+01 : f32
    %480 = vector.broadcast %cst_315 : f32 to vector<8x1xf32>
    %481 = arith.divf %479, %480 : vector<8x1xf32>
    %482 = vector.broadcast %474 : vector<8x1xf32> to vector<8x32xf32>
    %483 = arith.subf %468, %482 : vector<8x32xf32>
    %cst_316 = arith.constant 9.99999996E-13 : f32
    %484 = vector.broadcast %cst_316 : f32 to vector<8x1xf32>
    %485 = arith.addf %481, %484 : vector<8x1xf32>
    %486 = math.rsqrt %485 : vector<8x1xf32>
    %487 = vector.broadcast %486 : vector<8x1xf32> to vector<8x32xf32>
    %488 = arith.mulf %483, %487 : vector<8x32xf32>
    %489 = vector.broadcast %469 : vector<1x32xf32> to vector<8x32xf32>
    %490 = arith.mulf %488, %489 : vector<8x32xf32>
    %491 = vector.broadcast %470 : vector<1x32xf32> to vector<8x32xf32>
    %492 = arith.addf %490, %491 : vector<8x32xf32>
    %c0_317 = arith.constant 0 : index
    %c0_318 = arith.constant 0 : index
    %493 = vector.load %arg29[%c0_317, %c0_318] : memref<32x96xf32, #tpu.memory_space<vmem>>, vector<32x96xf32>
    %cst_319 = arith.constant dense<0.000000e+00> : vector<8x96xf32>
    %494 = tpu.matmul %492, %493, %cst_319 {dimension_numbers = #tpu.dot_dimension_numbers<[1], [0], [0], [1], [0, 0, 1, 1], [], []>} : vector<8x32xf32>, vector<32x96xf32>, vector<8x96xf32> -> vector<8x96xf32>
    %c0_320 = arith.constant 0 : index
    %c0_321 = arith.constant 0 : index
    %495 = vector.load %arg30[%c0_320, %c0_321] : memref<1x96xf32, #tpu.memory_space<vmem>>, vector<1x96xf32>
    %496 = vector.broadcast %495 : vector<1x96xf32> to vector<8x96xf32>
    %497 = arith.addf %494, %496 : vector<8x96xf32>
    %c0_322 = arith.constant 0 : index
    %c0_323 = arith.constant 0 : index
    %c0_324 = arith.constant 0 : index
    %498 = vector.load %arg31[%c0_322, %c0_323, %c0_324] : memref<2x8x96xf32, #tpu.memory_space<vmem>>, vector<1x8x96xf32>
    %499 = vector.shape_cast %498 : vector<1x8x96xf32> to vector<8x96xf32>
    %500 = vector.shape_cast %497 : vector<8x96xf32> to vector<1x8x96xf32>
    tpu.vector_store %arg31[%c0_322, %c0_323, %c0_324], %500 {strides = array<i32>} : memref<2x8x96xf32, #tpu.memory_space<vmem>>, vector<1x8x96xf32>,
    %c1_325 = arith.constant 1 : index
    %c0_326 = arith.constant 0 : index
    %c0_327 = arith.constant 0 : index
    %501 = vector.load %arg0[%c1_325, %c0_326, %c0_327] : memref<2x9x32xf32, #tpu.memory_space<vmem>>, vector<1x9x32xf32>
    %502 = vector.shape_cast %501 : vector<1x9x32xf32> to vector<9x32xf32>
    %c0_328 = arith.constant 0 : index
    %c0_329 = arith.constant 0 : index
    %503 = vector.load %arg4[%c0_328, %c0_329] : memref<1x32xf32, #tpu.memory_space<vmem>>, vector<1x32xf32>
    %c0_330 = arith.constant 0 : index
    %c0_331 = arith.constant 0 : index
    %c0_332 = arith.constant 0 : index
    %504 = vector.load %arg1[%c0_330, %c0_331, %c0_332] : memref<12x32x8xf32, #tpu.memory_space<vmem>>, vector<1x32x8xf32>
    %505 = vector.shape_cast %504 : vector<1x32x8xf32> to vector<32x8xf32>
    %cst_333 = arith.constant dense<0.000000e+00> : vector<9x8xf32>
    %506 = tpu.matmul %502, %505, %cst_333 {dimension_numbers = #tpu.dot_dimension_numbers<[1], [0], [0], [1], [0, 0, 1, 1], [], []>} : vector<9x32xf32>, vector<32x8xf32>, vector<9x8xf32> -> vector<9x8xf32>
    %c0_334 = arith.constant 0 : index
    %c0_335 = arith.constant 0 : index
    %c0_336 = arith.constant 0 : index
    %507 = vector.load %arg2[%c0_334, %c0_335, %c0_336] : memref<12x1x8xf32, #tpu.memory_space<vmem>>, vector<1x1x8xf32>
    %508 = vector.shape_cast %507 : vector<1x1x8xf32> to vector<1x8xf32>
    %509 = vector.broadcast %508 : vector<1x8xf32> to vector<9x8xf32>
    %510 = arith.addf %506, %509 : vector<9x8xf32>
    %c4_337 = arith.constant 4 : index
    %c0_338 = arith.constant 0 : index
    %c0_339 = arith.constant 0 : index
    %511 = vector.load %arg1[%c4_337, %c0_338, %c0_339] : memref<12x32x8xf32, #tpu.memory_space<vmem>>, vector<1x32x8xf32>
    %512 = vector.shape_cast %511 : vector<1x32x8xf32> to vector<32x8xf32>
    %cst_340 = arith.constant dense<0.000000e+00> : vector<9x8xf32>
    %513 = tpu.matmul %502, %512, %cst_340 {dimension_numbers = #tpu.dot_dimension_numbers<[1], [0], [0], [1], [0, 0, 1, 1], [], []>} : vector<9x32xf32>, vector<32x8xf32>, vector<9x8xf32> -> vector<9x8xf32>
    %c4_341 = arith.constant 4 : index
    %c0_342 = arith.constant 0 : index
    %c0_343 = arith.constant 0 : index
    %514 = vector.load %arg2[%c4_341, %c0_342, %c0_343] : memref<12x1x8xf32, #tpu.memory_space<vmem>>, vector<1x1x8xf32>
    %515 = vector.shape_cast %514 : vector<1x1x8xf32> to vector<1x8xf32>
    %516 = vector.broadcast %515 : vector<1x8xf32> to vector<9x8xf32>
    %517 = arith.addf %513, %516 : vector<9x8xf32>
    %c8_344 = arith.constant 8 : index
    %c0_345 = arith.constant 0 : index
    %c0_346 = arith.constant 0 : index
    %518 = vector.load %arg1[%c8_344, %c0_345, %c0_346] : memref<12x32x8xf32, #tpu.memory_space<vmem>>, vector<1x32x8xf32>
    %519 = vector.shape_cast %518 : vector<1x32x8xf32> to vector<32x8xf32>
    %cst_347 = arith.constant dense<0.000000e+00> : vector<9x8xf32>
    %520 = tpu.matmul %502, %519, %cst_347 {dimension_numbers = #tpu.dot_dimension_numbers<[1], [0], [0], [1], [0, 0, 1, 1], [], []>} : vector<9x32xf32>, vector<32x8xf32>, vector<9x8xf32> -> vector<9x8xf32>
    %c8_348 = arith.constant 8 : index
    %c0_349 = arith.constant 0 : index
    %c0_350 = arith.constant 0 : index
    %521 = vector.load %arg2[%c8_348, %c0_349, %c0_350] : memref<12x1x8xf32, #tpu.memory_space<vmem>>, vector<1x1x8xf32>
    %522 = vector.shape_cast %521 : vector<1x1x8xf32> to vector<1x8xf32>
    %523 = vector.broadcast %522 : vector<1x8xf32> to vector<9x8xf32>
    %524 = arith.addf %520, %523 : vector<9x8xf32>
    %cst_351 = arith.constant dense<0.000000e+00> : vector<9x9xf32>
    %525 = tpu.matmul %510, %517, %cst_351 {dimension_numbers = #tpu.dot_dimension_numbers<[1], [1], [0], [0], [0, 0, 1, 0], [], []>} : vector<9x8xf32>, vector<9x8xf32>, vector<9x9xf32> -> vector<9x9xf32>
    %cst_352 = arith.constant 0.353553385 : f32
    %526 = vector.broadcast %cst_352 : f32 to vector<9x9xf32>
    %527 = arith.mulf %525, %526 : vector<9x9xf32>
    %cst_353 = arith.constant dense<0xFF800000> : vector<9xf32>
    %528 = vector.multi_reduction <maximumf>, %527, %cst_353 [1] : vector<9x9xf32> to vector<9xf32>
    %529 = vector.shape_cast %528 : vector<9xf32> to vector<9x1xf32>
    %530 = vector.broadcast %529 : vector<9x1xf32> to vector<9x9xf32>
    %531 = arith.subf %527, %530 : vector<9x9xf32>
    %532 = math.exp %531 : vector<9x9xf32>
    %cst_354 = arith.constant dense<0.000000e+00> : vector<9xf32>
    %533 = vector.multi_reduction <add>, %532, %cst_354 [1] : vector<9x9xf32> to vector<9xf32>
    %534 = vector.shape_cast %533 : vector<9xf32> to vector<9x1xf32>
    %535 = tpu.reciprocal %534 {approx = true} : vector<9x1xf32> -> vector<9x1xf32>
    %536 = vector.broadcast %535 : vector<9x1xf32> to vector<9x9xf32>
    %537 = arith.mulf %532, %536 : vector<9x9xf32>
    %cst_355 = arith.constant dense<0.000000e+00> : vector<9x8xf32>
    %538 = tpu.matmul %537, %524, %cst_355 {dimension_numbers = #tpu.dot_dimension_numbers<[1], [0], [0], [1], [0, 0, 1, 1], [], []>} : vector<9x9xf32>, vector<9x8xf32>, vector<9x8xf32> -> vector<9x8xf32>
    %c0_356 = arith.constant 0 : index
    %c0_357 = arith.constant 0 : index
    %c0_358 = arith.constant 0 : index
    %539 = vector.load %arg3[%c0_356, %c0_357, %c0_358] : memref<4x8x32xf32, #tpu.memory_space<vmem>>, vector<1x8x32xf32>
    %540 = vector.shape_cast %539 : vector<1x8x32xf32> to vector<8x32xf32>
    %cst_359 = arith.constant dense<0.000000e+00> : vector<9x32xf32>
    %541 = tpu.matmul %538, %540, %cst_359 {dimension_numbers = #tpu.dot_dimension_numbers<[1], [0], [0], [1], [0, 0, 1, 1], [], []>} : vector<9x8xf32>, vector<8x32xf32>, vector<9x32xf32> -> vector<9x32xf32>
    %542 = vector.broadcast %503 : vector<1x32xf32> to vector<9x32xf32>
    %543 = arith.addf %542, %541 : vector<9x32xf32>
    %c1_360 = arith.constant 1 : index
    %c0_361 = arith.constant 0 : index
    %c0_362 = arith.constant 0 : index
    %544 = vector.load %arg1[%c1_360, %c0_361, %c0_362] : memref<12x32x8xf32, #tpu.memory_space<vmem>>, vector<1x32x8xf32>
    %545 = vector.shape_cast %544 : vector<1x32x8xf32> to vector<32x8xf32>
    %cst_363 = arith.constant dense<0.000000e+00> : vector<9x8xf32>
    %546 = tpu.matmul %502, %545, %cst_363 {dimension_numbers = #tpu.dot_dimension_numbers<[1], [0], [0], [1], [0, 0, 1, 1], [], []>} : vector<9x32xf32>, vector<32x8xf32>, vector<9x8xf32> -> vector<9x8xf32>
    %c1_364 = arith.constant 1 : index
    %c0_365 = arith.constant 0 : index
    %c0_366 = arith.constant 0 : index
    %547 = vector.load %arg2[%c1_364, %c0_365, %c0_366] : memref<12x1x8xf32, #tpu.memory_space<vmem>>, vector<1x1x8xf32>
    %548 = vector.shape_cast %547 : vector<1x1x8xf32> to vector<1x8xf32>
    %549 = vector.broadcast %548 : vector<1x8xf32> to vector<9x8xf32>
    %550 = arith.addf %546, %549 : vector<9x8xf32>
    %c5_367 = arith.constant 5 : index
    %c0_368 = arith.constant 0 : index
    %c0_369 = arith.constant 0 : index
    %551 = vector.load %arg1[%c5_367, %c0_368, %c0_369] : memref<12x32x8xf32, #tpu.memory_space<vmem>>, vector<1x32x8xf32>
    %552 = vector.shape_cast %551 : vector<1x32x8xf32> to vector<32x8xf32>
    %cst_370 = arith.constant dense<0.000000e+00> : vector<9x8xf32>
    %553 = tpu.matmul %502, %552, %cst_370 {dimension_numbers = #tpu.dot_dimension_numbers<[1], [0], [0], [1], [0, 0, 1, 1], [], []>} : vector<9x32xf32>, vector<32x8xf32>, vector<9x8xf32> -> vector<9x8xf32>
    %c5_371 = arith.constant 5 : index
    %c0_372 = arith.constant 0 : index
    %c0_373 = arith.constant 0 : index
    %554 = vector.load %arg2[%c5_371, %c0_372, %c0_373] : memref<12x1x8xf32, #tpu.memory_space<vmem>>, vector<1x1x8xf32>
    %555 = vector.shape_cast %554 : vector<1x1x8xf32> to vector<1x8xf32>
    %556 = vector.broadcast %555 : vector<1x8xf32> to vector<9x8xf32>
    %557 = arith.addf %553, %556 : vector<9x8xf32>
    %c9_374 = arith.constant 9 : index
    %c0_375 = arith.constant 0 : index
    %c0_376 = arith.constant 0 : index
    %558 = vector.load %arg1[%c9_374, %c0_375, %c0_376] : memref<12x32x8xf32, #tpu.memory_space<vmem>>, vector<1x32x8xf32>
    %559 = vector.shape_cast %558 : vector<1x32x8xf32> to vector<32x8xf32>
    %cst_377 = arith.constant dense<0.000000e+00> : vector<9x8xf32>
    %560 = tpu.matmul %502, %559, %cst_377 {dimension_numbers = #tpu.dot_dimension_numbers<[1], [0], [0], [1], [0, 0, 1, 1], [], []>} : vector<9x32xf32>, vector<32x8xf32>, vector<9x8xf32> -> vector<9x8xf32>
    %c9_378 = arith.constant 9 : index
    %c0_379 = arith.constant 0 : index
    %c0_380 = arith.constant 0 : index
    %561 = vector.load %arg2[%c9_378, %c0_379, %c0_380] : memref<12x1x8xf32, #tpu.memory_space<vmem>>, vector<1x1x8xf32>
    %562 = vector.shape_cast %561 : vector<1x1x8xf32> to vector<1x8xf32>
    %563 = vector.broadcast %562 : vector<1x8xf32> to vector<9x8xf32>
    %564 = arith.addf %560, %563 : vector<9x8xf32>
    %cst_381 = arith.constant dense<0.000000e+00> : vector<9x9xf32>
    %565 = tpu.matmul %550, %557, %cst_381 {dimension_numbers = #tpu.dot_dimension_numbers<[1], [1], [0], [0], [0, 0, 1, 0], [], []>} : vector<9x8xf32>, vector<9x8xf32>, vector<9x9xf32> -> vector<9x9xf32>
    %cst_382 = arith.constant 0.353553385 : f32
    %566 = vector.broadcast %cst_382 : f32 to vector<9x9xf32>
    %567 = arith.mulf %565, %566 : vector<9x9xf32>
    %cst_383 = arith.constant dense<0xFF800000> : vector<9xf32>
    %568 = vector.multi_reduction <maximumf>, %567, %cst_383 [1] : vector<9x9xf32> to vector<9xf32>
    %569 = vector.shape_cast %568 : vector<9xf32> to vector<9x1xf32>
    %570 = vector.broadcast %569 : vector<9x1xf32> to vector<9x9xf32>
    %571 = arith.subf %567, %570 : vector<9x9xf32>
    %572 = math.exp %571 : vector<9x9xf32>
    %cst_384 = arith.constant dense<0.000000e+00> : vector<9xf32>
    %573 = vector.multi_reduction <add>, %572, %cst_384 [1] : vector<9x9xf32> to vector<9xf32>
    %574 = vector.shape_cast %573 : vector<9xf32> to vector<9x1xf32>
    %575 = tpu.reciprocal %574 {approx = true} : vector<9x1xf32> -> vector<9x1xf32>
    %576 = vector.broadcast %575 : vector<9x1xf32> to vector<9x9xf32>
    %577 = arith.mulf %572, %576 : vector<9x9xf32>
    %cst_385 = arith.constant dense<0.000000e+00> : vector<9x8xf32>
    %578 = tpu.matmul %577, %564, %cst_385 {dimension_numbers = #tpu.dot_dimension_numbers<[1], [0], [0], [1], [0, 0, 1, 1], [], []>} : vector<9x9xf32>, vector<9x8xf32>, vector<9x8xf32> -> vector<9x8xf32>
    %c1_386 = arith.constant 1 : index
    %c0_387 = arith.constant 0 : index
    %c0_388 = arith.constant 0 : index
    %579 = vector.load %arg3[%c1_386, %c0_387, %c0_388] : memref<4x8x32xf32, #tpu.memory_space<vmem>>, vector<1x8x32xf32>
    %580 = vector.shape_cast %579 : vector<1x8x32xf32> to vector<8x32xf32>
    %cst_389 = arith.constant dense<0.000000e+00> : vector<9x32xf32>
    %581 = tpu.matmul %578, %580, %cst_389 {dimension_numbers = #tpu.dot_dimension_numbers<[1], [0], [0], [1], [0, 0, 1, 1], [], []>} : vector<9x8xf32>, vector<8x32xf32>, vector<9x32xf32> -> vector<9x32xf32>
    %582 = arith.addf %543, %581 : vector<9x32xf32>
    %c2_390 = arith.constant 2 : index
    %c0_391 = arith.constant 0 : index
    %c0_392 = arith.constant 0 : index
    %583 = vector.load %arg1[%c2_390, %c0_391, %c0_392] : memref<12x32x8xf32, #tpu.memory_space<vmem>>, vector<1x32x8xf32>
    %584 = vector.shape_cast %583 : vector<1x32x8xf32> to vector<32x8xf32>
    %cst_393 = arith.constant dense<0.000000e+00> : vector<9x8xf32>
    %585 = tpu.matmul %502, %584, %cst_393 {dimension_numbers = #tpu.dot_dimension_numbers<[1], [0], [0], [1], [0, 0, 1, 1], [], []>} : vector<9x32xf32>, vector<32x8xf32>, vector<9x8xf32> -> vector<9x8xf32>
    %c2_394 = arith.constant 2 : index
    %c0_395 = arith.constant 0 : index
    %c0_396 = arith.constant 0 : index
    %586 = vector.load %arg2[%c2_394, %c0_395, %c0_396] : memref<12x1x8xf32, #tpu.memory_space<vmem>>, vector<1x1x8xf32>
    %587 = vector.shape_cast %586 : vector<1x1x8xf32> to vector<1x8xf32>
    %588 = vector.broadcast %587 : vector<1x8xf32> to vector<9x8xf32>
    %589 = arith.addf %585, %588 : vector<9x8xf32>
    %c6_397 = arith.constant 6 : index
    %c0_398 = arith.constant 0 : index
    %c0_399 = arith.constant 0 : index
    %590 = vector.load %arg1[%c6_397, %c0_398, %c0_399] : memref<12x32x8xf32, #tpu.memory_space<vmem>>, vector<1x32x8xf32>
    %591 = vector.shape_cast %590 : vector<1x32x8xf32> to vector<32x8xf32>
    %cst_400 = arith.constant dense<0.000000e+00> : vector<9x8xf32>
    %592 = tpu.matmul %502, %591, %cst_400 {dimension_numbers = #tpu.dot_dimension_numbers<[1], [0], [0], [1], [0, 0, 1, 1], [], []>} : vector<9x32xf32>, vector<32x8xf32>, vector<9x8xf32> -> vector<9x8xf32>
    %c6_401 = arith.constant 6 : index
    %c0_402 = arith.constant 0 : index
    %c0_403 = arith.constant 0 : index
    %593 = vector.load %arg2[%c6_401, %c0_402, %c0_403] : memref<12x1x8xf32, #tpu.memory_space<vmem>>, vector<1x1x8xf32>
    %594 = vector.shape_cast %593 : vector<1x1x8xf32> to vector<1x8xf32>
    %595 = vector.broadcast %594 : vector<1x8xf32> to vector<9x8xf32>
    %596 = arith.addf %592, %595 : vector<9x8xf32>
    %c10_404 = arith.constant 10 : index
    %c0_405 = arith.constant 0 : index
    %c0_406 = arith.constant 0 : index
    %597 = vector.load %arg1[%c10_404, %c0_405, %c0_406] : memref<12x32x8xf32, #tpu.memory_space<vmem>>, vector<1x32x8xf32>
    %598 = vector.shape_cast %597 : vector<1x32x8xf32> to vector<32x8xf32>
    %cst_407 = arith.constant dense<0.000000e+00> : vector<9x8xf32>
    %599 = tpu.matmul %502, %598, %cst_407 {dimension_numbers = #tpu.dot_dimension_numbers<[1], [0], [0], [1], [0, 0, 1, 1], [], []>} : vector<9x32xf32>, vector<32x8xf32>, vector<9x8xf32> -> vector<9x8xf32>
    %c10_408 = arith.constant 10 : index
    %c0_409 = arith.constant 0 : index
    %c0_410 = arith.constant 0 : index
    %600 = vector.load %arg2[%c10_408, %c0_409, %c0_410] : memref<12x1x8xf32, #tpu.memory_space<vmem>>, vector<1x1x8xf32>
    %601 = vector.shape_cast %600 : vector<1x1x8xf32> to vector<1x8xf32>
    %602 = vector.broadcast %601 : vector<1x8xf32> to vector<9x8xf32>
    %603 = arith.addf %599, %602 : vector<9x8xf32>
    %cst_411 = arith.constant dense<0.000000e+00> : vector<9x9xf32>
    %604 = tpu.matmul %589, %596, %cst_411 {dimension_numbers = #tpu.dot_dimension_numbers<[1], [1], [0], [0], [0, 0, 1, 0], [], []>} : vector<9x8xf32>, vector<9x8xf32>, vector<9x9xf32> -> vector<9x9xf32>
    %cst_412 = arith.constant 0.353553385 : f32
    %605 = vector.broadcast %cst_412 : f32 to vector<9x9xf32>
    %606 = arith.mulf %604, %605 : vector<9x9xf32>
    %cst_413 = arith.constant dense<0xFF800000> : vector<9xf32>
    %607 = vector.multi_reduction <maximumf>, %606, %cst_413 [1] : vector<9x9xf32> to vector<9xf32>
    %608 = vector.shape_cast %607 : vector<9xf32> to vector<9x1xf32>
    %609 = vector.broadcast %608 : vector<9x1xf32> to vector<9x9xf32>
    %610 = arith.subf %606, %609 : vector<9x9xf32>
    %611 = math.exp %610 : vector<9x9xf32>
    %cst_414 = arith.constant dense<0.000000e+00> : vector<9xf32>
    %612 = vector.multi_reduction <add>, %611, %cst_414 [1] : vector<9x9xf32> to vector<9xf32>
    %613 = vector.shape_cast %612 : vector<9xf32> to vector<9x1xf32>
    %614 = tpu.reciprocal %613 {approx = true} : vector<9x1xf32> -> vector<9x1xf32>
    %615 = vector.broadcast %614 : vector<9x1xf32> to vector<9x9xf32>
    %616 = arith.mulf %611, %615 : vector<9x9xf32>
    %cst_415 = arith.constant dense<0.000000e+00> : vector<9x8xf32>
    %617 = tpu.matmul %616, %603, %cst_415 {dimension_numbers = #tpu.dot_dimension_numbers<[1], [0], [0], [1], [0, 0, 1, 1], [], []>} : vector<9x9xf32>, vector<9x8xf32>, vector<9x8xf32> -> vector<9x8xf32>
    %c2_416 = arith.constant 2 : index
    %c0_417 = arith.constant 0 : index
    %c0_418 = arith.constant 0 : index
    %618 = vector.load %arg3[%c2_416, %c0_417, %c0_418] : memref<4x8x32xf32, #tpu.memory_space<vmem>>, vector<1x8x32xf32>
    %619 = vector.shape_cast %618 : vector<1x8x32xf32> to vector<8x32xf32>
    %cst_419 = arith.constant dense<0.000000e+00> : vector<9x32xf32>
    %620 = tpu.matmul %617, %619, %cst_419 {dimension_numbers = #tpu.dot_dimension_numbers<[1], [0], [0], [1], [0, 0, 1, 1], [], []>} : vector<9x8xf32>, vector<8x32xf32>, vector<9x32xf32> -> vector<9x32xf32>
    %621 = arith.addf %582, %620 : vector<9x32xf32>
    %c3_420 = arith.constant 3 : index
    %c0_421 = arith.constant 0 : index
    %c0_422 = arith.constant 0 : index
    %622 = vector.load %arg1[%c3_420, %c0_421, %c0_422] : memref<12x32x8xf32, #tpu.memory_space<vmem>>, vector<1x32x8xf32>
    %623 = vector.shape_cast %622 : vector<1x32x8xf32> to vector<32x8xf32>
    %cst_423 = arith.constant dense<0.000000e+00> : vector<9x8xf32>
    %624 = tpu.matmul %502, %623, %cst_423 {dimension_numbers = #tpu.dot_dimension_numbers<[1], [0], [0], [1], [0, 0, 1, 1], [], []>} : vector<9x32xf32>, vector<32x8xf32>, vector<9x8xf32> -> vector<9x8xf32>
    %c3_424 = arith.constant 3 : index
    %c0_425 = arith.constant 0 : index
    %c0_426 = arith.constant 0 : index
    %625 = vector.load %arg2[%c3_424, %c0_425, %c0_426] : memref<12x1x8xf32, #tpu.memory_space<vmem>>, vector<1x1x8xf32>
    %626 = vector.shape_cast %625 : vector<1x1x8xf32> to vector<1x8xf32>
    %627 = vector.broadcast %626 : vector<1x8xf32> to vector<9x8xf32>
    %628 = arith.addf %624, %627 : vector<9x8xf32>
    %c7_427 = arith.constant 7 : index
    %c0_428 = arith.constant 0 : index
    %c0_429 = arith.constant 0 : index
    %629 = vector.load %arg1[%c7_427, %c0_428, %c0_429] : memref<12x32x8xf32, #tpu.memory_space<vmem>>, vector<1x32x8xf32>
    %630 = vector.shape_cast %629 : vector<1x32x8xf32> to vector<32x8xf32>
    %cst_430 = arith.constant dense<0.000000e+00> : vector<9x8xf32>
    %631 = tpu.matmul %502, %630, %cst_430 {dimension_numbers = #tpu.dot_dimension_numbers<[1], [0], [0], [1], [0, 0, 1, 1], [], []>} : vector<9x32xf32>, vector<32x8xf32>, vector<9x8xf32> -> vector<9x8xf32>
    %c7_431 = arith.constant 7 : index
    %c0_432 = arith.constant 0 : index
    %c0_433 = arith.constant 0 : index
    %632 = vector.load %arg2[%c7_431, %c0_432, %c0_433] : memref<12x1x8xf32, #tpu.memory_space<vmem>>, vector<1x1x8xf32>
    %633 = vector.shape_cast %632 : vector<1x1x8xf32> to vector<1x8xf32>
    %634 = vector.broadcast %633 : vector<1x8xf32> to vector<9x8xf32>
    %635 = arith.addf %631, %634 : vector<9x8xf32>
    %c11_434 = arith.constant 11 : index
    %c0_435 = arith.constant 0 : index
    %c0_436 = arith.constant 0 : index
    %636 = vector.load %arg1[%c11_434, %c0_435, %c0_436] : memref<12x32x8xf32, #tpu.memory_space<vmem>>, vector<1x32x8xf32>
    %637 = vector.shape_cast %636 : vector<1x32x8xf32> to vector<32x8xf32>
    %cst_437 = arith.constant dense<0.000000e+00> : vector<9x8xf32>
    %638 = tpu.matmul %502, %637, %cst_437 {dimension_numbers = #tpu.dot_dimension_numbers<[1], [0], [0], [1], [0, 0, 1, 1], [], []>} : vector<9x32xf32>, vector<32x8xf32>, vector<9x8xf32> -> vector<9x8xf32>
    %c11_438 = arith.constant 11 : index
    %c0_439 = arith.constant 0 : index
    %c0_440 = arith.constant 0 : index
    %639 = vector.load %arg2[%c11_438, %c0_439, %c0_440] : memref<12x1x8xf32, #tpu.memory_space<vmem>>, vector<1x1x8xf32>
    %640 = vector.shape_cast %639 : vector<1x1x8xf32> to vector<1x8xf32>
    %641 = vector.broadcast %640 : vector<1x8xf32> to vector<9x8xf32>
    %642 = arith.addf %638, %641 : vector<9x8xf32>
    %cst_441 = arith.constant dense<0.000000e+00> : vector<9x9xf32>
    %643 = tpu.matmul %628, %635, %cst_441 {dimension_numbers = #tpu.dot_dimension_numbers<[1], [1], [0], [0], [0, 0, 1, 0], [], []>} : vector<9x8xf32>, vector<9x8xf32>, vector<9x9xf32> -> vector<9x9xf32>
    %cst_442 = arith.constant 0.353553385 : f32
    %644 = vector.broadcast %cst_442 : f32 to vector<9x9xf32>
    %645 = arith.mulf %643, %644 : vector<9x9xf32>
    %cst_443 = arith.constant dense<0xFF800000> : vector<9xf32>
    %646 = vector.multi_reduction <maximumf>, %645, %cst_443 [1] : vector<9x9xf32> to vector<9xf32>
    %647 = vector.shape_cast %646 : vector<9xf32> to vector<9x1xf32>
    %648 = vector.broadcast %647 : vector<9x1xf32> to vector<9x9xf32>
    %649 = arith.subf %645, %648 : vector<9x9xf32>
    %650 = math.exp %649 : vector<9x9xf32>
    %cst_444 = arith.constant dense<0.000000e+00> : vector<9xf32>
    %651 = vector.multi_reduction <add>, %650, %cst_444 [1] : vector<9x9xf32> to vector<9xf32>
    %652 = vector.shape_cast %651 : vector<9xf32> to vector<9x1xf32>
    %653 = tpu.reciprocal %652 {approx = true} : vector<9x1xf32> -> vector<9x1xf32>
    %654 = vector.broadcast %653 : vector<9x1xf32> to vector<9x9xf32>
    %655 = arith.mulf %650, %654 : vector<9x9xf32>
    %cst_445 = arith.constant dense<0.000000e+00> : vector<9x8xf32>
    %656 = tpu.matmul %655, %642, %cst_445 {dimension_numbers = #tpu.dot_dimension_numbers<[1], [0], [0], [1], [0, 0, 1, 1], [], []>} : vector<9x9xf32>, vector<9x8xf32>, vector<9x8xf32> -> vector<9x8xf32>
    %c3_446 = arith.constant 3 : index
    %c0_447 = arith.constant 0 : index
    %c0_448 = arith.constant 0 : index
    %657 = vector.load %arg3[%c3_446, %c0_447, %c0_448] : memref<4x8x32xf32, #tpu.memory_space<vmem>>, vector<1x8x32xf32>
    %658 = vector.shape_cast %657 : vector<1x8x32xf32> to vector<8x32xf32>
    %cst_449 = arith.constant dense<0.000000e+00> : vector<9x32xf32>
    %659 = tpu.matmul %656, %658, %cst_449 {dimension_numbers = #tpu.dot_dimension_numbers<[1], [0], [0], [1], [0, 0, 1, 1], [], []>} : vector<9x8xf32>, vector<8x32xf32>, vector<9x32xf32> -> vector<9x32xf32>
    %660 = arith.addf %621, %659 : vector<9x32xf32>
    %661 = arith.addf %660, %502 : vector<9x32xf32>
    %c0_450 = arith.constant 0 : index
    %c0_451 = arith.constant 0 : index
    %662 = vector.load %arg5[%c0_450, %c0_451] : memref<1x32xf32, #tpu.memory_space<vmem>>, vector<1x32xf32>
    %c0_452 = arith.constant 0 : index
    %c0_453 = arith.constant 0 : index
    %663 = vector.load %arg6[%c0_452, %c0_453] : memref<1x32xf32, #tpu.memory_space<vmem>>, vector<1x32xf32>
    %cst_454 = arith.constant dense<0.000000e+00> : vector<9xf32>
    %664 = vector.multi_reduction <add>, %661, %cst_454 [1] : vector<9x32xf32> to vector<9xf32>
    %665 = vector.shape_cast %664 : vector<9xf32> to vector<9x1xf32>
    %cst_455 = arith.constant 3.200000e+01 : f32
    %666 = vector.broadcast %cst_455 : f32 to vector<9x1xf32>
    %667 = arith.divf %665, %666 : vector<9x1xf32>
    %668 = vector.broadcast %667 : vector<9x1xf32> to vector<9x32xf32>
    %669 = arith.subf %661, %668 : vector<9x32xf32>
    %670 = arith.mulf %669, %669 : vector<9x32xf32>
    %cst_456 = arith.constant dense<0.000000e+00> : vector<9xf32>
    %671 = vector.multi_reduction <add>, %670, %cst_456 [1] : vector<9x32xf32> to vector<9xf32>
    %672 = vector.shape_cast %671 : vector<9xf32> to vector<9x1xf32>
    %cst_457 = arith.constant 3.200000e+01 : f32
    %673 = vector.broadcast %cst_457 : f32 to vector<9x1xf32>
    %674 = arith.divf %672, %673 : vector<9x1xf32>
    %675 = vector.broadcast %667 : vector<9x1xf32> to vector<9x32xf32>
    %676 = arith.subf %661, %675 : vector<9x32xf32>
    %cst_458 = arith.constant 9.99999996E-13 : f32
    %677 = vector.broadcast %cst_458 : f32 to vector<9x1xf32>
    %678 = arith.addf %674, %677 : vector<9x1xf32>
    %679 = math.rsqrt %678 : vector<9x1xf32>
    %680 = vector.broadcast %679 : vector<9x1xf32> to vector<9x32xf32>
    %681 = arith.mulf %676, %680 : vector<9x32xf32>
    %682 = vector.broadcast %662 : vector<1x32xf32> to vector<9x32xf32>
    %683 = arith.mulf %681, %682 : vector<9x32xf32>
    %684 = vector.broadcast %663 : vector<1x32xf32> to vector<9x32xf32>
    %685 = arith.addf %683, %684 : vector<9x32xf32>
    %c0_459 = arith.constant 0 : index
    %c0_460 = arith.constant 0 : index
    %686 = vector.load %arg7[%c0_459, %c0_460] : memref<32x64xf32, #tpu.memory_space<vmem>>, vector<32x64xf32>
    %cst_461 = arith.constant dense<0.000000e+00> : vector<9x64xf32>
    %687 = tpu.matmul %685, %686, %cst_461 {dimension_numbers = #tpu.dot_dimension_numbers<[1], [0], [0], [1], [0, 0, 1, 1], [], []>} : vector<9x32xf32>, vector<32x64xf32>, vector<9x64xf32> -> vector<9x64xf32>
    %c0_462 = arith.constant 0 : index
    %c0_463 = arith.constant 0 : index
    %688 = vector.load %arg8[%c0_462, %c0_463] : memref<1x64xf32, #tpu.memory_space<vmem>>, vector<1x64xf32>
    %689 = vector.broadcast %688 : vector<1x64xf32> to vector<9x64xf32>
    %690 = arith.addf %687, %689 : vector<9x64xf32>
    %cst_464 = arith.constant 5.000000e-01 : f32
    %691 = vector.broadcast %cst_464 : f32 to vector<9x64xf32>
    %692 = arith.mulf %691, %690 : vector<9x64xf32>
    %cst_465 = arith.constant 0.707106769 : f32
    %693 = vector.broadcast %cst_465 : f32 to vector<9x64xf32>
    %694 = arith.mulf %690, %693 : vector<9x64xf32>
    %695 = math.erf %694 : vector<9x64xf32>
    %cst_466 = arith.constant 1.000000e+00 : f32
    %696 = vector.broadcast %cst_466 : f32 to vector<9x64xf32>
    %697 = arith.addf %696, %695 : vector<9x64xf32>
    %698 = arith.mulf %692, %697 : vector<9x64xf32>
    %c0_467 = arith.constant 0 : index
    %c0_468 = arith.constant 0 : index
    %699 = vector.load %arg9[%c0_467, %c0_468] : memref<64x32xf32, #tpu.memory_space<vmem>>, vector<64x32xf32>
    %cst_469 = arith.constant dense<0.000000e+00> : vector<9x32xf32>
    %700 = tpu.matmul %698, %699, %cst_469 {dimension_numbers = #tpu.dot_dimension_numbers<[1], [0], [0], [1], [0, 0, 1, 1], [], []>} : vector<9x64xf32>, vector<64x32xf32>, vector<9x32xf32> -> vector<9x32xf32>
    %c0_470 = arith.constant 0 : index
    %c0_471 = arith.constant 0 : index
    %701 = vector.load %arg10[%c0_470, %c0_471] : memref<1x32xf32, #tpu.memory_space<vmem>>, vector<1x32xf32>
    %702 = vector.broadcast %701 : vector<1x32xf32> to vector<9x32xf32>
    %703 = arith.addf %700, %702 : vector<9x32xf32>
    %704 = arith.addf %703, %685 : vector<9x32xf32>
    %c0_472 = arith.constant 0 : index
    %c0_473 = arith.constant 0 : index
    %705 = vector.load %arg11[%c0_472, %c0_473] : memref<1x32xf32, #tpu.memory_space<vmem>>, vector<1x32xf32>
    %c0_474 = arith.constant 0 : index
    %c0_475 = arith.constant 0 : index
    %706 = vector.load %arg12[%c0_474, %c0_475] : memref<1x32xf32, #tpu.memory_space<vmem>>, vector<1x32xf32>
    %cst_476 = arith.constant dense<0.000000e+00> : vector<9xf32>
    %707 = vector.multi_reduction <add>, %704, %cst_476 [1] : vector<9x32xf32> to vector<9xf32>
    %708 = vector.shape_cast %707 : vector<9xf32> to vector<9x1xf32>
    %cst_477 = arith.constant 3.200000e+01 : f32
    %709 = vector.broadcast %cst_477 : f32 to vector<9x1xf32>
    %710 = arith.divf %708, %709 : vector<9x1xf32>
    %711 = vector.broadcast %710 : vector<9x1xf32> to vector<9x32xf32>
    %712 = arith.subf %704, %711 : vector<9x32xf32>
    %713 = arith.mulf %712, %712 : vector<9x32xf32>
    %cst_478 = arith.constant dense<0.000000e+00> : vector<9xf32>
    %714 = vector.multi_reduction <add>, %713, %cst_478 [1] : vector<9x32xf32> to vector<9xf32>
    %715 = vector.shape_cast %714 : vector<9xf32> to vector<9x1xf32>
    %cst_479 = arith.constant 3.200000e+01 : f32
    %716 = vector.broadcast %cst_479 : f32 to vector<9x1xf32>
    %717 = arith.divf %715, %716 : vector<9x1xf32>
    %718 = vector.broadcast %710 : vector<9x1xf32> to vector<9x32xf32>
    %719 = arith.subf %704, %718 : vector<9x32xf32>
    %cst_480 = arith.constant 9.99999996E-13 : f32
    %720 = vector.broadcast %cst_480 : f32 to vector<9x1xf32>
    %721 = arith.addf %717, %720 : vector<9x1xf32>
    %722 = math.rsqrt %721 : vector<9x1xf32>
    %723 = vector.broadcast %722 : vector<9x1xf32> to vector<9x32xf32>
    %724 = arith.mulf %719, %723 : vector<9x32xf32>
    %725 = vector.broadcast %705 : vector<1x32xf32> to vector<9x32xf32>
    %726 = arith.mulf %724, %725 : vector<9x32xf32>
    %727 = vector.broadcast %706 : vector<1x32xf32> to vector<9x32xf32>
    %728 = arith.addf %726, %727 : vector<9x32xf32>
    %c0_481 = arith.constant 0 : index
    %c0_482 = arith.constant 0 : index
    %729 = vector.load %arg32[%c0_481, %c0_482] : memref<9x32xf32, #tpu.memory_space<vmem>>, vector<9x32xf32>
    tpu.vector_store %arg32[%c0_481, %c0_482], %728 {strides = array<i32>} : memref<9x32xf32, #tpu.memory_space<vmem>>, vector<9x32xf32>,
    %c1_483 = arith.constant 1 : index
    %c0_484 = arith.constant 0 : index
    %730 = vector.load %arg32[%c1_483, %c0_484] : memref<9x32xf32, #tpu.memory_space<vmem>>, vector<8x32xf32>
    %c0_485 = arith.constant 0 : index
    %c0_486 = arith.constant 0 : index
    %731 = vector.load %arg16[%c0_485, %c0_486] : memref<1x32xf32, #tpu.memory_space<vmem>>, vector<1x32xf32>
    %c0_487 = arith.constant 0 : index
    %c0_488 = arith.constant 0 : index
    %c0_489 = arith.constant 0 : index
    %732 = vector.load %arg13[%c0_487, %c0_488, %c0_489] : memref<12x32x8xf32, #tpu.memory_space<vmem>>, vector<1x32x8xf32>
    %733 = vector.shape_cast %732 : vector<1x32x8xf32> to vector<32x8xf32>
    %cst_490 = arith.constant dense<0.000000e+00> : vector<8x8xf32>
    %734 = tpu.matmul %730, %733, %cst_490 {dimension_numbers = #tpu.dot_dimension_numbers<[1], [0], [0], [1], [0, 0, 1, 1], [], []>} : vector<8x32xf32>, vector<32x8xf32>, vector<8x8xf32> -> vector<8x8xf32>
    %c0_491 = arith.constant 0 : index
    %c0_492 = arith.constant 0 : index
    %c0_493 = arith.constant 0 : index
    %735 = vector.load %arg14[%c0_491, %c0_492, %c0_493] : memref<12x1x8xf32, #tpu.memory_space<vmem>>, vector<1x1x8xf32>
    %736 = vector.shape_cast %735 : vector<1x1x8xf32> to vector<1x8xf32>
    %737 = vector.broadcast %736 : vector<1x8xf32> to vector<8x8xf32>
    %738 = arith.addf %734, %737 : vector<8x8xf32>
    %c4_494 = arith.constant 4 : index
    %c0_495 = arith.constant 0 : index
    %c0_496 = arith.constant 0 : index
    %739 = vector.load %arg13[%c4_494, %c0_495, %c0_496] : memref<12x32x8xf32, #tpu.memory_space<vmem>>, vector<1x32x8xf32>
    %740 = vector.shape_cast %739 : vector<1x32x8xf32> to vector<32x8xf32>
    %cst_497 = arith.constant dense<0.000000e+00> : vector<8x8xf32>
    %741 = tpu.matmul %730, %740, %cst_497 {dimension_numbers = #tpu.dot_dimension_numbers<[1], [0], [0], [1], [0, 0, 1, 1], [], []>} : vector<8x32xf32>, vector<32x8xf32>, vector<8x8xf32> -> vector<8x8xf32>
    %c4_498 = arith.constant 4 : index
    %c0_499 = arith.constant 0 : index
    %c0_500 = arith.constant 0 : index
    %742 = vector.load %arg14[%c4_498, %c0_499, %c0_500] : memref<12x1x8xf32, #tpu.memory_space<vmem>>, vector<1x1x8xf32>
    %743 = vector.shape_cast %742 : vector<1x1x8xf32> to vector<1x8xf32>
    %744 = vector.broadcast %743 : vector<1x8xf32> to vector<8x8xf32>
    %745 = arith.addf %741, %744 : vector<8x8xf32>
    %c8_501 = arith.constant 8 : index
    %c0_502 = arith.constant 0 : index
    %c0_503 = arith.constant 0 : index
    %746 = vector.load %arg13[%c8_501, %c0_502, %c0_503] : memref<12x32x8xf32, #tpu.memory_space<vmem>>, vector<1x32x8xf32>
    %747 = vector.shape_cast %746 : vector<1x32x8xf32> to vector<32x8xf32>
    %cst_504 = arith.constant dense<0.000000e+00> : vector<8x8xf32>
    %748 = tpu.matmul %730, %747, %cst_504 {dimension_numbers = #tpu.dot_dimension_numbers<[1], [0], [0], [1], [0, 0, 1, 1], [], []>} : vector<8x32xf32>, vector<32x8xf32>, vector<8x8xf32> -> vector<8x8xf32>
    %c8_505 = arith.constant 8 : index
    %c0_506 = arith.constant 0 : index
    %c0_507 = arith.constant 0 : index
    %749 = vector.load %arg14[%c8_505, %c0_506, %c0_507] : memref<12x1x8xf32, #tpu.memory_space<vmem>>, vector<1x1x8xf32>
    %750 = vector.shape_cast %749 : vector<1x1x8xf32> to vector<1x8xf32>
    %751 = vector.broadcast %750 : vector<1x8xf32> to vector<8x8xf32>
    %752 = arith.addf %748, %751 : vector<8x8xf32>
    %cst_508 = arith.constant dense<0.000000e+00> : vector<8x8xf32>
    %753 = tpu.matmul %738, %745, %cst_508 {dimension_numbers = #tpu.dot_dimension_numbers<[1], [1], [0], [0], [0, 0, 1, 0], [], []>} : vector<8x8xf32>, vector<8x8xf32>, vector<8x8xf32> -> vector<8x8xf32>
    %cst_509 = arith.constant 0.353553385 : f32
    %754 = vector.broadcast %cst_509 : f32 to vector<8x8xf32>
    %755 = arith.mulf %753, %754 : vector<8x8xf32>
    %cst_510 = arith.constant dense<0xFF800000> : vector<8xf32>
    %756 = vector.multi_reduction <maximumf>, %755, %cst_510 [1] : vector<8x8xf32> to vector<8xf32>
    %757 = vector.shape_cast %756 : vector<8xf32> to vector<8x1xf32>
    %758 = vector.broadcast %757 : vector<8x1xf32> to vector<8x8xf32>
    %759 = arith.subf %755, %758 : vector<8x8xf32>
    %760 = math.exp %759 : vector<8x8xf32>
    %cst_511 = arith.constant dense<0.000000e+00> : vector<8xf32>
    %761 = vector.multi_reduction <add>, %760, %cst_511 [1] : vector<8x8xf32> to vector<8xf32>
    %762 = vector.shape_cast %761 : vector<8xf32> to vector<8x1xf32>
    %763 = tpu.reciprocal %762 {approx = true} : vector<8x1xf32> -> vector<8x1xf32>
    %764 = vector.broadcast %763 : vector<8x1xf32> to vector<8x8xf32>
    %765 = arith.mulf %760, %764 : vector<8x8xf32>
    %cst_512 = arith.constant dense<0.000000e+00> : vector<8x8xf32>
    %766 = tpu.matmul %765, %752, %cst_512 {dimension_numbers = #tpu.dot_dimension_numbers<[1], [0], [0], [1], [0, 0, 1, 1], [], []>} : vector<8x8xf32>, vector<8x8xf32>, vector<8x8xf32> -> vector<8x8xf32>
    %c0_513 = arith.constant 0 : index
    %c0_514 = arith.constant 0 : index
    %c0_515 = arith.constant 0 : index
    %767 = vector.load %arg15[%c0_513, %c0_514, %c0_515] : memref<4x8x32xf32, #tpu.memory_space<vmem>>, vector<1x8x32xf32>
    %768 = vector.shape_cast %767 : vector<1x8x32xf32> to vector<8x32xf32>
    %cst_516 = arith.constant dense<0.000000e+00> : vector<8x32xf32>
    %769 = tpu.matmul %766, %768, %cst_516 {dimension_numbers = #tpu.dot_dimension_numbers<[1], [0], [0], [1], [0, 0, 1, 1], [], []>} : vector<8x8xf32>, vector<8x32xf32>, vector<8x32xf32> -> vector<8x32xf32>
    %770 = vector.broadcast %731 : vector<1x32xf32> to vector<8x32xf32>
    %771 = arith.addf %770, %769 : vector<8x32xf32>
    %c1_517 = arith.constant 1 : index
    %c0_518 = arith.constant 0 : index
    %c0_519 = arith.constant 0 : index
    %772 = vector.load %arg13[%c1_517, %c0_518, %c0_519] : memref<12x32x8xf32, #tpu.memory_space<vmem>>, vector<1x32x8xf32>
    %773 = vector.shape_cast %772 : vector<1x32x8xf32> to vector<32x8xf32>
    %cst_520 = arith.constant dense<0.000000e+00> : vector<8x8xf32>
    %774 = tpu.matmul %730, %773, %cst_520 {dimension_numbers = #tpu.dot_dimension_numbers<[1], [0], [0], [1], [0, 0, 1, 1], [], []>} : vector<8x32xf32>, vector<32x8xf32>, vector<8x8xf32> -> vector<8x8xf32>
    %c1_521 = arith.constant 1 : index
    %c0_522 = arith.constant 0 : index
    %c0_523 = arith.constant 0 : index
    %775 = vector.load %arg14[%c1_521, %c0_522, %c0_523] : memref<12x1x8xf32, #tpu.memory_space<vmem>>, vector<1x1x8xf32>
    %776 = vector.shape_cast %775 : vector<1x1x8xf32> to vector<1x8xf32>
    %777 = vector.broadcast %776 : vector<1x8xf32> to vector<8x8xf32>
    %778 = arith.addf %774, %777 : vector<8x8xf32>
    %c5_524 = arith.constant 5 : index
    %c0_525 = arith.constant 0 : index
    %c0_526 = arith.constant 0 : index
    %779 = vector.load %arg13[%c5_524, %c0_525, %c0_526] : memref<12x32x8xf32, #tpu.memory_space<vmem>>, vector<1x32x8xf32>
    %780 = vector.shape_cast %779 : vector<1x32x8xf32> to vector<32x8xf32>
    %cst_527 = arith.constant dense<0.000000e+00> : vector<8x8xf32>
    %781 = tpu.matmul %730, %780, %cst_527 {dimension_numbers = #tpu.dot_dimension_numbers<[1], [0], [0], [1], [0, 0, 1, 1], [], []>} : vector<8x32xf32>, vector<32x8xf32>, vector<8x8xf32> -> vector<8x8xf32>
    %c5_528 = arith.constant 5 : index
    %c0_529 = arith.constant 0 : index
    %c0_530 = arith.constant 0 : index
    %782 = vector.load %arg14[%c5_528, %c0_529, %c0_530] : memref<12x1x8xf32, #tpu.memory_space<vmem>>, vector<1x1x8xf32>
    %783 = vector.shape_cast %782 : vector<1x1x8xf32> to vector<1x8xf32>
    %784 = vector.broadcast %783 : vector<1x8xf32> to vector<8x8xf32>
    %785 = arith.addf %781, %784 : vector<8x8xf32>
    %c9_531 = arith.constant 9 : index
    %c0_532 = arith.constant 0 : index
    %c0_533 = arith.constant 0 : index
    %786 = vector.load %arg13[%c9_531, %c0_532, %c0_533] : memref<12x32x8xf32, #tpu.memory_space<vmem>>, vector<1x32x8xf32>
    %787 = vector.shape_cast %786 : vector<1x32x8xf32> to vector<32x8xf32>
    %cst_534 = arith.constant dense<0.000000e+00> : vector<8x8xf32>
    %788 = tpu.matmul %730, %787, %cst_534 {dimension_numbers = #tpu.dot_dimension_numbers<[1], [0], [0], [1], [0, 0, 1, 1], [], []>} : vector<8x32xf32>, vector<32x8xf32>, vector<8x8xf32> -> vector<8x8xf32>
    %c9_535 = arith.constant 9 : index
    %c0_536 = arith.constant 0 : index
    %c0_537 = arith.constant 0 : index
    %789 = vector.load %arg14[%c9_535, %c0_536, %c0_537] : memref<12x1x8xf32, #tpu.memory_space<vmem>>, vector<1x1x8xf32>
    %790 = vector.shape_cast %789 : vector<1x1x8xf32> to vector<1x8xf32>
    %791 = vector.broadcast %790 : vector<1x8xf32> to vector<8x8xf32>
    %792 = arith.addf %788, %791 : vector<8x8xf32>
    %cst_538 = arith.constant dense<0.000000e+00> : vector<8x8xf32>
    %793 = tpu.matmul %778, %785, %cst_538 {dimension_numbers = #tpu.dot_dimension_numbers<[1], [1], [0], [0], [0, 0, 1, 0], [], []>} : vector<8x8xf32>, vector<8x8xf32>, vector<8x8xf32> -> vector<8x8xf32>
    %cst_539 = arith.constant 0.353553385 : f32
    %794 = vector.broadcast %cst_539 : f32 to vector<8x8xf32>
    %795 = arith.mulf %793, %794 : vector<8x8xf32>
    %cst_540 = arith.constant dense<0xFF800000> : vector<8xf32>
    %796 = vector.multi_reduction <maximumf>, %795, %cst_540 [1] : vector<8x8xf32> to vector<8xf32>
    %797 = vector.shape_cast %796 : vector<8xf32> to vector<8x1xf32>
    %798 = vector.broadcast %797 : vector<8x1xf32> to vector<8x8xf32>
    %799 = arith.subf %795, %798 : vector<8x8xf32>
    %800 = math.exp %799 : vector<8x8xf32>
    %cst_541 = arith.constant dense<0.000000e+00> : vector<8xf32>
    %801 = vector.multi_reduction <add>, %800, %cst_541 [1] : vector<8x8xf32> to vector<8xf32>
    %802 = vector.shape_cast %801 : vector<8xf32> to vector<8x1xf32>
    %803 = tpu.reciprocal %802 {approx = true} : vector<8x1xf32> -> vector<8x1xf32>
    %804 = vector.broadcast %803 : vector<8x1xf32> to vector<8x8xf32>
    %805 = arith.mulf %800, %804 : vector<8x8xf32>
    %cst_542 = arith.constant dense<0.000000e+00> : vector<8x8xf32>
    %806 = tpu.matmul %805, %792, %cst_542 {dimension_numbers = #tpu.dot_dimension_numbers<[1], [0], [0], [1], [0, 0, 1, 1], [], []>} : vector<8x8xf32>, vector<8x8xf32>, vector<8x8xf32> -> vector<8x8xf32>
    %c1_543 = arith.constant 1 : index
    %c0_544 = arith.constant 0 : index
    %c0_545 = arith.constant 0 : index
    %807 = vector.load %arg15[%c1_543, %c0_544, %c0_545] : memref<4x8x32xf32, #tpu.memory_space<vmem>>, vector<1x8x32xf32>
    %808 = vector.shape_cast %807 : vector<1x8x32xf32> to vector<8x32xf32>
    %cst_546 = arith.constant dense<0.000000e+00> : vector<8x32xf32>
    %809 = tpu.matmul %806, %808, %cst_546 {dimension_numbers = #tpu.dot_dimension_numbers<[1], [0], [0], [1], [0, 0, 1, 1], [], []>} : vector<8x8xf32>, vector<8x32xf32>, vector<8x32xf32> -> vector<8x32xf32>
    %810 = arith.addf %771, %809 : vector<8x32xf32>
    %c2_547 = arith.constant 2 : index
    %c0_548 = arith.constant 0 : index
    %c0_549 = arith.constant 0 : index
    %811 = vector.load %arg13[%c2_547, %c0_548, %c0_549] : memref<12x32x8xf32, #tpu.memory_space<vmem>>, vector<1x32x8xf32>
    %812 = vector.shape_cast %811 : vector<1x32x8xf32> to vector<32x8xf32>
    %cst_550 = arith.constant dense<0.000000e+00> : vector<8x8xf32>
    %813 = tpu.matmul %730, %812, %cst_550 {dimension_numbers = #tpu.dot_dimension_numbers<[1], [0], [0], [1], [0, 0, 1, 1], [], []>} : vector<8x32xf32>, vector<32x8xf32>, vector<8x8xf32> -> vector<8x8xf32>
    %c2_551 = arith.constant 2 : index
    %c0_552 = arith.constant 0 : index
    %c0_553 = arith.constant 0 : index
    %814 = vector.load %arg14[%c2_551, %c0_552, %c0_553] : memref<12x1x8xf32, #tpu.memory_space<vmem>>, vector<1x1x8xf32>
    %815 = vector.shape_cast %814 : vector<1x1x8xf32> to vector<1x8xf32>
    %816 = vector.broadcast %815 : vector<1x8xf32> to vector<8x8xf32>
    %817 = arith.addf %813, %816 : vector<8x8xf32>
    %c6_554 = arith.constant 6 : index
    %c0_555 = arith.constant 0 : index
    %c0_556 = arith.constant 0 : index
    %818 = vector.load %arg13[%c6_554, %c0_555, %c0_556] : memref<12x32x8xf32, #tpu.memory_space<vmem>>, vector<1x32x8xf32>
    %819 = vector.shape_cast %818 : vector<1x32x8xf32> to vector<32x8xf32>
    %cst_557 = arith.constant dense<0.000000e+00> : vector<8x8xf32>
    %820 = tpu.matmul %730, %819, %cst_557 {dimension_numbers = #tpu.dot_dimension_numbers<[1], [0], [0], [1], [0, 0, 1, 1], [], []>} : vector<8x32xf32>, vector<32x8xf32>, vector<8x8xf32> -> vector<8x8xf32>
    %c6_558 = arith.constant 6 : index
    %c0_559 = arith.constant 0 : index
    %c0_560 = arith.constant 0 : index
    %821 = vector.load %arg14[%c6_558, %c0_559, %c0_560] : memref<12x1x8xf32, #tpu.memory_space<vmem>>, vector<1x1x8xf32>
    %822 = vector.shape_cast %821 : vector<1x1x8xf32> to vector<1x8xf32>
    %823 = vector.broadcast %822 : vector<1x8xf32> to vector<8x8xf32>
    %824 = arith.addf %820, %823 : vector<8x8xf32>
    %c10_561 = arith.constant 10 : index
    %c0_562 = arith.constant 0 : index
    %c0_563 = arith.constant 0 : index
    %825 = vector.load %arg13[%c10_561, %c0_562, %c0_563] : memref<12x32x8xf32, #tpu.memory_space<vmem>>, vector<1x32x8xf32>
    %826 = vector.shape_cast %825 : vector<1x32x8xf32> to vector<32x8xf32>
    %cst_564 = arith.constant dense<0.000000e+00> : vector<8x8xf32>
    %827 = tpu.matmul %730, %826, %cst_564 {dimension_numbers = #tpu.dot_dimension_numbers<[1], [0], [0], [1], [0, 0, 1, 1], [], []>} : vector<8x32xf32>, vector<32x8xf32>, vector<8x8xf32> -> vector<8x8xf32>
    %c10_565 = arith.constant 10 : index
    %c0_566 = arith.constant 0 : index
    %c0_567 = arith.constant 0 : index
    %828 = vector.load %arg14[%c10_565, %c0_566, %c0_567] : memref<12x1x8xf32, #tpu.memory_space<vmem>>, vector<1x1x8xf32>
    %829 = vector.shape_cast %828 : vector<1x1x8xf32> to vector<1x8xf32>
    %830 = vector.broadcast %829 : vector<1x8xf32> to vector<8x8xf32>
    %831 = arith.addf %827, %830 : vector<8x8xf32>
    %cst_568 = arith.constant dense<0.000000e+00> : vector<8x8xf32>
    %832 = tpu.matmul %817, %824, %cst_568 {dimension_numbers = #tpu.dot_dimension_numbers<[1], [1], [0], [0], [0, 0, 1, 0], [], []>} : vector<8x8xf32>, vector<8x8xf32>, vector<8x8xf32> -> vector<8x8xf32>
    %cst_569 = arith.constant 0.353553385 : f32
    %833 = vector.broadcast %cst_569 : f32 to vector<8x8xf32>
    %834 = arith.mulf %832, %833 : vector<8x8xf32>
    %cst_570 = arith.constant dense<0xFF800000> : vector<8xf32>
    %835 = vector.multi_reduction <maximumf>, %834, %cst_570 [1] : vector<8x8xf32> to vector<8xf32>
    %836 = vector.shape_cast %835 : vector<8xf32> to vector<8x1xf32>
    %837 = vector.broadcast %836 : vector<8x1xf32> to vector<8x8xf32>
    %838 = arith.subf %834, %837 : vector<8x8xf32>
    %839 = math.exp %838 : vector<8x8xf32>
    %cst_571 = arith.constant dense<0.000000e+00> : vector<8xf32>
    %840 = vector.multi_reduction <add>, %839, %cst_571 [1] : vector<8x8xf32> to vector<8xf32>
    %841 = vector.shape_cast %840 : vector<8xf32> to vector<8x1xf32>
    %842 = tpu.reciprocal %841 {approx = true} : vector<8x1xf32> -> vector<8x1xf32>
    %843 = vector.broadcast %842 : vector<8x1xf32> to vector<8x8xf32>
    %844 = arith.mulf %839, %843 : vector<8x8xf32>
    %cst_572 = arith.constant dense<0.000000e+00> : vector<8x8xf32>
    %845 = tpu.matmul %844, %831, %cst_572 {dimension_numbers = #tpu.dot_dimension_numbers<[1], [0], [0], [1], [0, 0, 1, 1], [], []>} : vector<8x8xf32>, vector<8x8xf32>, vector<8x8xf32> -> vector<8x8xf32>
    %c2_573 = arith.constant 2 : index
    %c0_574 = arith.constant 0 : index
    %c0_575 = arith.constant 0 : index
    %846 = vector.load %arg15[%c2_573, %c0_574, %c0_575] : memref<4x8x32xf32, #tpu.memory_space<vmem>>, vector<1x8x32xf32>
    %847 = vector.shape_cast %846 : vector<1x8x32xf32> to vector<8x32xf32>
    %cst_576 = arith.constant dense<0.000000e+00> : vector<8x32xf32>
    %848 = tpu.matmul %845, %847, %cst_576 {dimension_numbers = #tpu.dot_dimension_numbers<[1], [0], [0], [1], [0, 0, 1, 1], [], []>} : vector<8x8xf32>, vector<8x32xf32>, vector<8x32xf32> -> vector<8x32xf32>
    %849 = arith.addf %810, %848 : vector<8x32xf32>
    %c3_577 = arith.constant 3 : index
    %c0_578 = arith.constant 0 : index
    %c0_579 = arith.constant 0 : index
    %850 = vector.load %arg13[%c3_577, %c0_578, %c0_579] : memref<12x32x8xf32, #tpu.memory_space<vmem>>, vector<1x32x8xf32>
    %851 = vector.shape_cast %850 : vector<1x32x8xf32> to vector<32x8xf32>
    %cst_580 = arith.constant dense<0.000000e+00> : vector<8x8xf32>
    %852 = tpu.matmul %730, %851, %cst_580 {dimension_numbers = #tpu.dot_dimension_numbers<[1], [0], [0], [1], [0, 0, 1, 1], [], []>} : vector<8x32xf32>, vector<32x8xf32>, vector<8x8xf32> -> vector<8x8xf32>
    %c3_581 = arith.constant 3 : index
    %c0_582 = arith.constant 0 : index
    %c0_583 = arith.constant 0 : index
    %853 = vector.load %arg14[%c3_581, %c0_582, %c0_583] : memref<12x1x8xf32, #tpu.memory_space<vmem>>, vector<1x1x8xf32>
    %854 = vector.shape_cast %853 : vector<1x1x8xf32> to vector<1x8xf32>
    %855 = vector.broadcast %854 : vector<1x8xf32> to vector<8x8xf32>
    %856 = arith.addf %852, %855 : vector<8x8xf32>
    %c7_584 = arith.constant 7 : index
    %c0_585 = arith.constant 0 : index
    %c0_586 = arith.constant 0 : index
    %857 = vector.load %arg13[%c7_584, %c0_585, %c0_586] : memref<12x32x8xf32, #tpu.memory_space<vmem>>, vector<1x32x8xf32>
    %858 = vector.shape_cast %857 : vector<1x32x8xf32> to vector<32x8xf32>
    %cst_587 = arith.constant dense<0.000000e+00> : vector<8x8xf32>
    %859 = tpu.matmul %730, %858, %cst_587 {dimension_numbers = #tpu.dot_dimension_numbers<[1], [0], [0], [1], [0, 0, 1, 1], [], []>} : vector<8x32xf32>, vector<32x8xf32>, vector<8x8xf32> -> vector<8x8xf32>
    %c7_588 = arith.constant 7 : index
    %c0_589 = arith.constant 0 : index
    %c0_590 = arith.constant 0 : index
    %860 = vector.load %arg14[%c7_588, %c0_589, %c0_590] : memref<12x1x8xf32, #tpu.memory_space<vmem>>, vector<1x1x8xf32>
    %861 = vector.shape_cast %860 : vector<1x1x8xf32> to vector<1x8xf32>
    %862 = vector.broadcast %861 : vector<1x8xf32> to vector<8x8xf32>
    %863 = arith.addf %859, %862 : vector<8x8xf32>
    %c11_591 = arith.constant 11 : index
    %c0_592 = arith.constant 0 : index
    %c0_593 = arith.constant 0 : index
    %864 = vector.load %arg13[%c11_591, %c0_592, %c0_593] : memref<12x32x8xf32, #tpu.memory_space<vmem>>, vector<1x32x8xf32>
    %865 = vector.shape_cast %864 : vector<1x32x8xf32> to vector<32x8xf32>
    %cst_594 = arith.constant dense<0.000000e+00> : vector<8x8xf32>
    %866 = tpu.matmul %730, %865, %cst_594 {dimension_numbers = #tpu.dot_dimension_numbers<[1], [0], [0], [1], [0, 0, 1, 1], [], []>} : vector<8x32xf32>, vector<32x8xf32>, vector<8x8xf32> -> vector<8x8xf32>
    %c11_595 = arith.constant 11 : index
    %c0_596 = arith.constant 0 : index
    %c0_597 = arith.constant 0 : index
    %867 = vector.load %arg14[%c11_595, %c0_596, %c0_597] : memref<12x1x8xf32, #tpu.memory_space<vmem>>, vector<1x1x8xf32>
    %868 = vector.shape_cast %867 : vector<1x1x8xf32> to vector<1x8xf32>
    %869 = vector.broadcast %868 : vector<1x8xf32> to vector<8x8xf32>
    %870 = arith.addf %866, %869 : vector<8x8xf32>
    %cst_598 = arith.constant dense<0.000000e+00> : vector<8x8xf32>
    %871 = tpu.matmul %856, %863, %cst_598 {dimension_numbers = #tpu.dot_dimension_numbers<[1], [1], [0], [0], [0, 0, 1, 0], [], []>} : vector<8x8xf32>, vector<8x8xf32>, vector<8x8xf32> -> vector<8x8xf32>
    %cst_599 = arith.constant 0.353553385 : f32
    %872 = vector.broadcast %cst_599 : f32 to vector<8x8xf32>
    %873 = arith.mulf %871, %872 : vector<8x8xf32>
    %cst_600 = arith.constant dense<0xFF800000> : vector<8xf32>
    %874 = vector.multi_reduction <maximumf>, %873, %cst_600 [1] : vector<8x8xf32> to vector<8xf32>
    %875 = vector.shape_cast %874 : vector<8xf32> to vector<8x1xf32>
    %876 = vector.broadcast %875 : vector<8x1xf32> to vector<8x8xf32>
    %877 = arith.subf %873, %876 : vector<8x8xf32>
    %878 = math.exp %877 : vector<8x8xf32>
    %cst_601 = arith.constant dense<0.000000e+00> : vector<8xf32>
    %879 = vector.multi_reduction <add>, %878, %cst_601 [1] : vector<8x8xf32> to vector<8xf32>
    %880 = vector.shape_cast %879 : vector<8xf32> to vector<8x1xf32>
    %881 = tpu.reciprocal %880 {approx = true} : vector<8x1xf32> -> vector<8x1xf32>
    %882 = vector.broadcast %881 : vector<8x1xf32> to vector<8x8xf32>
    %883 = arith.mulf %878, %882 : vector<8x8xf32>
    %cst_602 = arith.constant dense<0.000000e+00> : vector<8x8xf32>
    %884 = tpu.matmul %883, %870, %cst_602 {dimension_numbers = #tpu.dot_dimension_numbers<[1], [0], [0], [1], [0, 0, 1, 1], [], []>} : vector<8x8xf32>, vector<8x8xf32>, vector<8x8xf32> -> vector<8x8xf32>
    %c3_603 = arith.constant 3 : index
    %c0_604 = arith.constant 0 : index
    %c0_605 = arith.constant 0 : index
    %885 = vector.load %arg15[%c3_603, %c0_604, %c0_605] : memref<4x8x32xf32, #tpu.memory_space<vmem>>, vector<1x8x32xf32>
    %886 = vector.shape_cast %885 : vector<1x8x32xf32> to vector<8x32xf32>
    %cst_606 = arith.constant dense<0.000000e+00> : vector<8x32xf32>
    %887 = tpu.matmul %884, %886, %cst_606 {dimension_numbers = #tpu.dot_dimension_numbers<[1], [0], [0], [1], [0, 0, 1, 1], [], []>} : vector<8x8xf32>, vector<8x32xf32>, vector<8x32xf32> -> vector<8x32xf32>
    %888 = arith.addf %849, %887 : vector<8x32xf32>
    %889 = arith.addf %888, %730 : vector<8x32xf32>
    %c0_607 = arith.constant 0 : index
    %c0_608 = arith.constant 0 : index
    %890 = vector.load %arg17[%c0_607, %c0_608] : memref<1x32xf32, #tpu.memory_space<vmem>>, vector<1x32xf32>
    %c0_609 = arith.constant 0 : index
    %c0_610 = arith.constant 0 : index
    %891 = vector.load %arg18[%c0_609, %c0_610] : memref<1x32xf32, #tpu.memory_space<vmem>>, vector<1x32xf32>
    %cst_611 = arith.constant dense<0.000000e+00> : vector<8xf32>
    %892 = vector.multi_reduction <add>, %889, %cst_611 [1] : vector<8x32xf32> to vector<8xf32>
    %893 = vector.shape_cast %892 : vector<8xf32> to vector<8x1xf32>
    %cst_612 = arith.constant 3.200000e+01 : f32
    %894 = vector.broadcast %cst_612 : f32 to vector<8x1xf32>
    %895 = arith.divf %893, %894 : vector<8x1xf32>
    %896 = vector.broadcast %895 : vector<8x1xf32> to vector<8x32xf32>
    %897 = arith.subf %889, %896 : vector<8x32xf32>
    %898 = arith.mulf %897, %897 : vector<8x32xf32>
    %cst_613 = arith.constant dense<0.000000e+00> : vector<8xf32>
    %899 = vector.multi_reduction <add>, %898, %cst_613 [1] : vector<8x32xf32> to vector<8xf32>
    %900 = vector.shape_cast %899 : vector<8xf32> to vector<8x1xf32>
    %cst_614 = arith.constant 3.200000e+01 : f32
    %901 = vector.broadcast %cst_614 : f32 to vector<8x1xf32>
    %902 = arith.divf %900, %901 : vector<8x1xf32>
    %903 = vector.broadcast %895 : vector<8x1xf32> to vector<8x32xf32>
    %904 = arith.subf %889, %903 : vector<8x32xf32>
    %cst_615 = arith.constant 9.99999996E-13 : f32
    %905 = vector.broadcast %cst_615 : f32 to vector<8x1xf32>
    %906 = arith.addf %902, %905 : vector<8x1xf32>
    %907 = math.rsqrt %906 : vector<8x1xf32>
    %908 = vector.broadcast %907 : vector<8x1xf32> to vector<8x32xf32>
    %909 = arith.mulf %904, %908 : vector<8x32xf32>
    %910 = vector.broadcast %890 : vector<1x32xf32> to vector<8x32xf32>
    %911 = arith.mulf %909, %910 : vector<8x32xf32>
    %912 = vector.broadcast %891 : vector<1x32xf32> to vector<8x32xf32>
    %913 = arith.addf %911, %912 : vector<8x32xf32>
    %c0_616 = arith.constant 0 : index
    %c0_617 = arith.constant 0 : index
    %914 = vector.load %arg19[%c0_616, %c0_617] : memref<32x64xf32, #tpu.memory_space<vmem>>, vector<32x64xf32>
    %cst_618 = arith.constant dense<0.000000e+00> : vector<8x64xf32>
    %915 = tpu.matmul %913, %914, %cst_618 {dimension_numbers = #tpu.dot_dimension_numbers<[1], [0], [0], [1], [0, 0, 1, 1], [], []>} : vector<8x32xf32>, vector<32x64xf32>, vector<8x64xf32> -> vector<8x64xf32>
    %c0_619 = arith.constant 0 : index
    %c0_620 = arith.constant 0 : index
    %916 = vector.load %arg20[%c0_619, %c0_620] : memref<1x64xf32, #tpu.memory_space<vmem>>, vector<1x64xf32>
    %917 = vector.broadcast %916 : vector<1x64xf32> to vector<8x64xf32>
    %918 = arith.addf %915, %917 : vector<8x64xf32>
    %cst_621 = arith.constant 5.000000e-01 : f32
    %919 = vector.broadcast %cst_621 : f32 to vector<8x64xf32>
    %920 = arith.mulf %919, %918 : vector<8x64xf32>
    %cst_622 = arith.constant 0.707106769 : f32
    %921 = vector.broadcast %cst_622 : f32 to vector<8x64xf32>
    %922 = arith.mulf %918, %921 : vector<8x64xf32>
    %923 = math.erf %922 : vector<8x64xf32>
    %cst_623 = arith.constant 1.000000e+00 : f32
    %924 = vector.broadcast %cst_623 : f32 to vector<8x64xf32>
    %925 = arith.addf %924, %923 : vector<8x64xf32>
    %926 = arith.mulf %920, %925 : vector<8x64xf32>
    %c0_624 = arith.constant 0 : index
    %c0_625 = arith.constant 0 : index
    %927 = vector.load %arg21[%c0_624, %c0_625] : memref<64x32xf32, #tpu.memory_space<vmem>>, vector<64x32xf32>
    %cst_626 = arith.constant dense<0.000000e+00> : vector<8x32xf32>
    %928 = tpu.matmul %926, %927, %cst_626 {dimension_numbers = #tpu.dot_dimension_numbers<[1], [0], [0], [1], [0, 0, 1, 1], [], []>} : vector<8x64xf32>, vector<64x32xf32>, vector<8x32xf32> -> vector<8x32xf32>
    %c0_627 = arith.constant 0 : index
    %c0_628 = arith.constant 0 : index
    %929 = vector.load %arg22[%c0_627, %c0_628] : memref<1x32xf32, #tpu.memory_space<vmem>>, vector<1x32xf32>
    %930 = vector.broadcast %929 : vector<1x32xf32> to vector<8x32xf32>
    %931 = arith.addf %928, %930 : vector<8x32xf32>
    %932 = arith.addf %931, %913 : vector<8x32xf32>
    %c0_629 = arith.constant 0 : index
    %c0_630 = arith.constant 0 : index
    %933 = vector.load %arg23[%c0_629, %c0_630] : memref<1x32xf32, #tpu.memory_space<vmem>>, vector<1x32xf32>
    %c0_631 = arith.constant 0 : index
    %c0_632 = arith.constant 0 : index
    %934 = vector.load %arg24[%c0_631, %c0_632] : memref<1x32xf32, #tpu.memory_space<vmem>>, vector<1x32xf32>
    %cst_633 = arith.constant dense<0.000000e+00> : vector<8xf32>
    %935 = vector.multi_reduction <add>, %932, %cst_633 [1] : vector<8x32xf32> to vector<8xf32>
    %936 = vector.shape_cast %935 : vector<8xf32> to vector<8x1xf32>
    %cst_634 = arith.constant 3.200000e+01 : f32
    %937 = vector.broadcast %cst_634 : f32 to vector<8x1xf32>
    %938 = arith.divf %936, %937 : vector<8x1xf32>
    %939 = vector.broadcast %938 : vector<8x1xf32> to vector<8x32xf32>
    %940 = arith.subf %932, %939 : vector<8x32xf32>
    %941 = arith.mulf %940, %940 : vector<8x32xf32>
    %cst_635 = arith.constant dense<0.000000e+00> : vector<8xf32>
    %942 = vector.multi_reduction <add>, %941, %cst_635 [1] : vector<8x32xf32> to vector<8xf32>
    %943 = vector.shape_cast %942 : vector<8xf32> to vector<8x1xf32>
    %cst_636 = arith.constant 3.200000e+01 : f32
    %944 = vector.broadcast %cst_636 : f32 to vector<8x1xf32>
    %945 = arith.divf %943, %944 : vector<8x1xf32>
    %946 = vector.broadcast %938 : vector<8x1xf32> to vector<8x32xf32>
    %947 = arith.subf %932, %946 : vector<8x32xf32>
    %cst_637 = arith.constant 9.99999996E-13 : f32
    %948 = vector.broadcast %cst_637 : f32 to vector<8x1xf32>
    %949 = arith.addf %945, %948 : vector<8x1xf32>
    %950 = math.rsqrt %949 : vector<8x1xf32>
    %951 = vector.broadcast %950 : vector<8x1xf32> to vector<8x32xf32>
    %952 = arith.mulf %947, %951 : vector<8x32xf32>
    %953 = vector.broadcast %933 : vector<1x32xf32> to vector<8x32xf32>
    %954 = arith.mulf %952, %953 : vector<8x32xf32>
    %955 = vector.broadcast %934 : vector<1x32xf32> to vector<8x32xf32>
    %956 = arith.addf %954, %955 : vector<8x32xf32>
    %c0_638 = arith.constant 0 : index
    %c0_639 = arith.constant 0 : index
    %957 = vector.load %arg25[%c0_638, %c0_639] : memref<32x32xf32, #tpu.memory_space<vmem>>, vector<32x32xf32>
    %cst_640 = arith.constant dense<0.000000e+00> : vector<8x32xf32>
    %958 = tpu.matmul %956, %957, %cst_640 {dimension_numbers = #tpu.dot_dimension_numbers<[1], [0], [0], [1], [0, 0, 1, 1], [], []>} : vector<8x32xf32>, vector<32x32xf32>, vector<8x32xf32> -> vector<8x32xf32>
    %c0_641 = arith.constant 0 : index
    %c0_642 = arith.constant 0 : index
    %959 = vector.load %arg26[%c0_641, %c0_642] : memref<1x32xf32, #tpu.memory_space<vmem>>, vector<1x32xf32>
    %960 = vector.broadcast %959 : vector<1x32xf32> to vector<8x32xf32>
    %961 = arith.addf %958, %960 : vector<8x32xf32>
    %cst_643 = arith.constant 5.000000e-01 : f32
    %962 = vector.broadcast %cst_643 : f32 to vector<8x32xf32>
    %963 = arith.mulf %962, %961 : vector<8x32xf32>
    %cst_644 = arith.constant 0.707106769 : f32
    %964 = vector.broadcast %cst_644 : f32 to vector<8x32xf32>
    %965 = arith.mulf %961, %964 : vector<8x32xf32>
    %966 = math.erf %965 : vector<8x32xf32>
    %cst_645 = arith.constant 1.000000e+00 : f32
    %967 = vector.broadcast %cst_645 : f32 to vector<8x32xf32>
    %968 = arith.addf %967, %966 : vector<8x32xf32>
    %969 = arith.mulf %963, %968 : vector<8x32xf32>
    %c0_646 = arith.constant 0 : index
    %c0_647 = arith.constant 0 : index
    %970 = vector.load %arg27[%c0_646, %c0_647] : memref<1x32xf32, #tpu.memory_space<vmem>>, vector<1x32xf32>
    %c0_648 = arith.constant 0 : index
    %c0_649 = arith.constant 0 : index
    %971 = vector.load %arg28[%c0_648, %c0_649] : memref<1x32xf32, #tpu.memory_space<vmem>>, vector<1x32xf32>
    %cst_650 = arith.constant dense<0.000000e+00> : vector<8xf32>
    %972 = vector.multi_reduction <add>, %969, %cst_650 [1] : vector<8x32xf32> to vector<8xf32>
    %973 = vector.shape_cast %972 : vector<8xf32> to vector<8x1xf32>
    %cst_651 = arith.constant 3.200000e+01 : f32
    %974 = vector.broadcast %cst_651 : f32 to vector<8x1xf32>
    %975 = arith.divf %973, %974 : vector<8x1xf32>
    %976 = vector.broadcast %975 : vector<8x1xf32> to vector<8x32xf32>
    %977 = arith.subf %969, %976 : vector<8x32xf32>
    %978 = arith.mulf %977, %977 : vector<8x32xf32>
    %cst_652 = arith.constant dense<0.000000e+00> : vector<8xf32>
    %979 = vector.multi_reduction <add>, %978, %cst_652 [1] : vector<8x32xf32> to vector<8xf32>
    %980 = vector.shape_cast %979 : vector<8xf32> to vector<8x1xf32>
    %cst_653 = arith.constant 3.200000e+01 : f32
    %981 = vector.broadcast %cst_653 : f32 to vector<8x1xf32>
    %982 = arith.divf %980, %981 : vector<8x1xf32>
    %983 = vector.broadcast %975 : vector<8x1xf32> to vector<8x32xf32>
    %984 = arith.subf %969, %983 : vector<8x32xf32>
    %cst_654 = arith.constant 9.99999996E-13 : f32
    %985 = vector.broadcast %cst_654 : f32 to vector<8x1xf32>
    %986 = arith.addf %982, %985 : vector<8x1xf32>
    %987 = math.rsqrt %986 : vector<8x1xf32>
    %988 = vector.broadcast %987 : vector<8x1xf32> to vector<8x32xf32>
    %989 = arith.mulf %984, %988 : vector<8x32xf32>
    %990 = vector.broadcast %970 : vector<1x32xf32> to vector<8x32xf32>
    %991 = arith.mulf %989, %990 : vector<8x32xf32>
    %992 = vector.broadcast %971 : vector<1x32xf32> to vector<8x32xf32>
    %993 = arith.addf %991, %992 : vector<8x32xf32>
    %c0_655 = arith.constant 0 : index
    %c0_656 = arith.constant 0 : index
    %994 = vector.load %arg29[%c0_655, %c0_656] : memref<32x96xf32, #tpu.memory_space<vmem>>, vector<32x96xf32>
    %cst_657 = arith.constant dense<0.000000e+00> : vector<8x96xf32>
    %995 = tpu.matmul %993, %994, %cst_657 {dimension_numbers = #tpu.dot_dimension_numbers<[1], [0], [0], [1], [0, 0, 1, 1], [], []>} : vector<8x32xf32>, vector<32x96xf32>, vector<8x96xf32> -> vector<8x96xf32>
    %c0_658 = arith.constant 0 : index
    %c0_659 = arith.constant 0 : index
    %996 = vector.load %arg30[%c0_658, %c0_659] : memref<1x96xf32, #tpu.memory_space<vmem>>, vector<1x96xf32>
    %997 = vector.broadcast %996 : vector<1x96xf32> to vector<8x96xf32>
    %998 = arith.addf %995, %997 : vector<8x96xf32>
    %c1_660 = arith.constant 1 : index
    %c0_661 = arith.constant 0 : index
    %c0_662 = arith.constant 0 : index
    %999 = vector.load %arg31[%c1_660, %c0_661, %c0_662] : memref<2x8x96xf32, #tpu.memory_space<vmem>>, vector<1x8x96xf32>
    %1000 = vector.shape_cast %999 : vector<1x8x96xf32> to vector<8x96xf32>
    %1001 = vector.shape_cast %998 : vector<8x96xf32> to vector<1x8x96xf32>
    tpu.vector_store %arg31[%c1_660, %c0_661, %c0_662], %1001 {strides = array<i32>} : memref<2x8x96xf32, #tpu.memory_space<vmem>>, vector<1x8x96xf32>,
    return
  }
}

</mosaic_0001>

<llo_original>
// kernel: qarac_decoder_head.1
$region0: #{qarac_decoder_head.1}
  #allocation0 [shape = 'u32[]', space=smem, size = 0x4, offset = 0x4, fixed_abs, tag = 'smem constant byte address 0x4 - core index']
  #allocation1 [shape = 'u32[72,128]{1,0:T(1,128)}', space=vmem, size = 0x9000, scoped, tag = 'internal scratch']
  #allocation2 [shape = 'f32[9,32]{1,0:T(8,128)}', space=vmem, size = 0x2000, scoped, tag = 'scratch operand']
  %s0 = inlined_call_operand.smem [shape: u32[32], index: -1, kind: input, shape index: {}]
  %s1 = sld [smem:[%s0]]
  %s2 = scalar_lea.smem %s0, 1
  %s3 = sld [smem:[%s2]]
  %s4 = scalar_lea.smem %s0, 2
  %s5 = sld [smem:[%s4]]
  %s6 = scalar_lea.smem %s0, 3
  %s7 = sld [smem:[%s6]]
  %s8 = scalar_lea.smem %s0, 4
  %s9 = sld [smem:[%s8]]
  %s10 = scalar_lea.smem %s0, 5
  %s11 = sld [smem:[%s10]]
  %s12 = scalar_lea.smem %s0, 6
  %s13 = sld [smem:[%s12]]
  %s14 = scalar_lea.smem %s0, 7
  %s15 = sld [smem:[%s14]]
  %s16 = scalar_lea.smem %s0, 8
  %s17 = sld [smem:[%s16]]
  %s18 = scalar_lea.smem %s0, 9
  %s19 = sld [smem:[%s18]]
  %s20 = scalar_lea.smem %s0, 10
  %s21 = sld [smem:[%s20]]
  %s22 = scalar_lea.smem %s0, 11
  %s23 = sld [smem:[%s22]]
  %s24 = scalar_lea.smem %s0, 12
  %s25 = sld [smem:[%s24]]
  %s26 = scalar_lea.smem %s0, 13
  %s27 = sld [smem:[%s26]]
  %s28 = scalar_lea.smem %s0, 14
  %s29 = sld [smem:[%s28]]
  %s30 = scalar_lea.smem %s0, 15
  %s31 = sld [smem:[%s30]]
  %s32 = scalar_lea.smem %s0, 16
  %s33 = sld [smem:[%s32]]
  %s34 = scalar_lea.smem %s0, 17
  %s35 = sld [smem:[%s34]]
  %s36 = scalar_lea.smem %s0, 18
  %s37 = sld [smem:[%s36]]
  %s38 = scalar_lea.smem %s0, 19
  %s39 = sld [smem:[%s38]]
  %s40 = scalar_lea.smem %s0, 20
  %s41 = sld [smem:[%s40]]
  %s42 = scalar_lea.smem %s0, 21
  %s43 = sld [smem:[%s42]]
  %s44 = scalar_lea.smem %s0, 22
  %s45 = sld [smem:[%s44]]
  %s46 = scalar_lea.smem %s0, 23
  %s47 = sld [smem:[%s46]]
  %s48 = scalar_lea.smem %s0, 24
  %s49 = sld [smem:[%s48]]
  %s50 = scalar_lea.smem %s0, 25
  %s51 = sld [smem:[%s50]]
  %s52 = scalar_lea.smem %s0, 26
  %s53 = sld [smem:[%s52]]
  %s54 = scalar_lea.smem %s0, 27
  %s55 = sld [smem:[%s54]]
  %s56 = scalar_lea.smem %s0, 28
  %s57 = sld [smem:[%s56]]
  %s58 = scalar_lea.smem %s0, 29
  %s59 = sld [smem:[%s58]]
  %s60 = scalar_lea.smem %s0, 30
  %s61 = sld [smem:[%s60]]
  %s62 = scalar_lea.smem %s0, 31
  %s63 = sld [smem:[%s62]]
  %s64 = sld [smem:[#allocation0]]
  $region134: #{qarac_decoder_head.1} parent=0
    _
  %s66 = ssub.s32 1, %s64
  %s67 = scalar_select 0, %s66, %s64
  $region1: #{qarac_decoder_head.1} parent=0
    #allocation3 [shape = 'u8[8192]{0}', space=vmem, size = 0x2000, scoped, tag = 'output window, operand 0, single buffered']
    #allocation4 [shape = 's32[1]{0}', space=sflag, size = 0x4, scoped, tag = 'scoped memory for qarac_decoder_head.1']
    %68 = vsyncpa [#allocation4], 0
    // Predicated region
    $region2: #{qarac_decoder_head.1} parent=1 // pred_check
      _
    $region3: #{qarac_decoder_head.1} parent=1 // pred_check_branch
      %70 = sbr.rel (0) target = $region5
    $region4: #{qarac_decoder_head.1} parent=1 // pred_region
      _
    $region5: #{qarac_decoder_head.1} parent=1 // pred_fallthru
      _
    // Predicated region
    $region6: #{qarac_decoder_head.1} parent=1 // pred_check
      _
    $region7: #{qarac_decoder_head.1} parent=1 // pred_check_branch
      %72 = sbr.rel (0) target = $region9
    $region8: #{qarac_decoder_head.1} parent=1 // pred_region
      _
    $region9: #{qarac_decoder_head.1} parent=1 // pred_fallthru
      _
    // Predicated region
    $region10: #{qarac_decoder_head.1} parent=1 // pred_check
      _
    $region11: #{qarac_decoder_head.1} parent=1 // pred_check_branch
      %74 = sbr.rel (0) target = $region13
    $region12: #{qarac_decoder_head.1} parent=1 // pred_region
      _
    $region13: #{qarac_decoder_head.1} parent=1 // pred_fallthru
      _
    // Predicated region
    $region14: #{qarac_decoder_head.1} parent=1 // pred_check
      _
    $region15: #{qarac_decoder_head.1} parent=1 // pred_check_branch
      %76 = sbr.rel (0) target = $region17
    $region16: #{qarac_decoder_head.1} parent=1 // pred_region
      _
    $region17: #{qarac_decoder_head.1} parent=1 // pred_fallthru
      _
    // Predicated region
    $region18: #{qarac_decoder_head.1} parent=1 // pred_check
      _
    $region19: #{qarac_decoder_head.1} parent=1 // pred_check_branch
      %78 = sbr.rel (0) target = $region21
    $region20: #{qarac_decoder_head.1} parent=1 // pred_region
      _
    $region21: #{qarac_decoder_head.1} parent=1 // pred_fallthru
      _
    // Predicated region
    $region22: #{qarac_decoder_head.1} parent=1 // pred_check
      _
    $region23: #{qarac_decoder_head.1} parent=1 // pred_check_branch
      %80 = sbr.rel (0) target = $region25
    $region24: #{qarac_decoder_head.1} parent=1 // pred_region
      _
    $region25: #{qarac_decoder_head.1} parent=1 // pred_fallthru
      _
    // Predicated region
    $region26: #{qarac_decoder_head.1} parent=1 // pred_check
      _
    $region27: #{qarac_decoder_head.1} parent=1 // pred_check_branch
      %82 = sbr.rel (0) target = $region29
    $region28: #{qarac_decoder_head.1} parent=1 // pred_region
      _
    $region29: #{qarac_decoder_head.1} parent=1 // pred_fallthru
      _
    // Predicated region
    $region30: #{qarac_decoder_head.1} parent=1 // pred_check
      _
    $region31: #{qarac_decoder_head.1} parent=1 // pred_check_branch
      %84 = sbr.rel (0) target = $region33
    $region32: #{qarac_decoder_head.1} parent=1 // pred_region
      _
    $region33: #{qarac_decoder_head.1} parent=1 // pred_fallthru
      _
    // Predicated region
    $region34: #{qarac_decoder_head.1} parent=1 // pred_check
      _
    $region35: #{qarac_decoder_head.1} parent=1 // pred_check_branch
      %86 = sbr.rel (0) target = $region37
    $region36: #{qarac_decoder_head.1} parent=1 // pred_region
      _
    $region37: #{qarac_decoder_head.1} parent=1 // pred_fallthru
      _
    // Predicated region
    $region38: #{qarac_decoder_head.1} parent=1 // pred_check
      _
    $region39: #{qarac_decoder_head.1} parent=1 // pred_check_branch
      %88 = sbr.rel (0) target = $region41
    $region40: #{qarac_decoder_head.1} parent=1 // pred_region
      _
    $region41: #{qarac_decoder_head.1} parent=1 // pred_fallthru
      _
    // Predicated region
    $region42: #{qarac_decoder_head.1} parent=1 // pred_check
      _
    $region43: #{qarac_decoder_head.1} parent=1 // pred_check_branch
      %90 = sbr.rel (0) target = $region45
    $region44: #{qarac_decoder_head.1} parent=1 // pred_region
      _
    $region45: #{qarac_decoder_head.1} parent=1 // pred_fallthru
      _
    // Predicated region
    $region46: #{qarac_decoder_head.1} parent=1 // pred_check
      _
    $region47: #{qarac_decoder_head.1} parent=1 // pred_check_branch
      %92 = sbr.rel (0) target = $region49
    $region48: #{qarac_decoder_head.1} parent=1 // pred_region
      _
    $region49: #{qarac_decoder_head.1} parent=1 // pred_fallthru
      _
    // Predicated region
    $region50: #{qarac_decoder_head.1} parent=1 // pred_check
      _
    $region51: #{qarac_decoder_head.1} parent=1 // pred_check_branch
      %94 = sbr.rel (0) target = $region53
    $region52: #{qarac_decoder_head.1} parent=1 // pred_region
      _
    $region53: #{qarac_decoder_head.1} parent=1 // pred_fallthru
      _
    // Predicated region
    $region54: #{qarac_decoder_head.1} parent=1 // pred_check
      _
    $region55: #{qarac_decoder_head.1} parent=1 // pred_check_branch
      %96 = sbr.rel (0) target = $region57
    $region56: #{qarac_decoder_head.1} parent=1 // pred_region
      _
    $region57: #{qarac_decoder_head.1} parent=1 // pred_fallthru
      _
    // Predicated region
    $region58: #{qarac_decoder_head.1} parent=1 // pred_check
      _
    $region59: #{qarac_decoder_head.1} parent=1 // pred_check_branch
      %98 = sbr.rel (0) target = $region61
    $region60: #{qarac_decoder_head.1} parent=1 // pred_region
      _
    $region61: #{qarac_decoder_head.1} parent=1 // pred_fallthru
      _
    // Predicated region
    $region62: #{qarac_decoder_head.1} parent=1 // pred_check
      _
    $region63: #{qarac_decoder_head.1} parent=1 // pred_check_branch
      %100 = sbr.rel (0) target = $region65
    $region64: #{qarac_decoder_head.1} parent=1 // pred_region
      _
    $region65: #{qarac_decoder_head.1} parent=1 // pred_fallthru
      _
    // Predicated region
    $region66: #{qarac_decoder_head.1} parent=1 // pred_check
      _
    $region67: #{qarac_decoder_head.1} parent=1 // pred_check_branch
      %102 = sbr.rel (0) target = $region69
    $region68: #{qarac_decoder_head.1} parent=1 // pred_region
      _
    $region69: #{qarac_decoder_head.1} parent=1 // pred_fallthru
      _
    // Predicated region
    $region70: #{qarac_decoder_head.1} parent=1 // pred_check
      _
    $region71: #{qarac_decoder_head.1} parent=1 // pred_check_branch
      %104 = sbr.rel (0) target = $region73
    $region72: #{qarac_decoder_head.1} parent=1 // pred_region
      _
    $region73: #{qarac_decoder_head.1} parent=1 // pred_fallthru
      _
    // Predicated region
    $region74: #{qarac_decoder_head.1} parent=1 // pred_check
      _
    $region75: #{qarac_decoder_head.1} parent=1 // pred_check_branch
      %106 = sbr.rel (0) target = $region77
    $region76: #{qarac_decoder_head.1} parent=1 // pred_region
      _
    $region77: #{qarac_decoder_head.1} parent=1 // pred_fallthru
      _
    // Predicated region
    $region78: #{qarac_decoder_head.1} parent=1 // pred_check
      _
    $region79: #{qarac_decoder_head.1} parent=1 // pred_check_branch
      %108 = sbr.rel (0) target = $region81
    $region80: #{qarac_decoder_head.1} parent=1 // pred_region
      _
    $region81: #{qarac_decoder_head.1} parent=1 // pred_fallthru
      _
    // Predicated region
    $region82: #{qarac_decoder_head.1} parent=1 // pred_check
      _
    $region83: #{qarac_decoder_head.1} parent=1 // pred_check_branch
      %110 = sbr.rel (0) target = $region85
    $region84: #{qarac_decoder_head.1} parent=1 // pred_region
      _
    $region85: #{qarac_decoder_head.1} parent=1 // pred_fallthru
      _
    // Predicated region
    $region86: #{qarac_decoder_head.1} parent=1 // pred_check
      _
    $region87: #{qarac_decoder_head.1} parent=1 // pred_check_branch
      %112 = sbr.rel (0) target = $region89
    $region88: #{qarac_decoder_head.1} parent=1 // pred_region
      _
    $region89: #{qarac_decoder_head.1} parent=1 // pred_fallthru
      _
    // Predicated region
    $region90: #{qarac_decoder_head.1} parent=1 // pred_check
      _
    $region91: #{qarac_decoder_head.1} parent=1 // pred_check_branch
      %114 = sbr.rel (0) target = $region93
    $region92: #{qarac_decoder_head.1} parent=1 // pred_region
      _
    $region93: #{qarac_decoder_head.1} parent=1 // pred_fallthru
      _
    // Predicated region
    $region94: #{qarac_decoder_head.1} parent=1 // pred_check
      _
    $region95: #{qarac_decoder_head.1} parent=1 // pred_check_branch
      %116 = sbr.rel (0) target = $region97
    $region96: #{qarac_decoder_head.1} parent=1 // pred_region
      _
    $region97: #{qarac_decoder_head.1} parent=1 // pred_fallthru
      _
    // Predicated region
    $region98: #{qarac_decoder_head.1} parent=1 // pred_check
      _
    $region99: #{qarac_decoder_head.1} parent=1 // pred_check_branch
      %118 = sbr.rel (0) target = $region101
    $region100: #{qarac_decoder_head.1} parent=1 // pred_region
      _
    $region101: #{qarac_decoder_head.1} parent=1 // pred_fallthru
      _
    // Predicated region
    $region102: #{qarac_decoder_head.1} parent=1 // pred_check
      _
    $region103: #{qarac_decoder_head.1} parent=1 // pred_check_branch
      %120 = sbr.rel (0) target = $region105
    $region104: #{qarac_decoder_head.1} parent=1 // pred_region
      _
    $region105: #{qarac_decoder_head.1} parent=1 // pred_fallthru
      _
    // Predicated region
    $region106: #{qarac_decoder_head.1} parent=1 // pred_check
      _
    $region107: #{qarac_decoder_head.1} parent=1 // pred_check_branch
      %122 = sbr.rel (0) target = $region109
    $region108: #{qarac_decoder_head.1} parent=1 // pred_region
      _
    $region109: #{qarac_decoder_head.1} parent=1 // pred_fallthru
      _
    // Predicated region
    $region110: #{qarac_decoder_head.1} parent=1 // pred_check
      _
    $region111: #{qarac_decoder_head.1} parent=1 // pred_check_branch
      %124 = sbr.rel (0) target = $region113
    $region112: #{qarac_decoder_head.1} parent=1 // pred_region
      _
    $region113: #{qarac_decoder_head.1} parent=1 // pred_fallthru
      _
    // Predicated region
    $region114: #{qarac_decoder_head.1} parent=1 // pred_check
      _
    $region115: #{qarac_decoder_head.1} parent=1 // pred_check_branch
      %126 = sbr.rel (0) target = $region117
    $region116: #{qarac_decoder_head.1} parent=1 // pred_region
      _
    $region117: #{qarac_decoder_head.1} parent=1 // pred_fallthru
      _
    // Predicated region
    $region118: #{qarac_decoder_head.1} parent=1 // pred_check
      _
    $region119: #{qarac_decoder_head.1} parent=1 // pred_check_branch
      %128 = sbr.rel (0) target = $region121
    $region120: #{qarac_decoder_head.1} parent=1 // pred_region
      _
    $region121: #{qarac_decoder_head.1} parent=1 // pred_fallthru
      _
    // Predicated region
    $region122: #{qarac_decoder_head.1} parent=1 // pred_check
      _
    $region123: #{qarac_decoder_head.1} parent=1 // pred_check_branch
      %130 = sbr.rel (0) target = $region125
    $region124: #{qarac_decoder_head.1} parent=1 // pred_region
      _
    $region125: #{qarac_decoder_head.1} parent=1 // pred_fallthru
      _
    %v131 = vld [vmem:[%s1] sm:$0xff]
    %v132 = vld [vmem:[%s1 + $0x8] sm:$0x1]
    %v133 = vld [vmem:[%s9] sm:$0x1]
    %v134 = vld [vmem:[%s3] sm:$0xff]
    %v135 = vld [vmem:[%s3 + $0x8] sm:$0xff]
    %v136 = vld [vmem:[%s3 + $0x10] sm:$0xff]
    %v137 = vld [vmem:[%s3 + $0x18] sm:$0xff]
    %v138 = vld [vmem:[%s5] sm:$0x1]
    %v140 = vperm.slane %v138, 0
    %vm142 = vcmask 261120
    %v144 = vsel %vm142, %v131, 0
    %v147 = vsel %vm142, %v132, 0
    %149 = vmatpush.msra.mxu0 0.0
    %150 = vmatpush.msra.mxu0 0.0
    %151 = vmatpush.msra.mxu0 0.0
    %152 = vmatpush.msra.mxu0 0.0
    %153 = vmatpush.msra.mxu0 0.0
    %154 = vmatpush.msra.mxu0 0.0
    %155 = vmatpush.msra.mxu0 0.0
    %156 = vmatpush.msra.mxu0 0.0
    %157 = vmatpush.msra.mxu0 0.0
    %158 = vmatpush.msra.mxu0 0.0
    %159 = vmatpush.msra.mxu0 0.0
    %160 = vmatpush.msra.mxu0 0.0
    %161 = vmatpush.msra.mxu0 %v137
    %162 = vmatpush.msra.mxu0 %v136
    %163 = vmatpush.msra.mxu0 %v135
    %164 = vmatpush.msra.mxu0 %v134
    %165 = vmatmul.f32.gmra.mxu0 %v144
    %v166 = vpop.f32.mrf.mxu0
    %v167 = vadd.f32 %v140, %v166
    %168 = vmatmul.f32.gmra.mxu0 %v147
    %v169 = vpop.f32.mrf.mxu0
    %v170 = vadd.f32 %v140, %v169
    %171 = vdwg.mxu0
    %s172 = scalar_lea.vmem %s3, 128
    %v173 = vld [vmem:[%s172] sm:$0xff]
    %v174 = vld [vmem:[%s172 + $0x8] sm:$0xff]
    %v175 = vld [vmem:[%s172 + $0x10] sm:$0xff]
    %v176 = vld [vmem:[%s172 + $0x18] sm:$0xff]
    %s177 = scalar_lea.vmem %s5, 4
    %v178 = vld [vmem:[%s177] sm:$0x1]
    %v180 = vperm.slane %v178, 0
    %182 = vmatpush.msra.mxu0 0.0
    %183 = vmatpush.msra.mxu0 0.0
    %184 = vmatpush.msra.mxu0 0.0
    %185 = vmatpush.msra.mxu0 0.0
    %186 = vmatpush.msra.mxu0 0.0
    %187 = vmatpush.msra.mxu0 0.0
    %188 = vmatpush.msra.mxu0 0.0
    %189 = vmatpush.msra.mxu0 0.0
    %190 = vmatpush.msra.mxu0 0.0
    %191 = vmatpush.msra.mxu0 0.0
    %192 = vmatpush.msra.mxu0 0.0
    %193 = vmatpush.msra.mxu0 0.0
    %194 = vmatpush.msra.mxu0 %v176
    %195 = vmatpush.msra.mxu0 %v175
    %196 = vmatpush.msra.mxu0 %v174
    %197 = vmatpush.msra.mxu0 %v173
    %198 = vmatmul.f32.gmra.mxu0 %v144
    %v199 = vpop.f32.mrf.mxu0
    %v200 = vadd.f32 %v180, %v199
    %201 = vmatmul.f32.gmra.mxu0 %v147
    %v202 = vpop.f32.mrf.mxu0
    %v203 = vadd.f32 %v180, %v202
    %204 = vdwg.mxu0
    %s205 = scalar_lea.vmem %s3, 256
    %v206 = vld [vmem:[%s205] sm:$0xff]
    %v207 = vld [vmem:[%s205 + $0x8] sm:$0xff]
    %v208 = vld [vmem:[%s205 + $0x10] sm:$0xff]
    %v209 = vld [vmem:[%s205 + $0x18] sm:$0xff]
    %s210 = scalar_lea.vmem %s5, 8
    %v211 = vld [vmem:[%s210] sm:$0x1]
    %v213 = vperm.slane %v211, 0
    %215 = vmatpush.msra.mxu0 0.0
    %216 = vmatpush.msra.mxu0 0.0
    %217 = vmatpush.msra.mxu0 0.0
    %218 = vmatpush.msra.mxu0 0.0
    %219 = vmatpush.msra.mxu0 0.0
    %220 = vmatpush.msra.mxu0 0.0
    %221 = vmatpush.msra.mxu0 0.0
    %222 = vmatpush.msra.mxu0 0.0
    %223 = vmatpush.msra.mxu0 0.0
    %224 = vmatpush.msra.mxu0 0.0
    %225 = vmatpush.msra.mxu0 0.0
    %226 = vmatpush.msra.mxu0 0.0
    %227 = vmatpush.msra.mxu0 %v209
    %228 = vmatpush.msra.mxu0 %v208
    %229 = vmatpush.msra.mxu0 %v207
    %230 = vmatpush.msra.mxu0 %v206
    %231 = vmatmul.f32.gmra.mxu0 %v144
    %v232 = vpop.f32.mrf.mxu0
    %v233 = vadd.f32 %v213, %v232
    %234 = vmatmul.f32.gmra.mxu0 %v147
    %v235 = vpop.f32.mrf.mxu0
    %v236 = vadd.f32 %v213, %v235
    %237 = vdwg.mxu0
    %vm238 = vcmask 64512
    %v240 = vsel %vm238, %v167, 0
    %v243 = vsel %vm238, %v170, 0
    %v246 = vsel %vm238, %v200, 0
    %v249 = vsel %vm238, %v203, 0
    %251 = vmatpush.xpose.msra.mxu0 0.0
    %252 = vmatpush.xpose.msra.mxu0 0.0
    %253 = vmatpush.xpose.msra.mxu0 0.0
    %254 = vmatpush.xpose.msra.mxu0 0.0
    %255 = vmatpush.xpose.msra.mxu0 0.0
    %256 = vmatpush.xpose.msra.mxu0 0.0
    %257 = vmatpush.xpose.msra.mxu0 0.0
    %258 = vmatpush.xpose.msra.mxu0 0.0
    %259 = vmatpush.xpose.msra.mxu0 0.0
    %260 = vmatpush.xpose.msra.mxu0 0.0
    %261 = vmatpush.xpose.msra.mxu0 0.0
    %262 = vmatpush.xpose.msra.mxu0 0.0
    %263 = vmatpush.xpose.msra.mxu0 0.0
    %264 = vmatpush.xpose.msra.mxu0 0.0
    %265 = vmatpush.xpose.msra.mxu0 %v249
    %266 = vmatpush.xpose.msra.mxu0 %v246
    %267 = vmatmul.f32.gmra.mxu0 %v240
    %v268 = vpop.f32.mrf.mxu0
    %v269 = vadd.f32 0.0, %v268
    %270 = vmatmul.f32.gmra.mxu0 %v243
    %v271 = vpop.f32.mrf.mxu0
    %v272 = vadd.f32 0.0, %v271
    %273 = vdwg.mxu0
    %v274 = vmul.f32 %v269, 0.35355338
    %v275 = vmul.f32 %v272, 0.35355338
    %vm276 = vcmask 72704
    %v277 = vsel %vm276, %v274, -inf
    %278 = vmax.xlane.f32.xlu0 %v277
    %v279 = vpop.xlane.xlu0 %278
    %vm280 = vcmask 65536
    %v281 = vsel %vm280, %v275, -inf
    %282 = vmax.xlane.f32.xlu0 %v281
    %v283 = vpop.xlane.xlu0 %282
    %v284 = vsub.f32 %v274, %v279
    %v285 = vsub.f32 %v275, %v283
    %v286 = vmul.f32 %v284, 1.442695
    %v287 = vpow.pop %v286
    %v288 = vmul.f32 %v285, 1.442695
    %v289 = vpow.pop %v288
    %v290 = vsel %vm276, %v287, 0.0
    %291 = vadd.xlane.f32.xlu0 %v290
    %v292 = vpop.xlane.xlu0 %291
    %v293 = vsel %vm280, %v289, 0.0
    %294 = vadd.xlane.f32.xlu0 %v293
    %v295 = vpop.xlane.xlu0 %294
    %v296 = vrcp.pop %v292
    %v297 = vrcp.pop %v295
    %v298 = vmul.f32 %v287, %v296
    %v299 = vmul.f32 %v289, %v297
    %v301 = vsel %vm276, %v298, 0
    %v304 = vsel %vm276, %v299, 0
    %vm306 = vcmask 1040384
    %v308 = vsel %vm306, %v236, 0
    %310 = vmatpush.msra.mxu0 0.0
    %311 = vmatpush.msra.mxu0 0.0
    %312 = vmatpush.msra.mxu0 0.0
    %313 = vmatpush.msra.mxu0 0.0
    %314 = vmatpush.msra.mxu0 0.0
    %315 = vmatpush.msra.mxu0 0.0
    %316 = vmatpush.msra.mxu0 0.0
    %317 = vmatpush.msra.mxu0 0.0
    %318 = vmatpush.msra.mxu0 0.0
    %319 = vmatpush.msra.mxu0 0.0
    %320 = vmatpush.msra.mxu0 0.0
    %321 = vmatpush.msra.mxu0 0.0
    %322 = vmatpush.msra.mxu0 0.0
    %323 = vmatpush.msra.mxu0 0.0
    %324 = vmatpush.msra.mxu0 %v308
    %325 = vmatpush.msra.mxu0 %v233
    %326 = vmatmul.f32.gmra.mxu0 %v301
    %v327 = vpop.f32.mrf.mxu0
    %v328 = vadd.f32 0.0, %v327
    %329 = vmatmul.f32.gmra.mxu0 %v304
    %v330 = vpop.f32.mrf.mxu0
    %v331 = vadd.f32 0.0, %v330
    %332 = vdwg.mxu0
    %v333 = vld [vmem:[%s7] sm:$0xff]
    %v335 = vsel %vm238, %v328, 0
    %v338 = vsel %vm238, %v331, 0
    %340 = vmatpush.msra.mxu0 0.0
    %341 = vmatpush.msra.mxu0 0.0
    %342 = vmatpush.msra.mxu0 0.0
    %343 = vmatpush.msra.mxu0 0.0
    %344 = vmatpush.msra.mxu0 0.0
    %345 = vmatpush.msra.mxu0 0.0
    %346 = vmatpush.msra.mxu0 0.0
    %347 = vmatpush.msra.mxu0 0.0
    %348 = vmatpush.msra.mxu0 0.0
    %349 = vmatpush.msra.mxu0 0.0
    %350 = vmatpush.msra.mxu0 0.0
    %351 = vmatpush.msra.mxu0 0.0
    %352 = vmatpush.msra.mxu0 0.0
    %353 = vmatpush.msra.mxu0 0.0
    %354 = vmatpush.msra.mxu0 0.0
    %355 = vmatpush.msra.mxu0 %v333
    %356 = vmatmul.f32.gmra.mxu0 %v335
    %v357 = vpop.f32.mrf.mxu0
    %v358 = vadd.f32 0.0, %v357
    %359 = vmatmul.f32.gmra.mxu0 %v338
    %v360 = vpop.f32.mrf.mxu0
    %v361 = vadd.f32 0.0, %v360
    %362 = vdwg.mxu0
    %v364 = vperm.slane %v133, 0
    %v366 = vadd.f32 %v364, %v358
    %v367 = vadd.f32 %v364, %v361
    %s368 = scalar_lea.vmem %s3, 32
    %v369 = vld [vmem:[%s368] sm:$0xff]
    %v370 = vld [vmem:[%s368 + $0x8] sm:$0xff]
    %v371 = vld [vmem:[%s368 + $0x10] sm:$0xff]
    %v372 = vld [vmem:[%s368 + $0x18] sm:$0xff]
    %s373 = scalar_lea.vmem %s5, 1
    %v374 = vld [vmem:[%s373] sm:$0x1]
    %v376 = vperm.slane %v374, 0
    %378 = vmatpush.msra.mxu0 0.0
    %379 = vmatpush.msra.mxu0 0.0
    %380 = vmatpush.msra.mxu0 0.0
    %381 = vmatpush.msra.mxu0 0.0
    %382 = vmatpush.msra.mxu0 0.0
    %383 = vmatpush.msra.mxu0 0.0
    %384 = vmatpush.msra.mxu0 0.0
    %385 = vmatpush.msra.mxu0 0.0
    %386 = vmatpush.msra.mxu0 0.0
    %387 = vmatpush.msra.mxu0 0.0
    %388 = vmatpush.msra.mxu0 0.0
    %389 = vmatpush.msra.mxu0 0.0
    %390 = vmatpush.msra.mxu0 %v372
    %391 = vmatpush.msra.mxu0 %v371
    %392 = vmatpush.msra.mxu0 %v370
    %393 = vmatpush.msra.mxu0 %v369
    %394 = vmatmul.f32.gmra.mxu0 %v144
    %v395 = vpop.f32.mrf.mxu0
    %v396 = vadd.f32 %v376, %v395
    %397 = vmatmul.f32.gmra.mxu0 %v147
    %v398 = vpop.f32.mrf.mxu0
    %v399 = vadd.f32 %v376, %v398
    %400 = vdwg.mxu0
    %s401 = scalar_lea.vmem %s3, 160
    %v402 = vld [vmem:[%s401] sm:$0xff]
    %v403 = vld [vmem:[%s401 + $0x8] sm:$0xff]
    %v404 = vld [vmem:[%s401 + $0x10] sm:$0xff]
    %v405 = vld [vmem:[%s401 + $0x18] sm:$0xff]
    %s406 = scalar_lea.vmem %s5, 5
    %v407 = vld [vmem:[%s406] sm:$0x1]
    %v409 = vperm.slane %v407, 0
    %411 = vmatpush.msra.mxu0 0.0
    %412 = vmatpush.msra.mxu0 0.0
    %413 = vmatpush.msra.mxu0 0.0
    %414 = vmatpush.msra.mxu0 0.0
    %415 = vmatpush.msra.mxu0 0.0
    %416 = vmatpush.msra.mxu0 0.0
    %417 = vmatpush.msra.mxu0 0.0
    %418 = vmatpush.msra.mxu0 0.0
    %419 = vmatpush.msra.mxu0 0.0
    %420 = vmatpush.msra.mxu0 0.0
    %421 = vmatpush.msra.mxu0 0.0
    %422 = vmatpush.msra.mxu0 0.0
    %423 = vmatpush.msra.mxu0 %v405
    %424 = vmatpush.msra.mxu0 %v404
    %425 = vmatpush.msra.mxu0 %v403
    %426 = vmatpush.msra.mxu0 %v402
    %427 = vmatmul.f32.gmra.mxu0 %v144
    %v428 = vpop.f32.mrf.mxu0
    %v429 = vadd.f32 %v409, %v428
    %430 = vmatmul.f32.gmra.mxu0 %v147
    %v431 = vpop.f32.mrf.mxu0
    %v432 = vadd.f32 %v409, %v431
    %433 = vdwg.mxu0
    %s434 = scalar_lea.vmem %s3, 288
    %v435 = vld [vmem:[%s434] sm:$0xff]
    %v436 = vld [vmem:[%s434 + $0x8] sm:$0xff]
    %v437 = vld [vmem:[%s434 + $0x10] sm:$0xff]
    %v438 = vld [vmem:[%s434 + $0x18] sm:$0xff]
    %s439 = scalar_lea.vmem %s5, 9
    %v440 = vld [vmem:[%s439] sm:$0x1]
    %v442 = vperm.slane %v440, 0
    %444 = vmatpush.msra.mxu0 0.0
    %445 = vmatpush.msra.mxu0 0.0
    %446 = vmatpush.msra.mxu0 0.0
    %447 = vmatpush.msra.mxu0 0.0
    %448 = vmatpush.msra.mxu0 0.0
    %449 = vmatpush.msra.mxu0 0.0
    %450 = vmatpush.msra.mxu0 0.0
    %451 = vmatpush.msra.mxu0 0.0
    %452 = vmatpush.msra.mxu0 0.0
    %453 = vmatpush.msra.mxu0 0.0
    %454 = vmatpush.msra.mxu0 0.0
    %455 = vmatpush.msra.mxu0 0.0
    %456 = vmatpush.msra.mxu0 %v438
    %457 = vmatpush.msra.mxu0 %v437
    %458 = vmatpush.msra.mxu0 %v436
    %459 = vmatpush.msra.mxu0 %v435
    %460 = vmatmul.f32.gmra.mxu0 %v144
    %v461 = vpop.f32.mrf.mxu0
    %v462 = vadd.f32 %v442, %v461
    %463 = vmatmul.f32.gmra.mxu0 %v147
    %v464 = vpop.f32.mrf.mxu0
    %v465 = vadd.f32 %v442, %v464
    %466 = vdwg.mxu0
    %v468 = vsel %vm238, %v396, 0
    %v471 = vsel %vm238, %v399, 0
    %v474 = vsel %vm238, %v429, 0
    %v477 = vsel %vm238, %v432, 0
    %479 = vmatpush.xpose.msra.mxu0 0.0
    %480 = vmatpush.xpose.msra.mxu0 0.0
    %481 = vmatpush.xpose.msra.mxu0 0.0
    %482 = vmatpush.xpose.msra.mxu0 0.0
    %483 = vmatpush.xpose.msra.mxu0 0.0
    %484 = vmatpush.xpose.msra.mxu0 0.0
    %485 = vmatpush.xpose.msra.mxu0 0.0
    %486 = vmatpush.xpose.msra.mxu0 0.0
    %487 = vmatpush.xpose.msra.mxu0 0.0
    %488 = vmatpush.xpose.msra.mxu0 0.0
    %489 = vmatpush.xpose.msra.mxu0 0.0
    %490 = vmatpush.xpose.msra.mxu0 0.0
    %491 = vmatpush.xpose.msra.mxu0 0.0
    %492 = vmatpush.xpose.msra.mxu0 0.0
    %493 = vmatpush.xpose.msra.mxu0 %v477
    %494 = vmatpush.xpose.msra.mxu0 %v474
    %495 = vmatmul.f32.gmra.mxu0 %v468
    %v496 = vpop.f32.mrf.mxu0
    %v497 = vadd.f32 0.0, %v496
    %498 = vmatmul.f32.gmra.mxu0 %v471
    %v499 = vpop.f32.mrf.mxu0
    %v500 = vadd.f32 0.0, %v499
    %501 = vdwg.mxu0
    %v502 = vmul.f32 %v497, 0.35355338
    %v503 = vmul.f32 %v500, 0.35355338
    %v504 = vsel %vm276, %v502, -inf
    %505 = vmax.xlane.f32.xlu0 %v504
    %v506 = vpop.xlane.xlu0 %505
    %v507 = vsel %vm280, %v503, -inf
    %508 = vmax.xlane.f32.xlu0 %v507
    %v509 = vpop.xlane.xlu0 %508
    %v510 = vsub.f32 %v502, %v506
    %v511 = vsub.f32 %v503, %v509
    %v512 = vmul.f32 %v510, 1.442695
    %v513 = vpow.pop %v512
    %v514 = vmul.f32 %v511, 1.442695
    %v515 = vpow.pop %v514
    %v516 = vsel %vm276, %v513, 0.0
    %517 = vadd.xlane.f32.xlu0 %v516
    %v518 = vpop.xlane.xlu0 %517
    %v519 = vsel %vm280, %v515, 0.0
    %520 = vadd.xlane.f32.xlu0 %v519
    %v521 = vpop.xlane.xlu0 %520
    %v522 = vrcp.pop %v518
    %v523 = vrcp.pop %v521
    %v524 = vmul.f32 %v513, %v522
    %v525 = vmul.f32 %v515, %v523
    %v527 = vsel %vm276, %v524, 0
    %v530 = vsel %vm276, %v525, 0
    %v533 = vsel %vm306, %v465, 0
    %535 = vmatpush.msra.mxu0 0.0
    %536 = vmatpush.msra.mxu0 0.0
    %537 = vmatpush.msra.mxu0 0.0
    %538 = vmatpush.msra.mxu0 0.0
    %539 = vmatpush.msra.mxu0 0.0
    %540 = vmatpush.msra.mxu0 0.0
    %541 = vmatpush.msra.mxu0 0.0
    %542 = vmatpush.msra.mxu0 0.0
    %543 = vmatpush.msra.mxu0 0.0
    %544 = vmatpush.msra.mxu0 0.0
    %545 = vmatpush.msra.mxu0 0.0
    %546 = vmatpush.msra.mxu0 0.0
    %547 = vmatpush.msra.mxu0 0.0
    %548 = vmatpush.msra.mxu0 0.0
    %549 = vmatpush.msra.mxu0 %v533
    %550 = vmatpush.msra.mxu0 %v462
    %551 = vmatmul.f32.gmra.mxu0 %v527
    %v552 = vpop.f32.mrf.mxu0
    %v553 = vadd.f32 0.0, %v552
    %554 = vmatmul.f32.gmra.mxu0 %v530
    %v555 = vpop.f32.mrf.mxu0
    %v556 = vadd.f32 0.0, %v555
    %557 = vdwg.mxu0
    %s558 = scalar_lea.vmem %s7, 8
    %v559 = vld [vmem:[%s558] sm:$0xff]
    %v561 = vsel %vm238, %v553, 0
    %v564 = vsel %vm238, %v556, 0
    %566 = vmatpush.msra.mxu0 0.0
    %567 = vmatpush.msra.mxu0 0.0
    %568 = vmatpush.msra.mxu0 0.0
    %569 = vmatpush.msra.mxu0 0.0
    %570 = vmatpush.msra.mxu0 0.0
    %571 = vmatpush.msra.mxu0 0.0
    %572 = vmatpush.msra.mxu0 0.0
    %573 = vmatpush.msra.mxu0 0.0
    %574 = vmatpush.msra.mxu0 0.0
    %575 = vmatpush.msra.mxu0 0.0
    %576 = vmatpush.msra.mxu0 0.0
    %577 = vmatpush.msra.mxu0 0.0
    %578 = vmatpush.msra.mxu0 0.0
    %579 = vmatpush.msra.mxu0 0.0
    %580 = vmatpush.msra.mxu0 0.0
    %581 = vmatpush.msra.mxu0 %v559
    %582 = vmatmul.f32.gmra.mxu0 %v561
    %v583 = vpop.f32.mrf.mxu0
    %v584 = vadd.f32 0.0, %v583
    %585 = vmatmul.f32.gmra.mxu0 %v564
    %v586 = vpop.f32.mrf.mxu0
    %v587 = vadd.f32 0.0, %v586
    %588 = vdwg.mxu0
    %v589 = vadd.f32 %v366, %v584
    %v590 = vadd.f32 %v367, %v587
    %s591 = scalar_lea.vmem %s3, 64
    %v592 = vld [vmem:[%s591] sm:$0xff]
    %v593 = vld [vmem:[%s591 + $0x8] sm:$0xff]
    %v594 = vld [vmem:[%s591 + $0x10] sm:$0xff]
    %v595 = vld [vmem:[%s591 + $0x18] sm:$0xff]
    %s596 = scalar_lea.vmem %s5, 2
    %v597 = vld [vmem:[%s596] sm:$0x1]
    %v599 = vperm.slane %v597, 0
    %601 = vmatpush.msra.mxu0 0.0
    %602 = vmatpush.msra.mxu0 0.0
    %603 = vmatpush.msra.mxu0 0.0
    %604 = vmatpush.msra.mxu0 0.0
    %605 = vmatpush.msra.mxu0 0.0
    %606 = vmatpush.msra.mxu0 0.0
    %607 = vmatpush.msra.mxu0 0.0
    %608 = vmatpush.msra.mxu0 0.0
    %609 = vmatpush.msra.mxu0 0.0
    %610 = vmatpush.msra.mxu0 0.0
    %611 = vmatpush.msra.mxu0 0.0
    %612 = vmatpush.msra.mxu0 0.0
    %613 = vmatpush.msra.mxu0 %v595
    %614 = vmatpush.msra.mxu0 %v594
    %615 = vmatpush.msra.mxu0 %v593
    %616 = vmatpush.msra.mxu0 %v592
    %617 = vmatmul.f32.gmra.mxu0 %v144
    %v618 = vpop.f32.mrf.mxu0
    %v619 = vadd.f32 %v599, %v618
    %620 = vmatmul.f32.gmra.mxu0 %v147
    %v621 = vpop.f32.mrf.mxu0
    %v622 = vadd.f32 %v599, %v621
    %623 = vdwg.mxu0
    %s624 = scalar_lea.vmem %s3, 192
    %v625 = vld [vmem:[%s624] sm:$0xff]
    %v626 = vld [vmem:[%s624 + $0x8] sm:$0xff]
    %v627 = vld [vmem:[%s624 + $0x10] sm:$0xff]
    %v628 = vld [vmem:[%s624 + $0x18] sm:$0xff]
    %s629 = scalar_lea.vmem %s5, 6
    %v630 = vld [vmem:[%s629] sm:$0x1]
    %v632 = vperm.slane %v630, 0
    %634 = vmatpush.msra.mxu0 0.0
    %635 = vmatpush.msra.mxu0 0.0
    %636 = vmatpush.msra.mxu0 0.0
    %637 = vmatpush.msra.mxu0 0.0
    %638 = vmatpush.msra.mxu0 0.0
    %639 = vmatpush.msra.mxu0 0.0
    %640 = vmatpush.msra.mxu0 0.0
    %641 = vmatpush.msra.mxu0 0.0
    %642 = vmatpush.msra.mxu0 0.0
    %643 = vmatpush.msra.mxu0 0.0
    %644 = vmatpush.msra.mxu0 0.0
    %645 = vmatpush.msra.mxu0 0.0
    %646 = vmatpush.msra.mxu0 %v628
    %647 = vmatpush.msra.mxu0 %v627
    %648 = vmatpush.msra.mxu0 %v626
    %649 = vmatpush.msra.mxu0 %v625
    %650 = vmatmul.f32.gmra.mxu0 %v144
    %v651 = vpop.f32.mrf.mxu0
    %v652 = vadd.f32 %v632, %v651
    %653 = vmatmul.f32.gmra.mxu0 %v147
    %v654 = vpop.f32.mrf.mxu0
    %v655 = vadd.f32 %v632, %v654
    %656 = vdwg.mxu0
    %s657 = scalar_lea.vmem %s3, 320
    %v658 = vld [vmem:[%s657] sm:$0xff]
    %v659 = vld [vmem:[%s657 + $0x8] sm:$0xff]
    %v660 = vld [vmem:[%s657 + $0x10] sm:$0xff]
    %v661 = vld [vmem:[%s657 + $0x18] sm:$0xff]
    %s662 = scalar_lea.vmem %s5, 10
    %v663 = vld [vmem:[%s662] sm:$0x1]
    %v665 = vperm.slane %v663, 0
    %667 = vmatpush.msra.mxu0 0.0
    %668 = vmatpush.msra.mxu0 0.0
    %669 = vmatpush.msra.mxu0 0.0
    %670 = vmatpush.msra.mxu0 0.0
    %671 = vmatpush.msra.mxu0 0.0
    %672 = vmatpush.msra.mxu0 0.0
    %673 = vmatpush.msra.mxu0 0.0
    %674 = vmatpush.msra.mxu0 0.0
    %675 = vmatpush.msra.mxu0 0.0
    %676 = vmatpush.msra.mxu0 0.0
    %677 = vmatpush.msra.mxu0 0.0
    %678 = vmatpush.msra.mxu0 0.0
    %679 = vmatpush.msra.mxu0 %v661
    %680 = vmatpush.msra.mxu0 %v660
    %681 = vmatpush.msra.mxu0 %v659
    %682 = vmatpush.msra.mxu0 %v658
    %683 = vmatmul.f32.gmra.mxu0 %v144
    %v684 = vpop.f32.mrf.mxu0
    %v685 = vadd.f32 %v665, %v684
    %686 = vmatmul.f32.gmra.mxu0 %v147
    %v687 = vpop.f32.mrf.mxu0
    %v688 = vadd.f32 %v665, %v687
    %689 = vdwg.mxu0
    %v691 = vsel %vm238, %v619, 0
    %v694 = vsel %vm238, %v622, 0
    %v697 = vsel %vm238, %v652, 0
    %v700 = vsel %vm238, %v655, 0
    %702 = vmatpush.xpose.msra.mxu0 0.0
    %703 = vmatpush.xpose.msra.mxu0 0.0
    %704 = vmatpush.xpose.msra.mxu0 0.0
    %705 = vmatpush.xpose.msra.mxu0 0.0
    %706 = vmatpush.xpose.msra.mxu0 0.0
    %707 = vmatpush.xpose.msra.mxu0 0.0
    %708 = vmatpush.xpose.msra.mxu0 0.0
    %709 = vmatpush.xpose.msra.mxu0 0.0
    %710 = vmatpush.xpose.msra.mxu0 0.0
    %711 = vmatpush.xpose.msra.mxu0 0.0
    %712 = vmatpush.xpose.msra.mxu0 0.0
    %713 = vmatpush.xpose.msra.mxu0 0.0
    %714 = vmatpush.xpose.msra.mxu0 0.0
    %715 = vmatpush.xpose.msra.mxu0 0.0
    %716 = vmatpush.xpose.msra.mxu0 %v700
    %717 = vmatpush.xpose.msra.mxu0 %v697
    %718 = vmatmul.f32.gmra.mxu0 %v691
    %v719 = vpop.f32.mrf.mxu0
    %v720 = vadd.f32 0.0, %v719
    %721 = vmatmul.f32.gmra.mxu0 %v694
    %v722 = vpop.f32.mrf.mxu0
    %v723 = vadd.f32 0.0, %v722
    %724 = vdwg.mxu0
    %v725 = vmul.f32 %v720, 0.35355338
    %v726 = vmul.f32 %v723, 0.35355338
    %v727 = vsel %vm276, %v725, -inf
    %728 = vmax.xlane.f32.xlu0 %v727
    %v729 = vpop.xlane.xlu0 %728
    %v730 = vsel %vm280, %v726, -inf
    %731 = vmax.xlane.f32.xlu0 %v730
    %v732 = vpop.xlane.xlu0 %731
    %v733 = vsub.f32 %v725, %v729
    %v734 = vsub.f32 %v726, %v732
    %v735 = vmul.f32 %v733, 1.442695
    %v736 = vpow.pop %v735
    %v737 = vmul.f32 %v734, 1.442695
    %v738 = vpow.pop %v737
    %v739 = vsel %vm276, %v736, 0.0
    %740 = vadd.xlane.f32.xlu0 %v739
    %v741 = vpop.xlane.xlu0 %740
    %v742 = vsel %vm280, %v738, 0.0
    %743 = vadd.xlane.f32.xlu0 %v742
    %v744 = vpop.xlane.xlu0 %743
    %v745 = vrcp.pop %v741
    %v746 = vrcp.pop %v744
    %v747 = vmul.f32 %v736, %v745
    %v748 = vmul.f32 %v738, %v746
    %v750 = vsel %vm276, %v747, 0
    %v753 = vsel %vm276, %v748, 0
    %v756 = vsel %vm306, %v688, 0
    %758 = vmatpush.msra.mxu0 0.0
    %759 = vmatpush.msra.mxu0 0.0
    %760 = vmatpush.msra.mxu0 0.0
    %761 = vmatpush.msra.mxu0 0.0
    %762 = vmatpush.msra.mxu0 0.0
    %763 = vmatpush.msra.mxu0 0.0
    %764 = vmatpush.msra.mxu0 0.0
    %765 = vmatpush.msra.mxu0 0.0
    %766 = vmatpush.msra.mxu0 0.0
    %767 = vmatpush.msra.mxu0 0.0
    %768 = vmatpush.msra.mxu0 0.0
    %769 = vmatpush.msra.mxu0 0.0
    %770 = vmatpush.msra.mxu0 0.0
    %771 = vmatpush.msra.mxu0 0.0
    %772 = vmatpush.msra.mxu0 %v756
    %773 = vmatpush.msra.mxu0 %v685
    %774 = vmatmul.f32.gmra.mxu0 %v750
    %v775 = vpop.f32.mrf.mxu0
    %v776 = vadd.f32 0.0, %v775
    %777 = vmatmul.f32.gmra.mxu0 %v753
    %v778 = vpop.f32.mrf.mxu0
    %v779 = vadd.f32 0.0, %v778
    %780 = vdwg.mxu0
    %s781 = scalar_lea.vmem %s7, 16
    %v782 = vld [vmem:[%s781] sm:$0xff]
    %v784 = vsel %vm238, %v776, 0
    %v787 = vsel %vm238, %v779, 0
    %789 = vmatpush.msra.mxu0 0.0
    %790 = vmatpush.msra.mxu0 0.0
    %791 = vmatpush.msra.mxu0 0.0
    %792 = vmatpush.msra.mxu0 0.0
    %793 = vmatpush.msra.mxu0 0.0
    %794 = vmatpush.msra.mxu0 0.0
    %795 = vmatpush.msra.mxu0 0.0
    %796 = vmatpush.msra.mxu0 0.0
    %797 = vmatpush.msra.mxu0 0.0
    %798 = vmatpush.msra.mxu0 0.0
    %799 = vmatpush.msra.mxu0 0.0
    %800 = vmatpush.msra.mxu0 0.0
    %801 = vmatpush.msra.mxu0 0.0
    %802 = vmatpush.msra.mxu0 0.0
    %803 = vmatpush.msra.mxu0 0.0
    %804 = vmatpush.msra.mxu0 %v782
    %805 = vmatmul.f32.gmra.mxu0 %v784
    %v806 = vpop.f32.mrf.mxu0
    %v807 = vadd.f32 0.0, %v806
    %808 = vmatmul.f32.gmra.mxu0 %v787
    %v809 = vpop.f32.mrf.mxu0
    %v810 = vadd.f32 0.0, %v809
    %811 = vdwg.mxu0
    %v812 = vadd.f32 %v589, %v807
    %v813 = vadd.f32 %v590, %v810
    %s814 = scalar_lea.vmem %s3, 96
    %v815 = vld [vmem:[%s814] sm:$0xff]
    %v816 = vld [vmem:[%s814 + $0x8] sm:$0xff]
    %v817 = vld [vmem:[%s814 + $0x10] sm:$0xff]
    %v818 = vld [vmem:[%s814 + $0x18] sm:$0xff]
    %s819 = scalar_lea.vmem %s5, 3
    %v820 = vld [vmem:[%s819] sm:$0x1]
    %v822 = vperm.slane %v820, 0
    %824 = vmatpush.msra.mxu0 0.0
    %825 = vmatpush.msra.mxu0 0.0
    %826 = vmatpush.msra.mxu0 0.0
    %827 = vmatpush.msra.mxu0 0.0
    %828 = vmatpush.msra.mxu0 0.0
    %829 = vmatpush.msra.mxu0 0.0
    %830 = vmatpush.msra.mxu0 0.0
    %831 = vmatpush.msra.mxu0 0.0
    %832 = vmatpush.msra.mxu0 0.0
    %833 = vmatpush.msra.mxu0 0.0
    %834 = vmatpush.msra.mxu0 0.0
    %835 = vmatpush.msra.mxu0 0.0
    %836 = vmatpush.msra.mxu0 %v818
    %837 = vmatpush.msra.mxu0 %v817
    %838 = vmatpush.msra.mxu0 %v816
    %839 = vmatpush.msra.mxu0 %v815
    %840 = vmatmul.f32.gmra.mxu0 %v144
    %v841 = vpop.f32.mrf.mxu0
    %v842 = vadd.f32 %v822, %v841
    %843 = vmatmul.f32.gmra.mxu0 %v147
    %v844 = vpop.f32.mrf.mxu0
    %v845 = vadd.f32 %v822, %v844
    %846 = vdwg.mxu0
    %s847 = scalar_lea.vmem %s3, 224
    %v848 = vld [vmem:[%s847] sm:$0xff]
    %v849 = vld [vmem:[%s847 + $0x8] sm:$0xff]
    %v850 = vld [vmem:[%s847 + $0x10] sm:$0xff]
    %v851 = vld [vmem:[%s847 + $0x18] sm:$0xff]
    %s852 = scalar_lea.vmem %s5, 7
    %v853 = vld [vmem:[%s852] sm:$0x1]
    %v855 = vperm.slane %v853, 0
    %857 = vmatpush.msra.mxu0 0.0
    %858 = vmatpush.msra.mxu0 0.0
    %859 = vmatpush.msra.mxu0 0.0
    %860 = vmatpush.msra.mxu0 0.0
    %861 = vmatpush.msra.mxu0 0.0
    %862 = vmatpush.msra.mxu0 0.0
    %863 = vmatpush.msra.mxu0 0.0
    %864 = vmatpush.msra.mxu0 0.0
    %865 = vmatpush.msra.mxu0 0.0
    %866 = vmatpush.msra.mxu0 0.0
    %867 = vmatpush.msra.mxu0 0.0
    %868 = vmatpush.msra.mxu0 0.0
    %869 = vmatpush.msra.mxu0 %v851
    %870 = vmatpush.msra.mxu0 %v850
    %871 = vmatpush.msra.mxu0 %v849
    %872 = vmatpush.msra.mxu0 %v848
    %873 = vmatmul.f32.gmra.mxu0 %v144
    %v874 = vpop.f32.mrf.mxu0
    %v875 = vadd.f32 %v855, %v874
    %876 = vmatmul.f32.gmra.mxu0 %v147
    %v877 = vpop.f32.mrf.mxu0
    %v878 = vadd.f32 %v855, %v877
    %879 = vdwg.mxu0
    %s880 = scalar_lea.vmem %s3, 352
    %v881 = vld [vmem:[%s880] sm:$0xff]
    %v882 = vld [vmem:[%s880 + $0x8] sm:$0xff]
    %v883 = vld [vmem:[%s880 + $0x10] sm:$0xff]
    %v884 = vld [vmem:[%s880 + $0x18] sm:$0xff]
    %s885 = scalar_lea.vmem %s5, 11
    %v886 = vld [vmem:[%s885] sm:$0x1]
    %v888 = vperm.slane %v886, 0
    %890 = vmatpush.msra.mxu0 0.0
    %891 = vmatpush.msra.mxu0 0.0
    %892 = vmatpush.msra.mxu0 0.0
    %893 = vmatpush.msra.mxu0 0.0
    %894 = vmatpush.msra.mxu0 0.0
    %895 = vmatpush.msra.mxu0 0.0
    %896 = vmatpush.msra.mxu0 0.0
    %897 = vmatpush.msra.mxu0 0.0
    %898 = vmatpush.msra.mxu0 0.0
    %899 = vmatpush.msra.mxu0 0.0
    %900 = vmatpush.msra.mxu0 0.0
    %901 = vmatpush.msra.mxu0 0.0
    %902 = vmatpush.msra.mxu0 %v884
    %903 = vmatpush.msra.mxu0 %v883
    %904 = vmatpush.msra.mxu0 %v882
    %905 = vmatpush.msra.mxu0 %v881
    %906 = vmatmul.f32.gmra.mxu0 %v144
    %v907 = vpop.f32.mrf.mxu0
    %v908 = vadd.f32 %v888, %v907
    %909 = vmatmul.f32.gmra.mxu0 %v147
    %v910 = vpop.f32.mrf.mxu0
    %v911 = vadd.f32 %v888, %v910
    %912 = vdwg.mxu0
    %v914 = vsel %vm238, %v842, 0
    %v917 = vsel %vm238, %v845, 0
    %v920 = vsel %vm238, %v875, 0
    %v923 = vsel %vm238, %v878, 0
    %925 = vmatpush.xpose.msra.mxu0 0.0
    %926 = vmatpush.xpose.msra.mxu0 0.0
    %927 = vmatpush.xpose.msra.mxu0 0.0
    %928 = vmatpush.xpose.msra.mxu0 0.0
    %929 = vmatpush.xpose.msra.mxu0 0.0
    %930 = vmatpush.xpose.msra.mxu0 0.0
    %931 = vmatpush.xpose.msra.mxu0 0.0
    %932 = vmatpush.xpose.msra.mxu0 0.0
    %933 = vmatpush.xpose.msra.mxu0 0.0
    %934 = vmatpush.xpose.msra.mxu0 0.0
    %935 = vmatpush.xpose.msra.mxu0 0.0
    %936 = vmatpush.xpose.msra.mxu0 0.0
    %937 = vmatpush.xpose.msra.mxu0 0.0
    %938 = vmatpush.xpose.msra.mxu0 0.0
    %939 = vmatpush.xpose.msra.mxu0 %v923
    %940 = vmatpush.xpose.msra.mxu0 %v920
    %941 = vmatmul.f32.gmra.mxu0 %v914
    %v942 = vpop.f32.mrf.mxu0
    %v943 = vadd.f32 0.0, %v942
    %944 = vmatmul.f32.gmra.mxu0 %v917
    %v945 = vpop.f32.mrf.mxu0
    %v946 = vadd.f32 0.0, %v945
    %947 = vdwg.mxu0
    %v948 = vmul.f32 %v943, 0.35355338
    %v949 = vmul.f32 %v946, 0.35355338
    %v950 = vsel %vm276, %v948, -inf
    %951 = vmax.xlane.f32.xlu0 %v950
    %v952 = vpop.xlane.xlu0 %951
    %v953 = vsel %vm280, %v949, -inf
    %954 = vmax.xlane.f32.xlu0 %v953
    %v955 = vpop.xlane.xlu0 %954
    %v956 = vsub.f32 %v948, %v952
    %v957 = vsub.f32 %v949, %v955
    %v958 = vmul.f32 %v956, 1.442695
    %v959 = vpow.pop %v958
    %v960 = vmul.f32 %v957, 1.442695
    %v961 = vpow.pop %v960
    %v962 = vsel %vm276, %v959, 0.0
    %963 = vadd.xlane.f32.xlu0 %v962
    %v964 = vpop.xlane.xlu0 %963
    %v965 = vsel %vm280, %v961, 0.0
    %966 = vadd.xlane.f32.xlu0 %v965
    %v967 = vpop.xlane.xlu0 %966
    %v968 = vrcp.pop %v964
    %v969 = vrcp.pop %v967
    %v970 = vmul.f32 %v959, %v968
    %v971 = vmul.f32 %v961, %v969
    %v973 = vsel %vm276, %v970, 0
    %v976 = vsel %vm276, %v971, 0
    %v979 = vsel %vm306, %v911, 0
    %981 = vmatpush.msra.mxu0 0.0
    %982 = vmatpush.msra.mxu0 0.0
    %983 = vmatpush.msra.mxu0 0.0
    %984 = vmatpush.msra.mxu0 0.0
    %985 = vmatpush.msra.mxu0 0.0
    %986 = vmatpush.msra.mxu0 0.0
    %987 = vmatpush.msra.mxu0 0.0
    %988 = vmatpush.msra.mxu0 0.0
    %989 = vmatpush.msra.mxu0 0.0
    %990 = vmatpush.msra.mxu0 0.0
    %991 = vmatpush.msra.mxu0 0.0
    %992 = vmatpush.msra.mxu0 0.0
    %993 = vmatpush.msra.mxu0 0.0
    %994 = vmatpush.msra.mxu0 0.0
    %995 = vmatpush.msra.mxu0 %v979
    %996 = vmatpush.msra.mxu0 %v908
    %997 = vmatmul.f32.gmra.mxu0 %v973
    %v998 = vpop.f32.mrf.mxu0
    %v999 = vadd.f32 0.0, %v998
    %1000 = vmatmul.f32.gmra.mxu0 %v976
    %v1001 = vpop.f32.mrf.mxu0
    %v1002 = vadd.f32 0.0, %v1001
    %1003 = vdwg.mxu0
    %s1004 = scalar_lea.vmem %s7, 24
    %v1005 = vld [vmem:[%s1004] sm:$0xff]
    %v1007 = vsel %vm238, %v999, 0
    %v1010 = vsel %vm238, %v1002, 0
    %1012 = vmatpush.msra.mxu0 0.0
    %1013 = vmatpush.msra.mxu0 0.0
    %1014 = vmatpush.msra.mxu0 0.0
    %1015 = vmatpush.msra.mxu0 0.0
    %1016 = vmatpush.msra.mxu0 0.0
    %1017 = vmatpush.msra.mxu0 0.0
    %1018 = vmatpush.msra.mxu0 0.0
    %1019 = vmatpush.msra.mxu0 0.0
    %1020 = vmatpush.msra.mxu0 0.0
    %1021 = vmatpush.msra.mxu0 0.0
    %1022 = vmatpush.msra.mxu0 0.0
    %1023 = vmatpush.msra.mxu0 0.0
    %1024 = vmatpush.msra.mxu0 0.0
    %1025 = vmatpush.msra.mxu0 0.0
    %1026 = vmatpush.msra.mxu0 0.0
    %1027 = vmatpush.msra.mxu0 %v1005
    %1028 = vmatmul.f32.gmra.mxu0 %v1007
    %v1029 = vpop.f32.mrf.mxu0
    %v1030 = vadd.f32 0.0, %v1029
    %1031 = vmatmul.f32.gmra.mxu0 %v1010
    %v1032 = vpop.f32.mrf.mxu0
    %v1033 = vadd.f32 0.0, %v1032
    %1034 = vdwg.mxu0
    %v1035 = vadd.f32 %v812, %v1030
    %v1036 = vadd.f32 %v813, %v1033
    %v1037 = vadd.f32 %v1035, %v131
    %v1038 = vadd.f32 %v1036, %v132
    %v1039 = vld [vmem:[%s11] sm:$0x1]
    %v1040 = vld [vmem:[%s13] sm:$0x1]
    %v1041 = vsel %vm142, %v1037, 0.0
    %1042 = vadd.xlane.f32.xlu0 %v1041
    %v1043 = vpop.xlane.xlu0 %1042
    %vm1044 = vcmask 253952
    %v1045 = vsel %vm1044, %v1038, 0.0
    %1046 = vadd.xlane.f32.xlu0 %v1045
    %v1047 = vpop.xlane.xlu0 %1046
    %v1048 = vrcp.pop 32.0
    %v1049 = vmul.f32 32.0, %v1048
    %v1050 = vsub.f32 1.0, %v1049
    %v1051 = vmul.f32 %v1048, %v1050
    %v1052 = vadd.f32 %v1048, %v1051
    %vm1053 = vweird.f32 %v1048
    %v1054 = vsel %vm1053, %v1048, %v1052
    %v1055 = vmul.f32 %v1043, %v1054
    %v1056 = vmul.f32 %v1047, %v1054
    %v1057 = vsub.f32 %v1037, %v1055
    %v1058 = vsub.f32 %v1038, %v1056
    %v1059 = vmul.f32 %v1057, %v1057
    %v1060 = vmul.f32 %v1058, %v1058
    %v1061 = vsel %vm142, %v1059, 0.0
    %1062 = vadd.xlane.f32.xlu0 %v1061
    %v1063 = vpop.xlane.xlu0 %1062
    %v1064 = vsel %vm1044, %v1060, 0.0
    %1065 = vadd.xlane.f32.xlu0 %v1064
    %v1066 = vpop.xlane.xlu0 %1065
    %v1067 = vmul.f32 %v1063, %v1054
    %v1068 = vmul.f32 %v1066, %v1054
    %v1069 = vadd.f32 %v1067, 1e-12
    %v1070 = vadd.f32 %v1068, 1e-12
    %v1071 = vrsqrt.pop %v1069
    %v1072 = vmul.f32 %v1071, %v1069
    %v1073 = vmul.f32 %v1072, %v1071
    %v1074 = vmul.f32 0.5, %v1073
    %v1075 = vsub.f32 1.5, %v1074
    %v1076 = vmul.f32 %v1071, %v1075
    %vm1077 = vweird.f32 %v1069
    %vm1078 = vweird.f32 %v1071
    %vm1079 = vmor %vm1077, %vm1078
    %v1080 = vsel %vm1079, %v1071, %v1076
    %v1081 = vrsqrt.pop %v1070
    %v1082 = vmul.f32 %v1081, %v1070
    %v1083 = vmul.f32 %v1082, %v1081
    %v1084 = vmul.f32 0.5, %v1083
    %v1085 = vsub.f32 1.5, %v1084
    %v1086 = vmul.f32 %v1081, %v1085
    %vm1087 = vweird.f32 %v1070
    %vm1088 = vweird.f32 %v1081
    %vm1089 = vmor %vm1087, %vm1088
    %v1090 = vsel %vm1089, %v1081, %v1086
    %v1091 = vmul.f32 %v1057, %v1080
    %v1092 = vmul.f32 %v1058, %v1090
    %v1094 = vperm.slane %v1039, 0
    %v1096 = vmul.f32 %v1091, %v1094
    %v1097 = vmul.f32 %v1092, %v1094
    %v1099 = vperm.slane %v1040, 0
    %v1101 = vadd.f32 %v1096, %v1099
    %v1102 = vadd.f32 %v1097, %v1099
    %v1103 = vld [vmem:[%s15] sm:$0xff]
    %v1104 = vld [vmem:[%s15 + $0x8] sm:$0xff]
    %v1105 = vld [vmem:[%s15 + $0x10] sm:$0xff]
    %v1106 = vld [vmem:[%s15 + $0x18] sm:$0xff]
    %v1107 = vld [vmem:[%s17] sm:$0x1]
    %v1109 = vperm.slane %v1107, 0
    %v1112 = vsel %vm142, %v1101, 0
    %v1115 = vsel %vm142, %v1102, 0
    %1117 = vmatpush.msra.mxu0 0.0
    %1118 = vmatpush.msra.mxu0 0.0
    %1119 = vmatpush.msra.mxu0 0.0
    %1120 = vmatpush.msra.mxu0 0.0
    %1121 = vmatpush.msra.mxu0 0.0
    %1122 = vmatpush.msra.mxu0 0.0
    %1123 = vmatpush.msra.mxu0 0.0
    %1124 = vmatpush.msra.mxu0 0.0
    %1125 = vmatpush.msra.mxu0 0.0
    %1126 = vmatpush.msra.mxu0 0.0
    %1127 = vmatpush.msra.mxu0 0.0
    %1128 = vmatpush.msra.mxu0 0.0
    %1129 = vmatpush.msra.mxu0 %v1106
    %1130 = vmatpush.msra.mxu0 %v1105
    %1131 = vmatpush.msra.mxu0 %v1104
    %1132 = vmatpush.msra.mxu0 %v1103
    %1133 = vmatmul.f32.gmra.mxu0 %v1112
    %v1134 = vpop.f32.mrf.mxu0
    %v1135 = vadd.f32 %v1109, %v1134
    %1136 = vmatmul.f32.gmra.mxu0 %v1115
    %v1137 = vpop.f32.mrf.mxu0
    %v1138 = vadd.f32 %v1109, %v1137
    %1139 = vdwg.mxu0
    %v1140 = vmul.f32 %v1135, 0.5
    %v1141 = vmul.f32 %v1138, 0.5
    %v1142 = vmul.f32 %v1135, 0.70710677
    %v1143 = vmul.f32 %v1138, 0.70710677
    %v1144 = vmul.f32 %v1142, %v1142
    %v1145 = vmin.f32 16.0, %v1144
    %v1146 = vmul.f32 %v1145, 2.1237322e-06
    %v1147 = vadd.f32 %v1146, 0.00028619796
    %v1148 = vmul.f32 %v1145, %v1147
    %v1149 = vadd.f32 %v1148, 0.0036580483
    %v1150 = vmul.f32 %v1145, %v1149
    %v1151 = vadd.f32 %v1150, 0.05243302
    %v1152 = vmul.f32 %v1145, %v1151
    %v1153 = vadd.f32 %v1152, 0.18741608
    %v1154 = vmul.f32 %v1145, %v1153
    %v1155 = vadd.f32 %v1154, 1.1283791
    %v1156 = vmul.f32 %v1142, %v1155
    %v1157 = vmul.f32 %v1145, 3.8918573e-05
    %v1158 = vadd.f32 %v1157, 0.001143296
    %v1159 = vmul.f32 %v1145, %v1158
    %v1160 = vadd.f32 %v1159, 0.014752088
    %v1161 = vmul.f32 %v1145, %v1160
    %v1162 = vadd.f32 %v1161, 0.112945676
    %v1163 = vmul.f32 %v1145, %v1162
    %v1164 = vadd.f32 %v1163, 0.4994258
    %v1165 = vmul.f32 %v1145, %v1164
    %v1166 = vadd.f32 %v1165, 1.0
    %v1167 = vrcp.pop %v1166
    %v1168 = vmul.f32 %v1166, %v1167
    %v1169 = vsub.f32 1.0, %v1168
    %v1170 = vmul.f32 %v1167, %v1169
    %v1171 = vadd.f32 %v1167, %v1170
    %vm1172 = vweird.f32 %v1166
    %vm1173 = vweird.f32 %v1167
    %vm1174 = vmor %vm1172, %vm1173
    %v1175 = vsel %vm1174, %v1167, %v1171
    %v1176 = vand.u32 2147483647, %v1166
    %vm1177 = vcmp.eq.f32.partialorder %v1176, 8.507059e+37
    %v1178 = vand.u32 %v1166, 2147483648
    %v1179 = vor.u32 1.1754944e-38, %v1178
    %v1180 = vsel %vm1177, %v1179, %v1175
    %v1181 = vmul.f32 %v1156, %v1180
    %v1182 = vmin.f32 %v1181, 1.0
    %v1183 = vmax.f32 %v1182, -1.0
    %v1184 = vmul.f32 %v1143, %v1143
    %v1185 = vmin.f32 16.0, %v1184
    %v1186 = vmul.f32 %v1185, 2.1237322e-06
    %v1187 = vadd.f32 %v1186, 0.00028619796
    %v1188 = vmul.f32 %v1185, %v1187
    %v1189 = vadd.f32 %v1188, 0.0036580483
    %v1190 = vmul.f32 %v1185, %v1189
    %v1191 = vadd.f32 %v1190, 0.05243302
    %v1192 = vmul.f32 %v1185, %v1191
    %v1193 = vadd.f32 %v1192, 0.18741608
    %v1194 = vmul.f32 %v1185, %v1193
    %v1195 = vadd.f32 %v1194, 1.1283791
    %v1196 = vmul.f32 %v1143, %v1195
    %v1197 = vmul.f32 %v1185, 3.8918573e-05
    %v1198 = vadd.f32 %v1197, 0.001143296
    %v1199 = vmul.f32 %v1185, %v1198
    %v1200 = vadd.f32 %v1199, 0.014752088
    %v1201 = vmul.f32 %v1185, %v1200
    %v1202 = vadd.f32 %v1201, 0.112945676
    %v1203 = vmul.f32 %v1185, %v1202
    %v1204 = vadd.f32 %v1203, 0.4994258
    %v1205 = vmul.f32 %v1185, %v1204
    %v1206 = vadd.f32 %v1205, 1.0
    %v1207 = vrcp.pop %v1206
    %v1208 = vmul.f32 %v1206, %v1207
    %v1209 = vsub.f32 1.0, %v1208
    %v1210 = vmul.f32 %v1207, %v1209
    %v1211 = vadd.f32 %v1207, %v1210
    %vm1212 = vweird.f32 %v1206
    %vm1213 = vweird.f32 %v1207
    %vm1214 = vmor %vm1212, %vm1213
    %v1215 = vsel %vm1214, %v1207, %v1211
    %v1216 = vand.u32 2147483647, %v1206
    %vm1217 = vcmp.eq.f32.partialorder %v1216, 8.507059e+37
    %v1218 = vand.u32 %v1206, 2147483648
    %v1219 = vor.u32 1.1754944e-38, %v1218
    %v1220 = vsel %vm1217, %v1219, %v1215
    %v1221 = vmul.f32 %v1196, %v1220
    %v1222 = vmin.f32 %v1221, 1.0
    %v1223 = vmax.f32 %v1222, -1.0
    %v1224 = vadd.f32 %v1183, 1.0
    %v1225 = vadd.f32 %v1223, 1.0
    %v1226 = vmul.f32 %v1140, %v1224
    %v1227 = vmul.f32 %v1141, %v1225
    %v1228 = vld [vmem:[%s19] sm:$0xff]
    %v1229 = vld [vmem:[%s19 + $0x8] sm:$0xff]
    %v1230 = vld [vmem:[%s19 + $0x10] sm:$0xff]
    %v1231 = vld [vmem:[%s19 + $0x18] sm:$0xff]
    %v1232 = vld [vmem:[%s19 + $0x20] sm:$0xff]
    %v1233 = vld [vmem:[%s19 + $0x28] sm:$0xff]
    %v1234 = vld [vmem:[%s19 + $0x30] sm:$0xff]
    %v1235 = vld [vmem:[%s19 + $0x38] sm:$0xff]
    %v1236 = vld [vmem:[%s21] sm:$0x1]
    %v1238 = vperm.slane %v1236, 0
    %vm1240 = vcmask 523264
    %v1242 = vsel %vm1240, %v1226, 0
    %v1245 = vsel %vm1240, %v1227, 0
    %1247 = vmatpush.msra.mxu0 0.0
    %1248 = vmatpush.msra.mxu0 0.0
    %1249 = vmatpush.msra.mxu0 0.0
    %1250 = vmatpush.msra.mxu0 0.0
    %1251 = vmatpush.msra.mxu0 0.0
    %1252 = vmatpush.msra.mxu0 0.0
    %1253 = vmatpush.msra.mxu0 0.0
    %1254 = vmatpush.msra.mxu0 0.0
    %1255 = vmatpush.msra.mxu0 %v1235
    %1256 = vmatpush.msra.mxu0 %v1234
    %1257 = vmatpush.msra.mxu0 %v1233
    %1258 = vmatpush.msra.mxu0 %v1232
    %1259 = vmatpush.msra.mxu0 %v1231
    %1260 = vmatpush.msra.mxu0 %v1230
    %1261 = vmatpush.msra.mxu0 %v1229
    %1262 = vmatpush.msra.mxu0 %v1228
    %1263 = vmatmul.f32.gmra.mxu0 %v1242
    %v1264 = vpop.f32.mrf.mxu0
    %v1265 = vadd.f32 %v1238, %v1264
    %1266 = vmatmul.f32.gmra.mxu0 %v1245
    %v1267 = vpop.f32.mrf.mxu0
    %v1268 = vadd.f32 %v1238, %v1267
    %1269 = vdwg.mxu0
    %v1270 = vadd.f32 %v1265, %v1101
    %v1271 = vadd.f32 %v1268, %v1102
    %v1272 = vld [vmem:[%s23] sm:$0x1]
    %v1273 = vld [vmem:[%s25] sm:$0x1]
    %v1274 = vsel %vm142, %v1270, 0.0
    %1275 = vadd.xlane.f32.xlu0 %v1274
    %v1276 = vpop.xlane.xlu0 %1275
    %v1277 = vsel %vm1044, %v1271, 0.0
    %1278 = vadd.xlane.f32.xlu0 %v1277
    %v1279 = vpop.xlane.xlu0 %1278
    %v1280 = vmul.f32 %v1276, %v1054
    %v1281 = vmul.f32 %v1279, %v1054
    %v1282 = vsub.f32 %v1270, %v1280
    %v1283 = vsub.f32 %v1271, %v1281
    %v1284 = vmul.f32 %v1282, %v1282
    %v1285 = vmul.f32 %v1283, %v1283
    %v1286 = vsel %vm142, %v1284, 0.0
    %1287 = vadd.xlane.f32.xlu0 %v1286
    %v1288 = vpop.xlane.xlu0 %1287
    %v1289 = vsel %vm1044, %v1285, 0.0
    %1290 = vadd.xlane.f32.xlu0 %v1289
    %v1291 = vpop.xlane.xlu0 %1290
    %v1292 = vmul.f32 %v1288, %v1054
    %v1293 = vmul.f32 %v1291, %v1054
    %v1294 = vadd.f32 %v1292, 1e-12
    %v1295 = vadd.f32 %v1293, 1e-12
    %v1296 = vrsqrt.pop %v1294
    %v1297 = vmul.f32 %v1296, %v1294
    %v1298 = vmul.f32 %v1297, %v1296
    %v1299 = vmul.f32 0.5, %v1298
    %v1300 = vsub.f32 1.5, %v1299
    %v1301 = vmul.f32 %v1296, %v1300
    %vm1302 = vweird.f32 %v1294
    %vm1303 = vweird.f32 %v1296
    %vm1304 = vmor %vm1302, %vm1303
    %v1305 = vsel %vm1304, %v1296, %v1301
    %v1306 = vrsqrt.pop %v1295
    %v1307 = vmul.f32 %v1306, %v1295
    %v1308 = vmul.f32 %v1307, %v1306
    %v1309 = vmul.f32 0.5, %v1308
    %v1310 = vsub.f32 1.5, %v1309
    %v1311 = vmul.f32 %v1306, %v1310
    %vm1312 = vweird.f32 %v1295
    %vm1313 = vweird.f32 %v1306
    %vm1314 = vmor %vm1312, %vm1313
    %v1315 = vsel %vm1314, %v1306, %v1311
    %v1316 = vmul.f32 %v1282, %v1305
    %v1317 = vmul.f32 %v1283, %v1315
    %v1319 = vperm.slane %v1272, 0
    %v1321 = vmul.f32 %v1316, %v1319
    %v1322 = vmul.f32 %v1317, %v1319
    %v1324 = vperm.slane %v1273, 0
    %v1326 = vadd.f32 %v1321, %v1324
    %v1327 = vadd.f32 %v1322, %v1324
    %1328 = vst.msk [vmem:[#allocation2] sm:$0xff] %vm142, %v1326
    %1329 = vst.msk [vmem:[#allocation2 + $0x8] sm:$0x1] %vm1044, %v1327
    %v1330 = vld [vmem:[#allocation2 + $0x1] sm:$0xff]
    %v1331 = vld [vmem:[%s33] sm:$0x1]
    %v1332 = vld [vmem:[%s27] sm:$0xff]
    %v1333 = vld [vmem:[%s27 + $0x8] sm:$0xff]
    %v1334 = vld [vmem:[%s27 + $0x10] sm:$0xff]
    %v1335 = vld [vmem:[%s27 + $0x18] sm:$0xff]
    %v1336 = vld [vmem:[%s29] sm:$0x1]
    %v1338 = vperm.slane %v1336, 0
    %v1341 = vsel %vm142, %v1330, 0
    %1343 = vmatpush.msra.mxu0 0.0
    %1344 = vmatpush.msra.mxu0 0.0
    %1345 = vmatpush.msra.mxu0 0.0
    %1346 = vmatpush.msra.mxu0 0.0
    %1347 = vmatpush.msra.mxu0 0.0
    %1348 = vmatpush.msra.mxu0 0.0
    %1349 = vmatpush.msra.mxu0 0.0
    %1350 = vmatpush.msra.mxu0 0.0
    %1351 = vmatpush.msra.mxu0 0.0
    %1352 = vmatpush.msra.mxu0 0.0
    %1353 = vmatpush.msra.mxu0 0.0
    %1354 = vmatpush.msra.mxu0 0.0
    %1355 = vmatpush.msra.mxu0 %v1335
    %1356 = vmatpush.msra.mxu0 %v1334
    %1357 = vmatpush.msra.mxu0 %v1333
    %1358 = vmatpush.msra.mxu0 %v1332
    %1359 = vmatmul.f32.gmra.mxu0 %v1341
    %v1360 = vpop.f32.mrf.mxu0
    %v1361 = vadd.f32 %v1338, %v1360
    %1362 = vdwg.mxu0
    %s1363 = scalar_lea.vmem %s27, 128
    %v1364 = vld [vmem:[%s1363] sm:$0xff]
    %v1365 = vld [vmem:[%s1363 + $0x8] sm:$0xff]
    %v1366 = vld [vmem:[%s1363 + $0x10] sm:$0xff]
    %v1367 = vld [vmem:[%s1363 + $0x18] sm:$0xff]
    %s1368 = scalar_lea.vmem %s29, 4
    %v1369 = vld [vmem:[%s1368] sm:$0x1]
    %v1371 = vperm.slane %v1369, 0
    %1373 = vmatpush.msra.mxu0 0.0
    %1374 = vmatpush.msra.mxu0 0.0
    %1375 = vmatpush.msra.mxu0 0.0
    %1376 = vmatpush.msra.mxu0 0.0
    %1377 = vmatpush.msra.mxu0 0.0
    %1378 = vmatpush.msra.mxu0 0.0
    %1379 = vmatpush.msra.mxu0 0.0
    %1380 = vmatpush.msra.mxu0 0.0
    %1381 = vmatpush.msra.mxu0 0.0
    %1382 = vmatpush.msra.mxu0 0.0
    %1383 = vmatpush.msra.mxu0 0.0
    %1384 = vmatpush.msra.mxu0 0.0
    %1385 = vmatpush.msra.mxu0 %v1367
    %1386 = vmatpush.msra.mxu0 %v1366
    %1387 = vmatpush.msra.mxu0 %v1365
    %1388 = vmatpush.msra.mxu0 %v1364
    %1389 = vmatmul.f32.gmra.mxu0 %v1341
    %v1390 = vpop.f32.mrf.mxu0
    %v1391 = vadd.f32 %v1371, %v1390
    %1392 = vdwg.mxu0
    %s1393 = scalar_lea.vmem %s27, 256
    %v1394 = vld [vmem:[%s1393] sm:$0xff]
    %v1395 = vld [vmem:[%s1393 + $0x8] sm:$0xff]
    %v1396 = vld [vmem:[%s1393 + $0x10] sm:$0xff]
    %v1397 = vld [vmem:[%s1393 + $0x18] sm:$0xff]
    %s1398 = scalar_lea.vmem %s29, 8
    %v1399 = vld [vmem:[%s1398] sm:$0x1]
    %v1401 = vperm.slane %v1399, 0
    %1403 = vmatpush.msra.mxu0 0.0
    %1404 = vmatpush.msra.mxu0 0.0
    %1405 = vmatpush.msra.mxu0 0.0
    %1406 = vmatpush.msra.mxu0 0.0
    %1407 = vmatpush.msra.mxu0 0.0
    %1408 = vmatpush.msra.mxu0 0.0
    %1409 = vmatpush.msra.mxu0 0.0
    %1410 = vmatpush.msra.mxu0 0.0
    %1411 = vmatpush.msra.mxu0 0.0
    %1412 = vmatpush.msra.mxu0 0.0
    %1413 = vmatpush.msra.mxu0 0.0
    %1414 = vmatpush.msra.mxu0 0.0
    %1415 = vmatpush.msra.mxu0 %v1397
    %1416 = vmatpush.msra.mxu0 %v1396
    %1417 = vmatpush.msra.mxu0 %v1395
    %1418 = vmatpush.msra.mxu0 %v1394
    %1419 = vmatmul.f32.gmra.mxu0 %v1341
    %v1420 = vpop.f32.mrf.mxu0
    %v1421 = vadd.f32 %v1401, %v1420
    %1422 = vdwg.mxu0
    %v1424 = vsel %vm238, %v1361, 0
    %v1427 = vsel %vm238, %v1391, 0
    %1429 = vmatpush.xpose.msra.mxu0 0.0
    %1430 = vmatpush.xpose.msra.mxu0 0.0
    %1431 = vmatpush.xpose.msra.mxu0 0.0
    %1432 = vmatpush.xpose.msra.mxu0 0.0
    %1433 = vmatpush.xpose.msra.mxu0 0.0
    %1434 = vmatpush.xpose.msra.mxu0 0.0
    %1435 = vmatpush.xpose.msra.mxu0 0.0
    %1436 = vmatpush.xpose.msra.mxu0 0.0
    %1437 = vmatpush.xpose.msra.mxu0 0.0
    %1438 = vmatpush.xpose.msra.mxu0 0.0
    %1439 = vmatpush.xpose.msra.mxu0 0.0
    %1440 = vmatpush.xpose.msra.mxu0 0.0
    %1441 = vmatpush.xpose.msra.mxu0 0.0
    %1442 = vmatpush.xpose.msra.mxu0 0.0
    %1443 = vmatpush.xpose.msra.mxu0 0.0
    %1444 = vmatpush.xpose.msra.mxu0 %v1427
    %1445 = vmatmul.f32.gmra.mxu0 %v1424
    %v1446 = vpop.f32.mrf.mxu0
    %v1447 = vadd.f32 0.0, %v1446
    %1448 = vdwg.mxu0
    %v1449 = vmul.f32 %v1447, 0.35355338
    %v1450 = vsel %vm238, %v1449, -inf
    %1451 = vmax.xlane.f32.xlu0 %v1450
    %v1452 = vpop.xlane.xlu0 %1451
    %v1453 = vsub.f32 %v1449, %v1452
    %v1454 = vmul.f32 %v1453, 1.442695
    %v1455 = vpow.pop %v1454
    %v1456 = vsel %vm238, %v1455, 0.0
    %1457 = vadd.xlane.f32.xlu0 %v1456
    %v1458 = vpop.xlane.xlu0 %1457
    %v1459 = vrcp.pop %v1458
    %v1460 = vmul.f32 %v1455, %v1459
    %v1462 = vsel %vm238, %v1460, 0
    %1464 = vmatpush.msra.mxu0 0.0
    %1465 = vmatpush.msra.mxu0 0.0
    %1466 = vmatpush.msra.mxu0 0.0
    %1467 = vmatpush.msra.mxu0 0.0
    %1468 = vmatpush.msra.mxu0 0.0
    %1469 = vmatpush.msra.mxu0 0.0
    %1470 = vmatpush.msra.mxu0 0.0
    %1471 = vmatpush.msra.mxu0 0.0
    %1472 = vmatpush.msra.mxu0 0.0
    %1473 = vmatpush.msra.mxu0 0.0
    %1474 = vmatpush.msra.mxu0 0.0
    %1475 = vmatpush.msra.mxu0 0.0
    %1476 = vmatpush.msra.mxu0 0.0
    %1477 = vmatpush.msra.mxu0 0.0
    %1478 = vmatpush.msra.mxu0 0.0
    %1479 = vmatpush.msra.mxu0 %v1421
    %1480 = vmatmul.f32.gmra.mxu0 %v1462
    %v1481 = vpop.f32.mrf.mxu0
    %v1482 = vadd.f32 0.0, %v1481
    %1483 = vdwg.mxu0
    %v1484 = vld [vmem:[%s31] sm:$0xff]
    %v1486 = vsel %vm238, %v1482, 0
    %1488 = vmatpush.msra.mxu0 0.0
    %1489 = vmatpush.msra.mxu0 0.0
    %1490 = vmatpush.msra.mxu0 0.0
    %1491 = vmatpush.msra.mxu0 0.0
    %1492 = vmatpush.msra.mxu0 0.0
    %1493 = vmatpush.msra.mxu0 0.0
    %1494 = vmatpush.msra.mxu0 0.0
    %1495 = vmatpush.msra.mxu0 0.0
    %1496 = vmatpush.msra.mxu0 0.0
    %1497 = vmatpush.msra.mxu0 0.0
    %1498 = vmatpush.msra.mxu0 0.0
    %1499 = vmatpush.msra.mxu0 0.0
    %1500 = vmatpush.msra.mxu0 0.0
    %1501 = vmatpush.msra.mxu0 0.0
    %1502 = vmatpush.msra.mxu0 0.0
    %1503 = vmatpush.msra.mxu0 %v1484
    %1504 = vmatmul.f32.gmra.mxu0 %v1486
    %v1505 = vpop.f32.mrf.mxu0
    %v1506 = vadd.f32 0.0, %v1505
    %1507 = vdwg.mxu0
    %v1509 = vperm.slane %v1331, 0
    %v1511 = vadd.f32 %v1509, %v1506
    %s1512 = scalar_lea.vmem %s27, 32
    %v1513 = vld [vmem:[%s1512] sm:$0xff]
    %v1514 = vld [vmem:[%s1512 + $0x8] sm:$0xff]
    %v1515 = vld [vmem:[%s1512 + $0x10] sm:$0xff]
    %v1516 = vld [vmem:[%s1512 + $0x18] sm:$0xff]
    %s1517 = scalar_lea.vmem %s29, 1
    %v1518 = vld [vmem:[%s1517] sm:$0x1]
    %v1520 = vperm.slane %v1518, 0
    %1522 = vmatpush.msra.mxu0 0.0
    %1523 = vmatpush.msra.mxu0 0.0
    %1524 = vmatpush.msra.mxu0 0.0
    %1525 = vmatpush.msra.mxu0 0.0
    %1526 = vmatpush.msra.mxu0 0.0
    %1527 = vmatpush.msra.mxu0 0.0
    %1528 = vmatpush.msra.mxu0 0.0
    %1529 = vmatpush.msra.mxu0 0.0
    %1530 = vmatpush.msra.mxu0 0.0
    %1531 = vmatpush.msra.mxu0 0.0
    %1532 = vmatpush.msra.mxu0 0.0
    %1533 = vmatpush.msra.mxu0 0.0
    %1534 = vmatpush.msra.mxu0 %v1516
    %1535 = vmatpush.msra.mxu0 %v1515
    %1536 = vmatpush.msra.mxu0 %v1514
    %1537 = vmatpush.msra.mxu0 %v1513
    %1538 = vmatmul.f32.gmra.mxu0 %v1341
    %v1539 = vpop.f32.mrf.mxu0
    %v1540 = vadd.f32 %v1520, %v1539
    %1541 = vdwg.mxu0
    %s1542 = scalar_lea.vmem %s27, 160
    %v1543 = vld [vmem:[%s1542] sm:$0xff]
    %v1544 = vld [vmem:[%s1542 + $0x8] sm:$0xff]
    %v1545 = vld [vmem:[%s1542 + $0x10] sm:$0xff]
    %v1546 = vld [vmem:[%s1542 + $0x18] sm:$0xff]
    %s1547 = scalar_lea.vmem %s29, 5
    %v1548 = vld [vmem:[%s1547] sm:$0x1]
    %v1550 = vperm.slane %v1548, 0
    %1552 = vmatpush.msra.mxu0 0.0
    %1553 = vmatpush.msra.mxu0 0.0
    %1554 = vmatpush.msra.mxu0 0.0
    %1555 = vmatpush.msra.mxu0 0.0
    %1556 = vmatpush.msra.mxu0 0.0
    %1557 = vmatpush.msra.mxu0 0.0
    %1558 = vmatpush.msra.mxu0 0.0
    %1559 = vmatpush.msra.mxu0 0.0
    %1560 = vmatpush.msra.mxu0 0.0
    %1561 = vmatpush.msra.mxu0 0.0
    %1562 = vmatpush.msra.mxu0 0.0
    %1563 = vmatpush.msra.mxu0 0.0
    %1564 = vmatpush.msra.mxu0 %v1546
    %1565 = vmatpush.msra.mxu0 %v1545
    %1566 = vmatpush.msra.mxu0 %v1544
    %1567 = vmatpush.msra.mxu0 %v1543
    %1568 = vmatmul.f32.gmra.mxu0 %v1341
    %v1569 = vpop.f32.mrf.mxu0
    %v1570 = vadd.f32 %v1550, %v1569
    %1571 = vdwg.mxu0
    %s1572 = scalar_lea.vmem %s27, 288
    %v1573 = vld [vmem:[%s1572] sm:$0xff]
    %v1574 = vld [vmem:[%s1572 + $0x8] sm:$0xff]
    %v1575 = vld [vmem:[%s1572 + $0x10] sm:$0xff]
    %v1576 = vld [vmem:[%s1572 + $0x18] sm:$0xff]
    %s1577 = scalar_lea.vmem %s29, 9
    %v1578 = vld [vmem:[%s1577] sm:$0x1]
    %v1580 = vperm.slane %v1578, 0
    %1582 = vmatpush.msra.mxu0 0.0
    %1583 = vmatpush.msra.mxu0 0.0
    %1584 = vmatpush.msra.mxu0 0.0
    %1585 = vmatpush.msra.mxu0 0.0
    %1586 = vmatpush.msra.mxu0 0.0
    %1587 = vmatpush.msra.mxu0 0.0
    %1588 = vmatpush.msra.mxu0 0.0
    %1589 = vmatpush.msra.mxu0 0.0
    %1590 = vmatpush.msra.mxu0 0.0
    %1591 = vmatpush.msra.mxu0 0.0
    %1592 = vmatpush.msra.mxu0 0.0
    %1593 = vmatpush.msra.mxu0 0.0
    %1594 = vmatpush.msra.mxu0 %v1576
    %1595 = vmatpush.msra.mxu0 %v1575
    %1596 = vmatpush.msra.mxu0 %v1574
    %1597 = vmatpush.msra.mxu0 %v1573
    %1598 = vmatmul.f32.gmra.mxu0 %v1341
    %v1599 = vpop.f32.mrf.mxu0
    %v1600 = vadd.f32 %v1580, %v1599
    %1601 = vdwg.mxu0
    %v1603 = vsel %vm238, %v1540, 0
    %v1606 = vsel %vm238, %v1570, 0
    %1608 = vmatpush.xpose.msra.mxu0 0.0
    %1609 = vmatpush.xpose.msra.mxu0 0.0
    %1610 = vmatpush.xpose.msra.mxu0 0.0
    %1611 = vmatpush.xpose.msra.mxu0 0.0
    %1612 = vmatpush.xpose.msra.mxu0 0.0
    %1613 = vmatpush.xpose.msra.mxu0 0.0
    %1614 = vmatpush.xpose.msra.mxu0 0.0
    %1615 = vmatpush.xpose.msra.mxu0 0.0
    %1616 = vmatpush.xpose.msra.mxu0 0.0
    %1617 = vmatpush.xpose.msra.mxu0 0.0
    %1618 = vmatpush.xpose.msra.mxu0 0.0
    %1619 = vmatpush.xpose.msra.mxu0 0.0
    %1620 = vmatpush.xpose.msra.mxu0 0.0
    %1621 = vmatpush.xpose.msra.mxu0 0.0
    %1622 = vmatpush.xpose.msra.mxu0 0.0
    %1623 = vmatpush.xpose.msra.mxu0 %v1606
    %1624 = vmatmul.f32.gmra.mxu0 %v1603
    %v1625 = vpop.f32.mrf.mxu0
    %v1626 = vadd.f32 0.0, %v1625
    %1627 = vdwg.mxu0
    %v1628 = vmul.f32 %v1626, 0.35355338
    %v1629 = vsel %vm238, %v1628, -inf
    %1630 = vmax.xlane.f32.xlu0 %v1629
    %v1631 = vpop.xlane.xlu0 %1630
    %v1632 = vsub.f32 %v1628, %v1631
    %v1633 = vmul.f32 %v1632, 1.442695
    %v1634 = vpow.pop %v1633
    %v1635 = vsel %vm238, %v1634, 0.0
    %1636 = vadd.xlane.f32.xlu0 %v1635
    %v1637 = vpop.xlane.xlu0 %1636
    %v1638 = vrcp.pop %v1637
    %v1639 = vmul.f32 %v1634, %v1638
    %v1641 = vsel %vm238, %v1639, 0
    %1643 = vmatpush.msra.mxu0 0.0
    %1644 = vmatpush.msra.mxu0 0.0
    %1645 = vmatpush.msra.mxu0 0.0
    %1646 = vmatpush.msra.mxu0 0.0
    %1647 = vmatpush.msra.mxu0 0.0
    %1648 = vmatpush.msra.mxu0 0.0
    %1649 = vmatpush.msra.mxu0 0.0
    %1650 = vmatpush.msra.mxu0 0.0
    %1651 = vmatpush.msra.mxu0 0.0
    %1652 = vmatpush.msra.mxu0 0.0
    %1653 = vmatpush.msra.mxu0 0.0
    %1654 = vmatpush.msra.mxu0 0.0
    %1655 = vmatpush.msra.mxu0 0.0
    %1656 = vmatpush.msra.mxu0 0.0
    %1657 = vmatpush.msra.mxu0 0.0
    %1658 = vmatpush.msra.mxu0 %v1600
    %1659 = vmatmul.f32.gmra.mxu0 %v1641
    %v1660 = vpop.f32.mrf.mxu0
    %v1661 = vadd.f32 0.0, %v1660
    %1662 = vdwg.mxu0
    %s1663 = scalar_lea.vmem %s31, 8
    %v1664 = vld [vmem:[%s1663] sm:$0xff]
    %v1666 = vsel %vm238, %v1661, 0
    %1668 = vmatpush.msra.mxu0 0.0
    %1669 = vmatpush.msra.mxu0 0.0
    %1670 = vmatpush.msra.mxu0 0.0
    %1671 = vmatpush.msra.mxu0 0.0
    %1672 = vmatpush.msra.mxu0 0.0
    %1673 = vmatpush.msra.mxu0 0.0
    %1674 = vmatpush.msra.mxu0 0.0
    %1675 = vmatpush.msra.mxu0 0.0
    %1676 = vmatpush.msra.mxu0 0.0
    %1677 = vmatpush.msra.mxu0 0.0
    %1678 = vmatpush.msra.mxu0 0.0
    %1679 = vmatpush.msra.mxu0 0.0
    %1680 = vmatpush.msra.mxu0 0.0
    %1681 = vmatpush.msra.mxu0 0.0
    %1682 = vmatpush.msra.mxu0 0.0
    %1683 = vmatpush.msra.mxu0 %v1664
    %1684 = vmatmul.f32.gmra.mxu0 %v1666
    %v1685 = vpop.f32.mrf.mxu0
    %v1686 = vadd.f32 0.0, %v1685
    %1687 = vdwg.mxu0
    %v1688 = vadd.f32 %v1511, %v1686
    %s1689 = scalar_lea.vmem %s27, 64
    %v1690 = vld [vmem:[%s1689] sm:$0xff]
    %v1691 = vld [vmem:[%s1689 + $0x8] sm:$0xff]
    %v1692 = vld [vmem:[%s1689 + $0x10] sm:$0xff]
    %v1693 = vld [vmem:[%s1689 + $0x18] sm:$0xff]
    %s1694 = scalar_lea.vmem %s29, 2
    %v1695 = vld [vmem:[%s1694] sm:$0x1]
    %v1697 = vperm.slane %v1695, 0
    %1699 = vmatpush.msra.mxu0 0.0
    %1700 = vmatpush.msra.mxu0 0.0
    %1701 = vmatpush.msra.mxu0 0.0
    %1702 = vmatpush.msra.mxu0 0.0
    %1703 = vmatpush.msra.mxu0 0.0
    %1704 = vmatpush.msra.mxu0 0.0
    %1705 = vmatpush.msra.mxu0 0.0
    %1706 = vmatpush.msra.mxu0 0.0
    %1707 = vmatpush.msra.mxu0 0.0
    %1708 = vmatpush.msra.mxu0 0.0
    %1709 = vmatpush.msra.mxu0 0.0
    %1710 = vmatpush.msra.mxu0 0.0
    %1711 = vmatpush.msra.mxu0 %v1693
    %1712 = vmatpush.msra.mxu0 %v1692
    %1713 = vmatpush.msra.mxu0 %v1691
    %1714 = vmatpush.msra.mxu0 %v1690
    %1715 = vmatmul.f32.gmra.mxu0 %v1341
    %v1716 = vpop.f32.mrf.mxu0
    %v1717 = vadd.f32 %v1697, %v1716
    %1718 = vdwg.mxu0
    %s1719 = scalar_lea.vmem %s27, 192
    %v1720 = vld [vmem:[%s1719] sm:$0xff]
    %v1721 = vld [vmem:[%s1719 + $0x8] sm:$0xff]
    %v1722 = vld [vmem:[%s1719 + $0x10] sm:$0xff]
    %v1723 = vld [vmem:[%s1719 + $0x18] sm:$0xff]
    %s1724 = scalar_lea.vmem %s29, 6
    %v1725 = vld [vmem:[%s1724] sm:$0x1]
    %v1727 = vperm.slane %v1725, 0
    %1729 = vmatpush.msra.mxu0 0.0
    %1730 = vmatpush.msra.mxu0 0.0
    %1731 = vmatpush.msra.mxu0 0.0
    %1732 = vmatpush.msra.mxu0 0.0
    %1733 = vmatpush.msra.mxu0 0.0
    %1734 = vmatpush.msra.mxu0 0.0
    %1735 = vmatpush.msra.mxu0 0.0
    %1736 = vmatpush.msra.mxu0 0.0
    %1737 = vmatpush.msra.mxu0 0.0
    %1738 = vmatpush.msra.mxu0 0.0
    %1739 = vmatpush.msra.mxu0 0.0
    %1740 = vmatpush.msra.mxu0 0.0
    %1741 = vmatpush.msra.mxu0 %v1723
    %1742 = vmatpush.msra.mxu0 %v1722
    %1743 = vmatpush.msra.mxu0 %v1721
    %1744 = vmatpush.msra.mxu0 %v1720
    %1745 = vmatmul.f32.gmra.mxu0 %v1341
    %v1746 = vpop.f32.mrf.mxu0
    %v1747 = vadd.f32 %v1727, %v1746
    %1748 = vdwg.mxu0
    %s1749 = scalar_lea.vmem %s27, 320
    %v1750 = vld [vmem:[%s1749] sm:$0xff]
    %v1751 = vld [vmem:[%s1749 + $0x8] sm:$0xff]
    %v1752 = vld [vmem:[%s1749 + $0x10] sm:$0xff]
    %v1753 = vld [vmem:[%s1749 + $0x18] sm:$0xff]
    %s1754 = scalar_lea.vmem %s29, 10
    %v1755 = vld [vmem:[%s1754] sm:$0x1]
    %v1757 = vperm.slane %v1755, 0
    %1759 = vmatpush.msra.mxu0 0.0
    %1760 = vmatpush.msra.mxu0 0.0
    %1761 = vmatpush.msra.mxu0 0.0
    %1762 = vmatpush.msra.mxu0 0.0
    %1763 = vmatpush.msra.mxu0 0.0
    %1764 = vmatpush.msra.mxu0 0.0
    %1765 = vmatpush.msra.mxu0 0.0
    %1766 = vmatpush.msra.mxu0 0.0
    %1767 = vmatpush.msra.mxu0 0.0
    %1768 = vmatpush.msra.mxu0 0.0
    %1769 = vmatpush.msra.mxu0 0.0
    %1770 = vmatpush.msra.mxu0 0.0
    %1771 = vmatpush.msra.mxu0 %v1753
    %1772 = vmatpush.msra.mxu0 %v1752
    %1773 = vmatpush.msra.mxu0 %v1751
    %1774 = vmatpush.msra.mxu0 %v1750
    %1775 = vmatmul.f32.gmra.mxu0 %v1341
    %v1776 = vpop.f32.mrf.mxu0
    %v1777 = vadd.f32 %v1757, %v1776
    %1778 = vdwg.mxu0
    %v1780 = vsel %vm238, %v1717, 0
    %v1783 = vsel %vm238, %v1747, 0
    %1785 = vmatpush.xpose.msra.mxu0 0.0
    %1786 = vmatpush.xpose.msra.mxu0 0.0
    %1787 = vmatpush.xpose.msra.mxu0 0.0
    %1788 = vmatpush.xpose.msra.mxu0 0.0
    %1789 = vmatpush.xpose.msra.mxu0 0.0
    %1790 = vmatpush.xpose.msra.mxu0 0.0
    %1791 = vmatpush.xpose.msra.mxu0 0.0
    %1792 = vmatpush.xpose.msra.mxu0 0.0
    %1793 = vmatpush.xpose.msra.mxu0 0.0
    %1794 = vmatpush.xpose.msra.mxu0 0.0
    %1795 = vmatpush.xpose.msra.mxu0 0.0
    %1796 = vmatpush.xpose.msra.mxu0 0.0
    %1797 = vmatpush.xpose.msra.mxu0 0.0
    %1798 = vmatpush.xpose.msra.mxu0 0.0
    %1799 = vmatpush.xpose.msra.mxu0 0.0
    %1800 = vmatpush.xpose.msra.mxu0 %v1783
    %1801 = vmatmul.f32.gmra.mxu0 %v1780
    %v1802 = vpop.f32.mrf.mxu0
    %v1803 = vadd.f32 0.0, %v1802
    %1804 = vdwg.mxu0
    %v1805 = vmul.f32 %v1803, 0.35355338
    %v1806 = vsel %vm238, %v1805, -inf
    %1807 = vmax.xlane.f32.xlu0 %v1806
    %v1808 = vpop.xlane.xlu0 %1807
    %v1809 = vsub.f32 %v1805, %v1808
    %v1810 = vmul.f32 %v1809, 1.442695
    %v1811 = vpow.pop %v1810
    %v1812 = vsel %vm238, %v1811, 0.0
    %1813 = vadd.xlane.f32.xlu0 %v1812
    %v1814 = vpop.xlane.xlu0 %1813
    %v1815 = vrcp.pop %v1814
    %v1816 = vmul.f32 %v1811, %v1815
    %v1818 = vsel %vm238, %v1816, 0
    %1820 = vmatpush.msra.mxu0 0.0
    %1821 = vmatpush.msra.mxu0 0.0
    %1822 = vmatpush.msra.mxu0 0.0
    %1823 = vmatpush.msra.mxu0 0.0
    %1824 = vmatpush.msra.mxu0 0.0
    %1825 = vmatpush.msra.mxu0 0.0
    %1826 = vmatpush.msra.mxu0 0.0
    %1827 = vmatpush.msra.mxu0 0.0
    %1828 = vmatpush.msra.mxu0 0.0
    %1829 = vmatpush.msra.mxu0 0.0
    %1830 = vmatpush.msra.mxu0 0.0
    %1831 = vmatpush.msra.mxu0 0.0
    %1832 = vmatpush.msra.mxu0 0.0
    %1833 = vmatpush.msra.mxu0 0.0
    %1834 = vmatpush.msra.mxu0 0.0
    %1835 = vmatpush.msra.mxu0 %v1777
    %1836 = vmatmul.f32.gmra.mxu0 %v1818
    %v1837 = vpop.f32.mrf.mxu0
    %v1838 = vadd.f32 0.0, %v1837
    %1839 = vdwg.mxu0
    %s1840 = scalar_lea.vmem %s31, 16
    %v1841 = vld [vmem:[%s1840] sm:$0xff]
    %v1843 = vsel %vm238, %v1838, 0
    %1845 = vmatpush.msra.mxu0 0.0
    %1846 = vmatpush.msra.mxu0 0.0
    %1847 = vmatpush.msra.mxu0 0.0
    %1848 = vmatpush.msra.mxu0 0.0
    %1849 = vmatpush.msra.mxu0 0.0
    %1850 = vmatpush.msra.mxu0 0.0
    %1851 = vmatpush.msra.mxu0 0.0
    %1852 = vmatpush.msra.mxu0 0.0
    %1853 = vmatpush.msra.mxu0 0.0
    %1854 = vmatpush.msra.mxu0 0.0
    %1855 = vmatpush.msra.mxu0 0.0
    %1856 = vmatpush.msra.mxu0 0.0
    %1857 = vmatpush.msra.mxu0 0.0
    %1858 = vmatpush.msra.mxu0 0.0
    %1859 = vmatpush.msra.mxu0 0.0
    %1860 = vmatpush.msra.mxu0 %v1841
    %1861 = vmatmul.f32.gmra.mxu0 %v1843
    %v1862 = vpop.f32.mrf.mxu0
    %v1863 = vadd.f32 0.0, %v1862
    %1864 = vdwg.mxu0
    %v1865 = vadd.f32 %v1688, %v1863
    %s1866 = scalar_lea.vmem %s27, 96
    %v1867 = vld [vmem:[%s1866] sm:$0xff]
    %v1868 = vld [vmem:[%s1866 + $0x8] sm:$0xff]
    %v1869 = vld [vmem:[%s1866 + $0x10] sm:$0xff]
    %v1870 = vld [vmem:[%s1866 + $0x18] sm:$0xff]
    %s1871 = scalar_lea.vmem %s29, 3
    %v1872 = vld [vmem:[%s1871] sm:$0x1]
    %v1874 = vperm.slane %v1872, 0
    %1876 = vmatpush.msra.mxu0 0.0
    %1877 = vmatpush.msra.mxu0 0.0
    %1878 = vmatpush.msra.mxu0 0.0
    %1879 = vmatpush.msra.mxu0 0.0
    %1880 = vmatpush.msra.mxu0 0.0
    %1881 = vmatpush.msra.mxu0 0.0
    %1882 = vmatpush.msra.mxu0 0.0
    %1883 = vmatpush.msra.mxu0 0.0
    %1884 = vmatpush.msra.mxu0 0.0
    %1885 = vmatpush.msra.mxu0 0.0
    %1886 = vmatpush.msra.mxu0 0.0
    %1887 = vmatpush.msra.mxu0 0.0
    %1888 = vmatpush.msra.mxu0 %v1870
    %1889 = vmatpush.msra.mxu0 %v1869
    %1890 = vmatpush.msra.mxu0 %v1868
    %1891 = vmatpush.msra.mxu0 %v1867
    %1892 = vmatmul.f32.gmra.mxu0 %v1341
    %v1893 = vpop.f32.mrf.mxu0
    %v1894 = vadd.f32 %v1874, %v1893
    %1895 = vdwg.mxu0
    %s1896 = scalar_lea.vmem %s27, 224
    %v1897 = vld [vmem:[%s1896] sm:$0xff]
    %v1898 = vld [vmem:[%s1896 + $0x8] sm:$0xff]
    %v1899 = vld [vmem:[%s1896 + $0x10] sm:$0xff]
    %v1900 = vld [vmem:[%s1896 + $0x18] sm:$0xff]
    %s1901 = scalar_lea.vmem %s29, 7
    %v1902 = vld [vmem:[%s1901] sm:$0x1]
    %v1904 = vperm.slane %v1902, 0
    %1906 = vmatpush.msra.mxu0 0.0
    %1907 = vmatpush.msra.mxu0 0.0
    %1908 = vmatpush.msra.mxu0 0.0
    %1909 = vmatpush.msra.mxu0 0.0
    %1910 = vmatpush.msra.mxu0 0.0
    %1911 = vmatpush.msra.mxu0 0.0
    %1912 = vmatpush.msra.mxu0 0.0
    %1913 = vmatpush.msra.mxu0 0.0
    %1914 = vmatpush.msra.mxu0 0.0
    %1915 = vmatpush.msra.mxu0 0.0
    %1916 = vmatpush.msra.mxu0 0.0
    %1917 = vmatpush.msra.mxu0 0.0
    %1918 = vmatpush.msra.mxu0 %v1900
    %1919 = vmatpush.msra.mxu0 %v1899
    %1920 = vmatpush.msra.mxu0 %v1898
    %1921 = vmatpush.msra.mxu0 %v1897
    %1922 = vmatmul.f32.gmra.mxu0 %v1341
    %v1923 = vpop.f32.mrf.mxu0
    %v1924 = vadd.f32 %v1904, %v1923
    %1925 = vdwg.mxu0
    %s1926 = scalar_lea.vmem %s27, 352
    %v1927 = vld [vmem:[%s1926] sm:$0xff]
    %v1928 = vld [vmem:[%s1926 + $0x8] sm:$0xff]
    %v1929 = vld [vmem:[%s1926 + $0x10] sm:$0xff]
    %v1930 = vld [vmem:[%s1926 + $0x18] sm:$0xff]
    %s1931 = scalar_lea.vmem %s29, 11
    %v1932 = vld [vmem:[%s1931] sm:$0x1]
    %v1934 = vperm.slane %v1932, 0
    %1936 = vmatpush.msra.mxu0 0.0
    %1937 = vmatpush.msra.mxu0 0.0
    %1938 = vmatpush.msra.mxu0 0.0
    %1939 = vmatpush.msra.mxu0 0.0
    %1940 = vmatpush.msra.mxu0 0.0
    %1941 = vmatpush.msra.mxu0 0.0
    %1942 = vmatpush.msra.mxu0 0.0
    %1943 = vmatpush.msra.mxu0 0.0
    %1944 = vmatpush.msra.mxu0 0.0
    %1945 = vmatpush.msra.mxu0 0.0
    %1946 = vmatpush.msra.mxu0 0.0
    %1947 = vmatpush.msra.mxu0 0.0
    %1948 = vmatpush.msra.mxu0 %v1930
    %1949 = vmatpush.msra.mxu0 %v1929
    %1950 = vmatpush.msra.mxu0 %v1928
    %1951 = vmatpush.msra.mxu0 %v1927
    %1952 = vmatmul.f32.gmra.mxu0 %v1341
    %v1953 = vpop.f32.mrf.mxu0
    %v1954 = vadd.f32 %v1934, %v1953
    %1955 = vdwg.mxu0
    %v1957 = vsel %vm238, %v1894, 0
    %v1960 = vsel %vm238, %v1924, 0
    %1962 = vmatpush.xpose.msra.mxu0 0.0
    %1963 = vmatpush.xpose.msra.mxu0 0.0
    %1964 = vmatpush.xpose.msra.mxu0 0.0
    %1965 = vmatpush.xpose.msra.mxu0 0.0
    %1966 = vmatpush.xpose.msra.mxu0 0.0
    %1967 = vmatpush.xpose.msra.mxu0 0.0
    %1968 = vmatpush.xpose.msra.mxu0 0.0
    %1969 = vmatpush.xpose.msra.mxu0 0.0
    %1970 = vmatpush.xpose.msra.mxu0 0.0
    %1971 = vmatpush.xpose.msra.mxu0 0.0
    %1972 = vmatpush.xpose.msra.mxu0 0.0
    %1973 = vmatpush.xpose.msra.mxu0 0.0
    %1974 = vmatpush.xpose.msra.mxu0 0.0
    %1975 = vmatpush.xpose.msra.mxu0 0.0
    %1976 = vmatpush.xpose.msra.mxu0 0.0
    %1977 = vmatpush.xpose.msra.mxu0 %v1960
    %1978 = vmatmul.f32.gmra.mxu0 %v1957
    %v1979 = vpop.f32.mrf.mxu0
    %v1980 = vadd.f32 0.0, %v1979
    %1981 = vdwg.mxu0
    %v1982 = vmul.f32 %v1980, 0.35355338
    %v1983 = vsel %vm238, %v1982, -inf
    %1984 = vmax.xlane.f32.xlu0 %v1983
    %v1985 = vpop.xlane.xlu0 %1984
    %v1986 = vsub.f32 %v1982, %v1985
    %v1987 = vmul.f32 %v1986, 1.442695
    %v1988 = vpow.pop %v1987
    %v1989 = vsel %vm238, %v1988, 0.0
    %1990 = vadd.xlane.f32.xlu0 %v1989
    %v1991 = vpop.xlane.xlu0 %1990
    %v1992 = vrcp.pop %v1991
    %v1993 = vmul.f32 %v1988, %v1992
    %v1995 = vsel %vm238, %v1993, 0
    %1997 = vmatpush.msra.mxu0 0.0
    %1998 = vmatpush.msra.mxu0 0.0
    %1999 = vmatpush.msra.mxu0 0.0
    %2000 = vmatpush.msra.mxu0 0.0
    %2001 = vmatpush.msra.mxu0 0.0
    %2002 = vmatpush.msra.mxu0 0.0
    %2003 = vmatpush.msra.mxu0 0.0
    %2004 = vmatpush.msra.mxu0 0.0
    %2005 = vmatpush.msra.mxu0 0.0
    %2006 = vmatpush.msra.mxu0 0.0
    %2007 = vmatpush.msra.mxu0 0.0
    %2008 = vmatpush.msra.mxu0 0.0
    %2009 = vmatpush.msra.mxu0 0.0
    %2010 = vmatpush.msra.mxu0 0.0
    %2011 = vmatpush.msra.mxu0 0.0
    %2012 = vmatpush.msra.mxu0 %v1954
    %2013 = vmatmul.f32.gmra.mxu0 %v1995
    %v2014 = vpop.f32.mrf.mxu0
    %v2015 = vadd.f32 0.0, %v2014
    %2016 = vdwg.mxu0
    %s2017 = scalar_lea.vmem %s31, 24
    %v2018 = vld [vmem:[%s2017] sm:$0xff]
    %v2020 = vsel %vm238, %v2015, 0
    %2022 = vmatpush.msra.mxu0 0.0
    %2023 = vmatpush.msra.mxu0 0.0
    %2024 = vmatpush.msra.mxu0 0.0
    %2025 = vmatpush.msra.mxu0 0.0
    %2026 = vmatpush.msra.mxu0 0.0
    %2027 = vmatpush.msra.mxu0 0.0
    %2028 = vmatpush.msra.mxu0 0.0
    %2029 = vmatpush.msra.mxu0 0.0
    %2030 = vmatpush.msra.mxu0 0.0
    %2031 = vmatpush.msra.mxu0 0.0
    %2032 = vmatpush.msra.mxu0 0.0
    %2033 = vmatpush.msra.mxu0 0.0
    %2034 = vmatpush.msra.mxu0 0.0
    %2035 = vmatpush.msra.mxu0 0.0
    %2036 = vmatpush.msra.mxu0 0.0
    %2037 = vmatpush.msra.mxu0 %v2018
    %2038 = vmatmul.f32.gmra.mxu0 %v2020
    %v2039 = vpop.f32.mrf.mxu0
    %v2040 = vadd.f32 0.0, %v2039
    %2041 = vdwg.mxu0
    %v2042 = vadd.f32 %v1865, %v2040
    %v2043 = vadd.f32 %v2042, %v1330
    %v2044 = vld [vmem:[%s35] sm:$0x1]
    %v2045 = vld [vmem:[%s37] sm:$0x1]
    %v2046 = vsel %vm142, %v2043, 0.0
    %2047 = vadd.xlane.f32.xlu0 %v2046
    %v2048 = vpop.xlane.xlu0 %2047
    %v2049 = vmul.f32 %v2048, %v1054
    %v2050 = vsub.f32 %v2043, %v2049
    %v2051 = vmul.f32 %v2050, %v2050
    %v2052 = vsel %vm142, %v2051, 0.0
    %2053 = vadd.xlane.f32.xlu0 %v2052
    %v2054 = vpop.xlane.xlu0 %2053
    %v2055 = vmul.f32 %v2054, %v1054
    %v2056 = vadd.f32 %v2055, 1e-12
    %v2057 = vrsqrt.pop %v2056
    %v2058 = vmul.f32 %v2057, %v2056
    %v2059 = vmul.f32 %v2058, %v2057
    %v2060 = vmul.f32 0.5, %v2059
    %v2061 = vsub.f32 1.5, %v2060
    %v2062 = vmul.f32 %v2057, %v2061
    %vm2063 = vweird.f32 %v2056
    %vm2064 = vweird.f32 %v2057
    %vm2065 = vmor %vm2063, %vm2064
    %v2066 = vsel %vm2065, %v2057, %v2062
    %v2067 = vmul.f32 %v2050, %v2066
    %v2069 = vperm.slane %v2044, 0
    %v2071 = vmul.f32 %v2067, %v2069
    %v2073 = vperm.slane %v2045, 0
    %v2075 = vadd.f32 %v2071, %v2073
    %v2076 = vld [vmem:[%s39] sm:$0xff]
    %v2077 = vld [vmem:[%s39 + $0x8] sm:$0xff]
    %v2078 = vld [vmem:[%s39 + $0x10] sm:$0xff]
    %v2079 = vld [vmem:[%s39 + $0x18] sm:$0xff]
    %v2080 = vld [vmem:[%s41] sm:$0x1]
    %v2082 = vperm.slane %v2080, 0
    %v2085 = vsel %vm142, %v2075, 0
    %2087 = vmatpush.msra.mxu0 0.0
    %2088 = vmatpush.msra.mxu0 0.0
    %2089 = vmatpush.msra.mxu0 0.0
    %2090 = vmatpush.msra.mxu0 0.0
    %2091 = vmatpush.msra.mxu0 0.0
    %2092 = vmatpush.msra.mxu0 0.0
    %2093 = vmatpush.msra.mxu0 0.0
    %2094 = vmatpush.msra.mxu0 0.0
    %2095 = vmatpush.msra.mxu0 0.0
    %2096 = vmatpush.msra.mxu0 0.0
    %2097 = vmatpush.msra.mxu0 0.0
    %2098 = vmatpush.msra.mxu0 0.0
    %2099 = vmatpush.msra.mxu0 %v2079
    %2100 = vmatpush.msra.mxu0 %v2078
    %2101 = vmatpush.msra.mxu0 %v2077
    %2102 = vmatpush.msra.mxu0 %v2076
    %2103 = vmatmul.f32.gmra.mxu0 %v2085
    %v2104 = vpop.f32.mrf.mxu0
    %v2105 = vadd.f32 %v2082, %v2104
    %2106 = vdwg.mxu0
    %v2107 = vmul.f32 %v2105, 0.5
    %v2108 = vmul.f32 %v2105, 0.70710677
    %v2109 = vmul.f32 %v2108, %v2108
    %v2110 = vmin.f32 16.0, %v2109
    %v2111 = vmul.f32 %v2110, 2.1237322e-06
    %v2112 = vadd.f32 %v2111, 0.00028619796
    %v2113 = vmul.f32 %v2110, %v2112
    %v2114 = vadd.f32 %v2113, 0.0036580483
    %v2115 = vmul.f32 %v2110, %v2114
    %v2116 = vadd.f32 %v2115, 0.05243302
    %v2117 = vmul.f32 %v2110, %v2116
    %v2118 = vadd.f32 %v2117, 0.18741608
    %v2119 = vmul.f32 %v2110, %v2118
    %v2120 = vadd.f32 %v2119, 1.1283791
    %v2121 = vmul.f32 %v2108, %v2120
    %v2122 = vmul.f32 %v2110, 3.8918573e-05
    %v2123 = vadd.f32 %v2122, 0.001143296
    %v2124 = vmul.f32 %v2110, %v2123
    %v2125 = vadd.f32 %v2124, 0.014752088
    %v2126 = vmul.f32 %v2110, %v2125
    %v2127 = vadd.f32 %v2126, 0.112945676
    %v2128 = vmul.f32 %v2110, %v2127
    %v2129 = vadd.f32 %v2128, 0.4994258
    %v2130 = vmul.f32 %v2110, %v2129
    %v2131 = vadd.f32 %v2130, 1.0
    %v2132 = vrcp.pop %v2131
    %v2133 = vmul.f32 %v2131, %v2132
    %v2134 = vsub.f32 1.0, %v2133
    %v2135 = vmul.f32 %v2132, %v2134
    %v2136 = vadd.f32 %v2132, %v2135
    %vm2137 = vweird.f32 %v2131
    %vm2138 = vweird.f32 %v2132
    %vm2139 = vmor %vm2137, %vm2138
    %v2140 = vsel %vm2139, %v2132, %v2136
    %v2141 = vand.u32 2147483647, %v2131
    %vm2142 = vcmp.eq.f32.partialorder %v2141, 8.507059e+37
    %v2143 = vand.u32 %v2131, 2147483648
    %v2144 = vor.u32 1.1754944e-38, %v2143
    %v2145 = vsel %vm2142, %v2144, %v2140
    %v2146 = vmul.f32 %v2121, %v2145
    %v2147 = vmin.f32 %v2146, 1.0
    %v2148 = vmax.f32 %v2147, -1.0
    %v2149 = vadd.f32 %v2148, 1.0
    %v2150 = vmul.f32 %v2107, %v2149
    %v2151 = vld [vmem:[%s43] sm:$0xff]
    %v2152 = vld [vmem:[%s43 + $0x8] sm:$0xff]
    %v2153 = vld [vmem:[%s43 + $0x10] sm:$0xff]
    %v2154 = vld [vmem:[%s43 + $0x18] sm:$0xff]
    %v2155 = vld [vmem:[%s43 + $0x20] sm:$0xff]
    %v2156 = vld [vmem:[%s43 + $0x28] sm:$0xff]
    %v2157 = vld [vmem:[%s43 + $0x30] sm:$0xff]
    %v2158 = vld [vmem:[%s43 + $0x38] sm:$0xff]
    %v2159 = vld [vmem:[%s45] sm:$0x1]
    %v2161 = vperm.slane %v2159, 0
    %v2164 = vsel %vm1240, %v2150, 0
    %2166 = vmatpush.msra.mxu0 0.0
    %2167 = vmatpush.msra.mxu0 0.0
    %2168 = vmatpush.msra.mxu0 0.0
    %2169 = vmatpush.msra.mxu0 0.0
    %2170 = vmatpush.msra.mxu0 0.0
    %2171 = vmatpush.msra.mxu0 0.0
    %2172 = vmatpush.msra.mxu0 0.0
    %2173 = vmatpush.msra.mxu0 0.0
    %2174 = vmatpush.msra.mxu0 %v2158
    %2175 = vmatpush.msra.mxu0 %v2157
    %2176 = vmatpush.msra.mxu0 %v2156
    %2177 = vmatpush.msra.mxu0 %v2155
    %2178 = vmatpush.msra.mxu0 %v2154
    %2179 = vmatpush.msra.mxu0 %v2153
    %2180 = vmatpush.msra.mxu0 %v2152
    %2181 = vmatpush.msra.mxu0 %v2151
    %2182 = vmatmul.f32.gmra.mxu0 %v2164
    %v2183 = vpop.f32.mrf.mxu0
    %v2184 = vadd.f32 %v2161, %v2183
    %2185 = vdwg.mxu0
    %v2186 = vadd.f32 %v2184, %v2075
    %v2187 = vld [vmem:[%s47] sm:$0x1]
    %v2188 = vld [vmem:[%s49] sm:$0x1]
    %v2189 = vsel %vm142, %v2186, 0.0
    %2190 = vadd.xlane.f32.xlu0 %v2189
    %v2191 = vpop.xlane.xlu0 %2190
    %v2192 = vmul.f32 %v2191, %v1054
    %v2193 = vsub.f32 %v2186, %v2192
    %v2194 = vmul.f32 %v2193, %v2193
    %v2195 = vsel %vm142, %v2194, 0.0
    %2196 = vadd.xlane.f32.xlu0 %v2195
    %v2197 = vpop.xlane.xlu0 %2196
    %v2198 = vmul.f32 %v2197, %v1054
    %v2199 = vadd.f32 %v2198, 1e-12
    %v2200 = vrsqrt.pop %v2199
    %v2201 = vmul.f32 %v2200, %v2199
    %v2202 = vmul.f32 %v2201, %v2200
    %v2203 = vmul.f32 0.5, %v2202
    %v2204 = vsub.f32 1.5, %v2203
    %v2205 = vmul.f32 %v2200, %v2204
    %vm2206 = vweird.f32 %v2199
    %vm2207 = vweird.f32 %v2200
    %vm2208 = vmor %vm2206, %vm2207
    %v2209 = vsel %vm2208, %v2200, %v2205
    %v2210 = vmul.f32 %v2193, %v2209
    %v2212 = vperm.slane %v2187, 0
    %v2214 = vmul.f32 %v2210, %v2212
    %v2216 = vperm.slane %v2188, 0
    %v2218 = vadd.f32 %v2214, %v2216
    %v2219 = vld [vmem:[%s51] sm:$0xff]
    %v2220 = vld [vmem:[%s51 + $0x8] sm:$0xff]
    %v2221 = vld [vmem:[%s51 + $0x10] sm:$0xff]
    %v2222 = vld [vmem:[%s51 + $0x18] sm:$0xff]
    %v2223 = vld [vmem:[%s53] sm:$0x1]
    %v2225 = vperm.slane %v2223, 0
    %v2228 = vsel %vm142, %v2218, 0
    %2230 = vmatpush.msra.mxu0 0.0
    %2231 = vmatpush.msra.mxu0 0.0
    %2232 = vmatpush.msra.mxu0 0.0
    %2233 = vmatpush.msra.mxu0 0.0
    %2234 = vmatpush.msra.mxu0 0.0
    %2235 = vmatpush.msra.mxu0 0.0
    %2236 = vmatpush.msra.mxu0 0.0
    %2237 = vmatpush.msra.mxu0 0.0
    %2238 = vmatpush.msra.mxu0 0.0
    %2239 = vmatpush.msra.mxu0 0.0
    %2240 = vmatpush.msra.mxu0 0.0
    %2241 = vmatpush.msra.mxu0 0.0
    %2242 = vmatpush.msra.mxu0 %v2222
    %2243 = vmatpush.msra.mxu0 %v2221
    %2244 = vmatpush.msra.mxu0 %v2220
    %2245 = vmatpush.msra.mxu0 %v2219
    %2246 = vmatmul.f32.gmra.mxu0 %v2228
    %v2247 = vpop.f32.mrf.mxu0
    %v2248 = vadd.f32 %v2225, %v2247
    %2249 = vdwg.mxu0
    %v2250 = vmul.f32 %v2248, 0.5
    %v2251 = vmul.f32 %v2248, 0.70710677
    %v2252 = vmul.f32 %v2251, %v2251
    %v2253 = vmin.f32 16.0, %v2252
    %v2254 = vmul.f32 %v2253, 2.1237322e-06
    %v2255 = vadd.f32 %v2254, 0.00028619796
    %v2256 = vmul.f32 %v2253, %v2255
    %v2257 = vadd.f32 %v2256, 0.0036580483
    %v2258 = vmul.f32 %v2253, %v2257
    %v2259 = vadd.f32 %v2258, 0.05243302
    %v2260 = vmul.f32 %v2253, %v2259
    %v2261 = vadd.f32 %v2260, 0.18741608
    %v2262 = vmul.f32 %v2253, %v2261
    %v2263 = vadd.f32 %v2262, 1.1283791
    %v2264 = vmul.f32 %v2251, %v2263
    %v2265 = vmul.f32 %v2253, 3.8918573e-05
    %v2266 = vadd.f32 %v2265, 0.001143296
    %v2267 = vmul.f32 %v2253, %v2266
    %v2268 = vadd.f32 %v2267, 0.014752088
    %v2269 = vmul.f32 %v2253, %v2268
    %v2270 = vadd.f32 %v2269, 0.112945676
    %v2271 = vmul.f32 %v2253, %v2270
    %v2272 = vadd.f32 %v2271, 0.4994258
    %v2273 = vmul.f32 %v2253, %v2272
    %v2274 = vadd.f32 %v2273, 1.0
    %v2275 = vrcp.pop %v2274
    %v2276 = vmul.f32 %v2274, %v2275
    %v2277 = vsub.f32 1.0, %v2276
    %v2278 = vmul.f32 %v2275, %v2277
    %v2279 = vadd.f32 %v2275, %v2278
    %vm2280 = vweird.f32 %v2274
    %vm2281 = vweird.f32 %v2275
    %vm2282 = vmor %vm2280, %vm2281
    %v2283 = vsel %vm2282, %v2275, %v2279
    %v2284 = vand.u32 2147483647, %v2274
    %vm2285 = vcmp.eq.f32.partialorder %v2284, 8.507059e+37
    %v2286 = vand.u32 %v2274, 2147483648
    %v2287 = vor.u32 1.1754944e-38, %v2286
    %v2288 = vsel %vm2285, %v2287, %v2283
    %v2289 = vmul.f32 %v2264, %v2288
    %v2290 = vmin.f32 %v2289, 1.0
    %v2291 = vmax.f32 %v2290, -1.0
    %v2292 = vadd.f32 %v2291, 1.0
    %v2293 = vmul.f32 %v2250, %v2292
    %v2294 = vld [vmem:[%s55] sm:$0x1]
    %v2295 = vld [vmem:[%s57] sm:$0x1]
    %v2296 = vsel %vm142, %v2293, 0.0
    %2297 = vadd.xlane.f32.xlu0 %v2296
    %v2298 = vpop.xlane.xlu0 %2297
    %v2299 = vmul.f32 %v2298, %v1054
    %v2300 = vsub.f32 %v2293, %v2299
    %v2301 = vmul.f32 %v2300, %v2300
    %v2302 = vsel %vm142, %v2301, 0.0
    %2303 = vadd.xlane.f32.xlu0 %v2302
    %v2304 = vpop.xlane.xlu0 %2303
    %v2305 = vmul.f32 %v2304, %v1054
    %v2306 = vadd.f32 %v2305, 1e-12
    %v2307 = vrsqrt.pop %v2306
    %v2308 = vmul.f32 %v2307, %v2306
    %v2309 = vmul.f32 %v2308, %v2307
    %v2310 = vmul.f32 0.5, %v2309
    %v2311 = vsub.f32 1.5, %v2310
    %v2312 = vmul.f32 %v2307, %v2311
    %vm2313 = vweird.f32 %v2306
    %vm2314 = vweird.f32 %v2307
    %vm2315 = vmor %vm2313, %vm2314
    %v2316 = vsel %vm2315, %v2307, %v2312
    %v2317 = vmul.f32 %v2300, %v2316
    %v2319 = vperm.slane %v2294, 0
    %v2321 = vmul.f32 %v2317, %v2319
    %v2323 = vperm.slane %v2295, 0
    %v2325 = vadd.f32 %v2321, %v2323
    %v2326 = vld [vmem:[%s59] sm:$0xff]
    %v2327 = vld [vmem:[%s59 + $0x8] sm:$0xff]
    %v2328 = vld [vmem:[%s59 + $0x10] sm:$0xff]
    %v2329 = vld [vmem:[%s59 + $0x18] sm:$0xff]
    %v2330 = vld [vmem:[%s61] sm:$0x1]
    %v2332 = vperm.slane %v2330, 0
    %v2335 = vsel %vm142, %v2325, 0
    %2337 = vmatpush.msra.mxu0 0.0
    %2338 = vmatpush.msra.mxu0 0.0
    %2339 = vmatpush.msra.mxu0 0.0
    %2340 = vmatpush.msra.mxu0 0.0
    %2341 = vmatpush.msra.mxu0 0.0
    %2342 = vmatpush.msra.mxu0 0.0
    %2343 = vmatpush.msra.mxu0 0.0
    %2344 = vmatpush.msra.mxu0 0.0
    %2345 = vmatpush.msra.mxu0 0.0
    %2346 = vmatpush.msra.mxu0 0.0
    %2347 = vmatpush.msra.mxu0 0.0
    %2348 = vmatpush.msra.mxu0 0.0
    %2349 = vmatpush.msra.mxu0 %v2329
    %2350 = vmatpush.msra.mxu0 %v2328
    %2351 = vmatpush.msra.mxu0 %v2327
    %2352 = vmatpush.msra.mxu0 %v2326
    %2353 = vmatmul.f32.gmra.mxu0 %v2335
    %v2354 = vpop.f32.mrf.mxu0
    %v2355 = vadd.f32 %v2332, %v2354
    %2356 = vdwg.mxu0
    %vm2357 = vcmask 785408
    %2358 = vst.msk [vmem:[#allocation3] sm:$0xff] %vm2357, %v2355
    %s2359 = scalar_lea.vmem %s1, 16
    %v2360 = vld [vmem:[%s2359] sm:$0xff]
    %v2361 = vld [vmem:[%s2359 + $0x8] sm:$0x1]
    %v2362 = vld [vmem:[%s9] sm:$0x1]
    %v2363 = vld [vmem:[%s3] sm:$0xff]
    %v2364 = vld [vmem:[%s3 + $0x8] sm:$0xff]
    %v2365 = vld [vmem:[%s3 + $0x10] sm:$0xff]
    %v2366 = vld [vmem:[%s3 + $0x18] sm:$0xff]
    %v2367 = vld [vmem:[%s5] sm:$0x1]
    %v2369 = vperm.slane %v2367, 0
    %v2372 = vsel %vm142, %v2360, 0
    %v2375 = vsel %vm142, %v2361, 0
    %2377 = vmatpush.msra.mxu0 0.0
    %2378 = vmatpush.msra.mxu0 0.0
    %2379 = vmatpush.msra.mxu0 0.0
    %2380 = vmatpush.msra.mxu0 0.0
    %2381 = vmatpush.msra.mxu0 0.0
    %2382 = vmatpush.msra.mxu0 0.0
    %2383 = vmatpush.msra.mxu0 0.0
    %2384 = vmatpush.msra.mxu0 0.0
    %2385 = vmatpush.msra.mxu0 0.0
    %2386 = vmatpush.msra.mxu0 0.0
    %2387 = vmatpush.msra.mxu0 0.0
    %2388 = vmatpush.msra.mxu0 0.0
    %2389 = vmatpush.msra.mxu0 %v2366
    %2390 = vmatpush.msra.mxu0 %v2365
    %2391 = vmatpush.msra.mxu0 %v2364
    %2392 = vmatpush.msra.mxu0 %v2363
    %2393 = vmatmul.f32.gmra.mxu0 %v2372
    %v2394 = vpop.f32.mrf.mxu0
    %v2395 = vadd.f32 %v2369, %v2394
    %2396 = vmatmul.f32.gmra.mxu0 %v2375
    %v2397 = vpop.f32.mrf.mxu0
    %v2398 = vadd.f32 %v2369, %v2397
    %2399 = vdwg.mxu0
    %v2400 = vld [vmem:[%s172] sm:$0xff]
    %v2401 = vld [vmem:[%s172 + $0x8] sm:$0xff]
    %v2402 = vld [vmem:[%s172 + $0x10] sm:$0xff]
    %v2403 = vld [vmem:[%s172 + $0x18] sm:$0xff]
    %v2404 = vld [vmem:[%s177] sm:$0x1]
    %v2406 = vperm.slane %v2404, 0
    %2408 = vmatpush.msra.mxu0 0.0
    %2409 = vmatpush.msra.mxu0 0.0
    %2410 = vmatpush.msra.mxu0 0.0
    %2411 = vmatpush.msra.mxu0 0.0
    %2412 = vmatpush.msra.mxu0 0.0
    %2413 = vmatpush.msra.mxu0 0.0
    %2414 = vmatpush.msra.mxu0 0.0
    %2415 = vmatpush.msra.mxu0 0.0
    %2416 = vmatpush.msra.mxu0 0.0
    %2417 = vmatpush.msra.mxu0 0.0
    %2418 = vmatpush.msra.mxu0 0.0
    %2419 = vmatpush.msra.mxu0 0.0
    %2420 = vmatpush.msra.mxu0 %v2403
    %2421 = vmatpush.msra.mxu0 %v2402
    %2422 = vmatpush.msra.mxu0 %v2401
    %2423 = vmatpush.msra.mxu0 %v2400
    %2424 = vmatmul.f32.gmra.mxu0 %v2372
    %v2425 = vpop.f32.mrf.mxu0
    %v2426 = vadd.f32 %v2406, %v2425
    %2427 = vmatmul.f32.gmra.mxu0 %v2375
    %v2428 = vpop.f32.mrf.mxu0
    %v2429 = vadd.f32 %v2406, %v2428
    %2430 = vdwg.mxu0
    %v2431 = vld [vmem:[%s205] sm:$0xff]
    %v2432 = vld [vmem:[%s205 + $0x8] sm:$0xff]
    %v2433 = vld [vmem:[%s205 + $0x10] sm:$0xff]
    %v2434 = vld [vmem:[%s205 + $0x18] sm:$0xff]
    %v2435 = vld [vmem:[%s210] sm:$0x1]
    %v2437 = vperm.slane %v2435, 0
    %2439 = vmatpush.msra.mxu0 0.0
    %2440 = vmatpush.msra.mxu0 0.0
    %2441 = vmatpush.msra.mxu0 0.0
    %2442 = vmatpush.msra.mxu0 0.0
    %2443 = vmatpush.msra.mxu0 0.0
    %2444 = vmatpush.msra.mxu0 0.0
    %2445 = vmatpush.msra.mxu0 0.0
    %2446 = vmatpush.msra.mxu0 0.0
    %2447 = vmatpush.msra.mxu0 0.0
    %2448 = vmatpush.msra.mxu0 0.0
    %2449 = vmatpush.msra.mxu0 0.0
    %2450 = vmatpush.msra.mxu0 0.0
    %2451 = vmatpush.msra.mxu0 %v2434
    %2452 = vmatpush.msra.mxu0 %v2433
    %2453 = vmatpush.msra.mxu0 %v2432
    %2454 = vmatpush.msra.mxu0 %v2431
    %2455 = vmatmul.f32.gmra.mxu0 %v2372
    %v2456 = vpop.f32.mrf.mxu0
    %v2457 = vadd.f32 %v2437, %v2456
    %2458 = vmatmul.f32.gmra.mxu0 %v2375
    %v2459 = vpop.f32.mrf.mxu0
    %v2460 = vadd.f32 %v2437, %v2459
    %2461 = vdwg.mxu0
    %v2463 = vsel %vm238, %v2395, 0
    %v2466 = vsel %vm238, %v2398, 0
    %v2469 = vsel %vm238, %v2426, 0
    %v2472 = vsel %vm238, %v2429, 0
    %2474 = vmatpush.xpose.msra.mxu0 0.0
    %2475 = vmatpush.xpose.msra.mxu0 0.0
    %2476 = vmatpush.xpose.msra.mxu0 0.0
    %2477 = vmatpush.xpose.msra.mxu0 0.0
    %2478 = vmatpush.xpose.msra.mxu0 0.0
    %2479 = vmatpush.xpose.msra.mxu0 0.0
    %2480 = vmatpush.xpose.msra.mxu0 0.0
    %2481 = vmatpush.xpose.msra.mxu0 0.0
    %2482 = vmatpush.xpose.msra.mxu0 0.0
    %2483 = vmatpush.xpose.msra.mxu0 0.0
    %2484 = vmatpush.xpose.msra.mxu0 0.0
    %2485 = vmatpush.xpose.msra.mxu0 0.0
    %2486 = vmatpush.xpose.msra.mxu0 0.0
    %2487 = vmatpush.xpose.msra.mxu0 0.0
    %2488 = vmatpush.xpose.msra.mxu0 %v2472
    %2489 = vmatpush.xpose.msra.mxu0 %v2469
    %2490 = vmatmul.f32.gmra.mxu0 %v2463
    %v2491 = vpop.f32.mrf.mxu0
    %v2492 = vadd.f32 0.0, %v2491
    %2493 = vmatmul.f32.gmra.mxu0 %v2466
    %v2494 = vpop.f32.mrf.mxu0
    %v2495 = vadd.f32 0.0, %v2494
    %2496 = vdwg.mxu0
    %v2497 = vmul.f32 %v2492, 0.35355338
    %v2498 = vmul.f32 %v2495, 0.35355338
    %v2499 = vsel %vm276, %v2497, -inf
    %2500 = vmax.xlane.f32.xlu0 %v2499
    %v2501 = vpop.xlane.xlu0 %2500
    %v2502 = vsel %vm280, %v2498, -inf
    %2503 = vmax.xlane.f32.xlu0 %v2502
    %v2504 = vpop.xlane.xlu0 %2503
    %v2505 = vsub.f32 %v2497, %v2501
    %v2506 = vsub.f32 %v2498, %v2504
    %v2507 = vmul.f32 %v2505, 1.442695
    %v2508 = vpow.pop %v2507
    %v2509 = vmul.f32 %v2506, 1.442695
    %v2510 = vpow.pop %v2509
    %v2511 = vsel %vm276, %v2508, 0.0
    %2512 = vadd.xlane.f32.xlu0 %v2511
    %v2513 = vpop.xlane.xlu0 %2512
    %v2514 = vsel %vm280, %v2510, 0.0
    %2515 = vadd.xlane.f32.xlu0 %v2514
    %v2516 = vpop.xlane.xlu0 %2515
    %v2517 = vrcp.pop %v2513
    %v2518 = vrcp.pop %v2516
    %v2519 = vmul.f32 %v2508, %v2517
    %v2520 = vmul.f32 %v2510, %v2518
    %v2522 = vsel %vm276, %v2519, 0
    %v2525 = vsel %vm276, %v2520, 0
    %v2528 = vsel %vm306, %v2460, 0
    %2530 = vmatpush.msra.mxu0 0.0
    %2531 = vmatpush.msra.mxu0 0.0
    %2532 = vmatpush.msra.mxu0 0.0
    %2533 = vmatpush.msra.mxu0 0.0
    %2534 = vmatpush.msra.mxu0 0.0
    %2535 = vmatpush.msra.mxu0 0.0
    %2536 = vmatpush.msra.mxu0 0.0
    %2537 = vmatpush.msra.mxu0 0.0
    %2538 = vmatpush.msra.mxu0 0.0
    %2539 = vmatpush.msra.mxu0 0.0
    %2540 = vmatpush.msra.mxu0 0.0
    %2541 = vmatpush.msra.mxu0 0.0
    %2542 = vmatpush.msra.mxu0 0.0
    %2543 = vmatpush.msra.mxu0 0.0
    %2544 = vmatpush.msra.mxu0 %v2528
    %2545 = vmatpush.msra.mxu0 %v2457
    %2546 = vmatmul.f32.gmra.mxu0 %v2522
    %v2547 = vpop.f32.mrf.mxu0
    %v2548 = vadd.f32 0.0, %v2547
    %2549 = vmatmul.f32.gmra.mxu0 %v2525
    %v2550 = vpop.f32.mrf.mxu0
    %v2551 = vadd.f32 0.0, %v2550
    %2552 = vdwg.mxu0
    %v2553 = vld [vmem:[%s7] sm:$0xff]
    %v2555 = vsel %vm238, %v2548, 0
    %v2558 = vsel %vm238, %v2551, 0
    %2560 = vmatpush.msra.mxu0 0.0
    %2561 = vmatpush.msra.mxu0 0.0
    %2562 = vmatpush.msra.mxu0 0.0
    %2563 = vmatpush.msra.mxu0 0.0
    %2564 = vmatpush.msra.mxu0 0.0
    %2565 = vmatpush.msra.mxu0 0.0
    %2566 = vmatpush.msra.mxu0 0.0
    %2567 = vmatpush.msra.mxu0 0.0
    %2568 = vmatpush.msra.mxu0 0.0
    %2569 = vmatpush.msra.mxu0 0.0
    %2570 = vmatpush.msra.mxu0 0.0
    %2571 = vmatpush.msra.mxu0 0.0
    %2572 = vmatpush.msra.mxu0 0.0
    %2573 = vmatpush.msra.mxu0 0.0
    %2574 = vmatpush.msra.mxu0 0.0
    %2575 = vmatpush.msra.mxu0 %v2553
    %2576 = vmatmul.f32.gmra.mxu0 %v2555
    %v2577 = vpop.f32.mrf.mxu0
    %v2578 = vadd.f32 0.0, %v2577
    %2579 = vmatmul.f32.gmra.mxu0 %v2558
    %v2580 = vpop.f32.mrf.mxu0
    %v2581 = vadd.f32 0.0, %v2580
    %2582 = vdwg.mxu0
    %v2584 = vperm.slane %v2362, 0
    %v2586 = vadd.f32 %v2584, %v2578
    %v2587 = vadd.f32 %v2584, %v2581
    %v2588 = vld [vmem:[%s368] sm:$0xff]
    %v2589 = vld [vmem:[%s368 + $0x8] sm:$0xff]
    %v2590 = vld [vmem:[%s368 + $0x10] sm:$0xff]
    %v2591 = vld [vmem:[%s368 + $0x18] sm:$0xff]
    %v2592 = vld [vmem:[%s373] sm:$0x1]
    %v2594 = vperm.slane %v2592, 0
    %2596 = vmatpush.msra.mxu0 0.0
    %2597 = vmatpush.msra.mxu0 0.0
    %2598 = vmatpush.msra.mxu0 0.0
    %2599 = vmatpush.msra.mxu0 0.0
    %2600 = vmatpush.msra.mxu0 0.0
    %2601 = vmatpush.msra.mxu0 0.0
    %2602 = vmatpush.msra.mxu0 0.0
    %2603 = vmatpush.msra.mxu0 0.0
    %2604 = vmatpush.msra.mxu0 0.0
    %2605 = vmatpush.msra.mxu0 0.0
    %2606 = vmatpush.msra.mxu0 0.0
    %2607 = vmatpush.msra.mxu0 0.0
    %2608 = vmatpush.msra.mxu0 %v2591
    %2609 = vmatpush.msra.mxu0 %v2590
    %2610 = vmatpush.msra.mxu0 %v2589
    %2611 = vmatpush.msra.mxu0 %v2588
    %2612 = vmatmul.f32.gmra.mxu0 %v2372
    %v2613 = vpop.f32.mrf.mxu0
    %v2614 = vadd.f32 %v2594, %v2613
    %2615 = vmatmul.f32.gmra.mxu0 %v2375
    %v2616 = vpop.f32.mrf.mxu0
    %v2617 = vadd.f32 %v2594, %v2616
    %2618 = vdwg.mxu0
    %v2619 = vld [vmem:[%s401] sm:$0xff]
    %v2620 = vld [vmem:[%s401 + $0x8] sm:$0xff]
    %v2621 = vld [vmem:[%s401 + $0x10] sm:$0xff]
    %v2622 = vld [vmem:[%s401 + $0x18] sm:$0xff]
    %v2623 = vld [vmem:[%s406] sm:$0x1]
    %v2625 = vperm.slane %v2623, 0
    %2627 = vmatpush.msra.mxu0 0.0
    %2628 = vmatpush.msra.mxu0 0.0
    %2629 = vmatpush.msra.mxu0 0.0
    %2630 = vmatpush.msra.mxu0 0.0
    %2631 = vmatpush.msra.mxu0 0.0
    %2632 = vmatpush.msra.mxu0 0.0
    %2633 = vmatpush.msra.mxu0 0.0
    %2634 = vmatpush.msra.mxu0 0.0
    %2635 = vmatpush.msra.mxu0 0.0
    %2636 = vmatpush.msra.mxu0 0.0
    %2637 = vmatpush.msra.mxu0 0.0
    %2638 = vmatpush.msra.mxu0 0.0
    %2639 = vmatpush.msra.mxu0 %v2622
    %2640 = vmatpush.msra.mxu0 %v2621
    %2641 = vmatpush.msra.mxu0 %v2620
    %2642 = vmatpush.msra.mxu0 %v2619
    %2643 = vmatmul.f32.gmra.mxu0 %v2372
    %v2644 = vpop.f32.mrf.mxu0
    %v2645 = vadd.f32 %v2625, %v2644
    %2646 = vmatmul.f32.gmra.mxu0 %v2375
    %v2647 = vpop.f32.mrf.mxu0
    %v2648 = vadd.f32 %v2625, %v2647
    %2649 = vdwg.mxu0
    %v2650 = vld [vmem:[%s434] sm:$0xff]
    %v2651 = vld [vmem:[%s434 + $0x8] sm:$0xff]
    %v2652 = vld [vmem:[%s434 + $0x10] sm:$0xff]
    %v2653 = vld [vmem:[%s434 + $0x18] sm:$0xff]
    %v2654 = vld [vmem:[%s439] sm:$0x1]
    %v2656 = vperm.slane %v2654, 0
    %2658 = vmatpush.msra.mxu0 0.0
    %2659 = vmatpush.msra.mxu0 0.0
    %2660 = vmatpush.msra.mxu0 0.0
    %2661 = vmatpush.msra.mxu0 0.0
    %2662 = vmatpush.msra.mxu0 0.0
    %2663 = vmatpush.msra.mxu0 0.0
    %2664 = vmatpush.msra.mxu0 0.0
    %2665 = vmatpush.msra.mxu0 0.0
    %2666 = vmatpush.msra.mxu0 0.0
    %2667 = vmatpush.msra.mxu0 0.0
    %2668 = vmatpush.msra.mxu0 0.0
    %2669 = vmatpush.msra.mxu0 0.0
    %2670 = vmatpush.msra.mxu0 %v2653
    %2671 = vmatpush.msra.mxu0 %v2652
    %2672 = vmatpush.msra.mxu0 %v2651
    %2673 = vmatpush.msra.mxu0 %v2650
    %2674 = vmatmul.f32.gmra.mxu0 %v2372
    %v2675 = vpop.f32.mrf.mxu0
    %v2676 = vadd.f32 %v2656, %v2675
    %2677 = vmatmul.f32.gmra.mxu0 %v2375
    %v2678 = vpop.f32.mrf.mxu0
    %v2679 = vadd.f32 %v2656, %v2678
    %2680 = vdwg.mxu0
    %v2682 = vsel %vm238, %v2614, 0
    %v2685 = vsel %vm238, %v2617, 0
    %v2688 = vsel %vm238, %v2645, 0
    %v2691 = vsel %vm238, %v2648, 0
    %2693 = vmatpush.xpose.msra.mxu0 0.0
    %2694 = vmatpush.xpose.msra.mxu0 0.0
    %2695 = vmatpush.xpose.msra.mxu0 0.0
    %2696 = vmatpush.xpose.msra.mxu0 0.0
    %2697 = vmatpush.xpose.msra.mxu0 0.0
    %2698 = vmatpush.xpose.msra.mxu0 0.0
    %2699 = vmatpush.xpose.msra.mxu0 0.0
    %2700 = vmatpush.xpose.msra.mxu0 0.0
    %2701 = vmatpush.xpose.msra.mxu0 0.0
    %2702 = vmatpush.xpose.msra.mxu0 0.0
    %2703 = vmatpush.xpose.msra.mxu0 0.0
    %2704 = vmatpush.xpose.msra.mxu0 0.0
    %2705 = vmatpush.xpose.msra.mxu0 0.0
    %2706 = vmatpush.xpose.msra.mxu0 0.0
    %2707 = vmatpush.xpose.msra.mxu0 %v2691
    %2708 = vmatpush.xpose.msra.mxu0 %v2688
    %2709 = vmatmul.f32.gmra.mxu0 %v2682
    %v2710 = vpop.f32.mrf.mxu0
    %v2711 = vadd.f32 0.0, %v2710
    %2712 = vmatmul.f32.gmra.mxu0 %v2685
    %v2713 = vpop.f32.mrf.mxu0
    %v2714 = vadd.f32 0.0, %v2713
    %2715 = vdwg.mxu0
    %v2716 = vmul.f32 %v2711, 0.35355338
    %v2717 = vmul.f32 %v2714, 0.35355338
    %v2718 = vsel %vm276, %v2716, -inf
    %2719 = vmax.xlane.f32.xlu0 %v2718
    %v2720 = vpop.xlane.xlu0 %2719
    %v2721 = vsel %vm280, %v2717, -inf
    %2722 = vmax.xlane.f32.xlu0 %v2721
    %v2723 = vpop.xlane.xlu0 %2722
    %v2724 = vsub.f32 %v2716, %v2720
    %v2725 = vsub.f32 %v2717, %v2723
    %v2726 = vmul.f32 %v2724, 1.442695
    %v2727 = vpow.pop %v2726
    %v2728 = vmul.f32 %v2725, 1.442695
    %v2729 = vpow.pop %v2728
    %v2730 = vsel %vm276, %v2727, 0.0
    %2731 = vadd.xlane.f32.xlu0 %v2730
    %v2732 = vpop.xlane.xlu0 %2731
    %v2733 = vsel %vm280, %v2729, 0.0
    %2734 = vadd.xlane.f32.xlu0 %v2733
    %v2735 = vpop.xlane.xlu0 %2734
    %v2736 = vrcp.pop %v2732
    %v2737 = vrcp.pop %v2735
    %v2738 = vmul.f32 %v2727, %v2736
    %v2739 = vmul.f32 %v2729, %v2737
    %v2741 = vsel %vm276, %v2738, 0
    %v2744 = vsel %vm276, %v2739, 0
    %v2747 = vsel %vm306, %v2679, 0
    %2749 = vmatpush.msra.mxu0 0.0
    %2750 = vmatpush.msra.mxu0 0.0
    %2751 = vmatpush.msra.mxu0 0.0
    %2752 = vmatpush.msra.mxu0 0.0
    %2753 = vmatpush.msra.mxu0 0.0
    %2754 = vmatpush.msra.mxu0 0.0
    %2755 = vmatpush.msra.mxu0 0.0
    %2756 = vmatpush.msra.mxu0 0.0
    %2757 = vmatpush.msra.mxu0 0.0
    %2758 = vmatpush.msra.mxu0 0.0
    %2759 = vmatpush.msra.mxu0 0.0
    %2760 = vmatpush.msra.mxu0 0.0
    %2761 = vmatpush.msra.mxu0 0.0
    %2762 = vmatpush.msra.mxu0 0.0
    %2763 = vmatpush.msra.mxu0 %v2747
    %2764 = vmatpush.msra.mxu0 %v2676
    %2765 = vmatmul.f32.gmra.mxu0 %v2741
    %v2766 = vpop.f32.mrf.mxu0
    %v2767 = vadd.f32 0.0, %v2766
    %2768 = vmatmul.f32.gmra.mxu0 %v2744
    %v2769 = vpop.f32.mrf.mxu0
    %v2770 = vadd.f32 0.0, %v2769
    %2771 = vdwg.mxu0
    %v2772 = vld [vmem:[%s558] sm:$0xff]
    %v2774 = vsel %vm238, %v2767, 0
    %v2777 = vsel %vm238, %v2770, 0
    %2779 = vmatpush.msra.mxu0 0.0
    %2780 = vmatpush.msra.mxu0 0.0
    %2781 = vmatpush.msra.mxu0 0.0
    %2782 = vmatpush.msra.mxu0 0.0
    %2783 = vmatpush.msra.mxu0 0.0
    %2784 = vmatpush.msra.mxu0 0.0
    %2785 = vmatpush.msra.mxu0 0.0
    %2786 = vmatpush.msra.mxu0 0.0
    %2787 = vmatpush.msra.mxu0 0.0
    %2788 = vmatpush.msra.mxu0 0.0
    %2789 = vmatpush.msra.mxu0 0.0
    %2790 = vmatpush.msra.mxu0 0.0
    %2791 = vmatpush.msra.mxu0 0.0
    %2792 = vmatpush.msra.mxu0 0.0
    %2793 = vmatpush.msra.mxu0 0.0
    %2794 = vmatpush.msra.mxu0 %v2772
    %2795 = vmatmul.f32.gmra.mxu0 %v2774
    %v2796 = vpop.f32.mrf.mxu0
    %v2797 = vadd.f32 0.0, %v2796
    %2798 = vmatmul.f32.gmra.mxu0 %v2777
    %v2799 = vpop.f32.mrf.mxu0
    %v2800 = vadd.f32 0.0, %v2799
    %2801 = vdwg.mxu0
    %v2802 = vadd.f32 %v2586, %v2797
    %v2803 = vadd.f32 %v2587, %v2800
    %v2804 = vld [vmem:[%s591] sm:$0xff]
    %v2805 = vld [vmem:[%s591 + $0x8] sm:$0xff]
    %v2806 = vld [vmem:[%s591 + $0x10] sm:$0xff]
    %v2807 = vld [vmem:[%s591 + $0x18] sm:$0xff]
    %v2808 = vld [vmem:[%s596] sm:$0x1]
    %v2810 = vperm.slane %v2808, 0
    %2812 = vmatpush.msra.mxu0 0.0
    %2813 = vmatpush.msra.mxu0 0.0
    %2814 = vmatpush.msra.mxu0 0.0
    %2815 = vmatpush.msra.mxu0 0.0
    %2816 = vmatpush.msra.mxu0 0.0
    %2817 = vmatpush.msra.mxu0 0.0
    %2818 = vmatpush.msra.mxu0 0.0
    %2819 = vmatpush.msra.mxu0 0.0
    %2820 = vmatpush.msra.mxu0 0.0
    %2821 = vmatpush.msra.mxu0 0.0
    %2822 = vmatpush.msra.mxu0 0.0
    %2823 = vmatpush.msra.mxu0 0.0
    %2824 = vmatpush.msra.mxu0 %v2807
    %2825 = vmatpush.msra.mxu0 %v2806
    %2826 = vmatpush.msra.mxu0 %v2805
    %2827 = vmatpush.msra.mxu0 %v2804
    %2828 = vmatmul.f32.gmra.mxu0 %v2372
    %v2829 = vpop.f32.mrf.mxu0
    %v2830 = vadd.f32 %v2810, %v2829
    %2831 = vmatmul.f32.gmra.mxu0 %v2375
    %v2832 = vpop.f32.mrf.mxu0
    %v2833 = vadd.f32 %v2810, %v2832
    %2834 = vdwg.mxu0
    %v2835 = vld [vmem:[%s624] sm:$0xff]
    %v2836 = vld [vmem:[%s624 + $0x8] sm:$0xff]
    %v2837 = vld [vmem:[%s624 + $0x10] sm:$0xff]
    %v2838 = vld [vmem:[%s624 + $0x18] sm:$0xff]
    %v2839 = vld [vmem:[%s629] sm:$0x1]
    %v2841 = vperm.slane %v2839, 0
    %2843 = vmatpush.msra.mxu0 0.0
    %2844 = vmatpush.msra.mxu0 0.0
    %2845 = vmatpush.msra.mxu0 0.0
    %2846 = vmatpush.msra.mxu0 0.0
    %2847 = vmatpush.msra.mxu0 0.0
    %2848 = vmatpush.msra.mxu0 0.0
    %2849 = vmatpush.msra.mxu0 0.0
    %2850 = vmatpush.msra.mxu0 0.0
    %2851 = vmatpush.msra.mxu0 0.0
    %2852 = vmatpush.msra.mxu0 0.0
    %2853 = vmatpush.msra.mxu0 0.0
    %2854 = vmatpush.msra.mxu0 0.0
    %2855 = vmatpush.msra.mxu0 %v2838
    %2856 = vmatpush.msra.mxu0 %v2837
    %2857 = vmatpush.msra.mxu0 %v2836
    %2858 = vmatpush.msra.mxu0 %v2835
    %2859 = vmatmul.f32.gmra.mxu0 %v2372
    %v2860 = vpop.f32.mrf.mxu0
    %v2861 = vadd.f32 %v2841, %v2860
    %2862 = vmatmul.f32.gmra.mxu0 %v2375
    %v2863 = vpop.f32.mrf.mxu0
    %v2864 = vadd.f32 %v2841, %v2863
    %2865 = vdwg.mxu0
    %v2866 = vld [vmem:[%s657] sm:$0xff]
    %v2867 = vld [vmem:[%s657 + $0x8] sm:$0xff]
    %v2868 = vld [vmem:[%s657 + $0x10] sm:$0xff]
    %v2869 = vld [vmem:[%s657 + $0x18] sm:$0xff]
    %v2870 = vld [vmem:[%s662] sm:$0x1]
    %v2872 = vperm.slane %v2870, 0
    %2874 = vmatpush.msra.mxu0 0.0
    %2875 = vmatpush.msra.mxu0 0.0
    %2876 = vmatpush.msra.mxu0 0.0
    %2877 = vmatpush.msra.mxu0 0.0
    %2878 = vmatpush.msra.mxu0 0.0
    %2879 = vmatpush.msra.mxu0 0.0
    %2880 = vmatpush.msra.mxu0 0.0
    %2881 = vmatpush.msra.mxu0 0.0
    %2882 = vmatpush.msra.mxu0 0.0
    %2883 = vmatpush.msra.mxu0 0.0
    %2884 = vmatpush.msra.mxu0 0.0
    %2885 = vmatpush.msra.mxu0 0.0
    %2886 = vmatpush.msra.mxu0 %v2869
    %2887 = vmatpush.msra.mxu0 %v2868
    %2888 = vmatpush.msra.mxu0 %v2867
    %2889 = vmatpush.msra.mxu0 %v2866
    %2890 = vmatmul.f32.gmra.mxu0 %v2372
    %v2891 = vpop.f32.mrf.mxu0
    %v2892 = vadd.f32 %v2872, %v2891
    %2893 = vmatmul.f32.gmra.mxu0 %v2375
    %v2894 = vpop.f32.mrf.mxu0
    %v2895 = vadd.f32 %v2872, %v2894
    %2896 = vdwg.mxu0
    %v2898 = vsel %vm238, %v2830, 0
    %v2901 = vsel %vm238, %v2833, 0
    %v2904 = vsel %vm238, %v2861, 0
    %v2907 = vsel %vm238, %v2864, 0
    %2909 = vmatpush.xpose.msra.mxu0 0.0
    %2910 = vmatpush.xpose.msra.mxu0 0.0
    %2911 = vmatpush.xpose.msra.mxu0 0.0
    %2912 = vmatpush.xpose.msra.mxu0 0.0
    %2913 = vmatpush.xpose.msra.mxu0 0.0
    %2914 = vmatpush.xpose.msra.mxu0 0.0
    %2915 = vmatpush.xpose.msra.mxu0 0.0
    %2916 = vmatpush.xpose.msra.mxu0 0.0
    %2917 = vmatpush.xpose.msra.mxu0 0.0
    %2918 = vmatpush.xpose.msra.mxu0 0.0
    %2919 = vmatpush.xpose.msra.mxu0 0.0
    %2920 = vmatpush.xpose.msra.mxu0 0.0
    %2921 = vmatpush.xpose.msra.mxu0 0.0
    %2922 = vmatpush.xpose.msra.mxu0 0.0
    %2923 = vmatpush.xpose.msra.mxu0 %v2907
    %2924 = vmatpush.xpose.msra.mxu0 %v2904
    %2925 = vmatmul.f32.gmra.mxu0 %v2898
    %v2926 = vpop.f32.mrf.mxu0
    %v2927 = vadd.f32 0.0, %v2926
    %2928 = vmatmul.f32.gmra.mxu0 %v2901
    %v2929 = vpop.f32.mrf.mxu0
    %v2930 = vadd.f32 0.0, %v2929
    %2931 = vdwg.mxu0
    %v2932 = vmul.f32 %v2927, 0.35355338
    %v2933 = vmul.f32 %v2930, 0.35355338
    %v2934 = vsel %vm276, %v2932, -inf
    %2935 = vmax.xlane.f32.xlu0 %v2934
    %v2936 = vpop.xlane.xlu0 %2935
    %v2937 = vsel %vm280, %v2933, -inf
    %2938 = vmax.xlane.f32.xlu0 %v2937
    %v2939 = vpop.xlane.xlu0 %2938
    %v2940 = vsub.f32 %v2932, %v2936
    %v2941 = vsub.f32 %v2933, %v2939
    %v2942 = vmul.f32 %v2940, 1.442695
    %v2943 = vpow.pop %v2942
    %v2944 = vmul.f32 %v2941, 1.442695
    %v2945 = vpow.pop %v2944
    %v2946 = vsel %vm276, %v2943, 0.0
    %2947 = vadd.xlane.f32.xlu0 %v2946
    %v2948 = vpop.xlane.xlu0 %2947
    %v2949 = vsel %vm280, %v2945, 0.0
    %2950 = vadd.xlane.f32.xlu0 %v2949
    %v2951 = vpop.xlane.xlu0 %2950
    %v2952 = vrcp.pop %v2948
    %v2953 = vrcp.pop %v2951
    %v2954 = vmul.f32 %v2943, %v2952
    %v2955 = vmul.f32 %v2945, %v2953
    %v2957 = vsel %vm276, %v2954, 0
    %v2960 = vsel %vm276, %v2955, 0
    %v2963 = vsel %vm306, %v2895, 0
    %2965 = vmatpush.msra.mxu0 0.0
    %2966 = vmatpush.msra.mxu0 0.0
    %2967 = vmatpush.msra.mxu0 0.0
    %2968 = vmatpush.msra.mxu0 0.0
    %2969 = vmatpush.msra.mxu0 0.0
    %2970 = vmatpush.msra.mxu0 0.0
    %2971 = vmatpush.msra.mxu0 0.0
    %2972 = vmatpush.msra.mxu0 0.0
    %2973 = vmatpush.msra.mxu0 0.0
    %2974 = vmatpush.msra.mxu0 0.0
    %2975 = vmatpush.msra.mxu0 0.0
    %2976 = vmatpush.msra.mxu0 0.0
    %2977 = vmatpush.msra.mxu0 0.0
    %2978 = vmatpush.msra.mxu0 0.0
    %2979 = vmatpush.msra.mxu0 %v2963
    %2980 = vmatpush.msra.mxu0 %v2892
    %2981 = vmatmul.f32.gmra.mxu0 %v2957
    %v2982 = vpop.f32.mrf.mxu0
    %v2983 = vadd.f32 0.0, %v2982
    %2984 = vmatmul.f32.gmra.mxu0 %v2960
    %v2985 = vpop.f32.mrf.mxu0
    %v2986 = vadd.f32 0.0, %v2985
    %2987 = vdwg.mxu0
    %v2988 = vld [vmem:[%s781] sm:$0xff]
    %v2990 = vsel %vm238, %v2983, 0
    %v2993 = vsel %vm238, %v2986, 0
    %2995 = vmatpush.msra.mxu0 0.0
    %2996 = vmatpush.msra.mxu0 0.0
    %2997 = vmatpush.msra.mxu0 0.0
    %2998 = vmatpush.msra.mxu0 0.0
    %2999 = vmatpush.msra.mxu0 0.0
    %3000 = vmatpush.msra.mxu0 0.0
    %3001 = vmatpush.msra.mxu0 0.0
    %3002 = vmatpush.msra.mxu0 0.0
    %3003 = vmatpush.msra.mxu0 0.0
    %3004 = vmatpush.msra.mxu0 0.0
    %3005 = vmatpush.msra.mxu0 0.0
    %3006 = vmatpush.msra.mxu0 0.0
    %3007 = vmatpush.msra.mxu0 0.0
    %3008 = vmatpush.msra.mxu0 0.0
    %3009 = vmatpush.msra.mxu0 0.0
    %3010 = vmatpush.msra.mxu0 %v2988
    %3011 = vmatmul.f32.gmra.mxu0 %v2990
    %v3012 = vpop.f32.mrf.mxu0
    %v3013 = vadd.f32 0.0, %v3012
    %3014 = vmatmul.f32.gmra.mxu0 %v2993
    %v3015 = vpop.f32.mrf.mxu0
    %v3016 = vadd.f32 0.0, %v3015
    %3017 = vdwg.mxu0
    %v3018 = vadd.f32 %v2802, %v3013
    %v3019 = vadd.f32 %v2803, %v3016
    %v3020 = vld [vmem:[%s814] sm:$0xff]
    %v3021 = vld [vmem:[%s814 + $0x8] sm:$0xff]
    %v3022 = vld [vmem:[%s814 + $0x10] sm:$0xff]
    %v3023 = vld [vmem:[%s814 + $0x18] sm:$0xff]
    %v3024 = vld [vmem:[%s819] sm:$0x1]
    %v3026 = vperm.slane %v3024, 0
    %3028 = vmatpush.msra.mxu0 0.0
    %3029 = vmatpush.msra.mxu0 0.0
    %3030 = vmatpush.msra.mxu0 0.0
    %3031 = vmatpush.msra.mxu0 0.0
    %3032 = vmatpush.msra.mxu0 0.0
    %3033 = vmatpush.msra.mxu0 0.0
    %3034 = vmatpush.msra.mxu0 0.0
    %3035 = vmatpush.msra.mxu0 0.0
    %3036 = vmatpush.msra.mxu0 0.0
    %3037 = vmatpush.msra.mxu0 0.0
    %3038 = vmatpush.msra.mxu0 0.0
    %3039 = vmatpush.msra.mxu0 0.0
    %3040 = vmatpush.msra.mxu0 %v3023
    %3041 = vmatpush.msra.mxu0 %v3022
    %3042 = vmatpush.msra.mxu0 %v3021
    %3043 = vmatpush.msra.mxu0 %v3020
    %3044 = vmatmul.f32.gmra.mxu0 %v2372
    %v3045 = vpop.f32.mrf.mxu0
    %v3046 = vadd.f32 %v3026, %v3045
    %3047 = vmatmul.f32.gmra.mxu0 %v2375
    %v3048 = vpop.f32.mrf.mxu0
    %v3049 = vadd.f32 %v3026, %v3048
    %3050 = vdwg.mxu0
    %v3051 = vld [vmem:[%s847] sm:$0xff]
    %v3052 = vld [vmem:[%s847 + $0x8] sm:$0xff]
    %v3053 = vld [vmem:[%s847 + $0x10] sm:$0xff]
    %v3054 = vld [vmem:[%s847 + $0x18] sm:$0xff]
    %v3055 = vld [vmem:[%s852] sm:$0x1]
    %v3057 = vperm.slane %v3055, 0
    %3059 = vmatpush.msra.mxu0 0.0
    %3060 = vmatpush.msra.mxu0 0.0
    %3061 = vmatpush.msra.mxu0 0.0
    %3062 = vmatpush.msra.mxu0 0.0
    %3063 = vmatpush.msra.mxu0 0.0
    %3064 = vmatpush.msra.mxu0 0.0
    %3065 = vmatpush.msra.mxu0 0.0
    %3066 = vmatpush.msra.mxu0 0.0
    %3067 = vmatpush.msra.mxu0 0.0
    %3068 = vmatpush.msra.mxu0 0.0
    %3069 = vmatpush.msra.mxu0 0.0
    %3070 = vmatpush.msra.mxu0 0.0
    %3071 = vmatpush.msra.mxu0 %v3054
    %3072 = vmatpush.msra.mxu0 %v3053
    %3073 = vmatpush.msra.mxu0 %v3052
    %3074 = vmatpush.msra.mxu0 %v3051
    %3075 = vmatmul.f32.gmra.mxu0 %v2372
    %v3076 = vpop.f32.mrf.mxu0
    %v3077 = vadd.f32 %v3057, %v3076
    %3078 = vmatmul.f32.gmra.mxu0 %v2375
    %v3079 = vpop.f32.mrf.mxu0
    %v3080 = vadd.f32 %v3057, %v3079
    %3081 = vdwg.mxu0
    %v3082 = vld [vmem:[%s880] sm:$0xff]
    %v3083 = vld [vmem:[%s880 + $0x8] sm:$0xff]
    %v3084 = vld [vmem:[%s880 + $0x10] sm:$0xff]
    %v3085 = vld [vmem:[%s880 + $0x18] sm:$0xff]
    %v3086 = vld [vmem:[%s885] sm:$0x1]
    %v3088 = vperm.slane %v3086, 0
    %3090 = vmatpush.msra.mxu0 0.0
    %3091 = vmatpush.msra.mxu0 0.0
    %3092 = vmatpush.msra.mxu0 0.0
    %3093 = vmatpush.msra.mxu0 0.0
    %3094 = vmatpush.msra.mxu0 0.0
    %3095 = vmatpush.msra.mxu0 0.0
    %3096 = vmatpush.msra.mxu0 0.0
    %3097 = vmatpush.msra.mxu0 0.0
    %3098 = vmatpush.msra.mxu0 0.0
    %3099 = vmatpush.msra.mxu0 0.0
    %3100 = vmatpush.msra.mxu0 0.0
    %3101 = vmatpush.msra.mxu0 0.0
    %3102 = vmatpush.msra.mxu0 %v3085
    %3103 = vmatpush.msra.mxu0 %v3084
    %3104 = vmatpush.msra.mxu0 %v3083
    %3105 = vmatpush.msra.mxu0 %v3082
    %3106 = vmatmul.f32.gmra.mxu0 %v2372
    %v3107 = vpop.f32.mrf.mxu0
    %v3108 = vadd.f32 %v3088, %v3107
    %3109 = vmatmul.f32.gmra.mxu0 %v2375
    %v3110 = vpop.f32.mrf.mxu0
    %v3111 = vadd.f32 %v3088, %v3110
    %3112 = vdwg.mxu0
    %v3114 = vsel %vm238, %v3046, 0
    %v3117 = vsel %vm238, %v3049, 0
    %v3120 = vsel %vm238, %v3077, 0
    %v3123 = vsel %vm238, %v3080, 0
    %3125 = vmatpush.xpose.msra.mxu0 0.0
    %3126 = vmatpush.xpose.msra.mxu0 0.0
    %3127 = vmatpush.xpose.msra.mxu0 0.0
    %3128 = vmatpush.xpose.msra.mxu0 0.0
    %3129 = vmatpush.xpose.msra.mxu0 0.0
    %3130 = vmatpush.xpose.msra.mxu0 0.0
    %3131 = vmatpush.xpose.msra.mxu0 0.0
    %3132 = vmatpush.xpose.msra.mxu0 0.0
    %3133 = vmatpush.xpose.msra.mxu0 0.0
    %3134 = vmatpush.xpose.msra.mxu0 0.0
    %3135 = vmatpush.xpose.msra.mxu0 0.0
    %3136 = vmatpush.xpose.msra.mxu0 0.0
    %3137 = vmatpush.xpose.msra.mxu0 0.0
    %3138 = vmatpush.xpose.msra.mxu0 0.0
    %3139 = vmatpush.xpose.msra.mxu0 %v3123
    %3140 = vmatpush.xpose.msra.mxu0 %v3120
    %3141 = vmatmul.f32.gmra.mxu0 %v3114
    %v3142 = vpop.f32.mrf.mxu0
    %v3143 = vadd.f32 0.0, %v3142
    %3144 = vmatmul.f32.gmra.mxu0 %v3117
    %v3145 = vpop.f32.mrf.mxu0
    %v3146 = vadd.f32 0.0, %v3145
    %3147 = vdwg.mxu0
    %v3148 = vmul.f32 %v3143, 0.35355338
    %v3149 = vmul.f32 %v3146, 0.35355338
    %v3150 = vsel %vm276, %v3148, -inf
    %3151 = vmax.xlane.f32.xlu0 %v3150
    %v3152 = vpop.xlane.xlu0 %3151
    %v3153 = vsel %vm280, %v3149, -inf
    %3154 = vmax.xlane.f32.xlu0 %v3153
    %v3155 = vpop.xlane.xlu0 %3154
    %v3156 = vsub.f32 %v3148, %v3152
    %v3157 = vsub.f32 %v3149, %v3155
    %v3158 = vmul.f32 %v3156, 1.442695
    %v3159 = vpow.pop %v3158
    %v3160 = vmul.f32 %v3157, 1.442695
    %v3161 = vpow.pop %v3160
    %v3162 = vsel %vm276, %v3159, 0.0
    %3163 = vadd.xlane.f32.xlu0 %v3162
    %v3164 = vpop.xlane.xlu0 %3163
    %v3165 = vsel %vm280, %v3161, 0.0
    %3166 = vadd.xlane.f32.xlu0 %v3165
    %v3167 = vpop.xlane.xlu0 %3166
    %v3168 = vrcp.pop %v3164
    %v3169 = vrcp.pop %v3167
    %v3170 = vmul.f32 %v3159, %v3168
    %v3171 = vmul.f32 %v3161, %v3169
    %v3173 = vsel %vm276, %v3170, 0
    %v3176 = vsel %vm276, %v3171, 0
    %v3179 = vsel %vm306, %v3111, 0
    %3181 = vmatpush.msra.mxu0 0.0
    %3182 = vmatpush.msra.mxu0 0.0
    %3183 = vmatpush.msra.mxu0 0.0
    %3184 = vmatpush.msra.mxu0 0.0
    %3185 = vmatpush.msra.mxu0 0.0
    %3186 = vmatpush.msra.mxu0 0.0
    %3187 = vmatpush.msra.mxu0 0.0
    %3188 = vmatpush.msra.mxu0 0.0
    %3189 = vmatpush.msra.mxu0 0.0
    %3190 = vmatpush.msra.mxu0 0.0
    %3191 = vmatpush.msra.mxu0 0.0
    %3192 = vmatpush.msra.mxu0 0.0
    %3193 = vmatpush.msra.mxu0 0.0
    %3194 = vmatpush.msra.mxu0 0.0
    %3195 = vmatpush.msra.mxu0 %v3179
    %3196 = vmatpush.msra.mxu0 %v3108
    %3197 = vmatmul.f32.gmra.mxu0 %v3173
    %v3198 = vpop.f32.mrf.mxu0
    %v3199 = vadd.f32 0.0, %v3198
    %3200 = vmatmul.f32.gmra.mxu0 %v3176
    %v3201 = vpop.f32.mrf.mxu0
    %v3202 = vadd.f32 0.0, %v3201
    %3203 = vdwg.mxu0
    %v3204 = vld [vmem:[%s1004] sm:$0xff]
    %v3206 = vsel %vm238, %v3199, 0
    %v3209 = vsel %vm238, %v3202, 0
    %3211 = vmatpush.msra.mxu0 0.0
    %3212 = vmatpush.msra.mxu0 0.0
    %3213 = vmatpush.msra.mxu0 0.0
    %3214 = vmatpush.msra.mxu0 0.0
    %3215 = vmatpush.msra.mxu0 0.0
    %3216 = vmatpush.msra.mxu0 0.0
    %3217 = vmatpush.msra.mxu0 0.0
    %3218 = vmatpush.msra.mxu0 0.0
    %3219 = vmatpush.msra.mxu0 0.0
    %3220 = vmatpush.msra.mxu0 0.0
    %3221 = vmatpush.msra.mxu0 0.0
    %3222 = vmatpush.msra.mxu0 0.0
    %3223 = vmatpush.msra.mxu0 0.0
    %3224 = vmatpush.msra.mxu0 0.0
    %3225 = vmatpush.msra.mxu0 0.0
    %3226 = vmatpush.msra.mxu0 %v3204
    %3227 = vmatmul.f32.gmra.mxu0 %v3206
    %v3228 = vpop.f32.mrf.mxu0
    %v3229 = vadd.f32 0.0, %v3228
    %3230 = vmatmul.f32.gmra.mxu0 %v3209
    %v3231 = vpop.f32.mrf.mxu0
    %v3232 = vadd.f32 0.0, %v3231
    %3233 = vdwg.mxu0
    %v3234 = vadd.f32 %v3018, %v3229
    %v3235 = vadd.f32 %v3019, %v3232
    %v3236 = vadd.f32 %v3234, %v2360
    %v3237 = vadd.f32 %v3235, %v2361
    %v3238 = vld [vmem:[%s11] sm:$0x1]
    %v3239 = vld [vmem:[%s13] sm:$0x1]
    %v3240 = vsel %vm142, %v3236, 0.0
    %3241 = vadd.xlane.f32.xlu0 %v3240
    %v3242 = vpop.xlane.xlu0 %3241
    %v3243 = vsel %vm1044, %v3237, 0.0
    %3244 = vadd.xlane.f32.xlu0 %v3243
    %v3245 = vpop.xlane.xlu0 %3244
    %v3246 = vmul.f32 %v3242, %v1054
    %v3247 = vmul.f32 %v3245, %v1054
    %v3248 = vsub.f32 %v3236, %v3246
    %v3249 = vsub.f32 %v3237, %v3247
    %v3250 = vmul.f32 %v3248, %v3248
    %v3251 = vmul.f32 %v3249, %v3249
    %v3252 = vsel %vm142, %v3250, 0.0
    %3253 = vadd.xlane.f32.xlu0 %v3252
    %v3254 = vpop.xlane.xlu0 %3253
    %v3255 = vsel %vm1044, %v3251, 0.0
    %3256 = vadd.xlane.f32.xlu0 %v3255
    %v3257 = vpop.xlane.xlu0 %3256
    %v3258 = vmul.f32 %v3254, %v1054
    %v3259 = vmul.f32 %v3257, %v1054
    %v3260 = vadd.f32 %v3258, 1e-12
    %v3261 = vadd.f32 %v3259, 1e-12
    %v3262 = vrsqrt.pop %v3260
    %v3263 = vmul.f32 %v3262, %v3260
    %v3264 = vmul.f32 %v3263, %v3262
    %v3265 = vmul.f32 0.5, %v3264
    %v3266 = vsub.f32 1.5, %v3265
    %v3267 = vmul.f32 %v3262, %v3266
    %vm3268 = vweird.f32 %v3260
    %vm3269 = vweird.f32 %v3262
    %vm3270 = vmor %vm3268, %vm3269
    %v3271 = vsel %vm3270, %v3262, %v3267
    %v3272 = vrsqrt.pop %v3261
    %v3273 = vmul.f32 %v3272, %v3261
    %v3274 = vmul.f32 %v3273, %v3272
    %v3275 = vmul.f32 0.5, %v3274
    %v3276 = vsub.f32 1.5, %v3275
    %v3277 = vmul.f32 %v3272, %v3276
    %vm3278 = vweird.f32 %v3261
    %vm3279 = vweird.f32 %v3272
    %vm3280 = vmor %vm3278, %vm3279
    %v3281 = vsel %vm3280, %v3272, %v3277
    %v3282 = vmul.f32 %v3248, %v3271
    %v3283 = vmul.f32 %v3249, %v3281
    %v3285 = vperm.slane %v3238, 0
    %v3287 = vmul.f32 %v3282, %v3285
    %v3288 = vmul.f32 %v3283, %v3285
    %v3290 = vperm.slane %v3239, 0
    %v3292 = vadd.f32 %v3287, %v3290
    %v3293 = vadd.f32 %v3288, %v3290
    %v3294 = vld [vmem:[%s15] sm:$0xff]
    %v3295 = vld [vmem:[%s15 + $0x8] sm:$0xff]
    %v3296 = vld [vmem:[%s15 + $0x10] sm:$0xff]
    %v3297 = vld [vmem:[%s15 + $0x18] sm:$0xff]
    %v3298 = vld [vmem:[%s17] sm:$0x1]
    %v3300 = vperm.slane %v3298, 0
    %v3303 = vsel %vm142, %v3292, 0
    %v3306 = vsel %vm142, %v3293, 0
    %3308 = vmatpush.msra.mxu0 0.0
    %3309 = vmatpush.msra.mxu0 0.0
    %3310 = vmatpush.msra.mxu0 0.0
    %3311 = vmatpush.msra.mxu0 0.0
    %3312 = vmatpush.msra.mxu0 0.0
    %3313 = vmatpush.msra.mxu0 0.0
    %3314 = vmatpush.msra.mxu0 0.0
    %3315 = vmatpush.msra.mxu0 0.0
    %3316 = vmatpush.msra.mxu0 0.0
    %3317 = vmatpush.msra.mxu0 0.0
    %3318 = vmatpush.msra.mxu0 0.0
    %3319 = vmatpush.msra.mxu0 0.0
    %3320 = vmatpush.msra.mxu0 %v3297
    %3321 = vmatpush.msra.mxu0 %v3296
    %3322 = vmatpush.msra.mxu0 %v3295
    %3323 = vmatpush.msra.mxu0 %v3294
    %3324 = vmatmul.f32.gmra.mxu0 %v3303
    %v3325 = vpop.f32.mrf.mxu0
    %v3326 = vadd.f32 %v3300, %v3325
    %3327 = vmatmul.f32.gmra.mxu0 %v3306
    %v3328 = vpop.f32.mrf.mxu0
    %v3329 = vadd.f32 %v3300, %v3328
    %3330 = vdwg.mxu0
    %v3331 = vmul.f32 %v3326, 0.5
    %v3332 = vmul.f32 %v3329, 0.5
    %v3333 = vmul.f32 %v3326, 0.70710677
    %v3334 = vmul.f32 %v3329, 0.70710677
    %v3335 = vmul.f32 %v3333, %v3333
    %v3336 = vmin.f32 16.0, %v3335
    %v3337 = vmul.f32 %v3336, 2.1237322e-06
    %v3338 = vadd.f32 %v3337, 0.00028619796
    %v3339 = vmul.f32 %v3336, %v3338
    %v3340 = vadd.f32 %v3339, 0.0036580483
    %v3341 = vmul.f32 %v3336, %v3340
    %v3342 = vadd.f32 %v3341, 0.05243302
    %v3343 = vmul.f32 %v3336, %v3342
    %v3344 = vadd.f32 %v3343, 0.18741608
    %v3345 = vmul.f32 %v3336, %v3344
    %v3346 = vadd.f32 %v3345, 1.1283791
    %v3347 = vmul.f32 %v3333, %v3346
    %v3348 = vmul.f32 %v3336, 3.8918573e-05
    %v3349 = vadd.f32 %v3348, 0.001143296
    %v3350 = vmul.f32 %v3336, %v3349
    %v3351 = vadd.f32 %v3350, 0.014752088
    %v3352 = vmul.f32 %v3336, %v3351
    %v3353 = vadd.f32 %v3352, 0.112945676
    %v3354 = vmul.f32 %v3336, %v3353
    %v3355 = vadd.f32 %v3354, 0.4994258
    %v3356 = vmul.f32 %v3336, %v3355
    %v3357 = vadd.f32 %v3356, 1.0
    %v3358 = vrcp.pop %v3357
    %v3359 = vmul.f32 %v3357, %v3358
    %v3360 = vsub.f32 1.0, %v3359
    %v3361 = vmul.f32 %v3358, %v3360
    %v3362 = vadd.f32 %v3358, %v3361
    %vm3363 = vweird.f32 %v3357
    %vm3364 = vweird.f32 %v3358
    %vm3365 = vmor %vm3363, %vm3364
    %v3366 = vsel %vm3365, %v3358, %v3362
    %v3367 = vand.u32 2147483647, %v3357
    %vm3368 = vcmp.eq.f32.partialorder %v3367, 8.507059e+37
    %v3369 = vand.u32 %v3357, 2147483648
    %v3370 = vor.u32 1.1754944e-38, %v3369
    %v3371 = vsel %vm3368, %v3370, %v3366
    %v3372 = vmul.f32 %v3347, %v3371
    %v3373 = vmin.f32 %v3372, 1.0
    %v3374 = vmax.f32 %v3373, -1.0
    %v3375 = vmul.f32 %v3334, %v3334
    %v3376 = vmin.f32 16.0, %v3375
    %v3377 = vmul.f32 %v3376, 2.1237322e-06
    %v3378 = vadd.f32 %v3377, 0.00028619796
    %v3379 = vmul.f32 %v3376, %v3378
    %v3380 = vadd.f32 %v3379, 0.0036580483
    %v3381 = vmul.f32 %v3376, %v3380
    %v3382 = vadd.f32 %v3381, 0.05243302
    %v3383 = vmul.f32 %v3376, %v3382
    %v3384 = vadd.f32 %v3383, 0.18741608
    %v3385 = vmul.f32 %v3376, %v3384
    %v3386 = vadd.f32 %v3385, 1.1283791
    %v3387 = vmul.f32 %v3334, %v3386
    %v3388 = vmul.f32 %v3376, 3.8918573e-05
    %v3389 = vadd.f32 %v3388, 0.001143296
    %v3390 = vmul.f32 %v3376, %v3389
    %v3391 = vadd.f32 %v3390, 0.014752088
    %v3392 = vmul.f32 %v3376, %v3391
    %v3393 = vadd.f32 %v3392, 0.112945676
    %v3394 = vmul.f32 %v3376, %v3393
    %v3395 = vadd.f32 %v3394, 0.4994258
    %v3396 = vmul.f32 %v3376, %v3395
    %v3397 = vadd.f32 %v3396, 1.0
    %v3398 = vrcp.pop %v3397
    %v3399 = vmul.f32 %v3397, %v3398
    %v3400 = vsub.f32 1.0, %v3399
    %v3401 = vmul.f32 %v3398, %v3400
    %v3402 = vadd.f32 %v3398, %v3401
    %vm3403 = vweird.f32 %v3397
    %vm3404 = vweird.f32 %v3398
    %vm3405 = vmor %vm3403, %vm3404
    %v3406 = vsel %vm3405, %v3398, %v3402
    %v3407 = vand.u32 2147483647, %v3397
    %vm3408 = vcmp.eq.f32.partialorder %v3407, 8.507059e+37
    %v3409 = vand.u32 %v3397, 2147483648
    %v3410 = vor.u32 1.1754944e-38, %v3409
    %v3411 = vsel %vm3408, %v3410, %v3406
    %v3412 = vmul.f32 %v3387, %v3411
    %v3413 = vmin.f32 %v3412, 1.0
    %v3414 = vmax.f32 %v3413, -1.0
    %v3415 = vadd.f32 %v3374, 1.0
    %v3416 = vadd.f32 %v3414, 1.0
    %v3417 = vmul.f32 %v3331, %v3415
    %v3418 = vmul.f32 %v3332, %v3416
    %v3419 = vld [vmem:[%s19] sm:$0xff]
    %v3420 = vld [vmem:[%s19 + $0x8] sm:$0xff]
    %v3421 = vld [vmem:[%s19 + $0x10] sm:$0xff]
    %v3422 = vld [vmem:[%s19 + $0x18] sm:$0xff]
    %v3423 = vld [vmem:[%s19 + $0x20] sm:$0xff]
    %v3424 = vld [vmem:[%s19 + $0x28] sm:$0xff]
    %v3425 = vld [vmem:[%s19 + $0x30] sm:$0xff]
    %v3426 = vld [vmem:[%s19 + $0x38] sm:$0xff]
    %v3427 = vld [vmem:[%s21] sm:$0x1]
    %v3429 = vperm.slane %v3427, 0
    %v3432 = vsel %vm1240, %v3417, 0
    %v3435 = vsel %vm1240, %v3418, 0
    %3437 = vmatpush.msra.mxu0 0.0
    %3438 = vmatpush.msra.mxu0 0.0
    %3439 = vmatpush.msra.mxu0 0.0
    %3440 = vmatpush.msra.mxu0 0.0
    %3441 = vmatpush.msra.mxu0 0.0
    %3442 = vmatpush.msra.mxu0 0.0
    %3443 = vmatpush.msra.mxu0 0.0
    %3444 = vmatpush.msra.mxu0 0.0
    %3445 = vmatpush.msra.mxu0 %v3426
    %3446 = vmatpush.msra.mxu0 %v3425
    %3447 = vmatpush.msra.mxu0 %v3424
    %3448 = vmatpush.msra.mxu0 %v3423
    %3449 = vmatpush.msra.mxu0 %v3422
    %3450 = vmatpush.msra.mxu0 %v3421
    %3451 = vmatpush.msra.mxu0 %v3420
    %3452 = vmatpush.msra.mxu0 %v3419
    %3453 = vmatmul.f32.gmra.mxu0 %v3432
    %v3454 = vpop.f32.mrf.mxu0
    %v3455 = vadd.f32 %v3429, %v3454
    %3456 = vmatmul.f32.gmra.mxu0 %v3435
    %v3457 = vpop.f32.mrf.mxu0
    %v3458 = vadd.f32 %v3429, %v3457
    %3459 = vdwg.mxu0
    %v3460 = vadd.f32 %v3455, %v3292
    %v3461 = vadd.f32 %v3458, %v3293
    %v3462 = vld [vmem:[%s23] sm:$0x1]
    %v3463 = vld [vmem:[%s25] sm:$0x1]
    %v3464 = vsel %vm142, %v3460, 0.0
    %3465 = vadd.xlane.f32.xlu0 %v3464
    %v3466 = vpop.xlane.xlu0 %3465
    %v3467 = vsel %vm1044, %v3461, 0.0
    %3468 = vadd.xlane.f32.xlu0 %v3467
    %v3469 = vpop.xlane.xlu0 %3468
    %v3470 = vmul.f32 %v3466, %v1054
    %v3471 = vmul.f32 %v3469, %v1054
    %v3472 = vsub.f32 %v3460, %v3470
    %v3473 = vsub.f32 %v3461, %v3471
    %v3474 = vmul.f32 %v3472, %v3472
    %v3475 = vmul.f32 %v3473, %v3473
    %v3476 = vsel %vm142, %v3474, 0.0
    %3477 = vadd.xlane.f32.xlu0 %v3476
    %v3478 = vpop.xlane.xlu0 %3477
    %v3479 = vsel %vm1044, %v3475, 0.0
    %3480 = vadd.xlane.f32.xlu0 %v3479
    %v3481 = vpop.xlane.xlu0 %3480
    %v3482 = vmul.f32 %v3478, %v1054
    %v3483 = vmul.f32 %v3481, %v1054
    %v3484 = vadd.f32 %v3482, 1e-12
    %v3485 = vadd.f32 %v3483, 1e-12
    %v3486 = vrsqrt.pop %v3484
    %v3487 = vmul.f32 %v3486, %v3484
    %v3488 = vmul.f32 %v3487, %v3486
    %v3489 = vmul.f32 0.5, %v3488
    %v3490 = vsub.f32 1.5, %v3489
    %v3491 = vmul.f32 %v3486, %v3490
    %vm3492 = vweird.f32 %v3484
    %vm3493 = vweird.f32 %v3486
    %vm3494 = vmor %vm3492, %vm3493
    %v3495 = vsel %vm3494, %v3486, %v3491
    %v3496 = vrsqrt.pop %v3485
    %v3497 = vmul.f32 %v3496, %v3485
    %v3498 = vmul.f32 %v3497, %v3496
    %v3499 = vmul.f32 0.5, %v3498
    %v3500 = vsub.f32 1.5, %v3499
    %v3501 = vmul.f32 %v3496, %v3500
    %vm3502 = vweird.f32 %v3485
    %vm3503 = vweird.f32 %v3496
    %vm3504 = vmor %vm3502, %vm3503
    %v3505 = vsel %vm3504, %v3496, %v3501
    %v3506 = vmul.f32 %v3472, %v3495
    %v3507 = vmul.f32 %v3473, %v3505
    %v3509 = vperm.slane %v3462, 0
    %v3511 = vmul.f32 %v3506, %v3509
    %v3512 = vmul.f32 %v3507, %v3509
    %v3514 = vperm.slane %v3463, 0
    %v3516 = vadd.f32 %v3511, %v3514
    %v3517 = vadd.f32 %v3512, %v3514
    %3518 = vst.msk [vmem:[#allocation2] sm:$0xff] %vm142, %v3516
    %3519 = vst.msk [vmem:[#allocation2 + $0x8] sm:$0x1] %vm1044, %v3517
    %v3520 = vld [vmem:[#allocation2 + $0x1] sm:$0xff]
    %v3521 = vld [vmem:[%s33] sm:$0x1]
    %v3522 = vld [vmem:[%s27] sm:$0xff]
    %v3523 = vld [vmem:[%s27 + $0x8] sm:$0xff]
    %v3524 = vld [vmem:[%s27 + $0x10] sm:$0xff]
    %v3525 = vld [vmem:[%s27 + $0x18] sm:$0xff]
    %v3526 = vld [vmem:[%s29] sm:$0x1]
    %v3528 = vperm.slane %v3526, 0
    %v3531 = vsel %vm142, %v3520, 0
    %3533 = vmatpush.msra.mxu0 0.0
    %3534 = vmatpush.msra.mxu0 0.0
    %3535 = vmatpush.msra.mxu0 0.0
    %3536 = vmatpush.msra.mxu0 0.0
    %3537 = vmatpush.msra.mxu0 0.0
    %3538 = vmatpush.msra.mxu0 0.0
    %3539 = vmatpush.msra.mxu0 0.0
    %3540 = vmatpush.msra.mxu0 0.0
    %3541 = vmatpush.msra.mxu0 0.0
    %3542 = vmatpush.msra.mxu0 0.0
    %3543 = vmatpush.msra.mxu0 0.0
    %3544 = vmatpush.msra.mxu0 0.0
    %3545 = vmatpush.msra.mxu0 %v3525
    %3546 = vmatpush.msra.mxu0 %v3524
    %3547 = vmatpush.msra.mxu0 %v3523
    %3548 = vmatpush.msra.mxu0 %v3522
    %3549 = vmatmul.f32.gmra.mxu0 %v3531
    %v3550 = vpop.f32.mrf.mxu0
    %v3551 = vadd.f32 %v3528, %v3550
    %3552 = vdwg.mxu0
    %v3553 = vld [vmem:[%s1363] sm:$0xff]
    %v3554 = vld [vmem:[%s1363 + $0x8] sm:$0xff]
    %v3555 = vld [vmem:[%s1363 + $0x10] sm:$0xff]
    %v3556 = vld [vmem:[%s1363 + $0x18] sm:$0xff]
    %v3557 = vld [vmem:[%s1368] sm:$0x1]
    %v3559 = vperm.slane %v3557, 0
    %3561 = vmatpush.msra.mxu0 0.0
    %3562 = vmatpush.msra.mxu0 0.0
    %3563 = vmatpush.msra.mxu0 0.0
    %3564 = vmatpush.msra.mxu0 0.0
    %3565 = vmatpush.msra.mxu0 0.0
    %3566 = vmatpush.msra.mxu0 0.0
    %3567 = vmatpush.msra.mxu0 0.0
    %3568 = vmatpush.msra.mxu0 0.0
    %3569 = vmatpush.msra.mxu0 0.0
    %3570 = vmatpush.msra.mxu0 0.0
    %3571 = vmatpush.msra.mxu0 0.0
    %3572 = vmatpush.msra.mxu0 0.0
    %3573 = vmatpush.msra.mxu0 %v3556
    %3574 = vmatpush.msra.mxu0 %v3555
    %3575 = vmatpush.msra.mxu0 %v3554
    %3576 = vmatpush.msra.mxu0 %v3553
    %3577 = vmatmul.f32.gmra.mxu0 %v3531
    %v3578 = vpop.f32.mrf.mxu0
    %v3579 = vadd.f32 %v3559, %v3578
    %3580 = vdwg.mxu0
    %v3581 = vld [vmem:[%s1393] sm:$0xff]
    %v3582 = vld [vmem:[%s1393 + $0x8] sm:$0xff]
    %v3583 = vld [vmem:[%s1393 + $0x10] sm:$0xff]
    %v3584 = vld [vmem:[%s1393 + $0x18] sm:$0xff]
    %v3585 = vld [vmem:[%s1398] sm:$0x1]
    %v3587 = vperm.slane %v3585, 0
    %3589 = vmatpush.msra.mxu0 0.0
    %3590 = vmatpush.msra.mxu0 0.0
    %3591 = vmatpush.msra.mxu0 0.0
    %3592 = vmatpush.msra.mxu0 0.0
    %3593 = vmatpush.msra.mxu0 0.0
    %3594 = vmatpush.msra.mxu0 0.0
    %3595 = vmatpush.msra.mxu0 0.0
    %3596 = vmatpush.msra.mxu0 0.0
    %3597 = vmatpush.msra.mxu0 0.0
    %3598 = vmatpush.msra.mxu0 0.0
    %3599 = vmatpush.msra.mxu0 0.0
    %3600 = vmatpush.msra.mxu0 0.0
    %3601 = vmatpush.msra.mxu0 %v3584
    %3602 = vmatpush.msra.mxu0 %v3583
    %3603 = vmatpush.msra.mxu0 %v3582
    %3604 = vmatpush.msra.mxu0 %v3581
    %3605 = vmatmul.f32.gmra.mxu0 %v3531
    %v3606 = vpop.f32.mrf.mxu0
    %v3607 = vadd.f32 %v3587, %v3606
    %3608 = vdwg.mxu0
    %v3610 = vsel %vm238, %v3551, 0
    %v3613 = vsel %vm238, %v3579, 0
    %3615 = vmatpush.xpose.msra.mxu0 0.0
    %3616 = vmatpush.xpose.msra.mxu0 0.0
    %3617 = vmatpush.xpose.msra.mxu0 0.0
    %3618 = vmatpush.xpose.msra.mxu0 0.0
    %3619 = vmatpush.xpose.msra.mxu0 0.0
    %3620 = vmatpush.xpose.msra.mxu0 0.0
    %3621 = vmatpush.xpose.msra.mxu0 0.0
    %3622 = vmatpush.xpose.msra.mxu0 0.0
    %3623 = vmatpush.xpose.msra.mxu0 0.0
    %3624 = vmatpush.xpose.msra.mxu0 0.0
    %3625 = vmatpush.xpose.msra.mxu0 0.0
    %3626 = vmatpush.xpose.msra.mxu0 0.0
    %3627 = vmatpush.xpose.msra.mxu0 0.0
    %3628 = vmatpush.xpose.msra.mxu0 0.0
    %3629 = vmatpush.xpose.msra.mxu0 0.0
    %3630 = vmatpush.xpose.msra.mxu0 %v3613
    %3631 = vmatmul.f32.gmra.mxu0 %v3610
    %v3632 = vpop.f32.mrf.mxu0
    %v3633 = vadd.f32 0.0, %v3632
    %3634 = vdwg.mxu0
    %v3635 = vmul.f32 %v3633, 0.35355338
    %v3636 = vsel %vm238, %v3635, -inf
    %3637 = vmax.xlane.f32.xlu0 %v3636
    %v3638 = vpop.xlane.xlu0 %3637
    %v3639 = vsub.f32 %v3635, %v3638
    %v3640 = vmul.f32 %v3639, 1.442695
    %v3641 = vpow.pop %v3640
    %v3642 = vsel %vm238, %v3641, 0.0
    %3643 = vadd.xlane.f32.xlu0 %v3642
    %v3644 = vpop.xlane.xlu0 %3643
    %v3645 = vrcp.pop %v3644
    %v3646 = vmul.f32 %v3641, %v3645
    %v3648 = vsel %vm238, %v3646, 0
    %3650 = vmatpush.msra.mxu0 0.0
    %3651 = vmatpush.msra.mxu0 0.0
    %3652 = vmatpush.msra.mxu0 0.0
    %3653 = vmatpush.msra.mxu0 0.0
    %3654 = vmatpush.msra.mxu0 0.0
    %3655 = vmatpush.msra.mxu0 0.0
    %3656 = vmatpush.msra.mxu0 0.0
    %3657 = vmatpush.msra.mxu0 0.0
    %3658 = vmatpush.msra.mxu0 0.0
    %3659 = vmatpush.msra.mxu0 0.0
    %3660 = vmatpush.msra.mxu0 0.0
    %3661 = vmatpush.msra.mxu0 0.0
    %3662 = vmatpush.msra.mxu0 0.0
    %3663 = vmatpush.msra.mxu0 0.0
    %3664 = vmatpush.msra.mxu0 0.0
    %3665 = vmatpush.msra.mxu0 %v3607
    %3666 = vmatmul.f32.gmra.mxu0 %v3648
    %v3667 = vpop.f32.mrf.mxu0
    %v3668 = vadd.f32 0.0, %v3667
    %3669 = vdwg.mxu0
    %v3670 = vld [vmem:[%s31] sm:$0xff]
    %v3672 = vsel %vm238, %v3668, 0
    %3674 = vmatpush.msra.mxu0 0.0
    %3675 = vmatpush.msra.mxu0 0.0
    %3676 = vmatpush.msra.mxu0 0.0
    %3677 = vmatpush.msra.mxu0 0.0
    %3678 = vmatpush.msra.mxu0 0.0
    %3679 = vmatpush.msra.mxu0 0.0
    %3680 = vmatpush.msra.mxu0 0.0
    %3681 = vmatpush.msra.mxu0 0.0
    %3682 = vmatpush.msra.mxu0 0.0
    %3683 = vmatpush.msra.mxu0 0.0
    %3684 = vmatpush.msra.mxu0 0.0
    %3685 = vmatpush.msra.mxu0 0.0
    %3686 = vmatpush.msra.mxu0 0.0
    %3687 = vmatpush.msra.mxu0 0.0
    %3688 = vmatpush.msra.mxu0 0.0
    %3689 = vmatpush.msra.mxu0 %v3670
    %3690 = vmatmul.f32.gmra.mxu0 %v3672
    %v3691 = vpop.f32.mrf.mxu0
    %v3692 = vadd.f32 0.0, %v3691
    %3693 = vdwg.mxu0
    %v3695 = vperm.slane %v3521, 0
    %v3697 = vadd.f32 %v3695, %v3692
    %v3698 = vld [vmem:[%s1512] sm:$0xff]
    %v3699 = vld [vmem:[%s1512 + $0x8] sm:$0xff]
    %v3700 = vld [vmem:[%s1512 + $0x10] sm:$0xff]
    %v3701 = vld [vmem:[%s1512 + $0x18] sm:$0xff]
    %v3702 = vld [vmem:[%s1517] sm:$0x1]
    %v3704 = vperm.slane %v3702, 0
    %3706 = vmatpush.msra.mxu0 0.0
    %3707 = vmatpush.msra.mxu0 0.0
    %3708 = vmatpush.msra.mxu0 0.0
    %3709 = vmatpush.msra.mxu0 0.0
    %3710 = vmatpush.msra.mxu0 0.0
    %3711 = vmatpush.msra.mxu0 0.0
    %3712 = vmatpush.msra.mxu0 0.0
    %3713 = vmatpush.msra.mxu0 0.0
    %3714 = vmatpush.msra.mxu0 0.0
    %3715 = vmatpush.msra.mxu0 0.0
    %3716 = vmatpush.msra.mxu0 0.0
    %3717 = vmatpush.msra.mxu0 0.0
    %3718 = vmatpush.msra.mxu0 %v3701
    %3719 = vmatpush.msra.mxu0 %v3700
    %3720 = vmatpush.msra.mxu0 %v3699
    %3721 = vmatpush.msra.mxu0 %v3698
    %3722 = vmatmul.f32.gmra.mxu0 %v3531
    %v3723 = vpop.f32.mrf.mxu0
    %v3724 = vadd.f32 %v3704, %v3723
    %3725 = vdwg.mxu0
    %v3726 = vld [vmem:[%s1542] sm:$0xff]
    %v3727 = vld [vmem:[%s1542 + $0x8] sm:$0xff]
    %v3728 = vld [vmem:[%s1542 + $0x10] sm:$0xff]
    %v3729 = vld [vmem:[%s1542 + $0x18] sm:$0xff]
    %v3730 = vld [vmem:[%s1547] sm:$0x1]
    %v3732 = vperm.slane %v3730, 0
    %3734 = vmatpush.msra.mxu0 0.0
    %3735 = vmatpush.msra.mxu0 0.0
    %3736 = vmatpush.msra.mxu0 0.0
    %3737 = vmatpush.msra.mxu0 0.0
    %3738 = vmatpush.msra.mxu0 0.0
    %3739 = vmatpush.msra.mxu0 0.0
    %3740 = vmatpush.msra.mxu0 0.0
    %3741 = vmatpush.msra.mxu0 0.0
    %3742 = vmatpush.msra.mxu0 0.0
    %3743 = vmatpush.msra.mxu0 0.0
    %3744 = vmatpush.msra.mxu0 0.0
    %3745 = vmatpush.msra.mxu0 0.0
    %3746 = vmatpush.msra.mxu0 %v3729
    %3747 = vmatpush.msra.mxu0 %v3728
    %3748 = vmatpush.msra.mxu0 %v3727
    %3749 = vmatpush.msra.mxu0 %v3726
    %3750 = vmatmul.f32.gmra.mxu0 %v3531
    %v3751 = vpop.f32.mrf.mxu0
    %v3752 = vadd.f32 %v3732, %v3751
    %3753 = vdwg.mxu0
    %v3754 = vld [vmem:[%s1572] sm:$0xff]
    %v3755 = vld [vmem:[%s1572 + $0x8] sm:$0xff]
    %v3756 = vld [vmem:[%s1572 + $0x10] sm:$0xff]
    %v3757 = vld [vmem:[%s1572 + $0x18] sm:$0xff]
    %v3758 = vld [vmem:[%s1577] sm:$0x1]
    %v3760 = vperm.slane %v3758, 0
    %3762 = vmatpush.msra.mxu0 0.0
    %3763 = vmatpush.msra.mxu0 0.0
    %3764 = vmatpush.msra.mxu0 0.0
    %3765 = vmatpush.msra.mxu0 0.0
    %3766 = vmatpush.msra.mxu0 0.0
    %3767 = vmatpush.msra.mxu0 0.0
    %3768 = vmatpush.msra.mxu0 0.0
    %3769 = vmatpush.msra.mxu0 0.0
    %3770 = vmatpush.msra.mxu0 0.0
    %3771 = vmatpush.msra.mxu0 0.0
    %3772 = vmatpush.msra.mxu0 0.0
    %3773 = vmatpush.msra.mxu0 0.0
    %3774 = vmatpush.msra.mxu0 %v3757
    %3775 = vmatpush.msra.mxu0 %v3756
    %3776 = vmatpush.msra.mxu0 %v3755
    %3777 = vmatpush.msra.mxu0 %v3754
    %3778 = vmatmul.f32.gmra.mxu0 %v3531
    %v3779 = vpop.f32.mrf.mxu0
    %v3780 = vadd.f32 %v3760, %v3779
    %3781 = vdwg.mxu0
    %v3783 = vsel %vm238, %v3724, 0
    %v3786 = vsel %vm238, %v3752, 0
    %3788 = vmatpush.xpose.msra.mxu0 0.0
    %3789 = vmatpush.xpose.msra.mxu0 0.0
    %3790 = vmatpush.xpose.msra.mxu0 0.0
    %3791 = vmatpush.xpose.msra.mxu0 0.0
    %3792 = vmatpush.xpose.msra.mxu0 0.0
    %3793 = vmatpush.xpose.msra.mxu0 0.0
    %3794 = vmatpush.xpose.msra.mxu0 0.0
    %3795 = vmatpush.xpose.msra.mxu0 0.0
    %3796 = vmatpush.xpose.msra.mxu0 0.0
    %3797 = vmatpush.xpose.msra.mxu0 0.0
    %3798 = vmatpush.xpose.msra.mxu0 0.0
    %3799 = vmatpush.xpose.msra.mxu0 0.0
    %3800 = vmatpush.xpose.msra.mxu0 0.0
    %3801 = vmatpush.xpose.msra.mxu0 0.0
    %3802 = vmatpush.xpose.msra.mxu0 0.0
    %3803 = vmatpush.xpose.msra.mxu0 %v3786
    %3804 = vmatmul.f32.gmra.mxu0 %v3783
    %v3805 = vpop.f32.mrf.mxu0
    %v3806 = vadd.f32 0.0, %v3805
    %3807 = vdwg.mxu0
    %v3808 = vmul.f32 %v3806, 0.35355338
    %v3809 = vsel %vm238, %v3808, -inf
    %3810 = vmax.xlane.f32.xlu0 %v3809
    %v3811 = vpop.xlane.xlu0 %3810
    %v3812 = vsub.f32 %v3808, %v3811
    %v3813 = vmul.f32 %v3812, 1.442695
    %v3814 = vpow.pop %v3813
    %v3815 = vsel %vm238, %v3814, 0.0
    %3816 = vadd.xlane.f32.xlu0 %v3815
    %v3817 = vpop.xlane.xlu0 %3816
    %v3818 = vrcp.pop %v3817
    %v3819 = vmul.f32 %v3814, %v3818
    %v3821 = vsel %vm238, %v3819, 0
    %3823 = vmatpush.msra.mxu0 0.0
    %3824 = vmatpush.msra.mxu0 0.0
    %3825 = vmatpush.msra.mxu0 0.0
    %3826 = vmatpush.msra.mxu0 0.0
    %3827 = vmatpush.msra.mxu0 0.0
    %3828 = vmatpush.msra.mxu0 0.0
    %3829 = vmatpush.msra.mxu0 0.0
    %3830 = vmatpush.msra.mxu0 0.0
    %3831 = vmatpush.msra.mxu0 0.0
    %3832 = vmatpush.msra.mxu0 0.0
    %3833 = vmatpush.msra.mxu0 0.0
    %3834 = vmatpush.msra.mxu0 0.0
    %3835 = vmatpush.msra.mxu0 0.0
    %3836 = vmatpush.msra.mxu0 0.0
    %3837 = vmatpush.msra.mxu0 0.0
    %3838 = vmatpush.msra.mxu0 %v3780
    %3839 = vmatmul.f32.gmra.mxu0 %v3821
    %v3840 = vpop.f32.mrf.mxu0
    %v3841 = vadd.f32 0.0, %v3840
    %3842 = vdwg.mxu0
    %v3843 = vld [vmem:[%s1663] sm:$0xff]
    %v3845 = vsel %vm238, %v3841, 0
    %3847 = vmatpush.msra.mxu0 0.0
    %3848 = vmatpush.msra.mxu0 0.0
    %3849 = vmatpush.msra.mxu0 0.0
    %3850 = vmatpush.msra.mxu0 0.0
    %3851 = vmatpush.msra.mxu0 0.0
    %3852 = vmatpush.msra.mxu0 0.0
    %3853 = vmatpush.msra.mxu0 0.0
    %3854 = vmatpush.msra.mxu0 0.0
    %3855 = vmatpush.msra.mxu0 0.0
    %3856 = vmatpush.msra.mxu0 0.0
    %3857 = vmatpush.msra.mxu0 0.0
    %3858 = vmatpush.msra.mxu0 0.0
    %3859 = vmatpush.msra.mxu0 0.0
    %3860 = vmatpush.msra.mxu0 0.0
    %3861 = vmatpush.msra.mxu0 0.0
    %3862 = vmatpush.msra.mxu0 %v3843
    %3863 = vmatmul.f32.gmra.mxu0 %v3845
    %v3864 = vpop.f32.mrf.mxu0
    %v3865 = vadd.f32 0.0, %v3864
    %3866 = vdwg.mxu0
    %v3867 = vadd.f32 %v3697, %v3865
    %v3868 = vld [vmem:[%s1689] sm:$0xff]
    %v3869 = vld [vmem:[%s1689 + $0x8] sm:$0xff]
    %v3870 = vld [vmem:[%s1689 + $0x10] sm:$0xff]
    %v3871 = vld [vmem:[%s1689 + $0x18] sm:$0xff]
    %v3872 = vld [vmem:[%s1694] sm:$0x1]
    %v3874 = vperm.slane %v3872, 0
    %3876 = vmatpush.msra.mxu0 0.0
    %3877 = vmatpush.msra.mxu0 0.0
    %3878 = vmatpush.msra.mxu0 0.0
    %3879 = vmatpush.msra.mxu0 0.0
    %3880 = vmatpush.msra.mxu0 0.0
    %3881 = vmatpush.msra.mxu0 0.0
    %3882 = vmatpush.msra.mxu0 0.0
    %3883 = vmatpush.msra.mxu0 0.0
    %3884 = vmatpush.msra.mxu0 0.0
    %3885 = vmatpush.msra.mxu0 0.0
    %3886 = vmatpush.msra.mxu0 0.0
    %3887 = vmatpush.msra.mxu0 0.0
    %3888 = vmatpush.msra.mxu0 %v3871
    %3889 = vmatpush.msra.mxu0 %v3870
    %3890 = vmatpush.msra.mxu0 %v3869
    %3891 = vmatpush.msra.mxu0 %v3868
    %3892 = vmatmul.f32.gmra.mxu0 %v3531
    %v3893 = vpop.f32.mrf.mxu0
    %v3894 = vadd.f32 %v3874, %v3893
    %3895 = vdwg.mxu0
    %v3896 = vld [vmem:[%s1719] sm:$0xff]
    %v3897 = vld [vmem:[%s1719 + $0x8] sm:$0xff]
    %v3898 = vld [vmem:[%s1719 + $0x10] sm:$0xff]
    %v3899 = vld [vmem:[%s1719 + $0x18] sm:$0xff]
    %v3900 = vld [vmem:[%s1724] sm:$0x1]
    %v3902 = vperm.slane %v3900, 0
    %3904 = vmatpush.msra.mxu0 0.0
    %3905 = vmatpush.msra.mxu0 0.0
    %3906 = vmatpush.msra.mxu0 0.0
    %3907 = vmatpush.msra.mxu0 0.0
    %3908 = vmatpush.msra.mxu0 0.0
    %3909 = vmatpush.msra.mxu0 0.0
    %3910 = vmatpush.msra.mxu0 0.0
    %3911 = vmatpush.msra.mxu0 0.0
    %3912 = vmatpush.msra.mxu0 0.0
    %3913 = vmatpush.msra.mxu0 0.0
    %3914 = vmatpush.msra.mxu0 0.0
    %3915 = vmatpush.msra.mxu0 0.0
    %3916 = vmatpush.msra.mxu0 %v3899
    %3917 = vmatpush.msra.mxu0 %v3898
    %3918 = vmatpush.msra.mxu0 %v3897
    %3919 = vmatpush.msra.mxu0 %v3896
    %3920 = vmatmul.f32.gmra.mxu0 %v3531
    %v3921 = vpop.f32.mrf.mxu0
    %v3922 = vadd.f32 %v3902, %v3921
    %3923 = vdwg.mxu0
    %v3924 = vld [vmem:[%s1749] sm:$0xff]
    %v3925 = vld [vmem:[%s1749 + $0x8] sm:$0xff]
    %v3926 = vld [vmem:[%s1749 + $0x10] sm:$0xff]
    %v3927 = vld [vmem:[%s1749 + $0x18] sm:$0xff]
    %v3928 = vld [vmem:[%s1754] sm:$0x1]
    %v3930 = vperm.slane %v3928, 0
    %3932 = vmatpush.msra.mxu0 0.0
    %3933 = vmatpush.msra.mxu0 0.0
    %3934 = vmatpush.msra.mxu0 0.0
    %3935 = vmatpush.msra.mxu0 0.0
    %3936 = vmatpush.msra.mxu0 0.0
    %3937 = vmatpush.msra.mxu0 0.0
    %3938 = vmatpush.msra.mxu0 0.0
    %3939 = vmatpush.msra.mxu0 0.0
    %3940 = vmatpush.msra.mxu0 0.0
    %3941 = vmatpush.msra.mxu0 0.0
    %3942 = vmatpush.msra.mxu0 0.0
    %3943 = vmatpush.msra.mxu0 0.0
    %3944 = vmatpush.msra.mxu0 %v3927
    %3945 = vmatpush.msra.mxu0 %v3926
    %3946 = vmatpush.msra.mxu0 %v3925
    %3947 = vmatpush.msra.mxu0 %v3924
    %3948 = vmatmul.f32.gmra.mxu0 %v3531
    %v3949 = vpop.f32.mrf.mxu0
    %v3950 = vadd.f32 %v3930, %v3949
    %3951 = vdwg.mxu0
    %v3953 = vsel %vm238, %v3894, 0
    %v3956 = vsel %vm238, %v3922, 0
    %3958 = vmatpush.xpose.msra.mxu0 0.0
    %3959 = vmatpush.xpose.msra.mxu0 0.0
    %3960 = vmatpush.xpose.msra.mxu0 0.0
    %3961 = vmatpush.xpose.msra.mxu0 0.0
    %3962 = vmatpush.xpose.msra.mxu0 0.0
    %3963 = vmatpush.xpose.msra.mxu0 0.0
    %3964 = vmatpush.xpose.msra.mxu0 0.0
    %3965 = vmatpush.xpose.msra.mxu0 0.0
    %3966 = vmatpush.xpose.msra.mxu0 0.0
    %3967 = vmatpush.xpose.msra.mxu0 0.0
    %3968 = vmatpush.xpose.msra.mxu0 0.0
    %3969 = vmatpush.xpose.msra.mxu0 0.0
    %3970 = vmatpush.xpose.msra.mxu0 0.0
    %3971 = vmatpush.xpose.msra.mxu0 0.0
    %3972 = vmatpush.xpose.msra.mxu0 0.0
    %3973 = vmatpush.xpose.msra.mxu0 %v3956
    %3974 = vmatmul.f32.gmra.mxu0 %v3953
    %v3975 = vpop.f32.mrf.mxu0
    %v3976 = vadd.f32 0.0, %v3975
    %3977 = vdwg.mxu0
    %v3978 = vmul.f32 %v3976, 0.35355338
    %v3979 = vsel %vm238, %v3978, -inf
    %3980 = vmax.xlane.f32.xlu0 %v3979
    %v3981 = vpop.xlane.xlu0 %3980
    %v3982 = vsub.f32 %v3978, %v3981
    %v3983 = vmul.f32 %v3982, 1.442695
    %v3984 = vpow.pop %v3983
    %v3985 = vsel %vm238, %v3984, 0.0
    %3986 = vadd.xlane.f32.xlu0 %v3985
    %v3987 = vpop.xlane.xlu0 %3986
    %v3988 = vrcp.pop %v3987
    %v3989 = vmul.f32 %v3984, %v3988
    %v3991 = vsel %vm238, %v3989, 0
    %3993 = vmatpush.msra.mxu0 0.0
    %3994 = vmatpush.msra.mxu0 0.0
    %3995 = vmatpush.msra.mxu0 0.0
    %3996 = vmatpush.msra.mxu0 0.0
    %3997 = vmatpush.msra.mxu0 0.0
    %3998 = vmatpush.msra.mxu0 0.0
    %3999 = vmatpush.msra.mxu0 0.0
    %4000 = vmatpush.msra.mxu0 0.0
    %4001 = vmatpush.msra.mxu0 0.0
    %4002 = vmatpush.msra.mxu0 0.0
    %4003 = vmatpush.msra.mxu0 0.0
    %4004 = vmatpush.msra.mxu0 0.0
    %4005 = vmatpush.msra.mxu0 0.0
    %4006 = vmatpush.msra.mxu0 0.0
    %4007 = vmatpush.msra.mxu0 0.0
    %4008 = vmatpush.msra.mxu0 %v3950
    %4009 = vmatmul.f32.gmra.mxu0 %v3991
    %v4010 = vpop.f32.mrf.mxu0
    %v4011 = vadd.f32 0.0, %v4010
    %4012 = vdwg.mxu0
    %v4013 = vld [vmem:[%s1840] sm:$0xff]
    %v4015 = vsel %vm238, %v4011, 0
    %4017 = vmatpush.msra.mxu0 0.0
    %4018 = vmatpush.msra.mxu0 0.0
    %4019 = vmatpush.msra.mxu0 0.0
    %4020 = vmatpush.msra.mxu0 0.0
    %4021 = vmatpush.msra.mxu0 0.0
    %4022 = vmatpush.msra.mxu0 0.0
    %4023 = vmatpush.msra.mxu0 0.0
    %4024 = vmatpush.msra.mxu0 0.0
    %4025 = vmatpush.msra.mxu0 0.0
    %4026 = vmatpush.msra.mxu0 0.0
    %4027 = vmatpush.msra.mxu0 0.0
    %4028 = vmatpush.msra.mxu0 0.0
    %4029 = vmatpush.msra.mxu0 0.0
    %4030 = vmatpush.msra.mxu0 0.0
    %4031 = vmatpush.msra.mxu0 0.0
    %4032 = vmatpush.msra.mxu0 %v4013
    %4033 = vmatmul.f32.gmra.mxu0 %v4015
    %v4034 = vpop.f32.mrf.mxu0
    %v4035 = vadd.f32 0.0, %v4034
    %4036 = vdwg.mxu0
    %v4037 = vadd.f32 %v3867, %v4035
    %v4038 = vld [vmem:[%s1866] sm:$0xff]
    %v4039 = vld [vmem:[%s1866 + $0x8] sm:$0xff]
    %v4040 = vld [vmem:[%s1866 + $0x10] sm:$0xff]
    %v4041 = vld [vmem:[%s1866 + $0x18] sm:$0xff]
    %v4042 = vld [vmem:[%s1871] sm:$0x1]
    %v4044 = vperm.slane %v4042, 0
    %4046 = vmatpush.msra.mxu0 0.0
    %4047 = vmatpush.msra.mxu0 0.0
    %4048 = vmatpush.msra.mxu0 0.0
    %4049 = vmatpush.msra.mxu0 0.0
    %4050 = vmatpush.msra.mxu0 0.0
    %4051 = vmatpush.msra.mxu0 0.0
    %4052 = vmatpush.msra.mxu0 0.0
    %4053 = vmatpush.msra.mxu0 0.0
    %4054 = vmatpush.msra.mxu0 0.0
    %4055 = vmatpush.msra.mxu0 0.0
    %4056 = vmatpush.msra.mxu0 0.0
    %4057 = vmatpush.msra.mxu0 0.0
    %4058 = vmatpush.msra.mxu0 %v4041
    %4059 = vmatpush.msra.mxu0 %v4040
    %4060 = vmatpush.msra.mxu0 %v4039
    %4061 = vmatpush.msra.mxu0 %v4038
    %4062 = vmatmul.f32.gmra.mxu0 %v3531
    %v4063 = vpop.f32.mrf.mxu0
    %v4064 = vadd.f32 %v4044, %v4063
    %4065 = vdwg.mxu0
    %v4066 = vld [vmem:[%s1896] sm:$0xff]
    %v4067 = vld [vmem:[%s1896 + $0x8] sm:$0xff]
    %v4068 = vld [vmem:[%s1896 + $0x10] sm:$0xff]
    %v4069 = vld [vmem:[%s1896 + $0x18] sm:$0xff]
    %v4070 = vld [vmem:[%s1901] sm:$0x1]
    %v4072 = vperm.slane %v4070, 0
    %4074 = vmatpush.msra.mxu0 0.0
    %4075 = vmatpush.msra.mxu0 0.0
    %4076 = vmatpush.msra.mxu0 0.0
    %4077 = vmatpush.msra.mxu0 0.0
    %4078 = vmatpush.msra.mxu0 0.0
    %4079 = vmatpush.msra.mxu0 0.0
    %4080 = vmatpush.msra.mxu0 0.0
    %4081 = vmatpush.msra.mxu0 0.0
    %4082 = vmatpush.msra.mxu0 0.0
    %4083 = vmatpush.msra.mxu0 0.0
    %4084 = vmatpush.msra.mxu0 0.0
    %4085 = vmatpush.msra.mxu0 0.0
    %4086 = vmatpush.msra.mxu0 %v4069
    %4087 = vmatpush.msra.mxu0 %v4068
    %4088 = vmatpush.msra.mxu0 %v4067
    %4089 = vmatpush.msra.mxu0 %v4066
    %4090 = vmatmul.f32.gmra.mxu0 %v3531
    %v4091 = vpop.f32.mrf.mxu0
    %v4092 = vadd.f32 %v4072, %v4091
    %4093 = vdwg.mxu0
    %v4094 = vld [vmem:[%s1926] sm:$0xff]
    %v4095 = vld [vmem:[%s1926 + $0x8] sm:$0xff]
    %v4096 = vld [vmem:[%s1926 + $0x10] sm:$0xff]
    %v4097 = vld [vmem:[%s1926 + $0x18] sm:$0xff]
    %v4098 = vld [vmem:[%s1931] sm:$0x1]
    %v4100 = vperm.slane %v4098, 0
    %4102 = vmatpush.msra.mxu0 0.0
    %4103 = vmatpush.msra.mxu0 0.0
    %4104 = vmatpush.msra.mxu0 0.0
    %4105 = vmatpush.msra.mxu0 0.0
    %4106 = vmatpush.msra.mxu0 0.0
    %4107 = vmatpush.msra.mxu0 0.0
    %4108 = vmatpush.msra.mxu0 0.0
    %4109 = vmatpush.msra.mxu0 0.0
    %4110 = vmatpush.msra.mxu0 0.0
    %4111 = vmatpush.msra.mxu0 0.0
    %4112 = vmatpush.msra.mxu0 0.0
    %4113 = vmatpush.msra.mxu0 0.0
    %4114 = vmatpush.msra.mxu0 %v4097
    %4115 = vmatpush.msra.mxu0 %v4096
    %4116 = vmatpush.msra.mxu0 %v4095
    %4117 = vmatpush.msra.mxu0 %v4094
    %4118 = vmatmul.f32.gmra.mxu0 %v3531
    %v4119 = vpop.f32.mrf.mxu0
    %v4120 = vadd.f32 %v4100, %v4119
    %4121 = vdwg.mxu0
    %v4123 = vsel %vm238, %v4064, 0
    %v4126 = vsel %vm238, %v4092, 0
    %4128 = vmatpush.xpose.msra.mxu0 0.0
    %4129 = vmatpush.xpose.msra.mxu0 0.0
    %4130 = vmatpush.xpose.msra.mxu0 0.0
    %4131 = vmatpush.xpose.msra.mxu0 0.0
    %4132 = vmatpush.xpose.msra.mxu0 0.0
    %4133 = vmatpush.xpose.msra.mxu0 0.0
    %4134 = vmatpush.xpose.msra.mxu0 0.0
    %4135 = vmatpush.xpose.msra.mxu0 0.0
    %4136 = vmatpush.xpose.msra.mxu0 0.0
    %4137 = vmatpush.xpose.msra.mxu0 0.0
    %4138 = vmatpush.xpose.msra.mxu0 0.0
    %4139 = vmatpush.xpose.msra.mxu0 0.0
    %4140 = vmatpush.xpose.msra.mxu0 0.0
    %4141 = vmatpush.xpose.msra.mxu0 0.0
    %4142 = vmatpush.xpose.msra.mxu0 0.0
    %4143 = vmatpush.xpose.msra.mxu0 %v4126
    %4144 = vmatmul.f32.gmra.mxu0 %v4123
    %v4145 = vpop.f32.mrf.mxu0
    %v4146 = vadd.f32 0.0, %v4145
    %4147 = vdwg.mxu0
    %v4148 = vmul.f32 %v4146, 0.35355338
    %v4149 = vsel %vm238, %v4148, -inf
    %4150 = vmax.xlane.f32.xlu0 %v4149
    %v4151 = vpop.xlane.xlu0 %4150
    %v4152 = vsub.f32 %v4148, %v4151
    %v4153 = vmul.f32 %v4152, 1.442695
    %v4154 = vpow.pop %v4153
    %v4155 = vsel %vm238, %v4154, 0.0
    %4156 = vadd.xlane.f32.xlu0 %v4155
    %v4157 = vpop.xlane.xlu0 %4156
    %v4158 = vrcp.pop %v4157
    %v4159 = vmul.f32 %v4154, %v4158
    %v4161 = vsel %vm238, %v4159, 0
    %4163 = vmatpush.msra.mxu0 0.0
    %4164 = vmatpush.msra.mxu0 0.0
    %4165 = vmatpush.msra.mxu0 0.0
    %4166 = vmatpush.msra.mxu0 0.0
    %4167 = vmatpush.msra.mxu0 0.0
    %4168 = vmatpush.msra.mxu0 0.0
    %4169 = vmatpush.msra.mxu0 0.0
    %4170 = vmatpush.msra.mxu0 0.0
    %4171 = vmatpush.msra.mxu0 0.0
    %4172 = vmatpush.msra.mxu0 0.0
    %4173 = vmatpush.msra.mxu0 0.0
    %4174 = vmatpush.msra.mxu0 0.0
    %4175 = vmatpush.msra.mxu0 0.0
    %4176 = vmatpush.msra.mxu0 0.0
    %4177 = vmatpush.msra.mxu0 0.0
    %4178 = vmatpush.msra.mxu0 %v4120
    %4179 = vmatmul.f32.gmra.mxu0 %v4161
    %v4180 = vpop.f32.mrf.mxu0
    %v4181 = vadd.f32 0.0, %v4180
    %4182 = vdwg.mxu0
    %v4183 = vld [vmem:[%s2017] sm:$0xff]
    %v4185 = vsel %vm238, %v4181, 0
    %4187 = vmatpush.msra.mxu0 0.0
    %4188 = vmatpush.msra.mxu0 0.0
    %4189 = vmatpush.msra.mxu0 0.0
    %4190 = vmatpush.msra.mxu0 0.0
    %4191 = vmatpush.msra.mxu0 0.0
    %4192 = vmatpush.msra.mxu0 0.0
    %4193 = vmatpush.msra.mxu0 0.0
    %4194 = vmatpush.msra.mxu0 0.0
    %4195 = vmatpush.msra.mxu0 0.0
    %4196 = vmatpush.msra.mxu0 0.0
    %4197 = vmatpush.msra.mxu0 0.0
    %4198 = vmatpush.msra.mxu0 0.0
    %4199 = vmatpush.msra.mxu0 0.0
    %4200 = vmatpush.msra.mxu0 0.0
    %4201 = vmatpush.msra.mxu0 0.0
    %4202 = vmatpush.msra.mxu0 %v4183
    %4203 = vmatmul.f32.gmra.mxu0 %v4185
    %v4204 = vpop.f32.mrf.mxu0
    %v4205 = vadd.f32 0.0, %v4204
    %4206 = vdwg.mxu0
    %v4207 = vadd.f32 %v4037, %v4205
    %v4208 = vadd.f32 %v4207, %v3520
    %v4209 = vld [vmem:[%s35] sm:$0x1]
    %v4210 = vld [vmem:[%s37] sm:$0x1]
    %v4211 = vsel %vm142, %v4208, 0.0
    %4212 = vadd.xlane.f32.xlu0 %v4211
    %v4213 = vpop.xlane.xlu0 %4212
    %v4214 = vmul.f32 %v4213, %v1054
    %v4215 = vsub.f32 %v4208, %v4214
    %v4216 = vmul.f32 %v4215, %v4215
    %v4217 = vsel %vm142, %v4216, 0.0
    %4218 = vadd.xlane.f32.xlu0 %v4217
    %v4219 = vpop.xlane.xlu0 %4218
    %v4220 = vmul.f32 %v4219, %v1054
    %v4221 = vadd.f32 %v4220, 1e-12
    %v4222 = vrsqrt.pop %v4221
    %v4223 = vmul.f32 %v4222, %v4221
    %v4224 = vmul.f32 %v4223, %v4222
    %v4225 = vmul.f32 0.5, %v4224
    %v4226 = vsub.f32 1.5, %v4225
    %v4227 = vmul.f32 %v4222, %v4226
    %vm4228 = vweird.f32 %v4221
    %vm4229 = vweird.f32 %v4222
    %vm4230 = vmor %vm4228, %vm4229
    %v4231 = vsel %vm4230, %v4222, %v4227
    %v4232 = vmul.f32 %v4215, %v4231
    %v4234 = vperm.slane %v4209, 0
    %v4236 = vmul.f32 %v4232, %v4234
    %v4238 = vperm.slane %v4210, 0
    %v4240 = vadd.f32 %v4236, %v4238
    %v4241 = vld [vmem:[%s39] sm:$0xff]
    %v4242 = vld [vmem:[%s39 + $0x8] sm:$0xff]
    %v4243 = vld [vmem:[%s39 + $0x10] sm:$0xff]
    %v4244 = vld [vmem:[%s39 + $0x18] sm:$0xff]
    %v4245 = vld [vmem:[%s41] sm:$0x1]
    %v4247 = vperm.slane %v4245, 0
    %v4250 = vsel %vm142, %v4240, 0
    %4252 = vmatpush.msra.mxu0 0.0
    %4253 = vmatpush.msra.mxu0 0.0
    %4254 = vmatpush.msra.mxu0 0.0
    %4255 = vmatpush.msra.mxu0 0.0
    %4256 = vmatpush.msra.mxu0 0.0
    %4257 = vmatpush.msra.mxu0 0.0
    %4258 = vmatpush.msra.mxu0 0.0
    %4259 = vmatpush.msra.mxu0 0.0
    %4260 = vmatpush.msra.mxu0 0.0
    %4261 = vmatpush.msra.mxu0 0.0
    %4262 = vmatpush.msra.mxu0 0.0
    %4263 = vmatpush.msra.mxu0 0.0
    %4264 = vmatpush.msra.mxu0 %v4244
    %4265 = vmatpush.msra.mxu0 %v4243
    %4266 = vmatpush.msra.mxu0 %v4242
    %4267 = vmatpush.msra.mxu0 %v4241
    %4268 = vmatmul.f32.gmra.mxu0 %v4250
    %v4269 = vpop.f32.mrf.mxu0
    %v4270 = vadd.f32 %v4247, %v4269
    %4271 = vdwg.mxu0
    %v4272 = vmul.f32 %v4270, 0.5
    %v4273 = vmul.f32 %v4270, 0.70710677
    %v4274 = vmul.f32 %v4273, %v4273
    %v4275 = vmin.f32 16.0, %v4274
    %v4276 = vmul.f32 %v4275, 2.1237322e-06
    %v4277 = vadd.f32 %v4276, 0.00028619796
    %v4278 = vmul.f32 %v4275, %v4277
    %v4279 = vadd.f32 %v4278, 0.0036580483
    %v4280 = vmul.f32 %v4275, %v4279
    %v4281 = vadd.f32 %v4280, 0.05243302
    %v4282 = vmul.f32 %v4275, %v4281
    %v4283 = vadd.f32 %v4282, 0.18741608
    %v4284 = vmul.f32 %v4275, %v4283
    %v4285 = vadd.f32 %v4284, 1.1283791
    %v4286 = vmul.f32 %v4273, %v4285
    %v4287 = vmul.f32 %v4275, 3.8918573e-05
    %v4288 = vadd.f32 %v4287, 0.001143296
    %v4289 = vmul.f32 %v4275, %v4288
    %v4290 = vadd.f32 %v4289, 0.014752088
    %v4291 = vmul.f32 %v4275, %v4290
    %v4292 = vadd.f32 %v4291, 0.112945676
    %v4293 = vmul.f32 %v4275, %v4292
    %v4294 = vadd.f32 %v4293, 0.4994258
    %v4295 = vmul.f32 %v4275, %v4294
    %v4296 = vadd.f32 %v4295, 1.0
    %v4297 = vrcp.pop %v4296
    %v4298 = vmul.f32 %v4296, %v4297
    %v4299 = vsub.f32 1.0, %v4298
    %v4300 = vmul.f32 %v4297, %v4299
    %v4301 = vadd.f32 %v4297, %v4300
    %vm4302 = vweird.f32 %v4296
    %vm4303 = vweird.f32 %v4297
    %vm4304 = vmor %vm4302, %vm4303
    %v4305 = vsel %vm4304, %v4297, %v4301
    %v4306 = vand.u32 2147483647, %v4296
    %vm4307 = vcmp.eq.f32.partialorder %v4306, 8.507059e+37
    %v4308 = vand.u32 %v4296, 2147483648
    %v4309 = vor.u32 1.1754944e-38, %v4308
    %v4310 = vsel %vm4307, %v4309, %v4305
    %v4311 = vmul.f32 %v4286, %v4310
    %v4312 = vmin.f32 %v4311, 1.0
    %v4313 = vmax.f32 %v4312, -1.0
    %v4314 = vadd.f32 %v4313, 1.0
    %v4315 = vmul.f32 %v4272, %v4314
    %v4316 = vld [vmem:[%s43] sm:$0xff]
    %v4317 = vld [vmem:[%s43 + $0x8] sm:$0xff]
    %v4318 = vld [vmem:[%s43 + $0x10] sm:$0xff]
    %v4319 = vld [vmem:[%s43 + $0x18] sm:$0xff]
    %v4320 = vld [vmem:[%s43 + $0x20] sm:$0xff]
    %v4321 = vld [vmem:[%s43 + $0x28] sm:$0xff]
    %v4322 = vld [vmem:[%s43 + $0x30] sm:$0xff]
    %v4323 = vld [vmem:[%s43 + $0x38] sm:$0xff]
    %v4324 = vld [vmem:[%s45] sm:$0x1]
    %v4326 = vperm.slane %v4324, 0
    %v4329 = vsel %vm1240, %v4315, 0
    %4331 = vmatpush.msra.mxu0 0.0
    %4332 = vmatpush.msra.mxu0 0.0
    %4333 = vmatpush.msra.mxu0 0.0
    %4334 = vmatpush.msra.mxu0 0.0
    %4335 = vmatpush.msra.mxu0 0.0
    %4336 = vmatpush.msra.mxu0 0.0
    %4337 = vmatpush.msra.mxu0 0.0
    %4338 = vmatpush.msra.mxu0 0.0
    %4339 = vmatpush.msra.mxu0 %v4323
    %4340 = vmatpush.msra.mxu0 %v4322
    %4341 = vmatpush.msra.mxu0 %v4321
    %4342 = vmatpush.msra.mxu0 %v4320
    %4343 = vmatpush.msra.mxu0 %v4319
    %4344 = vmatpush.msra.mxu0 %v4318
    %4345 = vmatpush.msra.mxu0 %v4317
    %4346 = vmatpush.msra.mxu0 %v4316
    %4347 = vmatmul.f32.gmra.mxu0 %v4329
    %v4348 = vpop.f32.mrf.mxu0
    %v4349 = vadd.f32 %v4326, %v4348
    %4350 = vdwg.mxu0
    %v4351 = vadd.f32 %v4349, %v4240
    %v4352 = vld [vmem:[%s47] sm:$0x1]
    %v4353 = vld [vmem:[%s49] sm:$0x1]
    %v4354 = vsel %vm142, %v4351, 0.0
    %4355 = vadd.xlane.f32.xlu0 %v4354
    %v4356 = vpop.xlane.xlu0 %4355
    %v4357 = vmul.f32 %v4356, %v1054
    %v4358 = vsub.f32 %v4351, %v4357
    %v4359 = vmul.f32 %v4358, %v4358
    %v4360 = vsel %vm142, %v4359, 0.0
    %4361 = vadd.xlane.f32.xlu0 %v4360
    %v4362 = vpop.xlane.xlu0 %4361
    %v4363 = vmul.f32 %v4362, %v1054
    %v4364 = vadd.f32 %v4363, 1e-12
    %v4365 = vrsqrt.pop %v4364
    %v4366 = vmul.f32 %v4365, %v4364
    %v4367 = vmul.f32 %v4366, %v4365
    %v4368 = vmul.f32 0.5, %v4367
    %v4369 = vsub.f32 1.5, %v4368
    %v4370 = vmul.f32 %v4365, %v4369
    %vm4371 = vweird.f32 %v4364
    %vm4372 = vweird.f32 %v4365
    %vm4373 = vmor %vm4371, %vm4372
    %v4374 = vsel %vm4373, %v4365, %v4370
    %v4375 = vmul.f32 %v4358, %v4374
    %v4377 = vperm.slane %v4352, 0
    %v4379 = vmul.f32 %v4375, %v4377
    %v4381 = vperm.slane %v4353, 0
    %v4383 = vadd.f32 %v4379, %v4381
    %v4384 = vld [vmem:[%s51] sm:$0xff]
    %v4385 = vld [vmem:[%s51 + $0x8] sm:$0xff]
    %v4386 = vld [vmem:[%s51 + $0x10] sm:$0xff]
    %v4387 = vld [vmem:[%s51 + $0x18] sm:$0xff]
    %v4388 = vld [vmem:[%s53] sm:$0x1]
    %v4390 = vperm.slane %v4388, 0
    %v4393 = vsel %vm142, %v4383, 0
    %4395 = vmatpush.msra.mxu0 0.0
    %4396 = vmatpush.msra.mxu0 0.0
    %4397 = vmatpush.msra.mxu0 0.0
    %4398 = vmatpush.msra.mxu0 0.0
    %4399 = vmatpush.msra.mxu0 0.0
    %4400 = vmatpush.msra.mxu0 0.0
    %4401 = vmatpush.msra.mxu0 0.0
    %4402 = vmatpush.msra.mxu0 0.0
    %4403 = vmatpush.msra.mxu0 0.0
    %4404 = vmatpush.msra.mxu0 0.0
    %4405 = vmatpush.msra.mxu0 0.0
    %4406 = vmatpush.msra.mxu0 0.0
    %4407 = vmatpush.msra.mxu0 %v4387
    %4408 = vmatpush.msra.mxu0 %v4386
    %4409 = vmatpush.msra.mxu0 %v4385
    %4410 = vmatpush.msra.mxu0 %v4384
    %4411 = vmatmul.f32.gmra.mxu0 %v4393
    %v4412 = vpop.f32.mrf.mxu0
    %v4413 = vadd.f32 %v4390, %v4412
    %4414 = vdwg.mxu0
    %v4415 = vmul.f32 %v4413, 0.5
    %v4416 = vmul.f32 %v4413, 0.70710677
    %v4417 = vmul.f32 %v4416, %v4416
    %v4418 = vmin.f32 16.0, %v4417
    %v4419 = vmul.f32 %v4418, 2.1237322e-06
    %v4420 = vadd.f32 %v4419, 0.00028619796
    %v4421 = vmul.f32 %v4418, %v4420
    %v4422 = vadd.f32 %v4421, 0.0036580483
    %v4423 = vmul.f32 %v4418, %v4422
    %v4424 = vadd.f32 %v4423, 0.05243302
    %v4425 = vmul.f32 %v4418, %v4424
    %v4426 = vadd.f32 %v4425, 0.18741608
    %v4427 = vmul.f32 %v4418, %v4426
    %v4428 = vadd.f32 %v4427, 1.1283791
    %v4429 = vmul.f32 %v4416, %v4428
    %v4430 = vmul.f32 %v4418, 3.8918573e-05
    %v4431 = vadd.f32 %v4430, 0.001143296
    %v4432 = vmul.f32 %v4418, %v4431
    %v4433 = vadd.f32 %v4432, 0.014752088
    %v4434 = vmul.f32 %v4418, %v4433
    %v4435 = vadd.f32 %v4434, 0.112945676
    %v4436 = vmul.f32 %v4418, %v4435
    %v4437 = vadd.f32 %v4436, 0.4994258
    %v4438 = vmul.f32 %v4418, %v4437
    %v4439 = vadd.f32 %v4438, 1.0
    %v4440 = vrcp.pop %v4439
    %v4441 = vmul.f32 %v4439, %v4440
    %v4442 = vsub.f32 1.0, %v4441
    %v4443 = vmul.f32 %v4440, %v4442
    %v4444 = vadd.f32 %v4440, %v4443
    %vm4445 = vweird.f32 %v4439
    %vm4446 = vweird.f32 %v4440
    %vm4447 = vmor %vm4445, %vm4446
    %v4448 = vsel %vm4447, %v4440, %v4444
    %v4449 = vand.u32 2147483647, %v4439
    %vm4450 = vcmp.eq.f32.partialorder %v4449, 8.507059e+37
    %v4451 = vand.u32 %v4439, 2147483648
    %v4452 = vor.u32 1.1754944e-38, %v4451
    %v4453 = vsel %vm4450, %v4452, %v4448
    %v4454 = vmul.f32 %v4429, %v4453
    %v4455 = vmin.f32 %v4454, 1.0
    %v4456 = vmax.f32 %v4455, -1.0
    %v4457 = vadd.f32 %v4456, 1.0
    %v4458 = vmul.f32 %v4415, %v4457
    %v4459 = vld [vmem:[%s55] sm:$0x1]
    %v4460 = vld [vmem:[%s57] sm:$0x1]
    %v4461 = vsel %vm142, %v4458, 0.0
    %4462 = vadd.xlane.f32.xlu0 %v4461
    %v4463 = vpop.xlane.xlu0 %4462
    %v4464 = vmul.f32 %v4463, %v1054
    %v4465 = vsub.f32 %v4458, %v4464
    %v4466 = vmul.f32 %v4465, %v4465
    %v4467 = vsel %vm142, %v4466, 0.0
    %4468 = vadd.xlane.f32.xlu0 %v4467
    %v4469 = vpop.xlane.xlu0 %4468
    %v4470 = vmul.f32 %v4469, %v1054
    %v4471 = vadd.f32 %v4470, 1e-12
    %v4472 = vrsqrt.pop %v4471
    %v4473 = vmul.f32 %v4472, %v4471
    %v4474 = vmul.f32 %v4473, %v4472
    %v4475 = vmul.f32 0.5, %v4474
    %v4476 = vsub.f32 1.5, %v4475
    %v4477 = vmul.f32 %v4472, %v4476
    %vm4478 = vweird.f32 %v4471
    %vm4479 = vweird.f32 %v4472
    %vm4480 = vmor %vm4478, %vm4479
    %v4481 = vsel %vm4480, %v4472, %v4477
    %v4482 = vmul.f32 %v4465, %v4481
    %v4484 = vperm.slane %v4459, 0
    %v4486 = vmul.f32 %v4482, %v4484
    %v4488 = vperm.slane %v4460, 0
    %v4490 = vadd.f32 %v4486, %v4488
    %v4491 = vld [vmem:[%s59] sm:$0xff]
    %v4492 = vld [vmem:[%s59 + $0x8] sm:$0xff]
    %v4493 = vld [vmem:[%s59 + $0x10] sm:$0xff]
    %v4494 = vld [vmem:[%s59 + $0x18] sm:$0xff]
    %v4495 = vld [vmem:[%s61] sm:$0x1]
    %v4497 = vperm.slane %v4495, 0
    %v4500 = vsel %vm142, %v4490, 0
    %4502 = vmatpush.msra.mxu0 0.0
    %4503 = vmatpush.msra.mxu0 0.0
    %4504 = vmatpush.msra.mxu0 0.0
    %4505 = vmatpush.msra.mxu0 0.0
    %4506 = vmatpush.msra.mxu0 0.0
    %4507 = vmatpush.msra.mxu0 0.0
    %4508 = vmatpush.msra.mxu0 0.0
    %4509 = vmatpush.msra.mxu0 0.0
    %4510 = vmatpush.msra.mxu0 0.0
    %4511 = vmatpush.msra.mxu0 0.0
    %4512 = vmatpush.msra.mxu0 0.0
    %4513 = vmatpush.msra.mxu0 0.0
    %4514 = vmatpush.msra.mxu0 %v4494
    %4515 = vmatpush.msra.mxu0 %v4493
    %4516 = vmatpush.msra.mxu0 %v4492
    %4517 = vmatpush.msra.mxu0 %v4491
    %4518 = vmatmul.f32.gmra.mxu0 %v4500
    %v4519 = vpop.f32.mrf.mxu0
    %v4520 = vadd.f32 %v4497, %v4519
    %4521 = vdwg.mxu0
    %s4522 = scalar_lea.vmem [#allocation3], 8
    %4523 = vst.msk [vmem:[%s4522] sm:$0xff] %vm2357, %v4520
    // Predicated region
    $region126: #{qarac_decoder_head.1} parent=1 // pred_check
      _
    $region127: #{qarac_decoder_head.1} parent=1 // pred_check_branch
      %4525 = sbr.rel (0) target = $region129
    $region128: #{qarac_decoder_head.1} parent=1 // pred_region
      %4527 = vsyncadd [#allocation4], 0
      %s4528 = sshll.u32 [#allocation3], 4
      %s4529 = int_to_ptr.vmem [resolvable:$true] %s4528
      %s4530 = sshll.u32 %s63, 4
      %s4531 = int_to_ptr.hbm [resolvable:$true] %s4530
      %4536 = dma.vmem_to_hbm [thread:$0]  %s4529, 256, %s4531, [#allocation4], 128, 128, 8
    $region129: #{qarac_decoder_head.1} parent=1 // pred_fallthru
      _
    // Predicated region
    $region130: #{qarac_decoder_head.1} parent=1 // pred_check
      _
    $region131: #{qarac_decoder_head.1} parent=1 // pred_check_branch
      %4538 = sbr.rel (0) target = $region133
    $region132: #{qarac_decoder_head.1} parent=1 // pred_region
      %4540 = dma.done [#allocation4], 256
    $region133: #{qarac_decoder_head.1} parent=1 // pred_fallthru
      _
    %4541 = vsyncpa [#allocation4], 1

</llo_original>
